<compile_context>
chip_gen: v7x
topology: tpu7x:2x2x1
jax: 0.10.0
libtpu: 0.0.40
codegen_flags: <defaults>
</compile_context>

<pallas_src>
import functools
import math

import jax
import jax.numpy as jnp
from jax import lax
from jax.experimental import pallas as pl
from jax.experimental.pallas import tpu as pltpu


def _round_up(v, m):
    return -(-v // m) * m


def _mish(x):
    # mish(x) = x * tanh(softplus(x)).  With t = 1 + exp(x):
    #   tanh(log(t)) = (t^2 - 1) / (t^2 + 1)
    # -> one EUP exp + VPU work + one EUP approx reciprocal.
    t = 1.0 + jnp.exp(jnp.minimum(x, 25.0))      # for x > 25, mish(x) ~= x
    t2 = t * t
    return x * (t2 - 1.0) * pl.reciprocal(t2 + 1.0, approx=True)


def _cpe_kernel(mask_ref, x_ref, w1_ref, b1_ref, w2_ref, b2_ref, o_ref,
                pad1_ref, pad2_ref, lhs_ref,
                *, N, Pc, CPAD, K, NC, nchunks, pad, PLO, Npad):
    """One (channel-pack, batch-element) tile per grid step.

    mask_ref : [1, N, 1]        bf16, 1 = valid (arbitrary mask supported)
    x_ref    : [1, N, Pc]       bf16 input slice (this pack's channels)
    w*_ref   : [1, K*CPAD, Pc]  bf16 tap-folded block-diagonal conv weights
    b*_ref   : [1, 1, Pc]       f32 biases
    o_ref    : [1, N, Pc]       output slice
    pad1_ref : [Npad, Pc]       bf16 zero-padded (masked) input scratch
    pad2_ref : [Npad, Pc]       bf16 zero-padded mish(conv1) scratch
    lhs_ref  : [NC, K*CPAD]     bf16 im2col (tap-folded) matmul LHS
    """
    mask2d = mask_ref[0]                          # [N, 1] bf16
    valid = mask2d != 0

    # Stage masked input; zero only the halo / overrun rows (left halo PLO is
    # a multiple of 8, so the data region starts sublane-aligned).
    zero_lo = jnp.zeros((PLO, Pc), jnp.bfloat16)
    zero_hi = jnp.zeros((Npad - PLO - N, Pc), jnp.bfloat16)
    pad1_ref[0:PLO, :] = zero_lo
    pad1_ref[PLO + N:Npad, :] = zero_hi
    pad2_ref[0:PLO, :] = zero_lo
    pad2_ref[PLO + N:Npad, :] = zero_hi
    xv = x_ref[0]
    pad1_ref[PLO:PLO + N, :] = jnp.where(valid, xv, jnp.zeros_like(xv))

    if CPAD != Pc:
        # zero the per-tap lane padding once; those lanes are never written
        lhs_ref[...] = jnp.zeros((NC, K * CPAD), jnp.bfloat16)

    def run_conv(src_ref, w_ref, b_ref, write_chunk):
        w = w_ref[0]                              # [K*CPAD, Pc] bf16
        bb = b_ref[0]                             # [1, Pc] f32
        for c in range(nchunks):
            n0 = c * NC
            base = PLO - pad + n0
            # im2col over taps: contraction depth K*CPAD, written once,
            # destinations 128-lane aligned.
            for k in range(K):
                lhs_ref[:, k * CPAD:k * CPAD + Pc] = \
                    src_ref[base + k:base + k + NC, :]
            acc = jnp.dot(lhs_ref[...], w,
                          preferred_element_type=jnp.float32) + bb
            write_chunk(n0, min(NC, N - n0), _mish(acc))

    # conv1 -> Mish -> padded intermediate (halo rows stay zero for conv2)
    def write_h1(n0, nv, h):
        pad2_ref[PLO + n0:PLO + n0 + nv, :] = h[:nv].astype(jnp.bfloat16)

    run_conv(pad1_ref, w1_ref, b1_ref, write_h1)

    # conv2 -> Mish -> masked output
    def write_out(n0, nv, h):
        hv = jnp.where(valid[n0:n0 + nv], h[:nv], jnp.zeros_like(h[:nv]))
        o_ref[0, n0:n0 + nv, :] = hv.astype(o_ref.dtype)

    run_conv(pad2_ref, w2_ref, b2_ref, write_out)


def _choose_pack(groups, cin_g):
    """Smallest divisor P of `groups` with (P * cin_g) % 128 == 0, else all
    groups (so the channel block is either lane-dense or the full dim)."""
    for p in range(1, groups + 1):
        if groups % p == 0 and (p * cin_g) % 128 == 0:
            return p
    return groups


def _pack_weights(w, groups, P, CPAD):
    """w: [D, D//groups, K] (PyTorch Conv1d OIH) ->
       [groups//P, K*CPAD, P*cin_g] bf16 tap-folded block-diagonal RHS."""
    D, cin_g, K = w.shape
    NP = groups // P
    Pc = P * cin_g
    wt = jnp.transpose(w, (2, 1, 0)).reshape(K, cin_g, NP, P, cin_g)
    wt = jnp.transpose(wt, (2, 0, 3, 1, 4))        # [p, k, j(out grp), c, d]
    eye = jnp.eye(P, dtype=wt.dtype)
    # block-diagonal inside a pack: nonzero only when in-group == out-group
    wf = jnp.einsum('pkjcd,ij->pkicjd', wt, eye)   # [p, k, i, c, j, d]
    wf = wf.reshape(NP, K, Pc, Pc)
    if CPAD != Pc:
        wf = jnp.pad(wf, ((0, 0), (0, 0), (0, CPAD - Pc), (0, 0)))
    return wf.reshape(NP, K * CPAD, Pc).astype(jnp.bfloat16)


def conv_position_embedding(x, mask, w1, b1, w2, b2, groups=16, n_chunk=512):
    """x: [B, N, D]; mask: [B, N] bool (or None); w1, w2: [D, D//groups, K]
    (PyTorch Conv1d layout); b1, b2: [D]."""
    B, N, D = x.shape
    Dw, cin_g, K = w1.shape
    assert Dw == D and D % groups == 0 and cin_g == D // groups
    assert K % 2 == 1 and N >= 1

    P = _choose_pack(groups, cin_g)
    NP = groups // P
    Pc = P * cin_g                                 # channels per grid step
    CPAD = Pc if Pc % 128 == 0 else _round_up(Pc, 128)
    pad = K // 2
    PLO = _round_up(pad, 8)                        # sublane-aligned left halo
    NC = max(1, min(n_chunk, N))                   # in-kernel row-chunk size
    nchunks = -(-N // NC)
    Npad = PLO + nchunks * NC + PLO

    wf1 = _pack_weights(w1, groups, P, CPAD)
    wf2 = _pack_weights(w2, groups, P, CPAD)
    b1_r = b1.astype(jnp.float32).reshape(NP, 1, Pc)
    b2_r = b2.astype(jnp.float32).reshape(NP, 1, Pc)

    x_bf = x.astype(jnp.bfloat16)
    if mask is None:
        mask_a = jnp.ones((B, N, 1), jnp.bfloat16)
    else:
        mask_a = mask.reshape(B, N, 1).astype(jnp.bfloat16)

    kernel = functools.partial(
        _cpe_kernel, N=N, Pc=Pc, CPAD=CPAD, K=K, NC=NC, nchunks=nchunks,
        pad=pad, PLO=PLO, Npad=Npad)

    # explicit scoped-VMEM budget: double-buffered blocks + scratch + headroom
    out_bytes = jnp.dtype(x.dtype).itemsize
    need = (2 * N * Pc * 2 + 2 * N * Pc * out_bytes + 2 * N * 2
            + 2 * 2 * K * CPAD * Pc * 2 + 2 * 2 * Pc * 4
            + 2 * Npad * Pc * 2 + NC * K * CPAD * 2)
    vmem_limit = int(min(100 * 2**20, need * 1.5 + 16 * 2**20))

    return pl.pallas_call(
        kernel,
        out_shape=jax.ShapeDtypeStruct((B, N, D), x.dtype),
        grid_spec=pltpu.PrefetchScalarGridSpec(
            num_scalar_prefetch=0,
            grid=(NP, B),          # weights constant across the inner B loop
            in_specs=[
                pl.BlockSpec((1, N, 1), lambda p, b: (b, 0, 0)),          # mask
                pl.BlockSpec((1, N, Pc), lambda p, b: (b, 0, p)),         # x
                pl.BlockSpec((1, K * CPAD, Pc), lambda p, b: (p, 0, 0)),  # W1
                pl.BlockSpec((1, 1, Pc), lambda p, b: (p, 0, 0)),         # b1
                pl.BlockSpec((1, K * CPAD, Pc), lambda p, b: (p, 0, 0)),  # W2
                pl.BlockSpec((1, 1, Pc), lambda p, b: (p, 0, 0)),         # b2
            ],
            out_specs=pl.BlockSpec((1, N, Pc), lambda p, b: (b, 0, p)),
            scratch_shapes=[
                pltpu.VMEM((Npad, Pc), jnp.bfloat16),       # padded input
                pltpu.VMEM((Npad, Pc), jnp.bfloat16),       # padded mish(conv1)
                pltpu.VMEM((NC, K * CPAD), jnp.bfloat16),   # im2col LHS
            ],
        ),
        compiler_params=pltpu.CompilerParams(
            dimension_semantics=("parallel", "parallel"),
            vmem_limit_bytes=vmem_limit),
    )(mask_a, x_bf, wf1, b1_r, wf2, b2_r)


def reference_forward(x, mask, w1, b1, w2, b2, groups):
    """Plain-JAX reference mirroring the PyTorch module (for self-check)."""
    K = w1.shape[-1]
    pad = K // 2
    if mask is not None:
        x = jnp.where(mask[..., None], x, 0.0)
    h = jnp.transpose(x, (0, 2, 1))                 # [B, D, N]

    def conv(h, w, b):
        o = lax.conv_general_dilated(
            h, w, window_strides=(1,), padding=[(pad, pad)],
            dimension_numbers=("NCH", "OIH", "NCH"),
            feature_group_count=groups)
        return o + b[None, :, None]

    def mish(v):
        return v * jnp.tanh(jax.nn.softplus(v))

    h = mish(conv(h, w1, b1))
    h = mish(conv(h, w2, b2))
    out = jnp.transpose(h, (0, 2, 1))
    if mask is not None:
        out = jnp.where(mask[..., None], out, 0.0)
    return out


if __name__ == "__main__":
    base_key = jax.random.PRNGKey(0)

    def run_case(case_id, B, N, D, K, G, mask_kind, n_chunk):
        key = jax.random.fold_in(base_key, case_id)
        kx, kw1, kb1, kw2, kb2, km = jax.random.split(key, 6)
        cin_g = D // G
        bound = 1.0 / math.sqrt(cin_g * K)   # Conv1d default init bound
        w1 = jax.random.uniform(kw1, (D, cin_g, K), jnp.float32, -bound, bound)
        b1 = jax.random.uniform(kb1, (D,), jnp.float32, -bound, bound)
        w2 = jax.random.uniform(kw2, (D, cin_g, K), jnp.float32, -bound, bound)
        b2 = jax.random.uniform(kb2, (D,), jnp.float32, -bound, bound)
        x = jax.random.normal(kx, (B, N, D), jnp.float32)
        if mask_kind == "prefix":
            lengths = jax.random.randint(km, (B,), N // 2, N + 1)
            mask = jnp.arange(N)[None, :] < lengths[:, None]
        elif mask_kind == "random":
            mask = jax.random.bernoulli(km, 0.8, (B, N))
        else:
            mask = None

        out = jax.block_until_ready(
            conv_position_embedding(x, mask, w1, b1, w2, b2, G,
                                    n_chunk=n_chunk))
        ref = reference_forward(x, mask, w1, b1, w2, b2, G)
        assert out.shape == (B, N, D)
        err = float(jnp.max(jnp.abs(out - ref)))
        # bf16 matmul operands with f32 accumulation -> relaxed tolerance
        assert jnp.allclose(out, ref, atol=5e-2, rtol=5e-2), (
            f"mismatch B={B} N={N} D={D} K={K} G={G}: max err {err}")

    # D < 128: single pack (Pc = D), lane-padded taps, prefix mask
    run_case(0, 2, 64, 32, 31, 16, "prefix", 512)
    # D = 256: multi-pack path (Pc=128, NP=2) + in-kernel N chunking,
    # arbitrary (non-prefix) mask
    run_case(1, 2, 44, 256, 15, 16, "random", 16)
    # mask=None path
    run_case(2, 2, 64, 32, 31, 16, None, 512)

    print("KERNEL_OK")
</pallas_src>

<mosaic_0001>
module attributes {stable_mosaic.version = 11 : i64} {
  func.func @_cpe_kernel(%arg0: i32, %arg1: i32, %arg2: memref<1x64x1xbf16, #tpu.memory_space<vmem>>, %arg3: memref<1x64x32xbf16, #tpu.memory_space<vmem>>, %arg4: memref<1x3968x32xbf16, #tpu.memory_space<vmem>>, %arg5: memref<1x1x32xf32, #tpu.memory_space<vmem>>, %arg6: memref<1x3968x32xbf16, #tpu.memory_space<vmem>>, %arg7: memref<1x1x32xf32, #tpu.memory_space<vmem>>, %arg8: memref<1x64x32xf32, #tpu.memory_space<vmem>>, %arg9: memref<96x32xbf16, #tpu.memory_space<vmem>>, %arg10: memref<96x32xbf16, #tpu.memory_space<vmem>>, %arg11: memref<64x3968xbf16, #tpu.memory_space<vmem>>) attributes {dimension_semantics = [#tpu.dimension_semantics<parallel>, #tpu.dimension_semantics<parallel>], iteration_bounds = array<i64: 1, 2>, scalar_prefetch = 0 : i64, scratch_operands = 3 : i64, tpu.core_type = #tpu.core_type<tc>, window_params = [{transform_indices = @transform_0, window_bounds = array<i64: 1, 64, 1>}, {transform_indices = @transform_1, window_bounds = array<i64: 1, 64, 32>}, {transform_indices = @transform_2, window_bounds = array<i64: 1, 3968, 32>}, {transform_indices = @transform_3, window_bounds = array<i64: 1, 1, 32>}, {transform_indices = @transform_4, window_bounds = array<i64: 1, 3968, 32>}, {transform_indices = @transform_5, window_bounds = array<i64: 1, 1, 32>}, {transform_indices = @transform_6, window_bounds = array<i64: 1, 64, 32>}]} {
    %c0 = arith.constant 0 : index
    %c0_0 = arith.constant 0 : index
    %c0_1 = arith.constant 0 : index
    %0 = vector.load %arg2[%c0, %c0_0, %c0_1] : memref<1x64x1xbf16, #tpu.memory_space<vmem>>, vector<1x64x1xbf16>
    %1 = vector.shape_cast %0 : vector<1x64x1xbf16> to vector<64x1xbf16>
    %cst = arith.constant 0.000000e+00 : bf16
    %2 = vector.broadcast %cst : bf16 to vector<64x1xbf16>
    %3 = arith.cmpf one, %1, %2 : vector<64x1xbf16>
    %cst_2 = arith.constant 0.000000e+00 : bf16
    %4 = vector.broadcast %cst_2 : bf16 to vector<16x32xbf16>
    %cst_3 = arith.constant 0.000000e+00 : bf16
    %5 = vector.broadcast %cst_3 : bf16 to vector<16x32xbf16>
    %c0_4 = arith.constant 0 : index
    %c0_5 = arith.constant 0 : index
    %6 = vector.load %arg9[%c0_4, %c0_5] : memref<96x32xbf16, #tpu.memory_space<vmem>>, vector<16x32xbf16>
    tpu.vector_store %arg9[%c0_4, %c0_5], %4 {strides = array<i32>} : memref<96x32xbf16, #tpu.memory_space<vmem>>, vector<16x32xbf16>,
    %c80 = arith.constant 80 : index
    %c0_6 = arith.constant 0 : index
    %7 = vector.load %arg9[%c80, %c0_6] : memref<96x32xbf16, #tpu.memory_space<vmem>>, vector<16x32xbf16>
    tpu.vector_store %arg9[%c80, %c0_6], %5 {strides = array<i32>} : memref<96x32xbf16, #tpu.memory_space<vmem>>, vector<16x32xbf16>,
    %c0_7 = arith.constant 0 : index
    %c0_8 = arith.constant 0 : index
    %8 = vector.load %arg10[%c0_7, %c0_8] : memref<96x32xbf16, #tpu.memory_space<vmem>>, vector<16x32xbf16>
    tpu.vector_store %arg10[%c0_7, %c0_8], %4 {strides = array<i32>} : memref<96x32xbf16, #tpu.memory_space<vmem>>, vector<16x32xbf16>,
    %c80_9 = arith.constant 80 : index
    %c0_10 = arith.constant 0 : index
    %9 = vector.load %arg10[%c80_9, %c0_10] : memref<96x32xbf16, #tpu.memory_space<vmem>>, vector<16x32xbf16>
    tpu.vector_store %arg10[%c80_9, %c0_10], %5 {strides = array<i32>} : memref<96x32xbf16, #tpu.memory_space<vmem>>, vector<16x32xbf16>,
    %c0_11 = arith.constant 0 : index
    %c0_12 = arith.constant 0 : index
    %c0_13 = arith.constant 0 : index
    %10 = vector.load %arg3[%c0_11, %c0_12, %c0_13] : memref<1x64x32xbf16, #tpu.memory_space<vmem>>, vector<1x64x32xbf16>
    %11 = vector.shape_cast %10 : vector<1x64x32xbf16> to vector<64x32xbf16>
    %cst_14 = arith.constant 0.000000e+00 : bf16
    %12 = vector.broadcast %cst_14 : bf16 to vector<64x32xbf16>
    %13 = vector.shape_cast %3 : vector<64x1xi1> to vector<64x1xi1>
    %14 = vector.broadcast %13 : vector<64x1xi1> to vector<64x32xi1>
    %15 = arith.select %14, %11, %12 : vector<64x32xi1>, vector<64x32xbf16>
    %c16 = arith.constant 16 : index
    %c0_15 = arith.constant 0 : index
    %16 = vector.load %arg9[%c16, %c0_15] : memref<96x32xbf16, #tpu.memory_space<vmem>>, vector<64x32xbf16>
    tpu.vector_store %arg9[%c16, %c0_15], %15 {strides = array<i32>} : memref<96x32xbf16, #tpu.memory_space<vmem>>, vector<64x32xbf16>,
    %cst_16 = arith.constant 0.000000e+00 : bf16
    %17 = vector.broadcast %cst_16 : bf16 to vector<64x3968xbf16>
    %c0_17 = arith.constant 0 : index
    %c0_18 = arith.constant 0 : index
    %18 = vector.load %arg11[%c0_17, %c0_18] : memref<64x3968xbf16, #tpu.memory_space<vmem>>, vector<64x3968xbf16>
    tpu.vector_store %arg11[%c0_17, %c0_18], %17 {strides = array<i32>} : memref<64x3968xbf16, #tpu.memory_space<vmem>>, vector<64x3968xbf16>,
    %c0_19 = arith.constant 0 : index
    %c0_20 = arith.constant 0 : index
    %c0_21 = arith.constant 0 : index
    %19 = vector.load %arg4[%c0_19, %c0_20, %c0_21] : memref<1x3968x32xbf16, #tpu.memory_space<vmem>>, vector<1x3968x32xbf16>
    %20 = vector.shape_cast %19 : vector<1x3968x32xbf16> to vector<3968x32xbf16>
    %c0_22 = arith.constant 0 : index
    %c0_23 = arith.constant 0 : index
    %c0_24 = arith.constant 0 : index
    %21 = vector.load %arg5[%c0_22, %c0_23, %c0_24] : memref<1x1x32xf32, #tpu.memory_space<vmem>>, vector<1x1x32xf32>
    %22 = vector.shape_cast %21 : vector<1x1x32xf32> to vector<1x32xf32>
    %c1 = arith.constant 1 : index
    %c0_25 = arith.constant 0 : index
    %23 = vector.load %arg9[%c1, %c0_25] : memref<96x32xbf16, #tpu.memory_space<vmem>>, vector<64x32xbf16>
    %c0_26 = arith.constant 0 : index
    %c0_27 = arith.constant 0 : index
    %24 = vector.load %arg11[%c0_26, %c0_27] : memref<64x3968xbf16, #tpu.memory_space<vmem>>, vector<64x32xbf16>
    tpu.vector_store %arg11[%c0_26, %c0_27], %23 {strides = array<i32>} : memref<64x3968xbf16, #tpu.memory_space<vmem>>, vector<64x32xbf16>,
    %c2 = arith.constant 2 : index
    %c0_28 = arith.constant 0 : index
    %25 = vector.load %arg9[%c2, %c0_28] : memref<96x32xbf16, #tpu.memory_space<vmem>>, vector<64x32xbf16>
    %c0_29 = arith.constant 0 : index
    %c128 = arith.constant 128 : index
    %26 = vector.load %arg11[%c0_29, %c128] : memref<64x3968xbf16, #tpu.memory_space<vmem>>, vector<64x32xbf16>
    tpu.vector_store %arg11[%c0_29, %c128], %25 {strides = array<i32>} : memref<64x3968xbf16, #tpu.memory_space<vmem>>, vector<64x32xbf16>,
    %c3 = arith.constant 3 : index
    %c0_30 = arith.constant 0 : index
    %27 = vector.load %arg9[%c3, %c0_30] : memref<96x32xbf16, #tpu.memory_space<vmem>>, vector<64x32xbf16>
    %c0_31 = arith.constant 0 : index
    %c256 = arith.constant 256 : index
    %28 = vector.load %arg11[%c0_31, %c256] : memref<64x3968xbf16, #tpu.memory_space<vmem>>, vector<64x32xbf16>
    tpu.vector_store %arg11[%c0_31, %c256], %27 {strides = array<i32>} : memref<64x3968xbf16, #tpu.memory_space<vmem>>, vector<64x32xbf16>,
    %c4 = arith.constant 4 : index
    %c0_32 = arith.constant 0 : index
    %29 = vector.load %arg9[%c4, %c0_32] : memref<96x32xbf16, #tpu.memory_space<vmem>>, vector<64x32xbf16>
    %c0_33 = arith.constant 0 : index
    %c384 = arith.constant 384 : index
    %30 = vector.load %arg11[%c0_33, %c384] : memref<64x3968xbf16, #tpu.memory_space<vmem>>, vector<64x32xbf16>
    tpu.vector_store %arg11[%c0_33, %c384], %29 {strides = array<i32>} : memref<64x3968xbf16, #tpu.memory_space<vmem>>, vector<64x32xbf16>,
    %c5 = arith.constant 5 : index
    %c0_34 = arith.constant 0 : index
    %31 = vector.load %arg9[%c5, %c0_34] : memref<96x32xbf16, #tpu.memory_space<vmem>>, vector<64x32xbf16>
    %c0_35 = arith.constant 0 : index
    %c512 = arith.constant 512 : index
    %32 = vector.load %arg11[%c0_35, %c512] : memref<64x3968xbf16, #tpu.memory_space<vmem>>, vector<64x32xbf16>
    tpu.vector_store %arg11[%c0_35, %c512], %31 {strides = array<i32>} : memref<64x3968xbf16, #tpu.memory_space<vmem>>, vector<64x32xbf16>,
    %c6 = arith.constant 6 : index
    %c0_36 = arith.constant 0 : index
    %33 = vector.load %arg9[%c6, %c0_36] : memref<96x32xbf16, #tpu.memory_space<vmem>>, vector<64x32xbf16>
    %c0_37 = arith.constant 0 : index
    %c640 = arith.constant 640 : index
    %34 = vector.load %arg11[%c0_37, %c640] : memref<64x3968xbf16, #tpu.memory_space<vmem>>, vector<64x32xbf16>
    tpu.vector_store %arg11[%c0_37, %c640], %33 {strides = array<i32>} : memref<64x3968xbf16, #tpu.memory_space<vmem>>, vector<64x32xbf16>,
    %c7 = arith.constant 7 : index
    %c0_38 = arith.constant 0 : index
    %35 = vector.load %arg9[%c7, %c0_38] : memref<96x32xbf16, #tpu.memory_space<vmem>>, vector<64x32xbf16>
    %c0_39 = arith.constant 0 : index
    %c768 = arith.constant 768 : index
    %36 = vector.load %arg11[%c0_39, %c768] : memref<64x3968xbf16, #tpu.memory_space<vmem>>, vector<64x32xbf16>
    tpu.vector_store %arg11[%c0_39, %c768], %35 {strides = array<i32>} : memref<64x3968xbf16, #tpu.memory_space<vmem>>, vector<64x32xbf16>,
    %c8 = arith.constant 8 : index
    %c0_40 = arith.constant 0 : index
    %37 = vector.load %arg9[%c8, %c0_40] : memref<96x32xbf16, #tpu.memory_space<vmem>>, vector<64x32xbf16>
    %c0_41 = arith.constant 0 : index
    %c896 = arith.constant 896 : index
    %38 = vector.load %arg11[%c0_41, %c896] : memref<64x3968xbf16, #tpu.memory_space<vmem>>, vector<64x32xbf16>
    tpu.vector_store %arg11[%c0_41, %c896], %37 {strides = array<i32>} : memref<64x3968xbf16, #tpu.memory_space<vmem>>, vector<64x32xbf16>,
    %c9 = arith.constant 9 : index
    %c0_42 = arith.constant 0 : index
    %39 = vector.load %arg9[%c9, %c0_42] : memref<96x32xbf16, #tpu.memory_space<vmem>>, vector<64x32xbf16>
    %c0_43 = arith.constant 0 : index
    %c1024 = arith.constant 1024 : index
    %40 = vector.load %arg11[%c0_43, %c1024] : memref<64x3968xbf16, #tpu.memory_space<vmem>>, vector<64x32xbf16>
    tpu.vector_store %arg11[%c0_43, %c1024], %39 {strides = array<i32>} : memref<64x3968xbf16, #tpu.memory_space<vmem>>, vector<64x32xbf16>,
    %c10 = arith.constant 10 : index
    %c0_44 = arith.constant 0 : index
    %41 = vector.load %arg9[%c10, %c0_44] : memref<96x32xbf16, #tpu.memory_space<vmem>>, vector<64x32xbf16>
    %c0_45 = arith.constant 0 : index
    %c1152 = arith.constant 1152 : index
    %42 = vector.load %arg11[%c0_45, %c1152] : memref<64x3968xbf16, #tpu.memory_space<vmem>>, vector<64x32xbf16>
    tpu.vector_store %arg11[%c0_45, %c1152], %41 {strides = array<i32>} : memref<64x3968xbf16, #tpu.memory_space<vmem>>, vector<64x32xbf16>,
    %c11 = arith.constant 11 : index
    %c0_46 = arith.constant 0 : index
    %43 = vector.load %arg9[%c11, %c0_46] : memref<96x32xbf16, #tpu.memory_space<vmem>>, vector<64x32xbf16>
    %c0_47 = arith.constant 0 : index
    %c1280 = arith.constant 1280 : index
    %44 = vector.load %arg11[%c0_47, %c1280] : memref<64x3968xbf16, #tpu.memory_space<vmem>>, vector<64x32xbf16>
    tpu.vector_store %arg11[%c0_47, %c1280], %43 {strides = array<i32>} : memref<64x3968xbf16, #tpu.memory_space<vmem>>, vector<64x32xbf16>,
    %c12 = arith.constant 12 : index
    %c0_48 = arith.constant 0 : index
    %45 = vector.load %arg9[%c12, %c0_48] : memref<96x32xbf16, #tpu.memory_space<vmem>>, vector<64x32xbf16>
    %c0_49 = arith.constant 0 : index
    %c1408 = arith.constant 1408 : index
    %46 = vector.load %arg11[%c0_49, %c1408] : memref<64x3968xbf16, #tpu.memory_space<vmem>>, vector<64x32xbf16>
    tpu.vector_store %arg11[%c0_49, %c1408], %45 {strides = array<i32>} : memref<64x3968xbf16, #tpu.memory_space<vmem>>, vector<64x32xbf16>,
    %c13 = arith.constant 13 : index
    %c0_50 = arith.constant 0 : index
    %47 = vector.load %arg9[%c13, %c0_50] : memref<96x32xbf16, #tpu.memory_space<vmem>>, vector<64x32xbf16>
    %c0_51 = arith.constant 0 : index
    %c1536 = arith.constant 1536 : index
    %48 = vector.load %arg11[%c0_51, %c1536] : memref<64x3968xbf16, #tpu.memory_space<vmem>>, vector<64x32xbf16>
    tpu.vector_store %arg11[%c0_51, %c1536], %47 {strides = array<i32>} : memref<64x3968xbf16, #tpu.memory_space<vmem>>, vector<64x32xbf16>,
    %c14 = arith.constant 14 : index
    %c0_52 = arith.constant 0 : index
    %49 = vector.load %arg9[%c14, %c0_52] : memref<96x32xbf16, #tpu.memory_space<vmem>>, vector<64x32xbf16>
    %c0_53 = arith.constant 0 : index
    %c1664 = arith.constant 1664 : index
    %50 = vector.load %arg11[%c0_53, %c1664] : memref<64x3968xbf16, #tpu.memory_space<vmem>>, vector<64x32xbf16>
    tpu.vector_store %arg11[%c0_53, %c1664], %49 {strides = array<i32>} : memref<64x3968xbf16, #tpu.memory_space<vmem>>, vector<64x32xbf16>,
    %c15 = arith.constant 15 : index
    %c0_54 = arith.constant 0 : index
    %51 = vector.load %arg9[%c15, %c0_54] : memref<96x32xbf16, #tpu.memory_space<vmem>>, vector<64x32xbf16>
    %c0_55 = arith.constant 0 : index
    %c1792 = arith.constant 1792 : index
    %52 = vector.load %arg11[%c0_55, %c1792] : memref<64x3968xbf16, #tpu.memory_space<vmem>>, vector<64x32xbf16>
    tpu.vector_store %arg11[%c0_55, %c1792], %51 {strides = array<i32>} : memref<64x3968xbf16, #tpu.memory_space<vmem>>, vector<64x32xbf16>,
    %c16_56 = arith.constant 16 : index
    %c0_57 = arith.constant 0 : index
    %53 = vector.load %arg9[%c16_56, %c0_57] : memref<96x32xbf16, #tpu.memory_space<vmem>>, vector<64x32xbf16>
    %c0_58 = arith.constant 0 : index
    %c1920 = arith.constant 1920 : index
    %54 = vector.load %arg11[%c0_58, %c1920] : memref<64x3968xbf16, #tpu.memory_space<vmem>>, vector<64x32xbf16>
    tpu.vector_store %arg11[%c0_58, %c1920], %53 {strides = array<i32>} : memref<64x3968xbf16, #tpu.memory_space<vmem>>, vector<64x32xbf16>,
    %c17 = arith.constant 17 : index
    %c0_59 = arith.constant 0 : index
    %55 = vector.load %arg9[%c17, %c0_59] : memref<96x32xbf16, #tpu.memory_space<vmem>>, vector<64x32xbf16>
    %c0_60 = arith.constant 0 : index
    %c2048 = arith.constant 2048 : index
    %56 = vector.load %arg11[%c0_60, %c2048] : memref<64x3968xbf16, #tpu.memory_space<vmem>>, vector<64x32xbf16>
    tpu.vector_store %arg11[%c0_60, %c2048], %55 {strides = array<i32>} : memref<64x3968xbf16, #tpu.memory_space<vmem>>, vector<64x32xbf16>,
    %c18 = arith.constant 18 : index
    %c0_61 = arith.constant 0 : index
    %57 = vector.load %arg9[%c18, %c0_61] : memref<96x32xbf16, #tpu.memory_space<vmem>>, vector<64x32xbf16>
    %c0_62 = arith.constant 0 : index
    %c2176 = arith.constant 2176 : index
    %58 = vector.load %arg11[%c0_62, %c2176] : memref<64x3968xbf16, #tpu.memory_space<vmem>>, vector<64x32xbf16>
    tpu.vector_store %arg11[%c0_62, %c2176], %57 {strides = array<i32>} : memref<64x3968xbf16, #tpu.memory_space<vmem>>, vector<64x32xbf16>,
    %c19 = arith.constant 19 : index
    %c0_63 = arith.constant 0 : index
    %59 = vector.load %arg9[%c19, %c0_63] : memref<96x32xbf16, #tpu.memory_space<vmem>>, vector<64x32xbf16>
    %c0_64 = arith.constant 0 : index
    %c2304 = arith.constant 2304 : index
    %60 = vector.load %arg11[%c0_64, %c2304] : memref<64x3968xbf16, #tpu.memory_space<vmem>>, vector<64x32xbf16>
    tpu.vector_store %arg11[%c0_64, %c2304], %59 {strides = array<i32>} : memref<64x3968xbf16, #tpu.memory_space<vmem>>, vector<64x32xbf16>,
    %c20 = arith.constant 20 : index
    %c0_65 = arith.constant 0 : index
    %61 = vector.load %arg9[%c20, %c0_65] : memref<96x32xbf16, #tpu.memory_space<vmem>>, vector<64x32xbf16>
    %c0_66 = arith.constant 0 : index
    %c2432 = arith.constant 2432 : index
    %62 = vector.load %arg11[%c0_66, %c2432] : memref<64x3968xbf16, #tpu.memory_space<vmem>>, vector<64x32xbf16>
    tpu.vector_store %arg11[%c0_66, %c2432], %61 {strides = array<i32>} : memref<64x3968xbf16, #tpu.memory_space<vmem>>, vector<64x32xbf16>,
    %c21 = arith.constant 21 : index
    %c0_67 = arith.constant 0 : index
    %63 = vector.load %arg9[%c21, %c0_67] : memref<96x32xbf16, #tpu.memory_space<vmem>>, vector<64x32xbf16>
    %c0_68 = arith.constant 0 : index
    %c2560 = arith.constant 2560 : index
    %64 = vector.load %arg11[%c0_68, %c2560] : memref<64x3968xbf16, #tpu.memory_space<vmem>>, vector<64x32xbf16>
    tpu.vector_store %arg11[%c0_68, %c2560], %63 {strides = array<i32>} : memref<64x3968xbf16, #tpu.memory_space<vmem>>, vector<64x32xbf16>,
    %c22 = arith.constant 22 : index
    %c0_69 = arith.constant 0 : index
    %65 = vector.load %arg9[%c22, %c0_69] : memref<96x32xbf16, #tpu.memory_space<vmem>>, vector<64x32xbf16>
    %c0_70 = arith.constant 0 : index
    %c2688 = arith.constant 2688 : index
    %66 = vector.load %arg11[%c0_70, %c2688] : memref<64x3968xbf16, #tpu.memory_space<vmem>>, vector<64x32xbf16>
    tpu.vector_store %arg11[%c0_70, %c2688], %65 {strides = array<i32>} : memref<64x3968xbf16, #tpu.memory_space<vmem>>, vector<64x32xbf16>,
    %c23 = arith.constant 23 : index
    %c0_71 = arith.constant 0 : index
    %67 = vector.load %arg9[%c23, %c0_71] : memref<96x32xbf16, #tpu.memory_space<vmem>>, vector<64x32xbf16>
    %c0_72 = arith.constant 0 : index
    %c2816 = arith.constant 2816 : index
    %68 = vector.load %arg11[%c0_72, %c2816] : memref<64x3968xbf16, #tpu.memory_space<vmem>>, vector<64x32xbf16>
    tpu.vector_store %arg11[%c0_72, %c2816], %67 {strides = array<i32>} : memref<64x3968xbf16, #tpu.memory_space<vmem>>, vector<64x32xbf16>,
    %c24 = arith.constant 24 : index
    %c0_73 = arith.constant 0 : index
    %69 = vector.load %arg9[%c24, %c0_73] : memref<96x32xbf16, #tpu.memory_space<vmem>>, vector<64x32xbf16>
    %c0_74 = arith.constant 0 : index
    %c2944 = arith.constant 2944 : index
    %70 = vector.load %arg11[%c0_74, %c2944] : memref<64x3968xbf16, #tpu.memory_space<vmem>>, vector<64x32xbf16>
    tpu.vector_store %arg11[%c0_74, %c2944], %69 {strides = array<i32>} : memref<64x3968xbf16, #tpu.memory_space<vmem>>, vector<64x32xbf16>,
    %c25 = arith.constant 25 : index
    %c0_75 = arith.constant 0 : index
    %71 = vector.load %arg9[%c25, %c0_75] : memref<96x32xbf16, #tpu.memory_space<vmem>>, vector<64x32xbf16>
    %c0_76 = arith.constant 0 : index
    %c3072 = arith.constant 3072 : index
    %72 = vector.load %arg11[%c0_76, %c3072] : memref<64x3968xbf16, #tpu.memory_space<vmem>>, vector<64x32xbf16>
    tpu.vector_store %arg11[%c0_76, %c3072], %71 {strides = array<i32>} : memref<64x3968xbf16, #tpu.memory_space<vmem>>, vector<64x32xbf16>,
    %c26 = arith.constant 26 : index
    %c0_77 = arith.constant 0 : index
    %73 = vector.load %arg9[%c26, %c0_77] : memref<96x32xbf16, #tpu.memory_space<vmem>>, vector<64x32xbf16>
    %c0_78 = arith.constant 0 : index
    %c3200 = arith.constant 3200 : index
    %74 = vector.load %arg11[%c0_78, %c3200] : memref<64x3968xbf16, #tpu.memory_space<vmem>>, vector<64x32xbf16>
    tpu.vector_store %arg11[%c0_78, %c3200], %73 {strides = array<i32>} : memref<64x3968xbf16, #tpu.memory_space<vmem>>, vector<64x32xbf16>,
    %c27 = arith.constant 27 : index
    %c0_79 = arith.constant 0 : index
    %75 = vector.load %arg9[%c27, %c0_79] : memref<96x32xbf16, #tpu.memory_space<vmem>>, vector<64x32xbf16>
    %c0_80 = arith.constant 0 : index
    %c3328 = arith.constant 3328 : index
    %76 = vector.load %arg11[%c0_80, %c3328] : memref<64x3968xbf16, #tpu.memory_space<vmem>>, vector<64x32xbf16>
    tpu.vector_store %arg11[%c0_80, %c3328], %75 {strides = array<i32>} : memref<64x3968xbf16, #tpu.memory_space<vmem>>, vector<64x32xbf16>,
    %c28 = arith.constant 28 : index
    %c0_81 = arith.constant 0 : index
    %77 = vector.load %arg9[%c28, %c0_81] : memref<96x32xbf16, #tpu.memory_space<vmem>>, vector<64x32xbf16>
    %c0_82 = arith.constant 0 : index
    %c3456 = arith.constant 3456 : index
    %78 = vector.load %arg11[%c0_82, %c3456] : memref<64x3968xbf16, #tpu.memory_space<vmem>>, vector<64x32xbf16>
    tpu.vector_store %arg11[%c0_82, %c3456], %77 {strides = array<i32>} : memref<64x3968xbf16, #tpu.memory_space<vmem>>, vector<64x32xbf16>,
    %c29 = arith.constant 29 : index
    %c0_83 = arith.constant 0 : index
    %79 = vector.load %arg9[%c29, %c0_83] : memref<96x32xbf16, #tpu.memory_space<vmem>>, vector<64x32xbf16>
    %c0_84 = arith.constant 0 : index
    %c3584 = arith.constant 3584 : index
    %80 = vector.load %arg11[%c0_84, %c3584] : memref<64x3968xbf16, #tpu.memory_space<vmem>>, vector<64x32xbf16>
    tpu.vector_store %arg11[%c0_84, %c3584], %79 {strides = array<i32>} : memref<64x3968xbf16, #tpu.memory_space<vmem>>, vector<64x32xbf16>,
    %c30 = arith.constant 30 : index
    %c0_85 = arith.constant 0 : index
    %81 = vector.load %arg9[%c30, %c0_85] : memref<96x32xbf16, #tpu.memory_space<vmem>>, vector<64x32xbf16>
    %c0_86 = arith.constant 0 : index
    %c3712 = arith.constant 3712 : index
    %82 = vector.load %arg11[%c0_86, %c3712] : memref<64x3968xbf16, #tpu.memory_space<vmem>>, vector<64x32xbf16>
    tpu.vector_store %arg11[%c0_86, %c3712], %81 {strides = array<i32>} : memref<64x3968xbf16, #tpu.memory_space<vmem>>, vector<64x32xbf16>,
    %c31 = arith.constant 31 : index
    %c0_87 = arith.constant 0 : index
    %83 = vector.load %arg9[%c31, %c0_87] : memref<96x32xbf16, #tpu.memory_space<vmem>>, vector<64x32xbf16>
    %c0_88 = arith.constant 0 : index
    %c3840 = arith.constant 3840 : index
    %84 = vector.load %arg11[%c0_88, %c3840] : memref<64x3968xbf16, #tpu.memory_space<vmem>>, vector<64x32xbf16>
    tpu.vector_store %arg11[%c0_88, %c3840], %83 {strides = array<i32>} : memref<64x3968xbf16, #tpu.memory_space<vmem>>, vector<64x32xbf16>,
    %c0_89 = arith.constant 0 : index
    %c0_90 = arith.constant 0 : index
    %85 = vector.load %arg11[%c0_89, %c0_90] : memref<64x3968xbf16, #tpu.memory_space<vmem>>, vector<64x3968xbf16>
    %cst_91 = arith.constant dense<0.000000e+00> : vector<64x32xf32>
    %86 = tpu.matmul %85, %20, %cst_91 {dimension_numbers = #tpu.dot_dimension_numbers<[1], [0], [0], [1], [0, 0, 1, 1], [], []>} : vector<64x3968xbf16>, vector<3968x32xbf16>, vector<64x32xf32> -> vector<64x32xf32>
    %87 = vector.broadcast %22 : vector<1x32xf32> to vector<64x32xf32>
    %88 = arith.addf %86, %87 : vector<64x32xf32>
    %cst_92 = arith.constant 2.500000e+01 : f32
    %89 = vector.broadcast %cst_92 : f32 to vector<64x32xf32>
    %90 = arith.minimumf %88, %89 : vector<64x32xf32>
    %91 = math.exp %90 : vector<64x32xf32>
    %cst_93 = arith.constant 1.000000e+00 : f32
    %92 = vector.broadcast %cst_93 : f32 to vector<64x32xf32>
    %93 = arith.addf %92, %91 : vector<64x32xf32>
    %94 = arith.mulf %93, %93 : vector<64x32xf32>
    %cst_94 = arith.constant 1.000000e+00 : f32
    %95 = vector.broadcast %cst_94 : f32 to vector<64x32xf32>
    %96 = arith.subf %94, %95 : vector<64x32xf32>
    %97 = arith.mulf %88, %96 : vector<64x32xf32>
    %cst_95 = arith.constant 1.000000e+00 : f32
    %98 = vector.broadcast %cst_95 : f32 to vector<64x32xf32>
    %99 = arith.addf %94, %98 : vector<64x32xf32>
    %100 = tpu.reciprocal %99 {approx = true} : vector<64x32xf32> -> vector<64x32xf32>
    %101 = arith.mulf %97, %100 : vector<64x32xf32>
    %102 = arith.truncf %101 : vector<64x32xf32> to vector<64x32xbf16>
    %c16_96 = arith.constant 16 : index
    %c0_97 = arith.constant 0 : index
    %103 = vector.load %arg10[%c16_96, %c0_97] : memref<96x32xbf16, #tpu.memory_space<vmem>>, vector<64x32xbf16>
    tpu.vector_store %arg10[%c16_96, %c0_97], %102 {strides = array<i32>} : memref<96x32xbf16, #tpu.memory_space<vmem>>, vector<64x32xbf16>,
    %c0_98 = arith.constant 0 : index
    %c0_99 = arith.constant 0 : index
    %c0_100 = arith.constant 0 : index
    %104 = vector.load %arg6[%c0_98, %c0_99, %c0_100] : memref<1x3968x32xbf16, #tpu.memory_space<vmem>>, vector<1x3968x32xbf16>
    %105 = vector.shape_cast %104 : vector<1x3968x32xbf16> to vector<3968x32xbf16>
    %c0_101 = arith.constant 0 : index
    %c0_102 = arith.constant 0 : index
    %c0_103 = arith.constant 0 : index
    %106 = vector.load %arg7[%c0_101, %c0_102, %c0_103] : memref<1x1x32xf32, #tpu.memory_space<vmem>>, vector<1x1x32xf32>
    %107 = vector.shape_cast %106 : vector<1x1x32xf32> to vector<1x32xf32>
    %c1_104 = arith.constant 1 : index
    %c0_105 = arith.constant 0 : index
    %108 = vector.load %arg10[%c1_104, %c0_105] : memref<96x32xbf16, #tpu.memory_space<vmem>>, vector<64x32xbf16>
    %c0_106 = arith.constant 0 : index
    %c0_107 = arith.constant 0 : index
    %109 = vector.load %arg11[%c0_106, %c0_107] : memref<64x3968xbf16, #tpu.memory_space<vmem>>, vector<64x32xbf16>
    tpu.vector_store %arg11[%c0_106, %c0_107], %108 {strides = array<i32>} : memref<64x3968xbf16, #tpu.memory_space<vmem>>, vector<64x32xbf16>,
    %c2_108 = arith.constant 2 : index
    %c0_109 = arith.constant 0 : index
    %110 = vector.load %arg10[%c2_108, %c0_109] : memref<96x32xbf16, #tpu.memory_space<vmem>>, vector<64x32xbf16>
    %c0_110 = arith.constant 0 : index
    %c128_111 = arith.constant 128 : index
    %111 = vector.load %arg11[%c0_110, %c128_111] : memref<64x3968xbf16, #tpu.memory_space<vmem>>, vector<64x32xbf16>
    tpu.vector_store %arg11[%c0_110, %c128_111], %110 {strides = array<i32>} : memref<64x3968xbf16, #tpu.memory_space<vmem>>, vector<64x32xbf16>,
    %c3_112 = arith.constant 3 : index
    %c0_113 = arith.constant 0 : index
    %112 = vector.load %arg10[%c3_112, %c0_113] : memref<96x32xbf16, #tpu.memory_space<vmem>>, vector<64x32xbf16>
    %c0_114 = arith.constant 0 : index
    %c256_115 = arith.constant 256 : index
    %113 = vector.load %arg11[%c0_114, %c256_115] : memref<64x3968xbf16, #tpu.memory_space<vmem>>, vector<64x32xbf16>
    tpu.vector_store %arg11[%c0_114, %c256_115], %112 {strides = array<i32>} : memref<64x3968xbf16, #tpu.memory_space<vmem>>, vector<64x32xbf16>,
    %c4_116 = arith.constant 4 : index
    %c0_117 = arith.constant 0 : index
    %114 = vector.load %arg10[%c4_116, %c0_117] : memref<96x32xbf16, #tpu.memory_space<vmem>>, vector<64x32xbf16>
    %c0_118 = arith.constant 0 : index
    %c384_119 = arith.constant 384 : index
    %115 = vector.load %arg11[%c0_118, %c384_119] : memref<64x3968xbf16, #tpu.memory_space<vmem>>, vector<64x32xbf16>
    tpu.vector_store %arg11[%c0_118, %c384_119], %114 {strides = array<i32>} : memref<64x3968xbf16, #tpu.memory_space<vmem>>, vector<64x32xbf16>,
    %c5_120 = arith.constant 5 : index
    %c0_121 = arith.constant 0 : index
    %116 = vector.load %arg10[%c5_120, %c0_121] : memref<96x32xbf16, #tpu.memory_space<vmem>>, vector<64x32xbf16>
    %c0_122 = arith.constant 0 : index
    %c512_123 = arith.constant 512 : index
    %117 = vector.load %arg11[%c0_122, %c512_123] : memref<64x3968xbf16, #tpu.memory_space<vmem>>, vector<64x32xbf16>
    tpu.vector_store %arg11[%c0_122, %c512_123], %116 {strides = array<i32>} : memref<64x3968xbf16, #tpu.memory_space<vmem>>, vector<64x32xbf16>,
    %c6_124 = arith.constant 6 : index
    %c0_125 = arith.constant 0 : index
    %118 = vector.load %arg10[%c6_124, %c0_125] : memref<96x32xbf16, #tpu.memory_space<vmem>>, vector<64x32xbf16>
    %c0_126 = arith.constant 0 : index
    %c640_127 = arith.constant 640 : index
    %119 = vector.load %arg11[%c0_126, %c640_127] : memref<64x3968xbf16, #tpu.memory_space<vmem>>, vector<64x32xbf16>
    tpu.vector_store %arg11[%c0_126, %c640_127], %118 {strides = array<i32>} : memref<64x3968xbf16, #tpu.memory_space<vmem>>, vector<64x32xbf16>,
    %c7_128 = arith.constant 7 : index
    %c0_129 = arith.constant 0 : index
    %120 = vector.load %arg10[%c7_128, %c0_129] : memref<96x32xbf16, #tpu.memory_space<vmem>>, vector<64x32xbf16>
    %c0_130 = arith.constant 0 : index
    %c768_131 = arith.constant 768 : index
    %121 = vector.load %arg11[%c0_130, %c768_131] : memref<64x3968xbf16, #tpu.memory_space<vmem>>, vector<64x32xbf16>
    tpu.vector_store %arg11[%c0_130, %c768_131], %120 {strides = array<i32>} : memref<64x3968xbf16, #tpu.memory_space<vmem>>, vector<64x32xbf16>,
    %c8_132 = arith.constant 8 : index
    %c0_133 = arith.constant 0 : index
    %122 = vector.load %arg10[%c8_132, %c0_133] : memref<96x32xbf16, #tpu.memory_space<vmem>>, vector<64x32xbf16>
    %c0_134 = arith.constant 0 : index
    %c896_135 = arith.constant 896 : index
    %123 = vector.load %arg11[%c0_134, %c896_135] : memref<64x3968xbf16, #tpu.memory_space<vmem>>, vector<64x32xbf16>
    tpu.vector_store %arg11[%c0_134, %c896_135], %122 {strides = array<i32>} : memref<64x3968xbf16, #tpu.memory_space<vmem>>, vector<64x32xbf16>,
    %c9_136 = arith.constant 9 : index
    %c0_137 = arith.constant 0 : index
    %124 = vector.load %arg10[%c9_136, %c0_137] : memref<96x32xbf16, #tpu.memory_space<vmem>>, vector<64x32xbf16>
    %c0_138 = arith.constant 0 : index
    %c1024_139 = arith.constant 1024 : index
    %125 = vector.load %arg11[%c0_138, %c1024_139] : memref<64x3968xbf16, #tpu.memory_space<vmem>>, vector<64x32xbf16>
    tpu.vector_store %arg11[%c0_138, %c1024_139], %124 {strides = array<i32>} : memref<64x3968xbf16, #tpu.memory_space<vmem>>, vector<64x32xbf16>,
    %c10_140 = arith.constant 10 : index
    %c0_141 = arith.constant 0 : index
    %126 = vector.load %arg10[%c10_140, %c0_141] : memref<96x32xbf16, #tpu.memory_space<vmem>>, vector<64x32xbf16>
    %c0_142 = arith.constant 0 : index
    %c1152_143 = arith.constant 1152 : index
    %127 = vector.load %arg11[%c0_142, %c1152_143] : memref<64x3968xbf16, #tpu.memory_space<vmem>>, vector<64x32xbf16>
    tpu.vector_store %arg11[%c0_142, %c1152_143], %126 {strides = array<i32>} : memref<64x3968xbf16, #tpu.memory_space<vmem>>, vector<64x32xbf16>,
    %c11_144 = arith.constant 11 : index
    %c0_145 = arith.constant 0 : index
    %128 = vector.load %arg10[%c11_144, %c0_145] : memref<96x32xbf16, #tpu.memory_space<vmem>>, vector<64x32xbf16>
    %c0_146 = arith.constant 0 : index
    %c1280_147 = arith.constant 1280 : index
    %129 = vector.load %arg11[%c0_146, %c1280_147] : memref<64x3968xbf16, #tpu.memory_space<vmem>>, vector<64x32xbf16>
    tpu.vector_store %arg11[%c0_146, %c1280_147], %128 {strides = array<i32>} : memref<64x3968xbf16, #tpu.memory_space<vmem>>, vector<64x32xbf16>,
    %c12_148 = arith.constant 12 : index
    %c0_149 = arith.constant 0 : index
    %130 = vector.load %arg10[%c12_148, %c0_149] : memref<96x32xbf16, #tpu.memory_space<vmem>>, vector<64x32xbf16>
    %c0_150 = arith.constant 0 : index
    %c1408_151 = arith.constant 1408 : index
    %131 = vector.load %arg11[%c0_150, %c1408_151] : memref<64x3968xbf16, #tpu.memory_space<vmem>>, vector<64x32xbf16>
    tpu.vector_store %arg11[%c0_150, %c1408_151], %130 {strides = array<i32>} : memref<64x3968xbf16, #tpu.memory_space<vmem>>, vector<64x32xbf16>,
    %c13_152 = arith.constant 13 : index
    %c0_153 = arith.constant 0 : index
    %132 = vector.load %arg10[%c13_152, %c0_153] : memref<96x32xbf16, #tpu.memory_space<vmem>>, vector<64x32xbf16>
    %c0_154 = arith.constant 0 : index
    %c1536_155 = arith.constant 1536 : index
    %133 = vector.load %arg11[%c0_154, %c1536_155] : memref<64x3968xbf16, #tpu.memory_space<vmem>>, vector<64x32xbf16>
    tpu.vector_store %arg11[%c0_154, %c1536_155], %132 {strides = array<i32>} : memref<64x3968xbf16, #tpu.memory_space<vmem>>, vector<64x32xbf16>,
    %c14_156 = arith.constant 14 : index
    %c0_157 = arith.constant 0 : index
    %134 = vector.load %arg10[%c14_156, %c0_157] : memref<96x32xbf16, #tpu.memory_space<vmem>>, vector<64x32xbf16>
    %c0_158 = arith.constant 0 : index
    %c1664_159 = arith.constant 1664 : index
    %135 = vector.load %arg11[%c0_158, %c1664_159] : memref<64x3968xbf16, #tpu.memory_space<vmem>>, vector<64x32xbf16>
    tpu.vector_store %arg11[%c0_158, %c1664_159], %134 {strides = array<i32>} : memref<64x3968xbf16, #tpu.memory_space<vmem>>, vector<64x32xbf16>,
    %c15_160 = arith.constant 15 : index
    %c0_161 = arith.constant 0 : index
    %136 = vector.load %arg10[%c15_160, %c0_161] : memref<96x32xbf16, #tpu.memory_space<vmem>>, vector<64x32xbf16>
    %c0_162 = arith.constant 0 : index
    %c1792_163 = arith.constant 1792 : index
    %137 = vector.load %arg11[%c0_162, %c1792_163] : memref<64x3968xbf16, #tpu.memory_space<vmem>>, vector<64x32xbf16>
    tpu.vector_store %arg11[%c0_162, %c1792_163], %136 {strides = array<i32>} : memref<64x3968xbf16, #tpu.memory_space<vmem>>, vector<64x32xbf16>,
    %c16_164 = arith.constant 16 : index
    %c0_165 = arith.constant 0 : index
    %138 = vector.load %arg10[%c16_164, %c0_165] : memref<96x32xbf16, #tpu.memory_space<vmem>>, vector<64x32xbf16>
    %c0_166 = arith.constant 0 : index
    %c1920_167 = arith.constant 1920 : index
    %139 = vector.load %arg11[%c0_166, %c1920_167] : memref<64x3968xbf16, #tpu.memory_space<vmem>>, vector<64x32xbf16>
    tpu.vector_store %arg11[%c0_166, %c1920_167], %138 {strides = array<i32>} : memref<64x3968xbf16, #tpu.memory_space<vmem>>, vector<64x32xbf16>,
    %c17_168 = arith.constant 17 : index
    %c0_169 = arith.constant 0 : index
    %140 = vector.load %arg10[%c17_168, %c0_169] : memref<96x32xbf16, #tpu.memory_space<vmem>>, vector<64x32xbf16>
    %c0_170 = arith.constant 0 : index
    %c2048_171 = arith.constant 2048 : index
    %141 = vector.load %arg11[%c0_170, %c2048_171] : memref<64x3968xbf16, #tpu.memory_space<vmem>>, vector<64x32xbf16>
    tpu.vector_store %arg11[%c0_170, %c2048_171], %140 {strides = array<i32>} : memref<64x3968xbf16, #tpu.memory_space<vmem>>, vector<64x32xbf16>,
    %c18_172 = arith.constant 18 : index
    %c0_173 = arith.constant 0 : index
    %142 = vector.load %arg10[%c18_172, %c0_173] : memref<96x32xbf16, #tpu.memory_space<vmem>>, vector<64x32xbf16>
    %c0_174 = arith.constant 0 : index
    %c2176_175 = arith.constant 2176 : index
    %143 = vector.load %arg11[%c0_174, %c2176_175] : memref<64x3968xbf16, #tpu.memory_space<vmem>>, vector<64x32xbf16>
    tpu.vector_store %arg11[%c0_174, %c2176_175], %142 {strides = array<i32>} : memref<64x3968xbf16, #tpu.memory_space<vmem>>, vector<64x32xbf16>,
    %c19_176 = arith.constant 19 : index
    %c0_177 = arith.constant 0 : index
    %144 = vector.load %arg10[%c19_176, %c0_177] : memref<96x32xbf16, #tpu.memory_space<vmem>>, vector<64x32xbf16>
    %c0_178 = arith.constant 0 : index
    %c2304_179 = arith.constant 2304 : index
    %145 = vector.load %arg11[%c0_178, %c2304_179] : memref<64x3968xbf16, #tpu.memory_space<vmem>>, vector<64x32xbf16>
    tpu.vector_store %arg11[%c0_178, %c2304_179], %144 {strides = array<i32>} : memref<64x3968xbf16, #tpu.memory_space<vmem>>, vector<64x32xbf16>,
    %c20_180 = arith.constant 20 : index
    %c0_181 = arith.constant 0 : index
    %146 = vector.load %arg10[%c20_180, %c0_181] : memref<96x32xbf16, #tpu.memory_space<vmem>>, vector<64x32xbf16>
    %c0_182 = arith.constant 0 : index
    %c2432_183 = arith.constant 2432 : index
    %147 = vector.load %arg11[%c0_182, %c2432_183] : memref<64x3968xbf16, #tpu.memory_space<vmem>>, vector<64x32xbf16>
    tpu.vector_store %arg11[%c0_182, %c2432_183], %146 {strides = array<i32>} : memref<64x3968xbf16, #tpu.memory_space<vmem>>, vector<64x32xbf16>,
    %c21_184 = arith.constant 21 : index
    %c0_185 = arith.constant 0 : index
    %148 = vector.load %arg10[%c21_184, %c0_185] : memref<96x32xbf16, #tpu.memory_space<vmem>>, vector<64x32xbf16>
    %c0_186 = arith.constant 0 : index
    %c2560_187 = arith.constant 2560 : index
    %149 = vector.load %arg11[%c0_186, %c2560_187] : memref<64x3968xbf16, #tpu.memory_space<vmem>>, vector<64x32xbf16>
    tpu.vector_store %arg11[%c0_186, %c2560_187], %148 {strides = array<i32>} : memref<64x3968xbf16, #tpu.memory_space<vmem>>, vector<64x32xbf16>,
    %c22_188 = arith.constant 22 : index
    %c0_189 = arith.constant 0 : index
    %150 = vector.load %arg10[%c22_188, %c0_189] : memref<96x32xbf16, #tpu.memory_space<vmem>>, vector<64x32xbf16>
    %c0_190 = arith.constant 0 : index
    %c2688_191 = arith.constant 2688 : index
    %151 = vector.load %arg11[%c0_190, %c2688_191] : memref<64x3968xbf16, #tpu.memory_space<vmem>>, vector<64x32xbf16>
    tpu.vector_store %arg11[%c0_190, %c2688_191], %150 {strides = array<i32>} : memref<64x3968xbf16, #tpu.memory_space<vmem>>, vector<64x32xbf16>,
    %c23_192 = arith.constant 23 : index
    %c0_193 = arith.constant 0 : index
    %152 = vector.load %arg10[%c23_192, %c0_193] : memref<96x32xbf16, #tpu.memory_space<vmem>>, vector<64x32xbf16>
    %c0_194 = arith.constant 0 : index
    %c2816_195 = arith.constant 2816 : index
    %153 = vector.load %arg11[%c0_194, %c2816_195] : memref<64x3968xbf16, #tpu.memory_space<vmem>>, vector<64x32xbf16>
    tpu.vector_store %arg11[%c0_194, %c2816_195], %152 {strides = array<i32>} : memref<64x3968xbf16, #tpu.memory_space<vmem>>, vector<64x32xbf16>,
    %c24_196 = arith.constant 24 : index
    %c0_197 = arith.constant 0 : index
    %154 = vector.load %arg10[%c24_196, %c0_197] : memref<96x32xbf16, #tpu.memory_space<vmem>>, vector<64x32xbf16>
    %c0_198 = arith.constant 0 : index
    %c2944_199 = arith.constant 2944 : index
    %155 = vector.load %arg11[%c0_198, %c2944_199] : memref<64x3968xbf16, #tpu.memory_space<vmem>>, vector<64x32xbf16>
    tpu.vector_store %arg11[%c0_198, %c2944_199], %154 {strides = array<i32>} : memref<64x3968xbf16, #tpu.memory_space<vmem>>, vector<64x32xbf16>,
    %c25_200 = arith.constant 25 : index
    %c0_201 = arith.constant 0 : index
    %156 = vector.load %arg10[%c25_200, %c0_201] : memref<96x32xbf16, #tpu.memory_space<vmem>>, vector<64x32xbf16>
    %c0_202 = arith.constant 0 : index
    %c3072_203 = arith.constant 3072 : index
    %157 = vector.load %arg11[%c0_202, %c3072_203] : memref<64x3968xbf16, #tpu.memory_space<vmem>>, vector<64x32xbf16>
    tpu.vector_store %arg11[%c0_202, %c3072_203], %156 {strides = array<i32>} : memref<64x3968xbf16, #tpu.memory_space<vmem>>, vector<64x32xbf16>,
    %c26_204 = arith.constant 26 : index
    %c0_205 = arith.constant 0 : index
    %158 = vector.load %arg10[%c26_204, %c0_205] : memref<96x32xbf16, #tpu.memory_space<vmem>>, vector<64x32xbf16>
    %c0_206 = arith.constant 0 : index
    %c3200_207 = arith.constant 3200 : index
    %159 = vector.load %arg11[%c0_206, %c3200_207] : memref<64x3968xbf16, #tpu.memory_space<vmem>>, vector<64x32xbf16>
    tpu.vector_store %arg11[%c0_206, %c3200_207], %158 {strides = array<i32>} : memref<64x3968xbf16, #tpu.memory_space<vmem>>, vector<64x32xbf16>,
    %c27_208 = arith.constant 27 : index
    %c0_209 = arith.constant 0 : index
    %160 = vector.load %arg10[%c27_208, %c0_209] : memref<96x32xbf16, #tpu.memory_space<vmem>>, vector<64x32xbf16>
    %c0_210 = arith.constant 0 : index
    %c3328_211 = arith.constant 3328 : index
    %161 = vector.load %arg11[%c0_210, %c3328_211] : memref<64x3968xbf16, #tpu.memory_space<vmem>>, vector<64x32xbf16>
    tpu.vector_store %arg11[%c0_210, %c3328_211], %160 {strides = array<i32>} : memref<64x3968xbf16, #tpu.memory_space<vmem>>, vector<64x32xbf16>,
    %c28_212 = arith.constant 28 : index
    %c0_213 = arith.constant 0 : index
    %162 = vector.load %arg10[%c28_212, %c0_213] : memref<96x32xbf16, #tpu.memory_space<vmem>>, vector<64x32xbf16>
    %c0_214 = arith.constant 0 : index
    %c3456_215 = arith.constant 3456 : index
    %163 = vector.load %arg11[%c0_214, %c3456_215] : memref<64x3968xbf16, #tpu.memory_space<vmem>>, vector<64x32xbf16>
    tpu.vector_store %arg11[%c0_214, %c3456_215], %162 {strides = array<i32>} : memref<64x3968xbf16, #tpu.memory_space<vmem>>, vector<64x32xbf16>,
    %c29_216 = arith.constant 29 : index
    %c0_217 = arith.constant 0 : index
    %164 = vector.load %arg10[%c29_216, %c0_217] : memref<96x32xbf16, #tpu.memory_space<vmem>>, vector<64x32xbf16>
    %c0_218 = arith.constant 0 : index
    %c3584_219 = arith.constant 3584 : index
    %165 = vector.load %arg11[%c0_218, %c3584_219] : memref<64x3968xbf16, #tpu.memory_space<vmem>>, vector<64x32xbf16>
    tpu.vector_store %arg11[%c0_218, %c3584_219], %164 {strides = array<i32>} : memref<64x3968xbf16, #tpu.memory_space<vmem>>, vector<64x32xbf16>,
    %c30_220 = arith.constant 30 : index
    %c0_221 = arith.constant 0 : index
    %166 = vector.load %arg10[%c30_220, %c0_221] : memref<96x32xbf16, #tpu.memory_space<vmem>>, vector<64x32xbf16>
    %c0_222 = arith.constant 0 : index
    %c3712_223 = arith.constant 3712 : index
    %167 = vector.load %arg11[%c0_222, %c3712_223] : memref<64x3968xbf16, #tpu.memory_space<vmem>>, vector<64x32xbf16>
    tpu.vector_store %arg11[%c0_222, %c3712_223], %166 {strides = array<i32>} : memref<64x3968xbf16, #tpu.memory_space<vmem>>, vector<64x32xbf16>,
    %c31_224 = arith.constant 31 : index
    %c0_225 = arith.constant 0 : index
    %168 = vector.load %arg10[%c31_224, %c0_225] : memref<96x32xbf16, #tpu.memory_space<vmem>>, vector<64x32xbf16>
    %c0_226 = arith.constant 0 : index
    %c3840_227 = arith.constant 3840 : index
    %169 = vector.load %arg11[%c0_226, %c3840_227] : memref<64x3968xbf16, #tpu.memory_space<vmem>>, vector<64x32xbf16>
    tpu.vector_store %arg11[%c0_226, %c3840_227], %168 {strides = array<i32>} : memref<64x3968xbf16, #tpu.memory_space<vmem>>, vector<64x32xbf16>,
    %c0_228 = arith.constant 0 : index
    %c0_229 = arith.constant 0 : index
    %170 = vector.load %arg11[%c0_228, %c0_229] : memref<64x3968xbf16, #tpu.memory_space<vmem>>, vector<64x3968xbf16>
    %cst_230 = arith.constant dense<0.000000e+00> : vector<64x32xf32>
    %171 = tpu.matmul %170, %105, %cst_230 {dimension_numbers = #tpu.dot_dimension_numbers<[1], [0], [0], [1], [0, 0, 1, 1], [], []>} : vector<64x3968xbf16>, vector<3968x32xbf16>, vector<64x32xf32> -> vector<64x32xf32>
    %172 = vector.broadcast %107 : vector<1x32xf32> to vector<64x32xf32>
    %173 = arith.addf %171, %172 : vector<64x32xf32>
    %cst_231 = arith.constant 2.500000e+01 : f32
    %174 = vector.broadcast %cst_231 : f32 to vector<64x32xf32>
    %175 = arith.minimumf %173, %174 : vector<64x32xf32>
    %176 = math.exp %175 : vector<64x32xf32>
    %cst_232 = arith.constant 1.000000e+00 : f32
    %177 = vector.broadcast %cst_232 : f32 to vector<64x32xf32>
    %178 = arith.addf %177, %176 : vector<64x32xf32>
    %179 = arith.mulf %178, %178 : vector<64x32xf32>
    %cst_233 = arith.constant 1.000000e+00 : f32
    %180 = vector.broadcast %cst_233 : f32 to vector<64x32xf32>
    %181 = arith.subf %179, %180 : vector<64x32xf32>
    %182 = arith.mulf %173, %181 : vector<64x32xf32>
    %cst_234 = arith.constant 1.000000e+00 : f32
    %183 = vector.broadcast %cst_234 : f32 to vector<64x32xf32>
    %184 = arith.addf %179, %183 : vector<64x32xf32>
    %185 = tpu.reciprocal %184 {approx = true} : vector<64x32xf32> -> vector<64x32xf32>
    %186 = arith.mulf %182, %185 : vector<64x32xf32>
    %cst_235 = arith.constant 0.000000e+00 : f32
    %187 = vector.broadcast %cst_235 : f32 to vector<64x32xf32>
    %188 = vector.shape_cast %3 : vector<64x1xi1> to vector<64x1xi1>
    %189 = vector.broadcast %188 : vector<64x1xi1> to vector<64x32xi1>
    %190 = arith.select %189, %186, %187 : vector<64x32xi1>, vector<64x32xf32>
    %c0_236 = arith.constant 0 : index
    %c0_237 = arith.constant 0 : index
    %c0_238 = arith.constant 0 : index
    %191 = vector.load %arg8[%c0_236, %c0_237, %c0_238] : memref<1x64x32xf32, #tpu.memory_space<vmem>>, vector<1x64x32xf32>
    %192 = vector.shape_cast %191 : vector<1x64x32xf32> to vector<64x32xf32>
    %193 = vector.shape_cast %190 : vector<64x32xf32> to vector<1x64x32xf32>
    tpu.vector_store %arg8[%c0_236, %c0_237, %c0_238], %193 {strides = array<i32>} : memref<1x64x32xf32, #tpu.memory_space<vmem>>, vector<1x64x32xf32>,
    return
  }
  func.func @transform_0(%arg0: i32, %arg1: i32) -> (i32, i32, i32) {
    %c0_i32 = arith.constant 0 : i32
    %c0_i32_0 = arith.constant 0 : i32
    %c0_i32_1 = arith.constant 0 : i32
    return %arg1, %c0_i32, %c0_i32_0 : i32, i32, i32
  }
  func.func @transform_1(%arg0: i32, %arg1: i32) -> (i32, i32, i32) {
    %c0_i32 = arith.constant 0 : i32
    %c0_i32_0 = arith.constant 0 : i32
    return %arg1, %c0_i32, %arg0 : i32, i32, i32
  }
  func.func @transform_2(%arg0: i32, %arg1: i32) -> (i32, i32, i32) {
    %c0_i32 = arith.constant 0 : i32
    %c0_i32_0 = arith.constant 0 : i32
    %c0_i32_1 = arith.constant 0 : i32
    return %arg0, %c0_i32, %c0_i32_0 : i32, i32, i32
  }
  func.func @transform_3(%arg0: i32, %arg1: i32) -> (i32, i32, i32) {
    %c0_i32 = arith.constant 0 : i32
    %c0_i32_0 = arith.constant 0 : i32
    %c0_i32_1 = arith.constant 0 : i32
    return %arg0, %c0_i32, %c0_i32_0 : i32, i32, i32
  }
  func.func @transform_4(%arg0: i32, %arg1: i32) -> (i32, i32, i32) {
    %c0_i32 = arith.constant 0 : i32
    %c0_i32_0 = arith.constant 0 : i32
    %c0_i32_1 = arith.constant 0 : i32
    return %arg0, %c0_i32, %c0_i32_0 : i32, i32, i32
  }
  func.func @transform_5(%arg0: i32, %arg1: i32) -> (i32, i32, i32) {
    %c0_i32 = arith.constant 0 : i32
    %c0_i32_0 = arith.constant 0 : i32
    %c0_i32_1 = arith.constant 0 : i32
    return %arg0, %c0_i32, %c0_i32_0 : i32, i32, i32
  }
  func.func @transform_6(%arg0: i32, %arg1: i32) -> (i32, i32, i32) {
    %c0_i32 = arith.constant 0 : i32
    %c0_i32_0 = arith.constant 0 : i32
    return %arg1, %c0_i32, %arg0 : i32, i32, i32
  }
}

</mosaic_0001>

<llo_original>
// kernel: tpu_custom_call.1
$region0: #{tpu_custom_call.1}
  #allocation0 [shape = 'u32[]', space=smem, size = 0x4, offset = 0x4, fixed_abs, tag = 'smem constant byte address 0x4 - core index']
  #allocation1 [shape = 'u32[144,128]{1,0:T(1,128)}', space=vmem, size = 0x12000, scoped, tag = 'internal scratch']
  #allocation2 [shape = 'bf16[96,32]{1,0:T(16,128)(2,1)}', space=vmem, size = 0x6000, scoped, tag = 'scratch operand']
  #allocation3 [shape = 'bf16[96,32]{1,0:T(16,128)(2,1)}', space=vmem, size = 0x6000, scoped, tag = 'scratch operand']
  #allocation4 [shape = 'bf16[64,3968]{1,0:T(16,128)(2,1)}', space=vmem, size = 0x7c000, scoped, tag = 'scratch operand']
  %s0 = inlined_call_operand.vmem [shape: bf16[2,64,1], index: 0, kind: input, shape index: {}]
  %s1 = inlined_call_operand.vmem [shape: bf16[2,64,32], index: 1, kind: input, shape index: {}]
  %s2 = inlined_call_operand.vmem [shape: bf16[1,3968,32], index: 2, kind: input, shape index: {}]
  %s3 = inlined_call_operand.vmem [shape: f32[1,1,32], index: 3, kind: input, shape index: {}]
  %s4 = inlined_call_operand.vmem [shape: bf16[1,3968,32], index: 4, kind: input, shape index: {}]
  %s5 = inlined_call_operand.vmem [shape: f32[1,1,32], index: 5, kind: input, shape index: {}]
  %s6 = inlined_call_operand.vmem [shape: f32[2,64,32], index: 6, kind: output, shape index: {}]
  %s7 = sld [smem:[#allocation0]]
  $region57: #{tpu_custom_call.1} parent=0
    _
  %s9 = ssub.s32 1, %s7
  %s10 = scalar_select 0, %s9, %s7
  loop: start=0, step=1, limit=4
  $region2: #{tpu_custom_call.1} parent=0 // loop_pre_header
    _
  $region3: #{tpu_custom_call.1} parent=0 // loop_header
    %s12 = sphi 0, %s16
    %p13 = scmp.ge.s32.totalorder %s12, 4
    %s19 = sphi 0, %s31
    %s20 = sphi 0, %s27
    %s21 = sphi 0, %s19
    %s22 = sphi 0, %s20
    %s23 = sphi 0, %s21
    %s24 = sphi 0, %s22
    %s34 = sphi 0, %s36
    %s37 = sphi 0, %s34
    %s38 = sphi 0, %s37
    %s54 = sphi 0, %s38
    %s62 = sphi 0, %s64
    %s65 = sphi 0, %s62
    %s66 = sphi 0, %s65
    %s82 = sphi 0, %s66
    %s88 = sphi 0, %s90
    %s91 = sphi 0, %s88
    %s92 = sphi 0, %s91
    %s108 = sphi 0, %s92
    %s114 = sphi 0, %s116
    %s117 = sphi 0, %s114
    %s118 = sphi 0, %s117
    %s134 = sphi 0, %s118
    %s140 = sphi 0, %s142
    %s143 = sphi 0, %s140
    %s144 = sphi 0, %s143
    %s160 = sphi 0, %s144
    %s166 = sphi 0, %s168
    %s169 = sphi 0, %s166
    %s170 = sphi 0, %s169
    %s186 = sphi 0, %s170
    %s194 = sphi 0, %s196
    %s197 = sphi 0, %s194
    %s198 = sphi 0, %s197
    %s214 = sphi 0, %s198
  $region4: #{tpu_custom_call.1} parent=0 // loop_header_branch
    %15 = sbr.rel (%p13) target = $region8
  $region5: #{tpu_custom_call.1} parent=0 // loop_body
    %s17 = ssub.s32 %s12, 1
    %s18 = ssub.s32 %s12, 2
    %s25 = sadd.s32 1, %s20
    %p26 = scmp.ge.s32.totalorder %s25, 2
    %s27 = scalar_select %p26, 0, %s25
    %s28 = sadd.s32 1, %s19
    %s29 = scalar_select %p26, %s28, %s19
    %p30 = scmp.ge.s32.totalorder %s29, 1
    %s31 = scalar_select %p30, 0, %s29
    %s32 = ssub.s32 %s20, %s27
    %p33 = scmp.eq.s32.totalorder %s32, 0
    %s35 = sadd.s32 %s34, 1
    %s36 = scalar_select %p33, %s34, %s35
    %p39 = pneg %p33
    %p40 = scmp.eq.s32.totalorder %s12, 1
    %p41 = por %p39, %p40
    %p42 = scmp.ne.s32.totalorder %s34, %s37
    %p43 = scmp.eq.s32.totalorder %s12, 0
    %p44 = por %p42, %p43
    %p45 = scmp.ne.s32.totalorder %s34, %s37
    %p46 = scmp.eq.s32.totalorder %s17, 1
    %p47 = por %p45, %p46
    %p48 = scmp.ne.s32.totalorder %s37, %s38
    %p49 = scmp.eq.s32.totalorder %s17, 0
    %p50 = por %p48, %p49
    %p51 = scmp.ne.s32.totalorder %s37, %s38
    %p52 = scmp.eq.s32.totalorder %s18, 1
    %p53 = por %p51, %p52
    %p55 = scmp.ne.s32.totalorder %s38, %s54
    %p56 = scmp.eq.s32.totalorder %s18, 0
    %p57 = por %p55, %p56
    %s58 = ssub.s32 %s20, %s27
    %s59 = ssub.s32 %s19, %s31
    %s60 = sor.u32 %s58, %s59
    %p61 = scmp.eq.s32.totalorder %s60, 0
    %s63 = sadd.s32 %s62, 1
    %s64 = scalar_select %p61, %s62, %s63
    %p67 = pneg %p61
    %p68 = scmp.eq.s32.totalorder %s12, 1
    %p69 = por %p67, %p68
    %p70 = scmp.ne.s32.totalorder %s62, %s65
    %p71 = scmp.eq.s32.totalorder %s12, 0
    %p72 = por %p70, %p71
    %p73 = scmp.ne.s32.totalorder %s62, %s65
    %p74 = scmp.eq.s32.totalorder %s17, 1
    %p75 = por %p73, %p74
    %p76 = scmp.ne.s32.totalorder %s65, %s66
    %p77 = scmp.eq.s32.totalorder %s17, 0
    %p78 = por %p76, %p77
    %p79 = scmp.ne.s32.totalorder %s65, %s66
    %p80 = scmp.eq.s32.totalorder %s18, 1
    %p81 = por %p79, %p80
    %p83 = scmp.ne.s32.totalorder %s66, %s82
    %p84 = scmp.eq.s32.totalorder %s18, 0
    %p85 = por %p83, %p84
    %s86 = ssub.s32 %s19, %s31
    %p87 = scmp.eq.s32.totalorder %s86, 0
    %s89 = sadd.s32 %s88, 1
    %s90 = scalar_select %p87, %s88, %s89
    %p93 = pneg %p87
    %p94 = scmp.eq.s32.totalorder %s12, 1
    %p95 = por %p93, %p94
    %p96 = scmp.ne.s32.totalorder %s88, %s91
    %p97 = scmp.eq.s32.totalorder %s12, 0
    %p98 = por %p96, %p97
    %p99 = scmp.ne.s32.totalorder %s88, %s91
    %p100 = scmp.eq.s32.totalorder %s17, 1
    %p101 = por %p99, %p100
    %p102 = scmp.ne.s32.totalorder %s91, %s92
    %p103 = scmp.eq.s32.totalorder %s17, 0
    %p104 = por %p102, %p103
    %p105 = scmp.ne.s32.totalorder %s91, %s92
    %p106 = scmp.eq.s32.totalorder %s18, 1
    %p107 = por %p105, %p106
    %p109 = scmp.ne.s32.totalorder %s92, %s108
    %p110 = scmp.eq.s32.totalorder %s18, 0
    %p111 = por %p109, %p110
    %s112 = ssub.s32 %s19, %s31
    %p113 = scmp.eq.s32.totalorder %s112, 0
    %s115 = sadd.s32 %s114, 1
    %s116 = scalar_select %p113, %s114, %s115
    %p119 = pneg %p113
    %p120 = scmp.eq.s32.totalorder %s12, 1
    %p121 = por %p119, %p120
    %p122 = scmp.ne.s32.totalorder %s114, %s117
    %p123 = scmp.eq.s32.totalorder %s12, 0
    %p124 = por %p122, %p123
    %p125 = scmp.ne.s32.totalorder %s114, %s117
    %p126 = scmp.eq.s32.totalorder %s17, 1
    %p127 = por %p125, %p126
    %p128 = scmp.ne.s32.totalorder %s117, %s118
    %p129 = scmp.eq.s32.totalorder %s17, 0
    %p130 = por %p128, %p129
    %p131 = scmp.ne.s32.totalorder %s117, %s118
    %p132 = scmp.eq.s32.totalorder %s18, 1
    %p133 = por %p131, %p132
    %p135 = scmp.ne.s32.totalorder %s118, %s134
    %p136 = scmp.eq.s32.totalorder %s18, 0
    %p137 = por %p135, %p136
    %s138 = ssub.s32 %s19, %s31
    %p139 = scmp.eq.s32.totalorder %s138, 0
    %s141 = sadd.s32 %s140, 1
    %s142 = scalar_select %p139, %s140, %s141
    %p145 = pneg %p139
    %p146 = scmp.eq.s32.totalorder %s12, 1
    %p147 = por %p145, %p146
    %p148 = scmp.ne.s32.totalorder %s140, %s143
    %p149 = scmp.eq.s32.totalorder %s12, 0
    %p150 = por %p148, %p149
    %p151 = scmp.ne.s32.totalorder %s140, %s143
    %p152 = scmp.eq.s32.totalorder %s17, 1
    %p153 = por %p151, %p152
    %p154 = scmp.ne.s32.totalorder %s143, %s144
    %p155 = scmp.eq.s32.totalorder %s17, 0
    %p156 = por %p154, %p155
    %p157 = scmp.ne.s32.totalorder %s143, %s144
    %p158 = scmp.eq.s32.totalorder %s18, 1
    %p159 = por %p157, %p158
    %p161 = scmp.ne.s32.totalorder %s144, %s160
    %p162 = scmp.eq.s32.totalorder %s18, 0
    %p163 = por %p161, %p162
    %s164 = ssub.s32 %s19, %s31
    %p165 = scmp.eq.s32.totalorder %s164, 0
    %s167 = sadd.s32 %s166, 1
    %s168 = scalar_select %p165, %s166, %s167
    %p171 = pneg %p165
    %p172 = scmp.eq.s32.totalorder %s12, 1
    %p173 = por %p171, %p172
    %p174 = scmp.ne.s32.totalorder %s166, %s169
    %p175 = scmp.eq.s32.totalorder %s12, 0
    %p176 = por %p174, %p175
    %p177 = scmp.ne.s32.totalorder %s166, %s169
    %p178 = scmp.eq.s32.totalorder %s17, 1
    %p179 = por %p177, %p178
    %p180 = scmp.ne.s32.totalorder %s169, %s170
    %p181 = scmp.eq.s32.totalorder %s17, 0
    %p182 = por %p180, %p181
    %p183 = scmp.ne.s32.totalorder %s169, %s170
    %p184 = scmp.eq.s32.totalorder %s18, 1
    %p185 = por %p183, %p184
    %p187 = scmp.ne.s32.totalorder %s170, %s186
    %p188 = scmp.eq.s32.totalorder %s18, 0
    %p189 = por %p187, %p188
    %s190 = ssub.s32 %s20, %s27
    %s191 = ssub.s32 %s19, %s31
    %s192 = sor.u32 %s190, %s191
    %p193 = scmp.eq.s32.totalorder %s192, 0
    %s195 = sadd.s32 %s194, 1
    %s196 = scalar_select %p193, %s194, %s195
    %p199 = pneg %p193
    %p200 = scmp.eq.s32.totalorder %s12, 1
    %p201 = por %p199, %p200
    %p202 = scmp.ne.s32.totalorder %s194, %s197
    %p203 = scmp.eq.s32.totalorder %s12, 0
    %p204 = por %p202, %p203
    %p205 = scmp.ne.s32.totalorder %s194, %s197
    %p206 = scmp.eq.s32.totalorder %s17, 1
    %p207 = por %p205, %p206
    %p208 = scmp.ne.s32.totalorder %s197, %s198
    %p209 = scmp.eq.s32.totalorder %s17, 0
    %p210 = por %p208, %p209
    %p211 = scmp.ne.s32.totalorder %s197, %s198
    %p212 = scmp.eq.s32.totalorder %s18, 1
    %p213 = por %p211, %p212
    %p215 = scmp.ne.s32.totalorder %s198, %s214
    %p216 = scmp.eq.s32.totalorder %s18, 0
    %p217 = por %p215, %p216
    %p218 = scmp.le.s32.totalorder 1, %s12
    %p219 = scmp.lt.s32.totalorder %s12, 3
    %p220 = pnand %p218, %p219
    %p221 = pneg %p220
    // Predicated region
    $region9: #{tpu_custom_call.1} parent=5 // pred_check
      _
    $region10: #{tpu_custom_call.1} parent=5 // pred_check_branch
      %223 = sbr.rel (%p220) target = $region12
    $region11: #{tpu_custom_call.1} parent=5 // pred_region
      %s224 = ssub.s32 %s12, 1
      // Predicated region
      $region13: #{tpu_custom_call.1} parent=11 // pred_check
        %p225 = pneg %p104
      $region14: #{tpu_custom_call.1} parent=11 // pred_check_branch
        %227 = sbr.rel (%p225) target = $region16
      $region15: #{tpu_custom_call.1} parent=11 // pred_region
        %p228 = scmp.lt.s32.totalorder %s21, 0
        %s229 = scalar_select %p228, %s21, 0
        %s230 = smul.addr %s229, 496
        %s231 = smul.addr %s230, 4
        %s232 = scalar_lea.vmem %s2, %s231
      $region16: #{tpu_custom_call.1} parent=11 // pred_fallthru
        _
      // Predicated region
      $region17: #{tpu_custom_call.1} parent=11 // pred_check
        %p233 = pneg %p130
      $region18: #{tpu_custom_call.1} parent=11 // pred_check_branch
        %235 = sbr.rel (%p233) target = $region20
      $region19: #{tpu_custom_call.1} parent=11 // pred_region
        %p236 = scmp.lt.s32.totalorder %s21, 0
        %s237 = scalar_select %p236, %s21, 0
        %s238 = scalar_lea.vmem %s3, %s237
      $region20: #{tpu_custom_call.1} parent=11 // pred_fallthru
        _
      // Predicated region
      $region21: #{tpu_custom_call.1} parent=11 // pred_check
        %p239 = pneg %p156
      $region22: #{tpu_custom_call.1} parent=11 // pred_check_branch
        %241 = sbr.rel (%p239) target = $region24
      $region23: #{tpu_custom_call.1} parent=11 // pred_region
        %p242 = scmp.lt.s32.totalorder %s21, 0
        %s243 = scalar_select %p242, %s21, 0
        %s244 = smul.addr %s243, 496
        %s245 = smul.addr %s244, 4
        %s246 = scalar_lea.vmem %s4, %s245
      $region24: #{tpu_custom_call.1} parent=11 // pred_fallthru
        _
      // Predicated region
      $region25: #{tpu_custom_call.1} parent=11 // pred_check
        %p247 = pneg %p182
      $region26: #{tpu_custom_call.1} parent=11 // pred_check_branch
        %249 = sbr.rel (%p247) target = $region28
      $region27: #{tpu_custom_call.1} parent=11 // pred_region
        %p250 = scmp.lt.s32.totalorder %s21, 0
        %s251 = scalar_select %p250, %s21, 0
        %s252 = scalar_lea.vmem %s5, %s251
      $region28: #{tpu_custom_call.1} parent=11 // pred_fallthru
        _
    $region12: #{tpu_custom_call.1} parent=5 // pred_fallthru
      _
    %p253 = scmp.lt.s32.totalorder %s12, 2
    // Predicated region
    $region29: #{tpu_custom_call.1} parent=5 // pred_check
      %p254 = pneg %p253
    $region30: #{tpu_custom_call.1} parent=5 // pred_check_branch
      %256 = sbr.rel (%p254) target = $region32
    $region31: #{tpu_custom_call.1} parent=5 // pred_region
      // Predicated region
      $region33: #{tpu_custom_call.1} parent=31 // pred_check
        %p257 = pneg %p44
      $region34: #{tpu_custom_call.1} parent=31 // pred_check_branch
        %259 = sbr.rel (%p257) target = $region36
      $region35: #{tpu_custom_call.1} parent=31 // pred_region
        %p260 = scmp.lt.s32.totalorder %s20, 1
        %s261 = scalar_select %p260, %s20, 1
        %s262 = smul.addr %s261, 8
        %s263 = smul.addr %s262, 4
        %s264 = scalar_lea.vmem %s0, %s263
      $region36: #{tpu_custom_call.1} parent=31 // pred_fallthru
        _
      // Predicated region
      $region37: #{tpu_custom_call.1} parent=31 // pred_check
        %p265 = pneg %p72
      $region38: #{tpu_custom_call.1} parent=31 // pred_check_branch
        %267 = sbr.rel (%p265) target = $region40
      $region39: #{tpu_custom_call.1} parent=31 // pred_region
        %p268 = scmp.lt.s32.totalorder %s20, 1
        %s269 = scalar_select %p268, %s20, 1
        %p270 = scmp.lt.s32.totalorder %s19, 0
        %s271 = scalar_select %p270, %s19, 0
        %s272 = smul.addr %s269, 8
        %s273 = sadd.s32 %s271, %s272
        %s274 = smul.addr %s273, 4
        %s275 = scalar_lea.vmem %s1, %s274
      $region40: #{tpu_custom_call.1} parent=31 // pred_fallthru
        _
    $region32: #{tpu_custom_call.1} parent=5 // pred_fallthru
      _
    %p276 = scmp.le.s32.totalorder 1, %s12
    %p277 = scmp.lt.s32.totalorder %s12, 3
    %p278 = pnand %p276, %p277
    %p279 = pneg %p278
    // Predicated region
    $region41: #{tpu_custom_call.1} parent=5 // pred_check
      _
    $region42: #{tpu_custom_call.1} parent=5 // pred_check_branch
      %281 = sbr.rel (%p278) target = $region44
    $region43: #{tpu_custom_call.1} parent=5 // pred_region
      %s282 = ssub.s32 %s12, 1
      %p283 = scmp.lt.s32.totalorder %s22, 1
      %s284 = scalar_select %p283, %s22, 1
      %s285 = smul.addr %s284, 8
      %s286 = smul.addr %s285, 4
      %s287 = scalar_lea.vmem %s0, %s286
      %p288 = pneg %p50
      %p289 = pneg %p47
      %p290 = scmp.lt.s32.totalorder %s22, 1
      %s291 = scalar_select %p290, %s22, 1
      %p292 = scmp.lt.s32.totalorder %s21, 0
      %s293 = scalar_select %p292, %s21, 0
      %s294 = smul.addr %s291, 8
      %s295 = sadd.s32 %s293, %s294
      %s296 = smul.addr %s295, 4
      %s297 = scalar_lea.vmem %s1, %s296
      %p298 = pneg %p78
      %p299 = pneg %p75
      %p300 = scmp.lt.s32.totalorder %s21, 0
      %s301 = scalar_select %p300, %s21, 0
      %s302 = smul.addr %s301, 496
      %s303 = smul.addr %s302, 4
      %s304 = scalar_lea.vmem %s2, %s303
      %p305 = pneg %p104
      %p306 = pneg %p101
      %p307 = scmp.lt.s32.totalorder %s21, 0
      %s308 = scalar_select %p307, %s21, 0
      %s309 = scalar_lea.vmem %s3, %s308
      %p310 = pneg %p130
      %p311 = pneg %p127
      %p312 = scmp.lt.s32.totalorder %s21, 0
      %s313 = scalar_select %p312, %s21, 0
      %s314 = smul.addr %s313, 496
      %s315 = smul.addr %s314, 4
      %s316 = scalar_lea.vmem %s4, %s315
      %p317 = pneg %p156
      %p318 = pneg %p153
      %p319 = scmp.lt.s32.totalorder %s21, 0
      %s320 = scalar_select %p319, %s21, 0
      %s321 = scalar_lea.vmem %s5, %s320
      %p322 = pneg %p182
      %p323 = pneg %p179
      %p324 = pneg %p210
      %p325 = pneg %p207
      %p326 = scmp.lt.s32.totalorder %s22, 1
      %s327 = scalar_select %p326, %s22, 1
      %p328 = scmp.lt.s32.totalorder %s21, 0
      %s329 = scalar_select %p328, %s21, 0
      %s330 = smul.addr %s327, 8
      %s331 = sadd.s32 %s329, %s330
      %s332 = smul.addr %s331, 8
      %s333 = scalar_lea.vmem %s6, %s332
      %p334 = scmp.lt.s32.totalorder %s22, 1
      %s335 = scalar_select %p334, %s22, 1
      %s336 = smul.addr %s335, 8
      %s337 = smul.addr %s336, 4
      %s338 = scalar_lea.vmem %s0, %s337
      %p339 = scmp.lt.s32.totalorder %s22, 1
      %s340 = scalar_select %p339, %s22, 1
      %p341 = scmp.lt.s32.totalorder %s21, 0
      %s342 = scalar_select %p341, %s21, 0
      %s343 = smul.addr %s340, 8
      %s344 = sadd.s32 %s342, %s343
      %s345 = smul.addr %s344, 4
      %s346 = scalar_lea.vmem %s1, %s345
      %p347 = scmp.lt.s32.totalorder %s21, 0
      %s348 = scalar_select %p347, %s21, 0
      %s349 = smul.addr %s348, 496
      %s350 = smul.addr %s349, 4
      %s351 = scalar_lea.vmem %s2, %s350
      %p352 = scmp.lt.s32.totalorder %s21, 0
      %s353 = scalar_select %p352, %s21, 0
      %s354 = scalar_lea.vmem %s3, %s353
      %p355 = scmp.lt.s32.totalorder %s21, 0
      %s356 = scalar_select %p355, %s21, 0
      %s357 = smul.addr %s356, 496
      %s358 = smul.addr %s357, 4
      %s359 = scalar_lea.vmem %s4, %s358
      %p360 = scmp.lt.s32.totalorder %s21, 0
      %s361 = scalar_select %p360, %s21, 0
      %s362 = scalar_lea.vmem %s5, %s361
      %p363 = scmp.lt.s32.totalorder %s22, 1
      %s364 = scalar_select %p363, %s22, 1
      %p365 = scmp.lt.s32.totalorder %s21, 0
      %s366 = scalar_select %p365, %s21, 0
      %s367 = smul.addr %s364, 8
      %s368 = sadd.s32 %s366, %s367
      %s369 = smul.addr %s368, 8
      %s370 = scalar_lea.vmem %s6, %s369
      %v374 = vld [vmem:[%s338] sm:$0xf]
      %v375 = vld [vmem:[%s338 + $0x4] sm:$0xf]
      %v376 = vld [vmem:[%s338 + $0x8] sm:$0xf]
      %v377 = vld [vmem:[%s338 + $0xc] sm:$0xf]
      %v378 = vld [vmem:[%s338 + $0x10] sm:$0xf]
      %v379 = vld [vmem:[%s338 + $0x14] sm:$0xf]
      %v380 = vld [vmem:[%s338 + $0x18] sm:$0xf]
      %v381 = vld [vmem:[%s338 + $0x1c] sm:$0xf]
      %vm382 = vcmp.ne.bf16.partialorder %v374, 0
      %vm383 = vcmp.ne.bf16.partialorder %v375, 0
      %vm384 = vcmp.ne.bf16.partialorder %v376, 0
      %vm385 = vcmp.ne.bf16.partialorder %v377, 0
      %vm386 = vcmp.ne.bf16.partialorder %v378, 0
      %vm387 = vcmp.ne.bf16.partialorder %v379, 0
      %vm388 = vcmp.ne.bf16.partialorder %v380, 0
      %vm389 = vcmp.ne.bf16.partialorder %v381, 0
      %vm390 = vcmask 261120
      %391 = vst.msk [vmem:[#allocation2] sm:$0xff] %vm390, 0
      %392 = vst.msk [vmem:[#allocation2 + $0x28] sm:$0xff] %vm390, 0
      %393 = vst.msk [vmem:[#allocation3] sm:$0xff] %vm390, 0
      %394 = vst.msk [vmem:[#allocation3 + $0x28] sm:$0xff] %vm390, 0
      %v395 = vld [vmem:[%s346] sm:$0xf]
      %v396 = vld [vmem:[%s346 + $0x4] sm:$0xf]
      %v397 = vld [vmem:[%s346 + $0x8] sm:$0xf]
      %v398 = vld [vmem:[%s346 + $0xc] sm:$0xf]
      %v399 = vld [vmem:[%s346 + $0x10] sm:$0xf]
      %v400 = vld [vmem:[%s346 + $0x14] sm:$0xf]
      %v401 = vld [vmem:[%s346 + $0x18] sm:$0xf]
      %v402 = vld [vmem:[%s346 + $0x1c] sm:$0xf]
      %v403 = vsel %vm382, 65537, 0
      %v404 = vsel %vm383, 65537, 0
      %v405 = vsel %vm384, 65537, 0
      %v406 = vsel %vm385, 65537, 0
      %v407 = vsel %vm386, 65537, 0
      %v408 = vsel %vm387, 65537, 0
      %v409 = vsel %vm388, 65537, 0
      %v410 = vsel %vm389, 65537, 0
      %v411 = vunpack.c.l.b16 %v403
      %v412 = vunpack.c.l.b16 %v404
      %v413 = vunpack.c.l.b16 %v405
      %v414 = vunpack.c.l.b16 %v406
      %v415 = vunpack.c.l.b16 %v407
      %v416 = vunpack.c.l.b16 %v408
      %v417 = vunpack.c.l.b16 %v409
      %v418 = vunpack.c.l.b16 %v410
      %vm419 = vcmp.ne.s32.totalorder %v411, 0
      %vm420 = vcmp.ne.s32.totalorder %v412, 0
      %vm421 = vcmp.ne.s32.totalorder %v413, 0
      %vm422 = vcmp.ne.s32.totalorder %v414, 0
      %vm423 = vcmp.ne.s32.totalorder %v415, 0
      %vm424 = vcmp.ne.s32.totalorder %v416, 0
      %vm425 = vcmp.ne.s32.totalorder %v417, 0
      %vm426 = vcmp.ne.s32.totalorder %v418, 0
      %v427 = vsel %vm419, 1, 0
      %v428 = vsel %vm420, 1, 0
      %v429 = vsel %vm421, 1, 0
      %v430 = vsel %vm422, 1, 0
      %v431 = vsel %vm423, 1, 0
      %v432 = vsel %vm424, 1, 0
      %v433 = vsel %vm425, 1, 0
      %v434 = vsel %vm426, 1, 0
      %435 = vset.pattern.permute.xlu0 0
      %436 = vperm.xlu0 %435, %v427
      %v437 = vpop.permute.xlu0 %436
      %438 = vset.pattern.permute.xlu0 0
      %439 = vperm.xlu0 %438, %v428
      %v440 = vpop.permute.xlu0 %439
      %441 = vset.pattern.permute.xlu0 0
      %442 = vperm.xlu0 %441, %v429
      %v443 = vpop.permute.xlu0 %442
      %444 = vset.pattern.permute.xlu0 0
      %445 = vperm.xlu0 %444, %v430
      %v446 = vpop.permute.xlu0 %445
      %447 = vset.pattern.permute.xlu0 0
      %448 = vperm.xlu0 %447, %v431
      %v449 = vpop.permute.xlu0 %448
      %450 = vset.pattern.permute.xlu0 0
      %451 = vperm.xlu0 %450, %v432
      %v452 = vpop.permute.xlu0 %451
      %453 = vset.pattern.permute.xlu0 0
      %454 = vperm.xlu0 %453, %v433
      %v455 = vpop.permute.xlu0 %454
      %456 = vset.pattern.permute.xlu0 0
      %457 = vperm.xlu0 %456, %v434
      %v458 = vpop.permute.xlu0 %457
      %vm459 = vcmp.eq.s32.totalorder %v437, 1
      %vm460 = vcmp.eq.s32.totalorder %v440, 1
      %vm461 = vcmp.eq.s32.totalorder %v443, 1
      %vm462 = vcmp.eq.s32.totalorder %v446, 1
      %vm463 = vcmp.eq.s32.totalorder %v449, 1
      %vm464 = vcmp.eq.s32.totalorder %v452, 1
      %vm465 = vcmp.eq.s32.totalorder %v455, 1
      %vm466 = vcmp.eq.s32.totalorder %v458, 1
      %vm467 = vmpackc.low %vm459, %vm459
      %vm468 = vmpackc.low %vm460, %vm460
      %vm469 = vmpackc.low %vm461, %vm461
      %vm470 = vmpackc.low %vm462, %vm462
      %vm471 = vmpackc.low %vm463, %vm463
      %vm472 = vmpackc.low %vm464, %vm464
      %vm473 = vmpackc.low %vm465, %vm465
      %vm474 = vmpackc.low %vm466, %vm466
      %v475 = vsel %vm467, %v395, 0
      %v476 = vsel %vm468, %v396, 0
      %v477 = vsel %vm469, %v397, 0
      %v478 = vsel %vm470, %v398, 0
      %v479 = vsel %vm471, %v399, 0
      %v480 = vsel %vm472, %v400, 0
      %v481 = vsel %vm473, %v401, 0
      %v482 = vsel %vm474, %v402, 0
      %v491 = vunpack.c.l.b16 %v475
      %v492 = vunpack.c.l.b16 %v476
      %v493 = vunpack.c.l.b16 %v477
      %v494 = vunpack.c.l.b16 %v478
      %v495 = vunpack.c.l.b16 %v479
      %v496 = vunpack.c.l.b16 %v480
      %v497 = vunpack.c.l.b16 %v481
      %v498 = vunpack.c.l.b16 %v482
      %v499 = vpack.c.b16 %v492, %v491
      %v500 = vpack.c.b16 %v494, %v493
      %v501 = vpack.c.b16 %v496, %v495
      %v502 = vpack.c.b16 %v498, %v497
      %507 = vst.msk [vmem:[#allocation2 + $0x8] sm:$0xff] %vm390, %v499
      %508 = vst.msk [vmem:[#allocation2 + $0x10] sm:$0xff] %vm390, %v500
      %509 = vst.msk [vmem:[#allocation2 + $0x18] sm:$0xff] %vm390, %v501
      %510 = vst.msk [vmem:[#allocation2 + $0x20] sm:$0xff] %vm390, %v502
      %511 = vst [vmem:[#allocation4] sm:$0xff] 0
      %512 = vst [vmem:[#allocation4 + $0x8] sm:$0xff] 0
      %513 = vst [vmem:[#allocation4 + $0x10] sm:$0xff] 0
      %514 = vst [vmem:[#allocation4 + $0x18] sm:$0xff] 0
      %515 = vst [vmem:[#allocation4 + $0x20] sm:$0xff] 0
      %516 = vst [vmem:[#allocation4 + $0x28] sm:$0xff] 0
      %517 = vst [vmem:[#allocation4 + $0x30] sm:$0xff] 0
      %518 = vst [vmem:[#allocation4 + $0x38] sm:$0xff] 0
      %519 = vst [vmem:[#allocation4 + $0x40] sm:$0xff] 0
      %520 = vst [vmem:[#allocation4 + $0x48] sm:$0xff] 0
      %521 = vst [vmem:[#allocation4 + $0x50] sm:$0xff] 0
      %522 = vst [vmem:[#allocation4 + $0x58] sm:$0xff] 0
      %523 = vst [vmem:[#allocation4 + $0x60] sm:$0xff] 0
      %524 = vst [vmem:[#allocation4 + $0x68] sm:$0xff] 0
      %525 = vst [vmem:[#allocation4 + $0x70] sm:$0xff] 0
      %526 = vst [vmem:[#allocation4 + $0x78] sm:$0xff] 0
      %527 = vst [vmem:[#allocation4 + $0x80] sm:$0xff] 0
      %528 = vst [vmem:[#allocation4 + $0x88] sm:$0xff] 0
      %529 = vst [vmem:[#allocation4 + $0x90] sm:$0xff] 0
      %530 = vst [vmem:[#allocation4 + $0x98] sm:$0xff] 0
      %531 = vst [vmem:[#allocation4 + $0xa0] sm:$0xff] 0
      %532 = vst [vmem:[#allocation4 + $0xa8] sm:$0xff] 0
      %533 = vst [vmem:[#allocation4 + $0xb0] sm:$0xff] 0
      %534 = vst [vmem:[#allocation4 + $0xb8] sm:$0xff] 0
      %535 = vst [vmem:[#allocation4 + $0xc0] sm:$0xff] 0
      %536 = vst [vmem:[#allocation4 + $0xc8] sm:$0xff] 0
      %537 = vst [vmem:[#allocation4 + $0xd0] sm:$0xff] 0
      %538 = vst [vmem:[#allocation4 + $0xd8] sm:$0xff] 0
      %539 = vst [vmem:[#allocation4 + $0xe0] sm:$0xff] 0
      %540 = vst [vmem:[#allocation4 + $0xe8] sm:$0xff] 0
      %541 = vst [vmem:[#allocation4 + $0xf0] sm:$0xff] 0
      %542 = vst [vmem:[#allocation4 + $0xf8] sm:$0xff] 0
      %543 = vst [vmem:[#allocation4 + $0x100] sm:$0xff] 0
      %544 = vst [vmem:[#allocation4 + $0x108] sm:$0xff] 0
      %545 = vst [vmem:[#allocation4 + $0x110] sm:$0xff] 0
      %546 = vst [vmem:[#allocation4 + $0x118] sm:$0xff] 0
      %547 = vst [vmem:[#allocation4 + $0x120] sm:$0xff] 0
      %548 = vst [vmem:[#allocation4 + $0x128] sm:$0xff] 0
      %549 = vst [vmem:[#allocation4 + $0x130] sm:$0xff] 0
      %550 = vst [vmem:[#allocation4 + $0x138] sm:$0xff] 0
      %551 = vst [vmem:[#allocation4 + $0x140] sm:$0xff] 0
      %552 = vst [vmem:[#allocation4 + $0x148] sm:$0xff] 0
      %553 = vst [vmem:[#allocation4 + $0x150] sm:$0xff] 0
      %554 = vst [vmem:[#allocation4 + $0x158] sm:$0xff] 0
      %555 = vst [vmem:[#allocation4 + $0x160] sm:$0xff] 0
      %556 = vst [vmem:[#allocation4 + $0x168] sm:$0xff] 0
      %557 = vst [vmem:[#allocation4 + $0x170] sm:$0xff] 0
      %558 = vst [vmem:[#allocation4 + $0x178] sm:$0xff] 0
      %559 = vst [vmem:[#allocation4 + $0x180] sm:$0xff] 0
      %560 = vst [vmem:[#allocation4 + $0x188] sm:$0xff] 0
      %561 = vst [vmem:[#allocation4 + $0x190] sm:$0xff] 0
      %562 = vst [vmem:[#allocation4 + $0x198] sm:$0xff] 0
      %563 = vst [vmem:[#allocation4 + $0x1a0] sm:$0xff] 0
      %564 = vst [vmem:[#allocation4 + $0x1a8] sm:$0xff] 0
      %565 = vst [vmem:[#allocation4 + $0x1b0] sm:$0xff] 0
      %566 = vst [vmem:[#allocation4 + $0x1b8] sm:$0xff] 0
      %567 = vst [vmem:[#allocation4 + $0x1c0] sm:$0xff] 0
      %568 = vst [vmem:[#allocation4 + $0x1c8] sm:$0xff] 0
      %569 = vst [vmem:[#allocation4 + $0x1d0] sm:$0xff] 0
      %570 = vst [vmem:[#allocation4 + $0x1d8] sm:$0xff] 0
      %571 = vst [vmem:[#allocation4 + $0x1e0] sm:$0xff] 0
      %572 = vst [vmem:[#allocation4 + $0x1e8] sm:$0xff] 0
      %573 = vst [vmem:[#allocation4 + $0x1f0] sm:$0xff] 0
      %574 = vst [vmem:[#allocation4 + $0x1f8] sm:$0xff] 0
      %575 = vst [vmem:[#allocation4 + $0x200] sm:$0xff] 0
      %576 = vst [vmem:[#allocation4 + $0x208] sm:$0xff] 0
      %577 = vst [vmem:[#allocation4 + $0x210] sm:$0xff] 0
      %578 = vst [vmem:[#allocation4 + $0x218] sm:$0xff] 0
      %579 = vst [vmem:[#allocation4 + $0x220] sm:$0xff] 0
      %580 = vst [vmem:[#allocation4 + $0x228] sm:$0xff] 0
      %581 = vst [vmem:[#allocation4 + $0x230] sm:$0xff] 0
      %582 = vst [vmem:[#allocation4 + $0x238] sm:$0xff] 0
      %583 = vst [vmem:[#allocation4 + $0x240] sm:$0xff] 0
      %584 = vst [vmem:[#allocation4 + $0x248] sm:$0xff] 0
      %585 = vst [vmem:[#allocation4 + $0x250] sm:$0xff] 0
      %586 = vst [vmem:[#allocation4 + $0x258] sm:$0xff] 0
      %587 = vst [vmem:[#allocation4 + $0x260] sm:$0xff] 0
      %588 = vst [vmem:[#allocation4 + $0x268] sm:$0xff] 0
      %589 = vst [vmem:[#allocation4 + $0x270] sm:$0xff] 0
      %590 = vst [vmem:[#allocation4 + $0x278] sm:$0xff] 0
      %591 = vst [vmem:[#allocation4 + $0x280] sm:$0xff] 0
      %592 = vst [vmem:[#allocation4 + $0x288] sm:$0xff] 0
      %593 = vst [vmem:[#allocation4 + $0x290] sm:$0xff] 0
      %594 = vst [vmem:[#allocation4 + $0x298] sm:$0xff] 0
      %595 = vst [vmem:[#allocation4 + $0x2a0] sm:$0xff] 0
      %596 = vst [vmem:[#allocation4 + $0x2a8] sm:$0xff] 0
      %597 = vst [vmem:[#allocation4 + $0x2b0] sm:$0xff] 0
      %598 = vst [vmem:[#allocation4 + $0x2b8] sm:$0xff] 0
      %599 = vst [vmem:[#allocation4 + $0x2c0] sm:$0xff] 0
      %600 = vst [vmem:[#allocation4 + $0x2c8] sm:$0xff] 0
      %601 = vst [vmem:[#allocation4 + $0x2d0] sm:$0xff] 0
      %602 = vst [vmem:[#allocation4 + $0x2d8] sm:$0xff] 0
      %603 = vst [vmem:[#allocation4 + $0x2e0] sm:$0xff] 0
      %604 = vst [vmem:[#allocation4 + $0x2e8] sm:$0xff] 0
      %605 = vst [vmem:[#allocation4 + $0x2f0] sm:$0xff] 0
      %606 = vst [vmem:[#allocation4 + $0x2f8] sm:$0xff] 0
      %607 = vst [vmem:[#allocation4 + $0x300] sm:$0xff] 0
      %608 = vst [vmem:[#allocation4 + $0x308] sm:$0xff] 0
      %609 = vst [vmem:[#allocation4 + $0x310] sm:$0xff] 0
      %610 = vst [vmem:[#allocation4 + $0x318] sm:$0xff] 0
      %611 = vst [vmem:[#allocation4 + $0x320] sm:$0xff] 0
      %612 = vst [vmem:[#allocation4 + $0x328] sm:$0xff] 0
      %613 = vst [vmem:[#allocation4 + $0x330] sm:$0xff] 0
      %614 = vst [vmem:[#allocation4 + $0x338] sm:$0xff] 0
      %615 = vst [vmem:[#allocation4 + $0x340] sm:$0xff] 0
      %616 = vst [vmem:[#allocation4 + $0x348] sm:$0xff] 0
      %617 = vst [vmem:[#allocation4 + $0x350] sm:$0xff] 0
      %618 = vst [vmem:[#allocation4 + $0x358] sm:$0xff] 0
      %619 = vst [vmem:[#allocation4 + $0x360] sm:$0xff] 0
      %620 = vst [vmem:[#allocation4 + $0x368] sm:$0xff] 0
      %621 = vst [vmem:[#allocation4 + $0x370] sm:$0xff] 0
      %622 = vst [vmem:[#allocation4 + $0x378] sm:$0xff] 0
      %623 = vst [vmem:[#allocation4 + $0x380] sm:$0xff] 0
      %624 = vst [vmem:[#allocation4 + $0x388] sm:$0xff] 0
      %625 = vst [vmem:[#allocation4 + $0x390] sm:$0xff] 0
      %626 = vst [vmem:[#allocation4 + $0x398] sm:$0xff] 0
      %627 = vst [vmem:[#allocation4 + $0x3a0] sm:$0xff] 0
      %628 = vst [vmem:[#allocation4 + $0x3a8] sm:$0xff] 0
      %629 = vst [vmem:[#allocation4 + $0x3b0] sm:$0xff] 0
      %630 = vst [vmem:[#allocation4 + $0x3b8] sm:$0xff] 0
      %631 = vst [vmem:[#allocation4 + $0x3c0] sm:$0xff] 0
      %632 = vst [vmem:[#allocation4 + $0x3c8] sm:$0xff] 0
      %633 = vst [vmem:[#allocation4 + $0x3d0] sm:$0xff] 0
      %634 = vst [vmem:[#allocation4 + $0x3d8] sm:$0xff] 0
      %v635 = vld [vmem:[%s351] sm:$0xf]
      %v636 = vld [vmem:[%s351 + $0x4] sm:$0xf]
      %v637 = vld [vmem:[%s351 + $0x8] sm:$0xf]
      %v638 = vld [vmem:[%s351 + $0xc] sm:$0xf]
      %v639 = vld [vmem:[%s351 + $0x10] sm:$0xf]
      %v640 = vld [vmem:[%s351 + $0x14] sm:$0xf]
      %v641 = vld [vmem:[%s351 + $0x18] sm:$0xf]
      %v642 = vld [vmem:[%s351 + $0x1c] sm:$0xf]
      %v643 = vld [vmem:[%s351 + $0x20] sm:$0xf]
      %v644 = vld [vmem:[%s351 + $0x24] sm:$0xf]
      %v645 = vld [vmem:[%s351 + $0x28] sm:$0xf]
      %v646 = vld [vmem:[%s351 + $0x2c] sm:$0xf]
      %v647 = vld [vmem:[%s351 + $0x30] sm:$0xf]
      %v648 = vld [vmem:[%s351 + $0x34] sm:$0xf]
      %v649 = vld [vmem:[%s351 + $0x38] sm:$0xf]
      %v650 = vld [vmem:[%s351 + $0x3c] sm:$0xf]
      %v651 = vld [vmem:[%s351 + $0x40] sm:$0xf]
      %v652 = vld [vmem:[%s351 + $0x44] sm:$0xf]
      %v653 = vld [vmem:[%s351 + $0x48] sm:$0xf]
      %v654 = vld [vmem:[%s351 + $0x4c] sm:$0xf]
      %v655 = vld [vmem:[%s351 + $0x50] sm:$0xf]
      %v656 = vld [vmem:[%s351 + $0x54] sm:$0xf]
      %v657 = vld [vmem:[%s351 + $0x58] sm:$0xf]
      %v658 = vld [vmem:[%s351 + $0x5c] sm:$0xf]
      %v659 = vld [vmem:[%s351 + $0x60] sm:$0xf]
      %v660 = vld [vmem:[%s351 + $0x64] sm:$0xf]
      %v661 = vld [vmem:[%s351 + $0x68] sm:$0xf]
      %v662 = vld [vmem:[%s351 + $0x6c] sm:$0xf]
      %v663 = vld [vmem:[%s351 + $0x70] sm:$0xf]
      %v664 = vld [vmem:[%s351 + $0x74] sm:$0xf]
      %v665 = vld [vmem:[%s351 + $0x78] sm:$0xf]
      %v666 = vld [vmem:[%s351 + $0x7c] sm:$0xf]
      %v667 = vld [vmem:[%s351 + $0x80] sm:$0xf]
      %v668 = vld [vmem:[%s351 + $0x84] sm:$0xf]
      %v669 = vld [vmem:[%s351 + $0x88] sm:$0xf]
      %v670 = vld [vmem:[%s351 + $0x8c] sm:$0xf]
      %v671 = vld [vmem:[%s351 + $0x90] sm:$0xf]
      %v672 = vld [vmem:[%s351 + $0x94] sm:$0xf]
      %v673 = vld [vmem:[%s351 + $0x98] sm:$0xf]
      %v674 = vld [vmem:[%s351 + $0x9c] sm:$0xf]
      %v675 = vld [vmem:[%s351 + $0xa0] sm:$0xf]
      %v676 = vld [vmem:[%s351 + $0xa4] sm:$0xf]
      %v677 = vld [vmem:[%s351 + $0xa8] sm:$0xf]
      %v678 = vld [vmem:[%s351 + $0xac] sm:$0xf]
      %v679 = vld [vmem:[%s351 + $0xb0] sm:$0xf]
      %v680 = vld [vmem:[%s351 + $0xb4] sm:$0xf]
      %v681 = vld [vmem:[%s351 + $0xb8] sm:$0xf]
      %v682 = vld [vmem:[%s351 + $0xbc] sm:$0xf]
      %v683 = vld [vmem:[%s351 + $0xc0] sm:$0xf]
      %v684 = vld [vmem:[%s351 + $0xc4] sm:$0xf]
      %v685 = vld [vmem:[%s351 + $0xc8] sm:$0xf]
      %v686 = vld [vmem:[%s351 + $0xcc] sm:$0xf]
      %v687 = vld [vmem:[%s351 + $0xd0] sm:$0xf]
      %v688 = vld [vmem:[%s351 + $0xd4] sm:$0xf]
      %v689 = vld [vmem:[%s351 + $0xd8] sm:$0xf]
      %v690 = vld [vmem:[%s351 + $0xdc] sm:$0xf]
      %v691 = vld [vmem:[%s351 + $0xe0] sm:$0xf]
      %v692 = vld [vmem:[%s351 + $0xe4] sm:$0xf]
      %v693 = vld [vmem:[%s351 + $0xe8] sm:$0xf]
      %v694 = vld [vmem:[%s351 + $0xec] sm:$0xf]
      %v695 = vld [vmem:[%s351 + $0xf0] sm:$0xf]
      %v696 = vld [vmem:[%s351 + $0xf4] sm:$0xf]
      %v697 = vld [vmem:[%s351 + $0xf8] sm:$0xf]
      %v698 = vld [vmem:[%s351 + $0xfc] sm:$0xf]
      %v699 = vld [vmem:[%s351 + $0x100] sm:$0xf]
      %v700 = vld [vmem:[%s351 + $0x104] sm:$0xf]
      %v701 = vld [vmem:[%s351 + $0x108] sm:$0xf]
      %v702 = vld [vmem:[%s351 + $0x10c] sm:$0xf]
      %v703 = vld [vmem:[%s351 + $0x110] sm:$0xf]
      %v704 = vld [vmem:[%s351 + $0x114] sm:$0xf]
      %v705 = vld [vmem:[%s351 + $0x118] sm:$0xf]
      %v706 = vld [vmem:[%s351 + $0x11c] sm:$0xf]
      %v707 = vld [vmem:[%s351 + $0x120] sm:$0xf]
      %v708 = vld [vmem:[%s351 + $0x124] sm:$0xf]
      %v709 = vld [vmem:[%s351 + $0x128] sm:$0xf]
      %v710 = vld [vmem:[%s351 + $0x12c] sm:$0xf]
      %v711 = vld [vmem:[%s351 + $0x130] sm:$0xf]
      %v712 = vld [vmem:[%s351 + $0x134] sm:$0xf]
      %v713 = vld [vmem:[%s351 + $0x138] sm:$0xf]
      %v714 = vld [vmem:[%s351 + $0x13c] sm:$0xf]
      %v715 = vld [vmem:[%s351 + $0x140] sm:$0xf]
      %v716 = vld [vmem:[%s351 + $0x144] sm:$0xf]
      %v717 = vld [vmem:[%s351 + $0x148] sm:$0xf]
      %v718 = vld [vmem:[%s351 + $0x14c] sm:$0xf]
      %v719 = vld [vmem:[%s351 + $0x150] sm:$0xf]
      %v720 = vld [vmem:[%s351 + $0x154] sm:$0xf]
      %v721 = vld [vmem:[%s351 + $0x158] sm:$0xf]
      %v722 = vld [vmem:[%s351 + $0x15c] sm:$0xf]
      %v723 = vld [vmem:[%s351 + $0x160] sm:$0xf]
      %v724 = vld [vmem:[%s351 + $0x164] sm:$0xf]
      %v725 = vld [vmem:[%s351 + $0x168] sm:$0xf]
      %v726 = vld [vmem:[%s351 + $0x16c] sm:$0xf]
      %v727 = vld [vmem:[%s351 + $0x170] sm:$0xf]
      %v728 = vld [vmem:[%s351 + $0x174] sm:$0xf]
      %v729 = vld [vmem:[%s351 + $0x178] sm:$0xf]
      %v730 = vld [vmem:[%s351 + $0x17c] sm:$0xf]
      %v731 = vld [vmem:[%s351 + $0x180] sm:$0xf]
      %v732 = vld [vmem:[%s351 + $0x184] sm:$0xf]
      %v733 = vld [vmem:[%s351 + $0x188] sm:$0xf]
      %v734 = vld [vmem:[%s351 + $0x18c] sm:$0xf]
      %v735 = vld [vmem:[%s351 + $0x190] sm:$0xf]
      %v736 = vld [vmem:[%s351 + $0x194] sm:$0xf]
      %v737 = vld [vmem:[%s351 + $0x198] sm:$0xf]
      %v738 = vld [vmem:[%s351 + $0x19c] sm:$0xf]
      %v739 = vld [vmem:[%s351 + $0x1a0] sm:$0xf]
      %v740 = vld [vmem:[%s351 + $0x1a4] sm:$0xf]
      %v741 = vld [vmem:[%s351 + $0x1a8] sm:$0xf]
      %v742 = vld [vmem:[%s351 + $0x1ac] sm:$0xf]
      %v743 = vld [vmem:[%s351 + $0x1b0] sm:$0xf]
      %v744 = vld [vmem:[%s351 + $0x1b4] sm:$0xf]
      %v745 = vld [vmem:[%s351 + $0x1b8] sm:$0xf]
      %v746 = vld [vmem:[%s351 + $0x1bc] sm:$0xf]
      %v747 = vld [vmem:[%s351 + $0x1c0] sm:$0xf]
      %v748 = vld [vmem:[%s351 + $0x1c4] sm:$0xf]
      %v749 = vld [vmem:[%s351 + $0x1c8] sm:$0xf]
      %v750 = vld [vmem:[%s351 + $0x1cc] sm:$0xf]
      %v751 = vld [vmem:[%s351 + $0x1d0] sm:$0xf]
      %v752 = vld [vmem:[%s351 + $0x1d4] sm:$0xf]
      %v753 = vld [vmem:[%s351 + $0x1d8] sm:$0xf]
      %v754 = vld [vmem:[%s351 + $0x1dc] sm:$0xf]
      %v755 = vld [vmem:[%s351 + $0x1e0] sm:$0xf]
      %v756 = vld [vmem:[%s351 + $0x1e4] sm:$0xf]
      %v757 = vld [vmem:[%s351 + $0x1e8] sm:$0xf]
      %v758 = vld [vmem:[%s351 + $0x1ec] sm:$0xf]
      %v759 = vld [vmem:[%s351 + $0x1f0] sm:$0xf]
      %v760 = vld [vmem:[%s351 + $0x1f4] sm:$0xf]
      %v761 = vld [vmem:[%s351 + $0x1f8] sm:$0xf]
      %v762 = vld [vmem:[%s351 + $0x1fc] sm:$0xf]
      %v763 = vld [vmem:[%s351 + $0x200] sm:$0xf]
      %v764 = vld [vmem:[%s351 + $0x204] sm:$0xf]
      %v765 = vld [vmem:[%s351 + $0x208] sm:$0xf]
      %v766 = vld [vmem:[%s351 + $0x20c] sm:$0xf]
      %v767 = vld [vmem:[%s351 + $0x210] sm:$0xf]
      %v768 = vld [vmem:[%s351 + $0x214] sm:$0xf]
      %v769 = vld [vmem:[%s351 + $0x218] sm:$0xf]
      %v770 = vld [vmem:[%s351 + $0x21c] sm:$0xf]
      %v771 = vld [vmem:[%s351 + $0x220] sm:$0xf]
      %v772 = vld [vmem:[%s351 + $0x224] sm:$0xf]
      %v773 = vld [vmem:[%s351 + $0x228] sm:$0xf]
      %v774 = vld [vmem:[%s351 + $0x22c] sm:$0xf]
      %v775 = vld [vmem:[%s351 + $0x230] sm:$0xf]
      %v776 = vld [vmem:[%s351 + $0x234] sm:$0xf]
      %v777 = vld [vmem:[%s351 + $0x238] sm:$0xf]
      %v778 = vld [vmem:[%s351 + $0x23c] sm:$0xf]
      %v779 = vld [vmem:[%s351 + $0x240] sm:$0xf]
      %v780 = vld [vmem:[%s351 + $0x244] sm:$0xf]
      %v781 = vld [vmem:[%s351 + $0x248] sm:$0xf]
      %v782 = vld [vmem:[%s351 + $0x24c] sm:$0xf]
      %v783 = vld [vmem:[%s351 + $0x250] sm:$0xf]
      %v784 = vld [vmem:[%s351 + $0x254] sm:$0xf]
      %v785 = vld [vmem:[%s351 + $0x258] sm:$0xf]
      %v786 = vld [vmem:[%s351 + $0x25c] sm:$0xf]
      %v787 = vld [vmem:[%s351 + $0x260] sm:$0xf]
      %v788 = vld [vmem:[%s351 + $0x264] sm:$0xf]
      %v789 = vld [vmem:[%s351 + $0x268] sm:$0xf]
      %v790 = vld [vmem:[%s351 + $0x26c] sm:$0xf]
      %v791 = vld [vmem:[%s351 + $0x270] sm:$0xf]
      %v792 = vld [vmem:[%s351 + $0x274] sm:$0xf]
      %v793 = vld [vmem:[%s351 + $0x278] sm:$0xf]
      %v794 = vld [vmem:[%s351 + $0x27c] sm:$0xf]
      %v795 = vld [vmem:[%s351 + $0x280] sm:$0xf]
      %v796 = vld [vmem:[%s351 + $0x284] sm:$0xf]
      %v797 = vld [vmem:[%s351 + $0x288] sm:$0xf]
      %v798 = vld [vmem:[%s351 + $0x28c] sm:$0xf]
      %v799 = vld [vmem:[%s351 + $0x290] sm:$0xf]
      %v800 = vld [vmem:[%s351 + $0x294] sm:$0xf]
      %v801 = vld [vmem:[%s351 + $0x298] sm:$0xf]
      %v802 = vld [vmem:[%s351 + $0x29c] sm:$0xf]
      %v803 = vld [vmem:[%s351 + $0x2a0] sm:$0xf]
      %v804 = vld [vmem:[%s351 + $0x2a4] sm:$0xf]
      %v805 = vld [vmem:[%s351 + $0x2a8] sm:$0xf]
      %v806 = vld [vmem:[%s351 + $0x2ac] sm:$0xf]
      %v807 = vld [vmem:[%s351 + $0x2b0] sm:$0xf]
      %v808 = vld [vmem:[%s351 + $0x2b4] sm:$0xf]
      %v809 = vld [vmem:[%s351 + $0x2b8] sm:$0xf]
      %v810 = vld [vmem:[%s351 + $0x2bc] sm:$0xf]
      %v811 = vld [vmem:[%s351 + $0x2c0] sm:$0xf]
      %v812 = vld [vmem:[%s351 + $0x2c4] sm:$0xf]
      %v813 = vld [vmem:[%s351 + $0x2c8] sm:$0xf]
      %v814 = vld [vmem:[%s351 + $0x2cc] sm:$0xf]
      %v815 = vld [vmem:[%s351 + $0x2d0] sm:$0xf]
      %v816 = vld [vmem:[%s351 + $0x2d4] sm:$0xf]
      %v817 = vld [vmem:[%s351 + $0x2d8] sm:$0xf]
      %v818 = vld [vmem:[%s351 + $0x2dc] sm:$0xf]
      %v819 = vld [vmem:[%s351 + $0x2e0] sm:$0xf]
      %v820 = vld [vmem:[%s351 + $0x2e4] sm:$0xf]
      %v821 = vld [vmem:[%s351 + $0x2e8] sm:$0xf]
      %v822 = vld [vmem:[%s351 + $0x2ec] sm:$0xf]
      %v823 = vld [vmem:[%s351 + $0x2f0] sm:$0xf]
      %v824 = vld [vmem:[%s351 + $0x2f4] sm:$0xf]
      %v825 = vld [vmem:[%s351 + $0x2f8] sm:$0xf]
      %v826 = vld [vmem:[%s351 + $0x2fc] sm:$0xf]
      %v827 = vld [vmem:[%s351 + $0x300] sm:$0xf]
      %v828 = vld [vmem:[%s351 + $0x304] sm:$0xf]
      %v829 = vld [vmem:[%s351 + $0x308] sm:$0xf]
      %v830 = vld [vmem:[%s351 + $0x30c] sm:$0xf]
      %v831 = vld [vmem:[%s351 + $0x310] sm:$0xf]
      %v832 = vld [vmem:[%s351 + $0x314] sm:$0xf]
      %v833 = vld [vmem:[%s351 + $0x318] sm:$0xf]
      %v834 = vld [vmem:[%s351 + $0x31c] sm:$0xf]
      %v835 = vld [vmem:[%s351 + $0x320] sm:$0xf]
      %v836 = vld [vmem:[%s351 + $0x324] sm:$0xf]
      %v837 = vld [vmem:[%s351 + $0x328] sm:$0xf]
      %v838 = vld [vmem:[%s351 + $0x32c] sm:$0xf]
      %v839 = vld [vmem:[%s351 + $0x330] sm:$0xf]
      %v840 = vld [vmem:[%s351 + $0x334] sm:$0xf]
      %v841 = vld [vmem:[%s351 + $0x338] sm:$0xf]
      %v842 = vld [vmem:[%s351 + $0x33c] sm:$0xf]
      %v843 = vld [vmem:[%s351 + $0x340] sm:$0xf]
      %v844 = vld [vmem:[%s351 + $0x344] sm:$0xf]
      %v845 = vld [vmem:[%s351 + $0x348] sm:$0xf]
      %v846 = vld [vmem:[%s351 + $0x34c] sm:$0xf]
      %v847 = vld [vmem:[%s351 + $0x350] sm:$0xf]
      %v848 = vld [vmem:[%s351 + $0x354] sm:$0xf]
      %v849 = vld [vmem:[%s351 + $0x358] sm:$0xf]
      %v850 = vld [vmem:[%s351 + $0x35c] sm:$0xf]
      %v851 = vld [vmem:[%s351 + $0x360] sm:$0xf]
      %v852 = vld [vmem:[%s351 + $0x364] sm:$0xf]
      %v853 = vld [vmem:[%s351 + $0x368] sm:$0xf]
      %v854 = vld [vmem:[%s351 + $0x36c] sm:$0xf]
      %v855 = vld [vmem:[%s351 + $0x370] sm:$0xf]
      %v856 = vld [vmem:[%s351 + $0x374] sm:$0xf]
      %v857 = vld [vmem:[%s351 + $0x378] sm:$0xf]
      %v858 = vld [vmem:[%s351 + $0x37c] sm:$0xf]
      %v859 = vld [vmem:[%s351 + $0x380] sm:$0xf]
      %v860 = vld [vmem:[%s351 + $0x384] sm:$0xf]
      %v861 = vld [vmem:[%s351 + $0x388] sm:$0xf]
      %v862 = vld [vmem:[%s351 + $0x38c] sm:$0xf]
      %v863 = vld [vmem:[%s351 + $0x390] sm:$0xf]
      %v864 = vld [vmem:[%s351 + $0x394] sm:$0xf]
      %v865 = vld [vmem:[%s351 + $0x398] sm:$0xf]
      %v866 = vld [vmem:[%s351 + $0x39c] sm:$0xf]
      %v867 = vld [vmem:[%s351 + $0x3a0] sm:$0xf]
      %v868 = vld [vmem:[%s351 + $0x3a4] sm:$0xf]
      %v869 = vld [vmem:[%s351 + $0x3a8] sm:$0xf]
      %v870 = vld [vmem:[%s351 + $0x3ac] sm:$0xf]
      %v871 = vld [vmem:[%s351 + $0x3b0] sm:$0xf]
      %v872 = vld [vmem:[%s351 + $0x3b4] sm:$0xf]
      %v873 = vld [vmem:[%s351 + $0x3b8] sm:$0xf]
      %v874 = vld [vmem:[%s351 + $0x3bc] sm:$0xf]
      %v875 = vld [vmem:[%s351 + $0x3c0] sm:$0xf]
      %v876 = vld [vmem:[%s351 + $0x3c4] sm:$0xf]
      %v877 = vld [vmem:[%s351 + $0x3c8] sm:$0xf]
      %v878 = vld [vmem:[%s351 + $0x3cc] sm:$0xf]
      %v879 = vld [vmem:[%s351 + $0x3d0] sm:$0xf]
      %v880 = vld [vmem:[%s351 + $0x3d4] sm:$0xf]
      %v881 = vld [vmem:[%s351 + $0x3d8] sm:$0xf]
      %v882 = vld [vmem:[%s351 + $0x3dc] sm:$0xf]
      %v883 = vld [vmem:[%s351 + $0x3e0] sm:$0xf]
      %v884 = vld [vmem:[%s351 + $0x3e4] sm:$0xf]
      %v885 = vld [vmem:[%s351 + $0x3e8] sm:$0xf]
      %v886 = vld [vmem:[%s351 + $0x3ec] sm:$0xf]
      %v887 = vld [vmem:[%s351 + $0x3f0] sm:$0xf]
      %v888 = vld [vmem:[%s351 + $0x3f4] sm:$0xf]
      %v889 = vld [vmem:[%s351 + $0x3f8] sm:$0xf]
      %v890 = vld [vmem:[%s351 + $0x3fc] sm:$0xf]
      %v891 = vld [vmem:[%s351 + $0x400] sm:$0xf]
      %v892 = vld [vmem:[%s351 + $0x404] sm:$0xf]
      %v893 = vld [vmem:[%s351 + $0x408] sm:$0xf]
      %v894 = vld [vmem:[%s351 + $0x40c] sm:$0xf]
      %v895 = vld [vmem:[%s351 + $0x410] sm:$0xf]
      %v896 = vld [vmem:[%s351 + $0x414] sm:$0xf]
      %v897 = vld [vmem:[%s351 + $0x418] sm:$0xf]
      %v898 = vld [vmem:[%s351 + $0x41c] sm:$0xf]
      %v899 = vld [vmem:[%s351 + $0x420] sm:$0xf]
      %v900 = vld [vmem:[%s351 + $0x424] sm:$0xf]
      %v901 = vld [vmem:[%s351 + $0x428] sm:$0xf]
      %v902 = vld [vmem:[%s351 + $0x42c] sm:$0xf]
      %v903 = vld [vmem:[%s351 + $0x430] sm:$0xf]
      %v904 = vld [vmem:[%s351 + $0x434] sm:$0xf]
      %v905 = vld [vmem:[%s351 + $0x438] sm:$0xf]
      %v906 = vld [vmem:[%s351 + $0x43c] sm:$0xf]
      %v907 = vld [vmem:[%s351 + $0x440] sm:$0xf]
      %v908 = vld [vmem:[%s351 + $0x444] sm:$0xf]
      %v909 = vld [vmem:[%s351 + $0x448] sm:$0xf]
      %v910 = vld [vmem:[%s351 + $0x44c] sm:$0xf]
      %v911 = vld [vmem:[%s351 + $0x450] sm:$0xf]
      %v912 = vld [vmem:[%s351 + $0x454] sm:$0xf]
      %v913 = vld [vmem:[%s351 + $0x458] sm:$0xf]
      %v914 = vld [vmem:[%s351 + $0x45c] sm:$0xf]
      %v915 = vld [vmem:[%s351 + $0x460] sm:$0xf]
      %v916 = vld [vmem:[%s351 + $0x464] sm:$0xf]
      %v917 = vld [vmem:[%s351 + $0x468] sm:$0xf]
      %v918 = vld [vmem:[%s351 + $0x46c] sm:$0xf]
      %v919 = vld [vmem:[%s351 + $0x470] sm:$0xf]
      %v920 = vld [vmem:[%s351 + $0x474] sm:$0xf]
      %v921 = vld [vmem:[%s351 + $0x478] sm:$0xf]
      %v922 = vld [vmem:[%s351 + $0x47c] sm:$0xf]
      %v923 = vld [vmem:[%s351 + $0x480] sm:$0xf]
      %v924 = vld [vmem:[%s351 + $0x484] sm:$0xf]
      %v925 = vld [vmem:[%s351 + $0x488] sm:$0xf]
      %v926 = vld [vmem:[%s351 + $0x48c] sm:$0xf]
      %v927 = vld [vmem:[%s351 + $0x490] sm:$0xf]
      %v928 = vld [vmem:[%s351 + $0x494] sm:$0xf]
      %v929 = vld [vmem:[%s351 + $0x498] sm:$0xf]
      %v930 = vld [vmem:[%s351 + $0x49c] sm:$0xf]
      %v931 = vld [vmem:[%s351 + $0x4a0] sm:$0xf]
      %v932 = vld [vmem:[%s351 + $0x4a4] sm:$0xf]
      %v933 = vld [vmem:[%s351 + $0x4a8] sm:$0xf]
      %v934 = vld [vmem:[%s351 + $0x4ac] sm:$0xf]
      %v935 = vld [vmem:[%s351 + $0x4b0] sm:$0xf]
      %v936 = vld [vmem:[%s351 + $0x4b4] sm:$0xf]
      %v937 = vld [vmem:[%s351 + $0x4b8] sm:$0xf]
      %v938 = vld [vmem:[%s351 + $0x4bc] sm:$0xf]
      %v939 = vld [vmem:[%s351 + $0x4c0] sm:$0xf]
      %v940 = vld [vmem:[%s351 + $0x4c4] sm:$0xf]
      %v941 = vld [vmem:[%s351 + $0x4c8] sm:$0xf]
      %v942 = vld [vmem:[%s351 + $0x4cc] sm:$0xf]
      %v943 = vld [vmem:[%s351 + $0x4d0] sm:$0xf]
      %v944 = vld [vmem:[%s351 + $0x4d4] sm:$0xf]
      %v945 = vld [vmem:[%s351 + $0x4d8] sm:$0xf]
      %v946 = vld [vmem:[%s351 + $0x4dc] sm:$0xf]
      %v947 = vld [vmem:[%s351 + $0x4e0] sm:$0xf]
      %v948 = vld [vmem:[%s351 + $0x4e4] sm:$0xf]
      %v949 = vld [vmem:[%s351 + $0x4e8] sm:$0xf]
      %v950 = vld [vmem:[%s351 + $0x4ec] sm:$0xf]
      %v951 = vld [vmem:[%s351 + $0x4f0] sm:$0xf]
      %v952 = vld [vmem:[%s351 + $0x4f4] sm:$0xf]
      %v953 = vld [vmem:[%s351 + $0x4f8] sm:$0xf]
      %v954 = vld [vmem:[%s351 + $0x4fc] sm:$0xf]
      %v955 = vld [vmem:[%s351 + $0x500] sm:$0xf]
      %v956 = vld [vmem:[%s351 + $0x504] sm:$0xf]
      %v957 = vld [vmem:[%s351 + $0x508] sm:$0xf]
      %v958 = vld [vmem:[%s351 + $0x50c] sm:$0xf]
      %v959 = vld [vmem:[%s351 + $0x510] sm:$0xf]
      %v960 = vld [vmem:[%s351 + $0x514] sm:$0xf]
      %v961 = vld [vmem:[%s351 + $0x518] sm:$0xf]
      %v962 = vld [vmem:[%s351 + $0x51c] sm:$0xf]
      %v963 = vld [vmem:[%s351 + $0x520] sm:$0xf]
      %v964 = vld [vmem:[%s351 + $0x524] sm:$0xf]
      %v965 = vld [vmem:[%s351 + $0x528] sm:$0xf]
      %v966 = vld [vmem:[%s351 + $0x52c] sm:$0xf]
      %v967 = vld [vmem:[%s351 + $0x530] sm:$0xf]
      %v968 = vld [vmem:[%s351 + $0x534] sm:$0xf]
      %v969 = vld [vmem:[%s351 + $0x538] sm:$0xf]
      %v970 = vld [vmem:[%s351 + $0x53c] sm:$0xf]
      %v971 = vld [vmem:[%s351 + $0x540] sm:$0xf]
      %v972 = vld [vmem:[%s351 + $0x544] sm:$0xf]
      %v973 = vld [vmem:[%s351 + $0x548] sm:$0xf]
      %v974 = vld [vmem:[%s351 + $0x54c] sm:$0xf]
      %v975 = vld [vmem:[%s351 + $0x550] sm:$0xf]
      %v976 = vld [vmem:[%s351 + $0x554] sm:$0xf]
      %v977 = vld [vmem:[%s351 + $0x558] sm:$0xf]
      %v978 = vld [vmem:[%s351 + $0x55c] sm:$0xf]
      %v979 = vld [vmem:[%s351 + $0x560] sm:$0xf]
      %v980 = vld [vmem:[%s351 + $0x564] sm:$0xf]
      %v981 = vld [vmem:[%s351 + $0x568] sm:$0xf]
      %v982 = vld [vmem:[%s351 + $0x56c] sm:$0xf]
      %v983 = vld [vmem:[%s351 + $0x570] sm:$0xf]
      %v984 = vld [vmem:[%s351 + $0x574] sm:$0xf]
      %v985 = vld [vmem:[%s351 + $0x578] sm:$0xf]
      %v986 = vld [vmem:[%s351 + $0x57c] sm:$0xf]
      %v987 = vld [vmem:[%s351 + $0x580] sm:$0xf]
      %v988 = vld [vmem:[%s351 + $0x584] sm:$0xf]
      %v989 = vld [vmem:[%s351 + $0x588] sm:$0xf]
      %v990 = vld [vmem:[%s351 + $0x58c] sm:$0xf]
      %v991 = vld [vmem:[%s351 + $0x590] sm:$0xf]
      %v992 = vld [vmem:[%s351 + $0x594] sm:$0xf]
      %v993 = vld [vmem:[%s351 + $0x598] sm:$0xf]
      %v994 = vld [vmem:[%s351 + $0x59c] sm:$0xf]
      %v995 = vld [vmem:[%s351 + $0x5a0] sm:$0xf]
      %v996 = vld [vmem:[%s351 + $0x5a4] sm:$0xf]
      %v997 = vld [vmem:[%s351 + $0x5a8] sm:$0xf]
      %v998 = vld [vmem:[%s351 + $0x5ac] sm:$0xf]
      %v999 = vld [vmem:[%s351 + $0x5b0] sm:$0xf]
      %v1000 = vld [vmem:[%s351 + $0x5b4] sm:$0xf]
      %v1001 = vld [vmem:[%s351 + $0x5b8] sm:$0xf]
      %v1002 = vld [vmem:[%s351 + $0x5bc] sm:$0xf]
      %v1003 = vld [vmem:[%s351 + $0x5c0] sm:$0xf]
      %v1004 = vld [vmem:[%s351 + $0x5c4] sm:$0xf]
      %v1005 = vld [vmem:[%s351 + $0x5c8] sm:$0xf]
      %v1006 = vld [vmem:[%s351 + $0x5cc] sm:$0xf]
      %v1007 = vld [vmem:[%s351 + $0x5d0] sm:$0xf]
      %v1008 = vld [vmem:[%s351 + $0x5d4] sm:$0xf]
      %v1009 = vld [vmem:[%s351 + $0x5d8] sm:$0xf]
      %v1010 = vld [vmem:[%s351 + $0x5dc] sm:$0xf]
      %v1011 = vld [vmem:[%s351 + $0x5e0] sm:$0xf]
      %v1012 = vld [vmem:[%s351 + $0x5e4] sm:$0xf]
      %v1013 = vld [vmem:[%s351 + $0x5e8] sm:$0xf]
      %v1014 = vld [vmem:[%s351 + $0x5ec] sm:$0xf]
      %v1015 = vld [vmem:[%s351 + $0x5f0] sm:$0xf]
      %v1016 = vld [vmem:[%s351 + $0x5f4] sm:$0xf]
      %v1017 = vld [vmem:[%s351 + $0x5f8] sm:$0xf]
      %v1018 = vld [vmem:[%s351 + $0x5fc] sm:$0xf]
      %v1019 = vld [vmem:[%s351 + $0x600] sm:$0xf]
      %v1020 = vld [vmem:[%s351 + $0x604] sm:$0xf]
      %v1021 = vld [vmem:[%s351 + $0x608] sm:$0xf]
      %v1022 = vld [vmem:[%s351 + $0x60c] sm:$0xf]
      %v1023 = vld [vmem:[%s351 + $0x610] sm:$0xf]
      %v1024 = vld [vmem:[%s351 + $0x614] sm:$0xf]
      %v1025 = vld [vmem:[%s351 + $0x618] sm:$0xf]
      %v1026 = vld [vmem:[%s351 + $0x61c] sm:$0xf]
      %v1027 = vld [vmem:[%s351 + $0x620] sm:$0xf]
      %v1028 = vld [vmem:[%s351 + $0x624] sm:$0xf]
      %v1029 = vld [vmem:[%s351 + $0x628] sm:$0xf]
      %v1030 = vld [vmem:[%s351 + $0x62c] sm:$0xf]
      %v1031 = vld [vmem:[%s351 + $0x630] sm:$0xf]
      %v1032 = vld [vmem:[%s351 + $0x634] sm:$0xf]
      %v1033 = vld [vmem:[%s351 + $0x638] sm:$0xf]
      %v1034 = vld [vmem:[%s351 + $0x63c] sm:$0xf]
      %v1035 = vld [vmem:[%s351 + $0x640] sm:$0xf]
      %v1036 = vld [vmem:[%s351 + $0x644] sm:$0xf]
      %v1037 = vld [vmem:[%s351 + $0x648] sm:$0xf]
      %v1038 = vld [vmem:[%s351 + $0x64c] sm:$0xf]
      %v1039 = vld [vmem:[%s351 + $0x650] sm:$0xf]
      %v1040 = vld [vmem:[%s351 + $0x654] sm:$0xf]
      %v1041 = vld [vmem:[%s351 + $0x658] sm:$0xf]
      %v1042 = vld [vmem:[%s351 + $0x65c] sm:$0xf]
      %v1043 = vld [vmem:[%s351 + $0x660] sm:$0xf]
      %v1044 = vld [vmem:[%s351 + $0x664] sm:$0xf]
      %v1045 = vld [vmem:[%s351 + $0x668] sm:$0xf]
      %v1046 = vld [vmem:[%s351 + $0x66c] sm:$0xf]
      %v1047 = vld [vmem:[%s351 + $0x670] sm:$0xf]
      %v1048 = vld [vmem:[%s351 + $0x674] sm:$0xf]
      %v1049 = vld [vmem:[%s351 + $0x678] sm:$0xf]
      %v1050 = vld [vmem:[%s351 + $0x67c] sm:$0xf]
      %v1051 = vld [vmem:[%s351 + $0x680] sm:$0xf]
      %v1052 = vld [vmem:[%s351 + $0x684] sm:$0xf]
      %v1053 = vld [vmem:[%s351 + $0x688] sm:$0xf]
      %v1054 = vld [vmem:[%s351 + $0x68c] sm:$0xf]
      %v1055 = vld [vmem:[%s351 + $0x690] sm:$0xf]
      %v1056 = vld [vmem:[%s351 + $0x694] sm:$0xf]
      %v1057 = vld [vmem:[%s351 + $0x698] sm:$0xf]
      %v1058 = vld [vmem:[%s351 + $0x69c] sm:$0xf]
      %v1059 = vld [vmem:[%s351 + $0x6a0] sm:$0xf]
      %v1060 = vld [vmem:[%s351 + $0x6a4] sm:$0xf]
      %v1061 = vld [vmem:[%s351 + $0x6a8] sm:$0xf]
      %v1062 = vld [vmem:[%s351 + $0x6ac] sm:$0xf]
      %v1063 = vld [vmem:[%s351 + $0x6b0] sm:$0xf]
      %v1064 = vld [vmem:[%s351 + $0x6b4] sm:$0xf]
      %v1065 = vld [vmem:[%s351 + $0x6b8] sm:$0xf]
      %v1066 = vld [vmem:[%s351 + $0x6bc] sm:$0xf]
      %v1067 = vld [vmem:[%s351 + $0x6c0] sm:$0xf]
      %v1068 = vld [vmem:[%s351 + $0x6c4] sm:$0xf]
      %v1069 = vld [vmem:[%s351 + $0x6c8] sm:$0xf]
      %v1070 = vld [vmem:[%s351 + $0x6cc] sm:$0xf]
      %v1071 = vld [vmem:[%s351 + $0x6d0] sm:$0xf]
      %v1072 = vld [vmem:[%s351 + $0x6d4] sm:$0xf]
      %v1073 = vld [vmem:[%s351 + $0x6d8] sm:$0xf]
      %v1074 = vld [vmem:[%s351 + $0x6dc] sm:$0xf]
      %v1075 = vld [vmem:[%s351 + $0x6e0] sm:$0xf]
      %v1076 = vld [vmem:[%s351 + $0x6e4] sm:$0xf]
      %v1077 = vld [vmem:[%s351 + $0x6e8] sm:$0xf]
      %v1078 = vld [vmem:[%s351 + $0x6ec] sm:$0xf]
      %v1079 = vld [vmem:[%s351 + $0x6f0] sm:$0xf]
      %v1080 = vld [vmem:[%s351 + $0x6f4] sm:$0xf]
      %v1081 = vld [vmem:[%s351 + $0x6f8] sm:$0xf]
      %v1082 = vld [vmem:[%s351 + $0x6fc] sm:$0xf]
      %v1083 = vld [vmem:[%s351 + $0x700] sm:$0xf]
      %v1084 = vld [vmem:[%s351 + $0x704] sm:$0xf]
      %v1085 = vld [vmem:[%s351 + $0x708] sm:$0xf]
      %v1086 = vld [vmem:[%s351 + $0x70c] sm:$0xf]
      %v1087 = vld [vmem:[%s351 + $0x710] sm:$0xf]
      %v1088 = vld [vmem:[%s351 + $0x714] sm:$0xf]
      %v1089 = vld [vmem:[%s351 + $0x718] sm:$0xf]
      %v1090 = vld [vmem:[%s351 + $0x71c] sm:$0xf]
      %v1091 = vld [vmem:[%s351 + $0x720] sm:$0xf]
      %v1092 = vld [vmem:[%s351 + $0x724] sm:$0xf]
      %v1093 = vld [vmem:[%s351 + $0x728] sm:$0xf]
      %v1094 = vld [vmem:[%s351 + $0x72c] sm:$0xf]
      %v1095 = vld [vmem:[%s351 + $0x730] sm:$0xf]
      %v1096 = vld [vmem:[%s351 + $0x734] sm:$0xf]
      %v1097 = vld [vmem:[%s351 + $0x738] sm:$0xf]
      %v1098 = vld [vmem:[%s351 + $0x73c] sm:$0xf]
      %v1099 = vld [vmem:[%s351 + $0x740] sm:$0xf]
      %v1100 = vld [vmem:[%s351 + $0x744] sm:$0xf]
      %v1101 = vld [vmem:[%s351 + $0x748] sm:$0xf]
      %v1102 = vld [vmem:[%s351 + $0x74c] sm:$0xf]
      %v1103 = vld [vmem:[%s351 + $0x750] sm:$0xf]
      %v1104 = vld [vmem:[%s351 + $0x754] sm:$0xf]
      %v1105 = vld [vmem:[%s351 + $0x758] sm:$0xf]
      %v1106 = vld [vmem:[%s351 + $0x75c] sm:$0xf]
      %v1107 = vld [vmem:[%s351 + $0x760] sm:$0xf]
      %v1108 = vld [vmem:[%s351 + $0x764] sm:$0xf]
      %v1109 = vld [vmem:[%s351 + $0x768] sm:$0xf]
      %v1110 = vld [vmem:[%s351 + $0x76c] sm:$0xf]
      %v1111 = vld [vmem:[%s351 + $0x770] sm:$0xf]
      %v1112 = vld [vmem:[%s351 + $0x774] sm:$0xf]
      %v1113 = vld [vmem:[%s351 + $0x778] sm:$0xf]
      %v1114 = vld [vmem:[%s351 + $0x77c] sm:$0xf]
      %v1115 = vld [vmem:[%s351 + $0x780] sm:$0xf]
      %v1116 = vld [vmem:[%s351 + $0x784] sm:$0xf]
      %v1117 = vld [vmem:[%s351 + $0x788] sm:$0xf]
      %v1118 = vld [vmem:[%s351 + $0x78c] sm:$0xf]
      %v1119 = vld [vmem:[%s351 + $0x790] sm:$0xf]
      %v1120 = vld [vmem:[%s351 + $0x794] sm:$0xf]
      %v1121 = vld [vmem:[%s351 + $0x798] sm:$0xf]
      %v1122 = vld [vmem:[%s351 + $0x79c] sm:$0xf]
      %v1123 = vld [vmem:[%s351 + $0x7a0] sm:$0xf]
      %v1124 = vld [vmem:[%s351 + $0x7a4] sm:$0xf]
      %v1125 = vld [vmem:[%s351 + $0x7a8] sm:$0xf]
      %v1126 = vld [vmem:[%s351 + $0x7ac] sm:$0xf]
      %v1127 = vld [vmem:[%s351 + $0x7b0] sm:$0xf]
      %v1128 = vld [vmem:[%s351 + $0x7b4] sm:$0xf]
      %v1129 = vld [vmem:[%s351 + $0x7b8] sm:$0xf]
      %v1130 = vld [vmem:[%s351 + $0x7bc] sm:$0xf]
      %v1131 = vld [vmem:[%s354] sm:$0x1]
      %v1132 = vld [vmem:[#allocation2] sm:$0xff]
      %v1133 = vld [vmem:[#allocation2 + $0x8] sm:$0xff]
      %v1134 = vld [vmem:[#allocation2 + $0x10] sm:$0xff]
      %v1135 = vld [vmem:[#allocation2 + $0x18] sm:$0xff]
      %v1136 = vld [vmem:[#allocation2 + $0x20] sm:$0x1]
      %vm1137 = vsmask.f32 7424
      %v1139 = vshrl.u32 %v1132, 16
      %v1141 = vshll.u32 %v1132, 16
      %v1143 = vrot.slane %v1141, 1
      %v1144 = vor.u32 %v1139, %v1143
      %v1146 = vshll.u32 %v1133, 16
      %v1148 = vrot.slane %v1146, 1
      %v1149 = vsel %vm1137, %v1144, %v1148
      %v1150 = vshrl.u32 %v1133, 16
      %v1152 = vor.u32 %v1150, %v1148
      %v1154 = vshll.u32 %v1134, 16
      %v1156 = vrot.slane %v1154, 1
      %v1157 = vsel %vm1137, %v1152, %v1156
      %v1158 = vshrl.u32 %v1134, 16
      %v1160 = vor.u32 %v1158, %v1156
      %v1162 = vshll.u32 %v1135, 16
      %v1164 = vrot.slane %v1162, 1
      %v1165 = vsel %vm1137, %v1160, %v1164
      %v1166 = vshrl.u32 %v1135, 16
      %v1168 = vor.u32 %v1166, %v1164
      %v1170 = vshll.u32 %v1136, 16
      %v1172 = vrot.slane %v1170, 1
      %v1173 = vsel %vm1137, %v1168, %v1172
      %1178 = vst.msk [vmem:[#allocation4] sm:$0xff] %vm390, %v1149
      %1179 = vst.msk [vmem:[#allocation4 + $0xf8] sm:$0xff] %vm390, %v1157
      %1180 = vst.msk [vmem:[#allocation4 + $0x1f0] sm:$0xff] %vm390, %v1165
      %1181 = vst.msk [vmem:[#allocation4 + $0x2e8] sm:$0xff] %vm390, %v1173
      %v1182 = vld [vmem:[#allocation2] sm:$0xfe]
      %v1183 = vld [vmem:[#allocation2 + $0x8] sm:$0xff]
      %v1184 = vld [vmem:[#allocation2 + $0x10] sm:$0xff]
      %v1185 = vld [vmem:[#allocation2 + $0x18] sm:$0xff]
      %v1186 = vld [vmem:[#allocation2 + $0x20] sm:$0x1]
      %vm1192 = vcmask 1046528
      %v1193 = vrot.slane %v1182, 1
      %v1194 = vrot.slane %v1183, 1
      %v1195 = vsel %vm1192, %v1193, %v1194
      %v1196 = vrot.slane %v1184, 1
      %v1197 = vsel %vm1192, %v1194, %v1196
      %v1198 = vrot.slane %v1185, 1
      %v1199 = vsel %vm1192, %v1196, %v1198
      %v1200 = vrot.slane %v1186, 1
      %v1201 = vsel %vm1192, %v1198, %v1200
      %1206 = vst.msk [vmem:[#allocation4 + $0x8] sm:$0xff] %vm390, %v1195
      %1207 = vst.msk [vmem:[#allocation4 + $0x100] sm:$0xff] %vm390, %v1197
      %1208 = vst.msk [vmem:[#allocation4 + $0x1f8] sm:$0xff] %vm390, %v1199
      %1209 = vst.msk [vmem:[#allocation4 + $0x2f0] sm:$0xff] %vm390, %v1201
      %v1210 = vld [vmem:[#allocation2] sm:$0xfe]
      %v1211 = vld [vmem:[#allocation2 + $0x8] sm:$0xff]
      %v1212 = vld [vmem:[#allocation2 + $0x10] sm:$0xff]
      %v1213 = vld [vmem:[#allocation2 + $0x18] sm:$0xff]
      %v1214 = vld [vmem:[#allocation2 + $0x20] sm:$0x3]
      %vm1215 = vsmask.f32 6400
      %v1217 = vshrl.u32 %v1210, 16
      %v1219 = vrot.slane %v1217, 1
      %v1220 = vshll.u32 %v1210, 16
      %v1222 = vrot.slane %v1220, 2
      %v1223 = vor.u32 %v1219, %v1222
      %v1225 = vshrl.u32 %v1211, 16
      %v1227 = vrot.slane %v1225, 1
      %v1228 = vshll.u32 %v1211, 16
      %v1230 = vrot.slane %v1228, 2
      %v1231 = vor.u32 %v1227, %v1230
      %v1232 = vsel %vm1215, %v1223, %v1231
      %v1234 = vshrl.u32 %v1212, 16
      %v1236 = vrot.slane %v1234, 1
      %v1237 = vshll.u32 %v1212, 16
      %v1239 = vrot.slane %v1237, 2
      %v1240 = vor.u32 %v1236, %v1239
      %v1241 = vsel %vm1215, %v1231, %v1240
      %v1243 = vshrl.u32 %v1213, 16
      %v1245 = vrot.slane %v1243, 1
      %v1246 = vshll.u32 %v1213, 16
      %v1248 = vrot.slane %v1246, 2
      %v1249 = vor.u32 %v1245, %v1248
      %v1250 = vsel %vm1215, %v1240, %v1249
      %v1252 = vshrl.u32 %v1214, 16
      %v1254 = vrot.slane %v1252, 1
      %v1255 = vshll.u32 %v1214, 16
      %v1257 = vrot.slane %v1255, 2
      %v1258 = vor.u32 %v1254, %v1257
      %v1259 = vsel %vm1215, %v1249, %v1258
      %1264 = vst.msk [vmem:[#allocation4 + $0x10] sm:$0xff] %vm390, %v1232
      %1265 = vst.msk [vmem:[#allocation4 + $0x108] sm:$0xff] %vm390, %v1241
      %1266 = vst.msk [vmem:[#allocation4 + $0x200] sm:$0xff] %vm390, %v1250
      %1267 = vst.msk [vmem:[#allocation4 + $0x2f8] sm:$0xff] %vm390, %v1259
      %v1268 = vld [vmem:[#allocation2] sm:$0xfc]
      %v1269 = vld [vmem:[#allocation2 + $0x8] sm:$0xff]
      %v1270 = vld [vmem:[#allocation2 + $0x10] sm:$0xff]
      %v1271 = vld [vmem:[#allocation2 + $0x18] sm:$0xff]
      %v1272 = vld [vmem:[#allocation2 + $0x20] sm:$0x3]
      %vm1278 = vcmask 1045504
      %v1279 = vrot.slane %v1268, 2
      %v1280 = vrot.slane %v1269, 2
      %v1281 = vsel %vm1278, %v1279, %v1280
      %v1282 = vrot.slane %v1270, 2
      %v1283 = vsel %vm1278, %v1280, %v1282
      %v1284 = vrot.slane %v1271, 2
      %v1285 = vsel %vm1278, %v1282, %v1284
      %v1286 = vrot.slane %v1272, 2
      %v1287 = vsel %vm1278, %v1284, %v1286
      %1292 = vst.msk [vmem:[#allocation4 + $0x18] sm:$0xff] %vm390, %v1281
      %1293 = vst.msk [vmem:[#allocation4 + $0x110] sm:$0xff] %vm390, %v1283
      %1294 = vst.msk [vmem:[#allocation4 + $0x208] sm:$0xff] %vm390, %v1285
      %1295 = vst.msk [vmem:[#allocation4 + $0x300] sm:$0xff] %vm390, %v1287
      %v1296 = vld [vmem:[#allocation2] sm:$0xfc]
      %v1297 = vld [vmem:[#allocation2 + $0x8] sm:$0xff]
      %v1298 = vld [vmem:[#allocation2 + $0x10] sm:$0xff]
      %v1299 = vld [vmem:[#allocation2 + $0x18] sm:$0xff]
      %v1300 = vld [vmem:[#allocation2 + $0x20] sm:$0x7]
      %vm1301 = vsmask.f32 5376
      %v1303 = vshrl.u32 %v1296, 16
      %v1305 = vrot.slane %v1303, 2
      %v1306 = vshll.u32 %v1296, 16
      %v1308 = vrot.slane %v1306, 3
      %v1309 = vor.u32 %v1305, %v1308
      %v1311 = vshrl.u32 %v1297, 16
      %v1313 = vrot.slane %v1311, 2
      %v1314 = vshll.u32 %v1297, 16
      %v1316 = vrot.slane %v1314, 3
      %v1317 = vor.u32 %v1313, %v1316
      %v1318 = vsel %vm1301, %v1309, %v1317
      %v1320 = vshrl.u32 %v1298, 16
      %v1322 = vrot.slane %v1320, 2
      %v1323 = vshll.u32 %v1298, 16
      %v1325 = vrot.slane %v1323, 3
      %v1326 = vor.u32 %v1322, %v1325
      %v1327 = vsel %vm1301, %v1317, %v1326
      %v1329 = vshrl.u32 %v1299, 16
      %v1331 = vrot.slane %v1329, 2
      %v1332 = vshll.u32 %v1299, 16
      %v1334 = vrot.slane %v1332, 3
      %v1335 = vor.u32 %v1331, %v1334
      %v1336 = vsel %vm1301, %v1326, %v1335
      %v1338 = vshrl.u32 %v1300, 16
      %v1340 = vrot.slane %v1338, 2
      %v1341 = vshll.u32 %v1300, 16
      %v1343 = vrot.slane %v1341, 3
      %v1344 = vor.u32 %v1340, %v1343
      %v1345 = vsel %vm1301, %v1335, %v1344
      %1350 = vst.msk [vmem:[#allocation4 + $0x20] sm:$0xff] %vm390, %v1318
      %1351 = vst.msk [vmem:[#allocation4 + $0x118] sm:$0xff] %vm390, %v1327
      %1352 = vst.msk [vmem:[#allocation4 + $0x210] sm:$0xff] %vm390, %v1336
      %1353 = vst.msk [vmem:[#allocation4 + $0x308] sm:$0xff] %vm390, %v1345
      %v1354 = vld [vmem:[#allocation2] sm:$0xf8]
      %v1355 = vld [vmem:[#allocation2 + $0x8] sm:$0xff]
      %v1356 = vld [vmem:[#allocation2 + $0x10] sm:$0xff]
      %v1357 = vld [vmem:[#allocation2 + $0x18] sm:$0xff]
      %v1358 = vld [vmem:[#allocation2 + $0x20] sm:$0x7]
      %vm1364 = vcmask 1044480
      %v1365 = vrot.slane %v1354, 3
      %v1366 = vrot.slane %v1355, 3
      %v1367 = vsel %vm1364, %v1365, %v1366
      %v1368 = vrot.slane %v1356, 3
      %v1369 = vsel %vm1364, %v1366, %v1368
      %v1370 = vrot.slane %v1357, 3
      %v1371 = vsel %vm1364, %v1368, %v1370
      %v1372 = vrot.slane %v1358, 3
      %v1373 = vsel %vm1364, %v1370, %v1372
      %1378 = vst.msk [vmem:[#allocation4 + $0x28] sm:$0xff] %vm390, %v1367
      %1379 = vst.msk [vmem:[#allocation4 + $0x120] sm:$0xff] %vm390, %v1369
      %1380 = vst.msk [vmem:[#allocation4 + $0x218] sm:$0xff] %vm390, %v1371
      %1381 = vst.msk [vmem:[#allocation4 + $0x310] sm:$0xff] %vm390, %v1373
      %v1382 = vld [vmem:[#allocation2] sm:$0xf8]
      %v1383 = vld [vmem:[#allocation2 + $0x8] sm:$0xff]
      %v1384 = vld [vmem:[#allocation2 + $0x10] sm:$0xff]
      %v1385 = vld [vmem:[#allocation2 + $0x18] sm:$0xff]
      %v1386 = vld [vmem:[#allocation2 + $0x20] sm:$0xf]
      %vm1387 = vsmask.f32 4352
      %v1389 = vshrl.u32 %v1382, 16
      %v1391 = vrot.slane %v1389, 3
      %v1392 = vshll.u32 %v1382, 16
      %v1394 = vrot.slane %v1392, 4
      %v1395 = vor.u32 %v1391, %v1394
      %v1397 = vshrl.u32 %v1383, 16
      %v1399 = vrot.slane %v1397, 3
      %v1400 = vshll.u32 %v1383, 16
      %v1402 = vrot.slane %v1400, 4
      %v1403 = vor.u32 %v1399, %v1402
      %v1404 = vsel %vm1387, %v1395, %v1403
      %v1406 = vshrl.u32 %v1384, 16
      %v1408 = vrot.slane %v1406, 3
      %v1409 = vshll.u32 %v1384, 16
      %v1411 = vrot.slane %v1409, 4
      %v1412 = vor.u32 %v1408, %v1411
      %v1413 = vsel %vm1387, %v1403, %v1412
      %v1415 = vshrl.u32 %v1385, 16
      %v1417 = vrot.slane %v1415, 3
      %v1418 = vshll.u32 %v1385, 16
      %v1420 = vrot.slane %v1418, 4
      %v1421 = vor.u32 %v1417, %v1420
      %v1422 = vsel %vm1387, %v1412, %v1421
      %v1424 = vshrl.u32 %v1386, 16
      %v1426 = vrot.slane %v1424, 3
      %v1427 = vshll.u32 %v1386, 16
      %v1429 = vrot.slane %v1427, 4
      %v1430 = vor.u32 %v1426, %v1429
      %v1431 = vsel %vm1387, %v1421, %v1430
      %1436 = vst.msk [vmem:[#allocation4 + $0x30] sm:$0xff] %vm390, %v1404
      %1437 = vst.msk [vmem:[#allocation4 + $0x128] sm:$0xff] %vm390, %v1413
      %1438 = vst.msk [vmem:[#allocation4 + $0x220] sm:$0xff] %vm390, %v1422
      %1439 = vst.msk [vmem:[#allocation4 + $0x318] sm:$0xff] %vm390, %v1431
      %v1440 = vld [vmem:[#allocation2] sm:$0xf0]
      %v1441 = vld [vmem:[#allocation2 + $0x8] sm:$0xff]
      %v1442 = vld [vmem:[#allocation2 + $0x10] sm:$0xff]
      %v1443 = vld [vmem:[#allocation2 + $0x18] sm:$0xff]
      %v1444 = vld [vmem:[#allocation2 + $0x20] sm:$0xf]
      %vm1450 = vcmask 1043456
      %v1451 = vrot.slane %v1440, 4
      %v1452 = vrot.slane %v1441, 4
      %v1453 = vsel %vm1450, %v1451, %v1452
      %v1454 = vrot.slane %v1442, 4
      %v1455 = vsel %vm1450, %v1452, %v1454
      %v1456 = vrot.slane %v1443, 4
      %v1457 = vsel %vm1450, %v1454, %v1456
      %v1458 = vrot.slane %v1444, 4
      %v1459 = vsel %vm1450, %v1456, %v1458
      %1464 = vst.msk [vmem:[#allocation4 + $0x38] sm:$0xff] %vm390, %v1453
      %1465 = vst.msk [vmem:[#allocation4 + $0x130] sm:$0xff] %vm390, %v1455
      %1466 = vst.msk [vmem:[#allocation4 + $0x228] sm:$0xff] %vm390, %v1457
      %1467 = vst.msk [vmem:[#allocation4 + $0x320] sm:$0xff] %vm390, %v1459
      %v1468 = vld [vmem:[#allocation2] sm:$0xf0]
      %v1469 = vld [vmem:[#allocation2 + $0x8] sm:$0xff]
      %v1470 = vld [vmem:[#allocation2 + $0x10] sm:$0xff]
      %v1471 = vld [vmem:[#allocation2 + $0x18] sm:$0xff]
      %v1472 = vld [vmem:[#allocation2 + $0x20] sm:$0x1f]
      %vm1473 = vsmask.f32 3328
      %v1475 = vshrl.u32 %v1468, 16
      %v1477 = vrot.slane %v1475, 4
      %v1478 = vshll.u32 %v1468, 16
      %v1480 = vrot.slane %v1478, 5
      %v1481 = vor.u32 %v1477, %v1480
      %v1483 = vshrl.u32 %v1469, 16
      %v1485 = vrot.slane %v1483, 4
      %v1486 = vshll.u32 %v1469, 16
      %v1488 = vrot.slane %v1486, 5
      %v1489 = vor.u32 %v1485, %v1488
      %v1490 = vsel %vm1473, %v1481, %v1489
      %v1492 = vshrl.u32 %v1470, 16
      %v1494 = vrot.slane %v1492, 4
      %v1495 = vshll.u32 %v1470, 16
      %v1497 = vrot.slane %v1495, 5
      %v1498 = vor.u32 %v1494, %v1497
      %v1499 = vsel %vm1473, %v1489, %v1498
      %v1501 = vshrl.u32 %v1471, 16
      %v1503 = vrot.slane %v1501, 4
      %v1504 = vshll.u32 %v1471, 16
      %v1506 = vrot.slane %v1504, 5
      %v1507 = vor.u32 %v1503, %v1506
      %v1508 = vsel %vm1473, %v1498, %v1507
      %v1510 = vshrl.u32 %v1472, 16
      %v1512 = vrot.slane %v1510, 4
      %v1513 = vshll.u32 %v1472, 16
      %v1515 = vrot.slane %v1513, 5
      %v1516 = vor.u32 %v1512, %v1515
      %v1517 = vsel %vm1473, %v1507, %v1516
      %1522 = vst.msk [vmem:[#allocation4 + $0x40] sm:$0xff] %vm390, %v1490
      %1523 = vst.msk [vmem:[#allocation4 + $0x138] sm:$0xff] %vm390, %v1499
      %1524 = vst.msk [vmem:[#allocation4 + $0x230] sm:$0xff] %vm390, %v1508
      %1525 = vst.msk [vmem:[#allocation4 + $0x328] sm:$0xff] %vm390, %v1517
      %v1526 = vld [vmem:[#allocation2] sm:$0xe0]
      %v1527 = vld [vmem:[#allocation2 + $0x8] sm:$0xff]
      %v1528 = vld [vmem:[#allocation2 + $0x10] sm:$0xff]
      %v1529 = vld [vmem:[#allocation2 + $0x18] sm:$0xff]
      %v1530 = vld [vmem:[#allocation2 + $0x20] sm:$0x1f]
      %vm1536 = vcmask 1042432
      %v1537 = vrot.slane %v1526, 5
      %v1538 = vrot.slane %v1527, 5
      %v1539 = vsel %vm1536, %v1537, %v1538
      %v1540 = vrot.slane %v1528, 5
      %v1541 = vsel %vm1536, %v1538, %v1540
      %v1542 = vrot.slane %v1529, 5
      %v1543 = vsel %vm1536, %v1540, %v1542
      %v1544 = vrot.slane %v1530, 5
      %v1545 = vsel %vm1536, %v1542, %v1544
      %1550 = vst.msk [vmem:[#allocation4 + $0x48] sm:$0xff] %vm390, %v1539
      %1551 = vst.msk [vmem:[#allocation4 + $0x140] sm:$0xff] %vm390, %v1541
      %1552 = vst.msk [vmem:[#allocation4 + $0x238] sm:$0xff] %vm390, %v1543
      %1553 = vst.msk [vmem:[#allocation4 + $0x330] sm:$0xff] %vm390, %v1545
      %v1554 = vld [vmem:[#allocation2] sm:$0xe0]
      %v1555 = vld [vmem:[#allocation2 + $0x8] sm:$0xff]
      %v1556 = vld [vmem:[#allocation2 + $0x10] sm:$0xff]
      %v1557 = vld [vmem:[#allocation2 + $0x18] sm:$0xff]
      %v1558 = vld [vmem:[#allocation2 + $0x20] sm:$0x3f]
      %vm1559 = vsmask.f32 2304
      %v1561 = vshrl.u32 %v1554, 16
      %v1563 = vrot.slane %v1561, 5
      %v1564 = vshll.u32 %v1554, 16
      %v1566 = vrot.slane %v1564, 6
      %v1567 = vor.u32 %v1563, %v1566
      %v1569 = vshrl.u32 %v1555, 16
      %v1571 = vrot.slane %v1569, 5
      %v1572 = vshll.u32 %v1555, 16
      %v1574 = vrot.slane %v1572, 6
      %v1575 = vor.u32 %v1571, %v1574
      %v1576 = vsel %vm1559, %v1567, %v1575
      %v1578 = vshrl.u32 %v1556, 16
      %v1580 = vrot.slane %v1578, 5
      %v1581 = vshll.u32 %v1556, 16
      %v1583 = vrot.slane %v1581, 6
      %v1584 = vor.u32 %v1580, %v1583
      %v1585 = vsel %vm1559, %v1575, %v1584
      %v1587 = vshrl.u32 %v1557, 16
      %v1589 = vrot.slane %v1587, 5
      %v1590 = vshll.u32 %v1557, 16
      %v1592 = vrot.slane %v1590, 6
      %v1593 = vor.u32 %v1589, %v1592
      %v1594 = vsel %vm1559, %v1584, %v1593
      %v1596 = vshrl.u32 %v1558, 16
      %v1598 = vrot.slane %v1596, 5
      %v1599 = vshll.u32 %v1558, 16
      %v1601 = vrot.slane %v1599, 6
      %v1602 = vor.u32 %v1598, %v1601
      %v1603 = vsel %vm1559, %v1593, %v1602
      %1608 = vst.msk [vmem:[#allocation4 + $0x50] sm:$0xff] %vm390, %v1576
      %1609 = vst.msk [vmem:[#allocation4 + $0x148] sm:$0xff] %vm390, %v1585
      %1610 = vst.msk [vmem:[#allocation4 + $0x240] sm:$0xff] %vm390, %v1594
      %1611 = vst.msk [vmem:[#allocation4 + $0x338] sm:$0xff] %vm390, %v1603
      %v1612 = vld [vmem:[#allocation2] sm:$0xc0]
      %v1613 = vld [vmem:[#allocation2 + $0x8] sm:$0xff]
      %v1614 = vld [vmem:[#allocation2 + $0x10] sm:$0xff]
      %v1615 = vld [vmem:[#allocation2 + $0x18] sm:$0xff]
      %v1616 = vld [vmem:[#allocation2 + $0x20] sm:$0x3f]
      %vm1622 = vcmask 1041408
      %v1623 = vrot.slane %v1612, 6
      %v1624 = vrot.slane %v1613, 6
      %v1625 = vsel %vm1622, %v1623, %v1624
      %v1626 = vrot.slane %v1614, 6
      %v1627 = vsel %vm1622, %v1624, %v1626
      %v1628 = vrot.slane %v1615, 6
      %v1629 = vsel %vm1622, %v1626, %v1628
      %v1630 = vrot.slane %v1616, 6
      %v1631 = vsel %vm1622, %v1628, %v1630
      %1636 = vst.msk [vmem:[#allocation4 + $0x58] sm:$0xff] %vm390, %v1625
      %1637 = vst.msk [vmem:[#allocation4 + $0x150] sm:$0xff] %vm390, %v1627
      %1638 = vst.msk [vmem:[#allocation4 + $0x248] sm:$0xff] %vm390, %v1629
      %1639 = vst.msk [vmem:[#allocation4 + $0x340] sm:$0xff] %vm390, %v1631
      %v1640 = vld [vmem:[#allocation2] sm:$0xc0]
      %v1641 = vld [vmem:[#allocation2 + $0x8] sm:$0xff]
      %v1642 = vld [vmem:[#allocation2 + $0x10] sm:$0xff]
      %v1643 = vld [vmem:[#allocation2 + $0x18] sm:$0xff]
      %v1644 = vld [vmem:[#allocation2 + $0x20] sm:$0x7f]
      %vm1645 = vsmask.f32 1280
      %v1647 = vshrl.u32 %v1640, 16
      %v1649 = vrot.slane %v1647, 6
      %v1650 = vshll.u32 %v1640, 16
      %v1652 = vrot.slane %v1650, 7
      %v1653 = vor.u32 %v1649, %v1652
      %v1655 = vshrl.u32 %v1641, 16
      %v1657 = vrot.slane %v1655, 6
      %v1658 = vshll.u32 %v1641, 16
      %v1660 = vrot.slane %v1658, 7
      %v1661 = vor.u32 %v1657, %v1660
      %v1662 = vsel %vm1645, %v1653, %v1661
      %v1664 = vshrl.u32 %v1642, 16
      %v1666 = vrot.slane %v1664, 6
      %v1667 = vshll.u32 %v1642, 16
      %v1669 = vrot.slane %v1667, 7
      %v1670 = vor.u32 %v1666, %v1669
      %v1671 = vsel %vm1645, %v1661, %v1670
      %v1673 = vshrl.u32 %v1643, 16
      %v1675 = vrot.slane %v1673, 6
      %v1676 = vshll.u32 %v1643, 16
      %v1678 = vrot.slane %v1676, 7
      %v1679 = vor.u32 %v1675, %v1678
      %v1680 = vsel %vm1645, %v1670, %v1679
      %v1682 = vshrl.u32 %v1644, 16
      %v1684 = vrot.slane %v1682, 6
      %v1685 = vshll.u32 %v1644, 16
      %v1687 = vrot.slane %v1685, 7
      %v1688 = vor.u32 %v1684, %v1687
      %v1689 = vsel %vm1645, %v1679, %v1688
      %1694 = vst.msk [vmem:[#allocation4 + $0x60] sm:$0xff] %vm390, %v1662
      %1695 = vst.msk [vmem:[#allocation4 + $0x158] sm:$0xff] %vm390, %v1671
      %1696 = vst.msk [vmem:[#allocation4 + $0x250] sm:$0xff] %vm390, %v1680
      %1697 = vst.msk [vmem:[#allocation4 + $0x348] sm:$0xff] %vm390, %v1689
      %v1698 = vld [vmem:[#allocation2] sm:$0x80]
      %v1699 = vld [vmem:[#allocation2 + $0x8] sm:$0xff]
      %v1700 = vld [vmem:[#allocation2 + $0x10] sm:$0xff]
      %v1701 = vld [vmem:[#allocation2 + $0x18] sm:$0xff]
      %v1702 = vld [vmem:[#allocation2 + $0x20] sm:$0x7f]
      %vm1708 = vcmask 1040384
      %v1709 = vrot.slane %v1698, 7
      %v1710 = vrot.slane %v1699, 7
      %v1711 = vsel %vm1708, %v1709, %v1710
      %v1712 = vrot.slane %v1700, 7
      %v1713 = vsel %vm1708, %v1710, %v1712
      %v1714 = vrot.slane %v1701, 7
      %v1715 = vsel %vm1708, %v1712, %v1714
      %v1716 = vrot.slane %v1702, 7
      %v1717 = vsel %vm1708, %v1714, %v1716
      %1722 = vst.msk [vmem:[#allocation4 + $0x68] sm:$0xff] %vm390, %v1711
      %1723 = vst.msk [vmem:[#allocation4 + $0x160] sm:$0xff] %vm390, %v1713
      %1724 = vst.msk [vmem:[#allocation4 + $0x258] sm:$0xff] %vm390, %v1715
      %1725 = vst.msk [vmem:[#allocation4 + $0x350] sm:$0xff] %vm390, %v1717
      %v1726 = vld [vmem:[#allocation2] sm:$0x80]
      %v1727 = vld [vmem:[#allocation2 + $0x8] sm:$0xff]
      %v1728 = vld [vmem:[#allocation2 + $0x10] sm:$0xff]
      %v1729 = vld [vmem:[#allocation2 + $0x18] sm:$0xff]
      %v1730 = vld [vmem:[#allocation2 + $0x20] sm:$0xff]
      %vm1731 = vsmask.f32 256
      %v1733 = vshrl.u32 %v1726, 16
      %v1735 = vrot.slane %v1733, 7
      %v1737 = vshrl.u32 %v1727, 16
      %v1739 = vrot.slane %v1737, 7
      %v1740 = vshll.u32 %v1727, 16
      %v1742 = vor.u32 %v1739, %v1740
      %v1743 = vsel %vm1731, %v1735, %v1742
      %v1745 = vshrl.u32 %v1728, 16
      %v1747 = vrot.slane %v1745, 7
      %v1748 = vshll.u32 %v1728, 16
      %v1750 = vor.u32 %v1747, %v1748
      %v1751 = vsel %vm1731, %v1739, %v1750
      %v1753 = vshrl.u32 %v1729, 16
      %v1755 = vrot.slane %v1753, 7
      %v1756 = vshll.u32 %v1729, 16
      %v1758 = vor.u32 %v1755, %v1756
      %v1759 = vsel %vm1731, %v1747, %v1758
      %v1761 = vshrl.u32 %v1730, 16
      %v1763 = vrot.slane %v1761, 7
      %v1764 = vshll.u32 %v1730, 16
      %v1766 = vor.u32 %v1763, %v1764
      %v1767 = vsel %vm1731, %v1755, %v1766
      %1772 = vst.msk [vmem:[#allocation4 + $0x70] sm:$0xff] %vm390, %v1743
      %1773 = vst.msk [vmem:[#allocation4 + $0x168] sm:$0xff] %vm390, %v1751
      %1774 = vst.msk [vmem:[#allocation4 + $0x260] sm:$0xff] %vm390, %v1759
      %1775 = vst.msk [vmem:[#allocation4 + $0x358] sm:$0xff] %vm390, %v1767
      %v1776 = vld [vmem:[#allocation2 + $0x8] sm:$0xff]
      %v1777 = vld [vmem:[#allocation2 + $0x10] sm:$0xff]
      %v1778 = vld [vmem:[#allocation2 + $0x18] sm:$0xff]
      %v1779 = vld [vmem:[#allocation2 + $0x20] sm:$0xff]
      %1780 = vst.msk [vmem:[#allocation4 + $0x78] sm:$0xff] %vm390, %v1776
      %1781 = vst.msk [vmem:[#allocation4 + $0x170] sm:$0xff] %vm390, %v1777
      %1782 = vst.msk [vmem:[#allocation4 + $0x268] sm:$0xff] %vm390, %v1778
      %1783 = vst.msk [vmem:[#allocation4 + $0x360] sm:$0xff] %vm390, %v1779
      %v1784 = vld [vmem:[#allocation2 + $0x8] sm:$0xff]
      %v1785 = vld [vmem:[#allocation2 + $0x10] sm:$0xff]
      %v1786 = vld [vmem:[#allocation2 + $0x18] sm:$0xff]
      %v1787 = vld [vmem:[#allocation2 + $0x20] sm:$0xff]
      %v1788 = vld [vmem:[#allocation2 + $0x28] sm:$0x1]
      %v1790 = vshrl.u32 %v1784, 16
      %v1792 = vshll.u32 %v1784, 16
      %v1794 = vrot.slane %v1792, 1
      %v1795 = vor.u32 %v1790, %v1794
      %v1797 = vshll.u32 %v1785, 16
      %v1799 = vrot.slane %v1797, 1
      %v1800 = vsel %vm1137, %v1795, %v1799
      %v1801 = vshrl.u32 %v1785, 16
      %v1803 = vor.u32 %v1801, %v1799
      %v1805 = vshll.u32 %v1786, 16
      %v1807 = vrot.slane %v1805, 1
      %v1808 = vsel %vm1137, %v1803, %v1807
      %v1809 = vshrl.u32 %v1786, 16
      %v1811 = vor.u32 %v1809, %v1807
      %v1813 = vshll.u32 %v1787, 16
      %v1815 = vrot.slane %v1813, 1
      %v1816 = vsel %vm1137, %v1811, %v1815
      %v1817 = vshrl.u32 %v1787, 16
      %v1819 = vor.u32 %v1817, %v1815
      %v1821 = vshll.u32 %v1788, 16
      %v1823 = vrot.slane %v1821, 1
      %v1824 = vsel %vm1137, %v1819, %v1823
      %1829 = vst.msk [vmem:[#allocation4 + $0x80] sm:$0xff] %vm390, %v1800
      %1830 = vst.msk [vmem:[#allocation4 + $0x178] sm:$0xff] %vm390, %v1808
      %1831 = vst.msk [vmem:[#allocation4 + $0x270] sm:$0xff] %vm390, %v1816
      %1832 = vst.msk [vmem:[#allocation4 + $0x368] sm:$0xff] %vm390, %v1824
      %v1833 = vld [vmem:[#allocation2 + $0x8] sm:$0xfe]
      %v1834 = vld [vmem:[#allocation2 + $0x10] sm:$0xff]
      %v1835 = vld [vmem:[#allocation2 + $0x18] sm:$0xff]
      %v1836 = vld [vmem:[#allocation2 + $0x20] sm:$0xff]
      %v1837 = vld [vmem:[#allocation2 + $0x28] sm:$0x1]
      %v1843 = vrot.slane %v1833, 1
      %v1844 = vrot.slane %v1834, 1
      %v1845 = vsel %vm1192, %v1843, %v1844
      %v1846 = vrot.slane %v1835, 1
      %v1847 = vsel %vm1192, %v1844, %v1846
      %v1848 = vrot.slane %v1836, 1
      %v1849 = vsel %vm1192, %v1846, %v1848
      %v1850 = vrot.slane %v1837, 1
      %v1851 = vsel %vm1192, %v1848, %v1850
      %1856 = vst.msk [vmem:[#allocation4 + $0x88] sm:$0xff] %vm390, %v1845
      %1857 = vst.msk [vmem:[#allocation4 + $0x180] sm:$0xff] %vm390, %v1847
      %1858 = vst.msk [vmem:[#allocation4 + $0x278] sm:$0xff] %vm390, %v1849
      %1859 = vst.msk [vmem:[#allocation4 + $0x370] sm:$0xff] %vm390, %v1851
      %v1860 = vld [vmem:[#allocation2 + $0x8] sm:$0xfe]
      %v1861 = vld [vmem:[#allocation2 + $0x10] sm:$0xff]
      %v1862 = vld [vmem:[#allocation2 + $0x18] sm:$0xff]
      %v1863 = vld [vmem:[#allocation2 + $0x20] sm:$0xff]
      %v1864 = vld [vmem:[#allocation2 + $0x28] sm:$0x3]
      %v1866 = vshrl.u32 %v1860, 16
      %v1868 = vrot.slane %v1866, 1
      %v1869 = vshll.u32 %v1860, 16
      %v1871 = vrot.slane %v1869, 2
      %v1872 = vor.u32 %v1868, %v1871
      %v1874 = vshrl.u32 %v1861, 16
      %v1876 = vrot.slane %v1874, 1
      %v1877 = vshll.u32 %v1861, 16
      %v1879 = vrot.slane %v1877, 2
      %v1880 = vor.u32 %v1876, %v1879
      %v1881 = vsel %vm1215, %v1872, %v1880
      %v1883 = vshrl.u32 %v1862, 16
      %v1885 = vrot.slane %v1883, 1
      %v1886 = vshll.u32 %v1862, 16
      %v1888 = vrot.slane %v1886, 2
      %v1889 = vor.u32 %v1885, %v1888
      %v1890 = vsel %vm1215, %v1880, %v1889
      %v1892 = vshrl.u32 %v1863, 16
      %v1894 = vrot.slane %v1892, 1
      %v1895 = vshll.u32 %v1863, 16
      %v1897 = vrot.slane %v1895, 2
      %v1898 = vor.u32 %v1894, %v1897
      %v1899 = vsel %vm1215, %v1889, %v1898
      %v1901 = vshrl.u32 %v1864, 16
      %v1903 = vrot.slane %v1901, 1
      %v1904 = vshll.u32 %v1864, 16
      %v1906 = vrot.slane %v1904, 2
      %v1907 = vor.u32 %v1903, %v1906
      %v1908 = vsel %vm1215, %v1898, %v1907
      %1913 = vst.msk [vmem:[#allocation4 + $0x90] sm:$0xff] %vm390, %v1881
      %1914 = vst.msk [vmem:[#allocation4 + $0x188] sm:$0xff] %vm390, %v1890
      %1915 = vst.msk [vmem:[#allocation4 + $0x280] sm:$0xff] %vm390, %v1899
      %1916 = vst.msk [vmem:[#allocation4 + $0x378] sm:$0xff] %vm390, %v1908
      %v1917 = vld [vmem:[#allocation2 + $0x8] sm:$0xfc]
      %v1918 = vld [vmem:[#allocation2 + $0x10] sm:$0xff]
      %v1919 = vld [vmem:[#allocation2 + $0x18] sm:$0xff]
      %v1920 = vld [vmem:[#allocation2 + $0x20] sm:$0xff]
      %v1921 = vld [vmem:[#allocation2 + $0x28] sm:$0x3]
      %v1927 = vrot.slane %v1917, 2
      %v1928 = vrot.slane %v1918, 2
      %v1929 = vsel %vm1278, %v1927, %v1928
      %v1930 = vrot.slane %v1919, 2
      %v1931 = vsel %vm1278, %v1928, %v1930
      %v1932 = vrot.slane %v1920, 2
      %v1933 = vsel %vm1278, %v1930, %v1932
      %v1934 = vrot.slane %v1921, 2
      %v1935 = vsel %vm1278, %v1932, %v1934
      %1940 = vst.msk [vmem:[#allocation4 + $0x98] sm:$0xff] %vm390, %v1929
      %1941 = vst.msk [vmem:[#allocation4 + $0x190] sm:$0xff] %vm390, %v1931
      %1942 = vst.msk [vmem:[#allocation4 + $0x288] sm:$0xff] %vm390, %v1933
      %1943 = vst.msk [vmem:[#allocation4 + $0x380] sm:$0xff] %vm390, %v1935
      %v1944 = vld [vmem:[#allocation2 + $0x8] sm:$0xfc]
      %v1945 = vld [vmem:[#allocation2 + $0x10] sm:$0xff]
      %v1946 = vld [vmem:[#allocation2 + $0x18] sm:$0xff]
      %v1947 = vld [vmem:[#allocation2 + $0x20] sm:$0xff]
      %v1948 = vld [vmem:[#allocation2 + $0x28] sm:$0x7]
      %v1950 = vshrl.u32 %v1944, 16
      %v1952 = vrot.slane %v1950, 2
      %v1953 = vshll.u32 %v1944, 16
      %v1955 = vrot.slane %v1953, 3
      %v1956 = vor.u32 %v1952, %v1955
      %v1958 = vshrl.u32 %v1945, 16
      %v1960 = vrot.slane %v1958, 2
      %v1961 = vshll.u32 %v1945, 16
      %v1963 = vrot.slane %v1961, 3
      %v1964 = vor.u32 %v1960, %v1963
      %v1965 = vsel %vm1301, %v1956, %v1964
      %v1967 = vshrl.u32 %v1946, 16
      %v1969 = vrot.slane %v1967, 2
      %v1970 = vshll.u32 %v1946, 16
      %v1972 = vrot.slane %v1970, 3
      %v1973 = vor.u32 %v1969, %v1972
      %v1974 = vsel %vm1301, %v1964, %v1973
      %v1976 = vshrl.u32 %v1947, 16
      %v1978 = vrot.slane %v1976, 2
      %v1979 = vshll.u32 %v1947, 16
      %v1981 = vrot.slane %v1979, 3
      %v1982 = vor.u32 %v1978, %v1981
      %v1983 = vsel %vm1301, %v1973, %v1982
      %v1985 = vshrl.u32 %v1948, 16
      %v1987 = vrot.slane %v1985, 2
      %v1988 = vshll.u32 %v1948, 16
      %v1990 = vrot.slane %v1988, 3
      %v1991 = vor.u32 %v1987, %v1990
      %v1992 = vsel %vm1301, %v1982, %v1991
      %1997 = vst.msk [vmem:[#allocation4 + $0xa0] sm:$0xff] %vm390, %v1965
      %1998 = vst.msk [vmem:[#allocation4 + $0x198] sm:$0xff] %vm390, %v1974
      %1999 = vst.msk [vmem:[#allocation4 + $0x290] sm:$0xff] %vm390, %v1983
      %2000 = vst.msk [vmem:[#allocation4 + $0x388] sm:$0xff] %vm390, %v1992
      %v2001 = vld [vmem:[#allocation2 + $0x8] sm:$0xf8]
      %v2002 = vld [vmem:[#allocation2 + $0x10] sm:$0xff]
      %v2003 = vld [vmem:[#allocation2 + $0x18] sm:$0xff]
      %v2004 = vld [vmem:[#allocation2 + $0x20] sm:$0xff]
      %v2005 = vld [vmem:[#allocation2 + $0x28] sm:$0x7]
      %v2011 = vrot.slane %v2001, 3
      %v2012 = vrot.slane %v2002, 3
      %v2013 = vsel %vm1364, %v2011, %v2012
      %v2014 = vrot.slane %v2003, 3
      %v2015 = vsel %vm1364, %v2012, %v2014
      %v2016 = vrot.slane %v2004, 3
      %v2017 = vsel %vm1364, %v2014, %v2016
      %v2018 = vrot.slane %v2005, 3
      %v2019 = vsel %vm1364, %v2016, %v2018
      %2024 = vst.msk [vmem:[#allocation4 + $0xa8] sm:$0xff] %vm390, %v2013
      %2025 = vst.msk [vmem:[#allocation4 + $0x1a0] sm:$0xff] %vm390, %v2015
      %2026 = vst.msk [vmem:[#allocation4 + $0x298] sm:$0xff] %vm390, %v2017
      %2027 = vst.msk [vmem:[#allocation4 + $0x390] sm:$0xff] %vm390, %v2019
      %v2028 = vld [vmem:[#allocation2 + $0x8] sm:$0xf8]
      %v2029 = vld [vmem:[#allocation2 + $0x10] sm:$0xff]
      %v2030 = vld [vmem:[#allocation2 + $0x18] sm:$0xff]
      %v2031 = vld [vmem:[#allocation2 + $0x20] sm:$0xff]
      %v2032 = vld [vmem:[#allocation2 + $0x28] sm:$0xf]
      %v2034 = vshrl.u32 %v2028, 16
      %v2036 = vrot.slane %v2034, 3
      %v2037 = vshll.u32 %v2028, 16
      %v2039 = vrot.slane %v2037, 4
      %v2040 = vor.u32 %v2036, %v2039
      %v2042 = vshrl.u32 %v2029, 16
      %v2044 = vrot.slane %v2042, 3
      %v2045 = vshll.u32 %v2029, 16
      %v2047 = vrot.slane %v2045, 4
      %v2048 = vor.u32 %v2044, %v2047
      %v2049 = vsel %vm1387, %v2040, %v2048
      %v2051 = vshrl.u32 %v2030, 16
      %v2053 = vrot.slane %v2051, 3
      %v2054 = vshll.u32 %v2030, 16
      %v2056 = vrot.slane %v2054, 4
      %v2057 = vor.u32 %v2053, %v2056
      %v2058 = vsel %vm1387, %v2048, %v2057
      %v2060 = vshrl.u32 %v2031, 16
      %v2062 = vrot.slane %v2060, 3
      %v2063 = vshll.u32 %v2031, 16
      %v2065 = vrot.slane %v2063, 4
      %v2066 = vor.u32 %v2062, %v2065
      %v2067 = vsel %vm1387, %v2057, %v2066
      %v2069 = vshrl.u32 %v2032, 16
      %v2071 = vrot.slane %v2069, 3
      %v2072 = vshll.u32 %v2032, 16
      %v2074 = vrot.slane %v2072, 4
      %v2075 = vor.u32 %v2071, %v2074
      %v2076 = vsel %vm1387, %v2066, %v2075
      %2081 = vst.msk [vmem:[#allocation4 + $0xb0] sm:$0xff] %vm390, %v2049
      %2082 = vst.msk [vmem:[#allocation4 + $0x1a8] sm:$0xff] %vm390, %v2058
      %2083 = vst.msk [vmem:[#allocation4 + $0x2a0] sm:$0xff] %vm390, %v2067
      %2084 = vst.msk [vmem:[#allocation4 + $0x398] sm:$0xff] %vm390, %v2076
      %v2085 = vld [vmem:[#allocation2 + $0x8] sm:$0xf0]
      %v2086 = vld [vmem:[#allocation2 + $0x10] sm:$0xff]
      %v2087 = vld [vmem:[#allocation2 + $0x18] sm:$0xff]
      %v2088 = vld [vmem:[#allocation2 + $0x20] sm:$0xff]
      %v2089 = vld [vmem:[#allocation2 + $0x28] sm:$0xf]
      %v2095 = vrot.slane %v2085, 4
      %v2096 = vrot.slane %v2086, 4
      %v2097 = vsel %vm1450, %v2095, %v2096
      %v2098 = vrot.slane %v2087, 4
      %v2099 = vsel %vm1450, %v2096, %v2098
      %v2100 = vrot.slane %v2088, 4
      %v2101 = vsel %vm1450, %v2098, %v2100
      %v2102 = vrot.slane %v2089, 4
      %v2103 = vsel %vm1450, %v2100, %v2102
      %2108 = vst.msk [vmem:[#allocation4 + $0xb8] sm:$0xff] %vm390, %v2097
      %2109 = vst.msk [vmem:[#allocation4 + $0x1b0] sm:$0xff] %vm390, %v2099
      %2110 = vst.msk [vmem:[#allocation4 + $0x2a8] sm:$0xff] %vm390, %v2101
      %2111 = vst.msk [vmem:[#allocation4 + $0x3a0] sm:$0xff] %vm390, %v2103
      %v2112 = vld [vmem:[#allocation2 + $0x8] sm:$0xf0]
      %v2113 = vld [vmem:[#allocation2 + $0x10] sm:$0xff]
      %v2114 = vld [vmem:[#allocation2 + $0x18] sm:$0xff]
      %v2115 = vld [vmem:[#allocation2 + $0x20] sm:$0xff]
      %v2116 = vld [vmem:[#allocation2 + $0x28] sm:$0x1f]
      %v2118 = vshrl.u32 %v2112, 16
      %v2120 = vrot.slane %v2118, 4
      %v2121 = vshll.u32 %v2112, 16
      %v2123 = vrot.slane %v2121, 5
      %v2124 = vor.u32 %v2120, %v2123
      %v2126 = vshrl.u32 %v2113, 16
      %v2128 = vrot.slane %v2126, 4
      %v2129 = vshll.u32 %v2113, 16
      %v2131 = vrot.slane %v2129, 5
      %v2132 = vor.u32 %v2128, %v2131
      %v2133 = vsel %vm1473, %v2124, %v2132
      %v2135 = vshrl.u32 %v2114, 16
      %v2137 = vrot.slane %v2135, 4
      %v2138 = vshll.u32 %v2114, 16
      %v2140 = vrot.slane %v2138, 5
      %v2141 = vor.u32 %v2137, %v2140
      %v2142 = vsel %vm1473, %v2132, %v2141
      %v2144 = vshrl.u32 %v2115, 16
      %v2146 = vrot.slane %v2144, 4
      %v2147 = vshll.u32 %v2115, 16
      %v2149 = vrot.slane %v2147, 5
      %v2150 = vor.u32 %v2146, %v2149
      %v2151 = vsel %vm1473, %v2141, %v2150
      %v2153 = vshrl.u32 %v2116, 16
      %v2155 = vrot.slane %v2153, 4
      %v2156 = vshll.u32 %v2116, 16
      %v2158 = vrot.slane %v2156, 5
      %v2159 = vor.u32 %v2155, %v2158
      %v2160 = vsel %vm1473, %v2150, %v2159
      %2165 = vst.msk [vmem:[#allocation4 + $0xc0] sm:$0xff] %vm390, %v2133
      %2166 = vst.msk [vmem:[#allocation4 + $0x1b8] sm:$0xff] %vm390, %v2142
      %2167 = vst.msk [vmem:[#allocation4 + $0x2b0] sm:$0xff] %vm390, %v2151
      %2168 = vst.msk [vmem:[#allocation4 + $0x3a8] sm:$0xff] %vm390, %v2160
      %v2169 = vld [vmem:[#allocation2 + $0x8] sm:$0xe0]
      %v2170 = vld [vmem:[#allocation2 + $0x10] sm:$0xff]
      %v2171 = vld [vmem:[#allocation2 + $0x18] sm:$0xff]
      %v2172 = vld [vmem:[#allocation2 + $0x20] sm:$0xff]
      %v2173 = vld [vmem:[#allocation2 + $0x28] sm:$0x1f]
      %v2179 = vrot.slane %v2169, 5
      %v2180 = vrot.slane %v2170, 5
      %v2181 = vsel %vm1536, %v2179, %v2180
      %v2182 = vrot.slane %v2171, 5
      %v2183 = vsel %vm1536, %v2180, %v2182
      %v2184 = vrot.slane %v2172, 5
      %v2185 = vsel %vm1536, %v2182, %v2184
      %v2186 = vrot.slane %v2173, 5
      %v2187 = vsel %vm1536, %v2184, %v2186
      %2192 = vst.msk [vmem:[#allocation4 + $0xc8] sm:$0xff] %vm390, %v2181
      %2193 = vst.msk [vmem:[#allocation4 + $0x1c0] sm:$0xff] %vm390, %v2183
      %2194 = vst.msk [vmem:[#allocation4 + $0x2b8] sm:$0xff] %vm390, %v2185
      %2195 = vst.msk [vmem:[#allocation4 + $0x3b0] sm:$0xff] %vm390, %v2187
      %v2196 = vld [vmem:[#allocation2 + $0x8] sm:$0xe0]
      %v2197 = vld [vmem:[#allocation2 + $0x10] sm:$0xff]
      %v2198 = vld [vmem:[#allocation2 + $0x18] sm:$0xff]
      %v2199 = vld [vmem:[#allocation2 + $0x20] sm:$0xff]
      %v2200 = vld [vmem:[#allocation2 + $0x28] sm:$0x3f]
      %v2202 = vshrl.u32 %v2196, 16
      %v2204 = vrot.slane %v2202, 5
      %v2205 = vshll.u32 %v2196, 16
      %v2207 = vrot.slane %v2205, 6
      %v2208 = vor.u32 %v2204, %v2207
      %v2210 = vshrl.u32 %v2197, 16
      %v2212 = vrot.slane %v2210, 5
      %v2213 = vshll.u32 %v2197, 16
      %v2215 = vrot.slane %v2213, 6
      %v2216 = vor.u32 %v2212, %v2215
      %v2217 = vsel %vm1559, %v2208, %v2216
      %v2219 = vshrl.u32 %v2198, 16
      %v2221 = vrot.slane %v2219, 5
      %v2222 = vshll.u32 %v2198, 16
      %v2224 = vrot.slane %v2222, 6
      %v2225 = vor.u32 %v2221, %v2224
      %v2226 = vsel %vm1559, %v2216, %v2225
      %v2228 = vshrl.u32 %v2199, 16
      %v2230 = vrot.slane %v2228, 5
      %v2231 = vshll.u32 %v2199, 16
      %v2233 = vrot.slane %v2231, 6
      %v2234 = vor.u32 %v2230, %v2233
      %v2235 = vsel %vm1559, %v2225, %v2234
      %v2237 = vshrl.u32 %v2200, 16
      %v2239 = vrot.slane %v2237, 5
      %v2240 = vshll.u32 %v2200, 16
      %v2242 = vrot.slane %v2240, 6
      %v2243 = vor.u32 %v2239, %v2242
      %v2244 = vsel %vm1559, %v2234, %v2243
      %2249 = vst.msk [vmem:[#allocation4 + $0xd0] sm:$0xff] %vm390, %v2217
      %2250 = vst.msk [vmem:[#allocation4 + $0x1c8] sm:$0xff] %vm390, %v2226
      %2251 = vst.msk [vmem:[#allocation4 + $0x2c0] sm:$0xff] %vm390, %v2235
      %2252 = vst.msk [vmem:[#allocation4 + $0x3b8] sm:$0xff] %vm390, %v2244
      %v2253 = vld [vmem:[#allocation2 + $0x8] sm:$0xc0]
      %v2254 = vld [vmem:[#allocation2 + $0x10] sm:$0xff]
      %v2255 = vld [vmem:[#allocation2 + $0x18] sm:$0xff]
      %v2256 = vld [vmem:[#allocation2 + $0x20] sm:$0xff]
      %v2257 = vld [vmem:[#allocation2 + $0x28] sm:$0x3f]
      %v2263 = vrot.slane %v2253, 6
      %v2264 = vrot.slane %v2254, 6
      %v2265 = vsel %vm1622, %v2263, %v2264
      %v2266 = vrot.slane %v2255, 6
      %v2267 = vsel %vm1622, %v2264, %v2266
      %v2268 = vrot.slane %v2256, 6
      %v2269 = vsel %vm1622, %v2266, %v2268
      %v2270 = vrot.slane %v2257, 6
      %v2271 = vsel %vm1622, %v2268, %v2270
      %2276 = vst.msk [vmem:[#allocation4 + $0xd8] sm:$0xff] %vm390, %v2265
      %2277 = vst.msk [vmem:[#allocation4 + $0x1d0] sm:$0xff] %vm390, %v2267
      %2278 = vst.msk [vmem:[#allocation4 + $0x2c8] sm:$0xff] %vm390, %v2269
      %2279 = vst.msk [vmem:[#allocation4 + $0x3c0] sm:$0xff] %vm390, %v2271
      %v2280 = vld [vmem:[#allocation2 + $0x8] sm:$0xc0]
      %v2281 = vld [vmem:[#allocation2 + $0x10] sm:$0xff]
      %v2282 = vld [vmem:[#allocation2 + $0x18] sm:$0xff]
      %v2283 = vld [vmem:[#allocation2 + $0x20] sm:$0xff]
      %v2284 = vld [vmem:[#allocation2 + $0x28] sm:$0x7f]
      %v2286 = vshrl.u32 %v2280, 16
      %v2288 = vrot.slane %v2286, 6
      %v2289 = vshll.u32 %v2280, 16
      %v2291 = vrot.slane %v2289, 7
      %v2292 = vor.u32 %v2288, %v2291
      %v2294 = vshrl.u32 %v2281, 16
      %v2296 = vrot.slane %v2294, 6
      %v2297 = vshll.u32 %v2281, 16
      %v2299 = vrot.slane %v2297, 7
      %v2300 = vor.u32 %v2296, %v2299
      %v2301 = vsel %vm1645, %v2292, %v2300
      %v2303 = vshrl.u32 %v2282, 16
      %v2305 = vrot.slane %v2303, 6
      %v2306 = vshll.u32 %v2282, 16
      %v2308 = vrot.slane %v2306, 7
      %v2309 = vor.u32 %v2305, %v2308
      %v2310 = vsel %vm1645, %v2300, %v2309
      %v2312 = vshrl.u32 %v2283, 16
      %v2314 = vrot.slane %v2312, 6
      %v2315 = vshll.u32 %v2283, 16
      %v2317 = vrot.slane %v2315, 7
      %v2318 = vor.u32 %v2314, %v2317
      %v2319 = vsel %vm1645, %v2309, %v2318
      %v2321 = vshrl.u32 %v2284, 16
      %v2323 = vrot.slane %v2321, 6
      %v2324 = vshll.u32 %v2284, 16
      %v2326 = vrot.slane %v2324, 7
      %v2327 = vor.u32 %v2323, %v2326
      %v2328 = vsel %vm1645, %v2318, %v2327
      %2333 = vst.msk [vmem:[#allocation4 + $0xe0] sm:$0xff] %vm390, %v2301
      %2334 = vst.msk [vmem:[#allocation4 + $0x1d8] sm:$0xff] %vm390, %v2310
      %2335 = vst.msk [vmem:[#allocation4 + $0x2d0] sm:$0xff] %vm390, %v2319
      %2336 = vst.msk [vmem:[#allocation4 + $0x3c8] sm:$0xff] %vm390, %v2328
      %v2337 = vld [vmem:[#allocation2 + $0x8] sm:$0x80]
      %v2338 = vld [vmem:[#allocation2 + $0x10] sm:$0xff]
      %v2339 = vld [vmem:[#allocation2 + $0x18] sm:$0xff]
      %v2340 = vld [vmem:[#allocation2 + $0x20] sm:$0xff]
      %v2341 = vld [vmem:[#allocation2 + $0x28] sm:$0x7f]
      %v2347 = vrot.slane %v2337, 7
      %v2348 = vrot.slane %v2338, 7
      %v2349 = vsel %vm1708, %v2347, %v2348
      %v2350 = vrot.slane %v2339, 7
      %v2351 = vsel %vm1708, %v2348, %v2350
      %v2352 = vrot.slane %v2340, 7
      %v2353 = vsel %vm1708, %v2350, %v2352
      %v2354 = vrot.slane %v2341, 7
      %v2355 = vsel %vm1708, %v2352, %v2354
      %2360 = vst.msk [vmem:[#allocation4 + $0xe8] sm:$0xff] %vm390, %v2349
      %2361 = vst.msk [vmem:[#allocation4 + $0x1e0] sm:$0xff] %vm390, %v2351
      %2362 = vst.msk [vmem:[#allocation4 + $0x2d8] sm:$0xff] %vm390, %v2353
      %2363 = vst.msk [vmem:[#allocation4 + $0x3d0] sm:$0xff] %vm390, %v2355
      %v2364 = vld [vmem:[#allocation2 + $0x8] sm:$0x80]
      %v2365 = vld [vmem:[#allocation2 + $0x10] sm:$0xff]
      %v2366 = vld [vmem:[#allocation2 + $0x18] sm:$0xff]
      %v2367 = vld [vmem:[#allocation2 + $0x20] sm:$0xff]
      %v2368 = vld [vmem:[#allocation2 + $0x28] sm:$0xff]
      %v2370 = vshrl.u32 %v2364, 16
      %v2372 = vrot.slane %v2370, 7
      %v2374 = vshrl.u32 %v2365, 16
      %v2376 = vrot.slane %v2374, 7
      %v2377 = vshll.u32 %v2365, 16
      %v2379 = vor.u32 %v2376, %v2377
      %v2380 = vsel %vm1731, %v2372, %v2379
      %v2382 = vshrl.u32 %v2366, 16
      %v2384 = vrot.slane %v2382, 7
      %v2385 = vshll.u32 %v2366, 16
      %v2387 = vor.u32 %v2384, %v2385
      %v2388 = vsel %vm1731, %v2376, %v2387
      %v2390 = vshrl.u32 %v2367, 16
      %v2392 = vrot.slane %v2390, 7
      %v2393 = vshll.u32 %v2367, 16
      %v2395 = vor.u32 %v2392, %v2393
      %v2396 = vsel %vm1731, %v2384, %v2395
      %v2398 = vshrl.u32 %v2368, 16
      %v2400 = vrot.slane %v2398, 7
      %v2401 = vshll.u32 %v2368, 16
      %v2403 = vor.u32 %v2400, %v2401
      %v2404 = vsel %vm1731, %v2392, %v2403
      %2409 = vst.msk [vmem:[#allocation4 + $0xf0] sm:$0xff] %vm390, %v2380
      %2410 = vst.msk [vmem:[#allocation4 + $0x1e8] sm:$0xff] %vm390, %v2388
      %2411 = vst.msk [vmem:[#allocation4 + $0x2e0] sm:$0xff] %vm390, %v2396
      %2412 = vst.msk [vmem:[#allocation4 + $0x3d8] sm:$0xff] %vm390, %v2404
      %v2413 = vld [vmem:[#allocation4] sm:$0xff]
      %v2414 = vld [vmem:[#allocation4 + $0x8] sm:$0xff]
      %v2415 = vld [vmem:[#allocation4 + $0x10] sm:$0xff]
      %v2416 = vld [vmem:[#allocation4 + $0x18] sm:$0xff]
      %v2417 = vld [vmem:[#allocation4 + $0x20] sm:$0xff]
      %v2418 = vld [vmem:[#allocation4 + $0x28] sm:$0xff]
      %v2419 = vld [vmem:[#allocation4 + $0x30] sm:$0xff]
      %v2420 = vld [vmem:[#allocation4 + $0x38] sm:$0xff]
      %v2421 = vld [vmem:[#allocation4 + $0x40] sm:$0xff]
      %v2422 = vld [vmem:[#allocation4 + $0x48] sm:$0xff]
      %v2423 = vld [vmem:[#allocation4 + $0x50] sm:$0xff]
      %v2424 = vld [vmem:[#allocation4 + $0x58] sm:$0xff]
      %v2425 = vld [vmem:[#allocation4 + $0x60] sm:$0xff]
      %v2426 = vld [vmem:[#allocation4 + $0x68] sm:$0xff]
      %v2427 = vld [vmem:[#allocation4 + $0x70] sm:$0xff]
      %v2428 = vld [vmem:[#allocation4 + $0x78] sm:$0xff]
      %v2429 = vld [vmem:[#allocation4 + $0x80] sm:$0xff]
      %v2430 = vld [vmem:[#allocation4 + $0x88] sm:$0xff]
      %v2431 = vld [vmem:[#allocation4 + $0x90] sm:$0xff]
      %v2432 = vld [vmem:[#allocation4 + $0x98] sm:$0xff]
      %v2433 = vld [vmem:[#allocation4 + $0xa0] sm:$0xff]
      %v2434 = vld [vmem:[#allocation4 + $0xa8] sm:$0xff]
      %v2435 = vld [vmem:[#allocation4 + $0xb0] sm:$0xff]
      %v2436 = vld [vmem:[#allocation4 + $0xb8] sm:$0xff]
      %v2437 = vld [vmem:[#allocation4 + $0xc0] sm:$0xff]
      %v2438 = vld [vmem:[#allocation4 + $0xc8] sm:$0xff]
      %v2439 = vld [vmem:[#allocation4 + $0xd0] sm:$0xff]
      %v2440 = vld [vmem:[#allocation4 + $0xd8] sm:$0xff]
      %v2441 = vld [vmem:[#allocation4 + $0xe0] sm:$0xff]
      %v2442 = vld [vmem:[#allocation4 + $0xe8] sm:$0xff]
      %v2443 = vld [vmem:[#allocation4 + $0xf0] sm:$0xff]
      %v2444 = vld [vmem:[#allocation4 + $0xf8] sm:$0xff]
      %v2445 = vld [vmem:[#allocation4 + $0x100] sm:$0xff]
      %v2446 = vld [vmem:[#allocation4 + $0x108] sm:$0xff]
      %v2447 = vld [vmem:[#allocation4 + $0x110] sm:$0xff]
      %v2448 = vld [vmem:[#allocation4 + $0x118] sm:$0xff]
      %v2449 = vld [vmem:[#allocation4 + $0x120] sm:$0xff]
      %v2450 = vld [vmem:[#allocation4 + $0x128] sm:$0xff]
      %v2451 = vld [vmem:[#allocation4 + $0x130] sm:$0xff]
      %v2452 = vld [vmem:[#allocation4 + $0x138] sm:$0xff]
      %v2453 = vld [vmem:[#allocation4 + $0x140] sm:$0xff]
      %v2454 = vld [vmem:[#allocation4 + $0x148] sm:$0xff]
      %v2455 = vld [vmem:[#allocation4 + $0x150] sm:$0xff]
      %v2456 = vld [vmem:[#allocation4 + $0x158] sm:$0xff]
      %v2457 = vld [vmem:[#allocation4 + $0x160] sm:$0xff]
      %v2458 = vld [vmem:[#allocation4 + $0x168] sm:$0xff]
      %v2459 = vld [vmem:[#allocation4 + $0x170] sm:$0xff]
      %v2460 = vld [vmem:[#allocation4 + $0x178] sm:$0xff]
      %v2461 = vld [vmem:[#allocation4 + $0x180] sm:$0xff]
      %v2462 = vld [vmem:[#allocation4 + $0x188] sm:$0xff]
      %v2463 = vld [vmem:[#allocation4 + $0x190] sm:$0xff]
      %v2464 = vld [vmem:[#allocation4 + $0x198] sm:$0xff]
      %v2465 = vld [vmem:[#allocation4 + $0x1a0] sm:$0xff]
      %v2466 = vld [vmem:[#allocation4 + $0x1a8] sm:$0xff]
      %v2467 = vld [vmem:[#allocation4 + $0x1b0] sm:$0xff]
      %v2468 = vld [vmem:[#allocation4 + $0x1b8] sm:$0xff]
      %v2469 = vld [vmem:[#allocation4 + $0x1c0] sm:$0xff]
      %v2470 = vld [vmem:[#allocation4 + $0x1c8] sm:$0xff]
      %v2471 = vld [vmem:[#allocation4 + $0x1d0] sm:$0xff]
      %v2472 = vld [vmem:[#allocation4 + $0x1d8] sm:$0xff]
      %v2473 = vld [vmem:[#allocation4 + $0x1e0] sm:$0xff]
      %v2474 = vld [vmem:[#allocation4 + $0x1e8] sm:$0xff]
      %v2475 = vld [vmem:[#allocation4 + $0x1f0] sm:$0xff]
      %v2476 = vld [vmem:[#allocation4 + $0x1f8] sm:$0xff]
      %v2477 = vld [vmem:[#allocation4 + $0x200] sm:$0xff]
      %v2478 = vld [vmem:[#allocation4 + $0x208] sm:$0xff]
      %v2479 = vld [vmem:[#allocation4 + $0x210] sm:$0xff]
      %v2480 = vld [vmem:[#allocation4 + $0x218] sm:$0xff]
      %v2481 = vld [vmem:[#allocation4 + $0x220] sm:$0xff]
      %v2482 = vld [vmem:[#allocation4 + $0x228] sm:$0xff]
      %v2483 = vld [vmem:[#allocation4 + $0x230] sm:$0xff]
      %v2484 = vld [vmem:[#allocation4 + $0x238] sm:$0xff]
      %v2485 = vld [vmem:[#allocation4 + $0x240] sm:$0xff]
      %v2486 = vld [vmem:[#allocation4 + $0x248] sm:$0xff]
      %v2487 = vld [vmem:[#allocation4 + $0x250] sm:$0xff]
      %v2488 = vld [vmem:[#allocation4 + $0x258] sm:$0xff]
      %v2489 = vld [vmem:[#allocation4 + $0x260] sm:$0xff]
      %v2490 = vld [vmem:[#allocation4 + $0x268] sm:$0xff]
      %v2491 = vld [vmem:[#allocation4 + $0x270] sm:$0xff]
      %v2492 = vld [vmem:[#allocation4 + $0x278] sm:$0xff]
      %v2493 = vld [vmem:[#allocation4 + $0x280] sm:$0xff]
      %v2494 = vld [vmem:[#allocation4 + $0x288] sm:$0xff]
      %v2495 = vld [vmem:[#allocation4 + $0x290] sm:$0xff]
      %v2496 = vld [vmem:[#allocation4 + $0x298] sm:$0xff]
      %v2497 = vld [vmem:[#allocation4 + $0x2a0] sm:$0xff]
      %v2498 = vld [vmem:[#allocation4 + $0x2a8] sm:$0xff]
      %v2499 = vld [vmem:[#allocation4 + $0x2b0] sm:$0xff]
      %v2500 = vld [vmem:[#allocation4 + $0x2b8] sm:$0xff]
      %v2501 = vld [vmem:[#allocation4 + $0x2c0] sm:$0xff]
      %v2502 = vld [vmem:[#allocation4 + $0x2c8] sm:$0xff]
      %v2503 = vld [vmem:[#allocation4 + $0x2d0] sm:$0xff]
      %v2504 = vld [vmem:[#allocation4 + $0x2d8] sm:$0xff]
      %v2505 = vld [vmem:[#allocation4 + $0x2e0] sm:$0xff]
      %v2506 = vld [vmem:[#allocation4 + $0x2e8] sm:$0xff]
      %v2507 = vld [vmem:[#allocation4 + $0x2f0] sm:$0xff]
      %v2508 = vld [vmem:[#allocation4 + $0x2f8] sm:$0xff]
      %v2509 = vld [vmem:[#allocation4 + $0x300] sm:$0xff]
      %v2510 = vld [vmem:[#allocation4 + $0x308] sm:$0xff]
      %v2511 = vld [vmem:[#allocation4 + $0x310] sm:$0xff]
      %v2512 = vld [vmem:[#allocation4 + $0x318] sm:$0xff]
      %v2513 = vld [vmem:[#allocation4 + $0x320] sm:$0xff]
      %v2514 = vld [vmem:[#allocation4 + $0x328] sm:$0xff]
      %v2515 = vld [vmem:[#allocation4 + $0x330] sm:$0xff]
      %v2516 = vld [vmem:[#allocation4 + $0x338] sm:$0xff]
      %v2517 = vld [vmem:[#allocation4 + $0x340] sm:$0xff]
      %v2518 = vld [vmem:[#allocation4 + $0x348] sm:$0xff]
      %v2519 = vld [vmem:[#allocation4 + $0x350] sm:$0xff]
      %v2520 = vld [vmem:[#allocation4 + $0x358] sm:$0xff]
      %v2521 = vld [vmem:[#allocation4 + $0x360] sm:$0xff]
      %v2522 = vld [vmem:[#allocation4 + $0x368] sm:$0xff]
      %v2523 = vld [vmem:[#allocation4 + $0x370] sm:$0xff]
      %v2524 = vld [vmem:[#allocation4 + $0x378] sm:$0xff]
      %v2525 = vld [vmem:[#allocation4 + $0x380] sm:$0xff]
      %v2526 = vld [vmem:[#allocation4 + $0x388] sm:$0xff]
      %v2527 = vld [vmem:[#allocation4 + $0x390] sm:$0xff]
      %v2528 = vld [vmem:[#allocation4 + $0x398] sm:$0xff]
      %v2529 = vld [vmem:[#allocation4 + $0x3a0] sm:$0xff]
      %v2530 = vld [vmem:[#allocation4 + $0x3a8] sm:$0xff]
      %v2531 = vld [vmem:[#allocation4 + $0x3b0] sm:$0xff]
      %v2532 = vld [vmem:[#allocation4 + $0x3b8] sm:$0xff]
      %v2533 = vld [vmem:[#allocation4 + $0x3c0] sm:$0xff]
      %v2534 = vld [vmem:[#allocation4 + $0x3c8] sm:$0xff]
      %v2535 = vld [vmem:[#allocation4 + $0x3d0] sm:$0xff]
      %v2536 = vld [vmem:[#allocation4 + $0x3d8] sm:$0xff]
      %v2538 = vlaneseq
      %v2539 = vshrl.u32 %v2538, 7
      %v2540 = vsub.s32 0, %v2539
      %v2541 = vrot.slane %v1131, %v2540
      %v3039 = vunpack.c.l.b16 %v635
      %v3040 = vunpack.c.l.b16 %v636
      %v3041 = vunpack.c.l.b16 %v637
      %v3042 = vunpack.c.l.b16 %v638
      %v3043 = vunpack.c.l.b16 %v639
      %v3044 = vunpack.c.l.b16 %v640
      %v3045 = vunpack.c.l.b16 %v641
      %v3046 = vunpack.c.l.b16 %v642
      %v3047 = vunpack.c.l.b16 %v643
      %v3048 = vunpack.c.l.b16 %v644
      %v3049 = vunpack.c.l.b16 %v645
      %v3050 = vunpack.c.l.b16 %v646
      %v3051 = vunpack.c.l.b16 %v647
      %v3052 = vunpack.c.l.b16 %v648
      %v3053 = vunpack.c.l.b16 %v649
      %v3054 = vunpack.c.l.b16 %v650
      %v3055 = vunpack.c.l.b16 %v651
      %v3056 = vunpack.c.l.b16 %v652
      %v3057 = vunpack.c.l.b16 %v653
      %v3058 = vunpack.c.l.b16 %v654
      %v3059 = vunpack.c.l.b16 %v655
      %v3060 = vunpack.c.l.b16 %v656
      %v3061 = vunpack.c.l.b16 %v657
      %v3062 = vunpack.c.l.b16 %v658
      %v3063 = vunpack.c.l.b16 %v659
      %v3064 = vunpack.c.l.b16 %v660
      %v3065 = vunpack.c.l.b16 %v661
      %v3066 = vunpack.c.l.b16 %v662
      %v3067 = vunpack.c.l.b16 %v663
      %v3068 = vunpack.c.l.b16 %v664
      %v3069 = vunpack.c.l.b16 %v665
      %v3070 = vunpack.c.l.b16 %v666
      %v3071 = vunpack.c.l.b16 %v667
      %v3072 = vunpack.c.l.b16 %v668
      %v3073 = vunpack.c.l.b16 %v669
      %v3074 = vunpack.c.l.b16 %v670
      %v3075 = vunpack.c.l.b16 %v671
      %v3076 = vunpack.c.l.b16 %v672
      %v3077 = vunpack.c.l.b16 %v673
      %v3078 = vunpack.c.l.b16 %v674
      %v3079 = vunpack.c.l.b16 %v675
      %v3080 = vunpack.c.l.b16 %v676
      %v3081 = vunpack.c.l.b16 %v677
      %v3082 = vunpack.c.l.b16 %v678
      %v3083 = vunpack.c.l.b16 %v679
      %v3084 = vunpack.c.l.b16 %v680
      %v3085 = vunpack.c.l.b16 %v681
      %v3086 = vunpack.c.l.b16 %v682
      %v3087 = vunpack.c.l.b16 %v683
      %v3088 = vunpack.c.l.b16 %v684
      %v3089 = vunpack.c.l.b16 %v685
      %v3090 = vunpack.c.l.b16 %v686
      %v3091 = vunpack.c.l.b16 %v687
      %v3092 = vunpack.c.l.b16 %v688
      %v3093 = vunpack.c.l.b16 %v689
      %v3094 = vunpack.c.l.b16 %v690
      %v3095 = vunpack.c.l.b16 %v691
      %v3096 = vunpack.c.l.b16 %v692
      %v3097 = vunpack.c.l.b16 %v693
      %v3098 = vunpack.c.l.b16 %v694
      %v3099 = vunpack.c.l.b16 %v695
      %v3100 = vunpack.c.l.b16 %v696
      %v3101 = vunpack.c.l.b16 %v697
      %v3102 = vunpack.c.l.b16 %v698
      %v3103 = vunpack.c.l.b16 %v699
      %v3104 = vunpack.c.l.b16 %v700
      %v3105 = vunpack.c.l.b16 %v701
      %v3106 = vunpack.c.l.b16 %v702
      %v3107 = vunpack.c.l.b16 %v703
      %v3108 = vunpack.c.l.b16 %v704
      %v3109 = vunpack.c.l.b16 %v705
      %v3110 = vunpack.c.l.b16 %v706
      %v3111 = vunpack.c.l.b16 %v707
      %v3112 = vunpack.c.l.b16 %v708
      %v3113 = vunpack.c.l.b16 %v709
      %v3114 = vunpack.c.l.b16 %v710
      %v3115 = vunpack.c.l.b16 %v711
      %v3116 = vunpack.c.l.b16 %v712
      %v3117 = vunpack.c.l.b16 %v713
      %v3118 = vunpack.c.l.b16 %v714
      %v3119 = vunpack.c.l.b16 %v715
      %v3120 = vunpack.c.l.b16 %v716
      %v3121 = vunpack.c.l.b16 %v717
      %v3122 = vunpack.c.l.b16 %v718
      %v3123 = vunpack.c.l.b16 %v719
      %v3124 = vunpack.c.l.b16 %v720
      %v3125 = vunpack.c.l.b16 %v721
      %v3126 = vunpack.c.l.b16 %v722
      %v3127 = vunpack.c.l.b16 %v723
      %v3128 = vunpack.c.l.b16 %v724
      %v3129 = vunpack.c.l.b16 %v725
      %v3130 = vunpack.c.l.b16 %v726
      %v3131 = vunpack.c.l.b16 %v727
      %v3132 = vunpack.c.l.b16 %v728
      %v3133 = vunpack.c.l.b16 %v729
      %v3134 = vunpack.c.l.b16 %v730
      %v3135 = vunpack.c.l.b16 %v731
      %v3136 = vunpack.c.l.b16 %v732
      %v3137 = vunpack.c.l.b16 %v733
      %v3138 = vunpack.c.l.b16 %v734
      %v3139 = vunpack.c.l.b16 %v735
      %v3140 = vunpack.c.l.b16 %v736
      %v3141 = vunpack.c.l.b16 %v737
      %v3142 = vunpack.c.l.b16 %v738
      %v3143 = vunpack.c.l.b16 %v739
      %v3144 = vunpack.c.l.b16 %v740
      %v3145 = vunpack.c.l.b16 %v741
      %v3146 = vunpack.c.l.b16 %v742
      %v3147 = vunpack.c.l.b16 %v743
      %v3148 = vunpack.c.l.b16 %v744
      %v3149 = vunpack.c.l.b16 %v745
      %v3150 = vunpack.c.l.b16 %v746
      %v3151 = vunpack.c.l.b16 %v747
      %v3152 = vunpack.c.l.b16 %v748
      %v3153 = vunpack.c.l.b16 %v749
      %v3154 = vunpack.c.l.b16 %v750
      %v3155 = vunpack.c.l.b16 %v751
      %v3156 = vunpack.c.l.b16 %v752
      %v3157 = vunpack.c.l.b16 %v753
      %v3158 = vunpack.c.l.b16 %v754
      %v3159 = vunpack.c.l.b16 %v755
      %v3160 = vunpack.c.l.b16 %v756
      %v3161 = vunpack.c.l.b16 %v757
      %v3162 = vunpack.c.l.b16 %v758
      %v3163 = vunpack.c.l.b16 %v759
      %v3164 = vunpack.c.l.b16 %v760
      %v3165 = vunpack.c.l.b16 %v761
      %v3166 = vunpack.c.l.b16 %v762
      %v3167 = vunpack.c.l.b16 %v763
      %v3168 = vunpack.c.l.b16 %v764
      %v3169 = vunpack.c.l.b16 %v765
      %v3170 = vunpack.c.l.b16 %v766
      %v3171 = vunpack.c.l.b16 %v767
      %v3172 = vunpack.c.l.b16 %v768
      %v3173 = vunpack.c.l.b16 %v769
      %v3174 = vunpack.c.l.b16 %v770
      %v3175 = vunpack.c.l.b16 %v771
      %v3176 = vunpack.c.l.b16 %v772
      %v3177 = vunpack.c.l.b16 %v773
      %v3178 = vunpack.c.l.b16 %v774
      %v3179 = vunpack.c.l.b16 %v775
      %v3180 = vunpack.c.l.b16 %v776
      %v3181 = vunpack.c.l.b16 %v777
      %v3182 = vunpack.c.l.b16 %v778
      %v3183 = vunpack.c.l.b16 %v779
      %v3184 = vunpack.c.l.b16 %v780
      %v3185 = vunpack.c.l.b16 %v781
      %v3186 = vunpack.c.l.b16 %v782
      %v3187 = vunpack.c.l.b16 %v783
      %v3188 = vunpack.c.l.b16 %v784
      %v3189 = vunpack.c.l.b16 %v785
      %v3190 = vunpack.c.l.b16 %v786
      %v3191 = vunpack.c.l.b16 %v787
      %v3192 = vunpack.c.l.b16 %v788
      %v3193 = vunpack.c.l.b16 %v789
      %v3194 = vunpack.c.l.b16 %v790
      %v3195 = vunpack.c.l.b16 %v791
      %v3196 = vunpack.c.l.b16 %v792
      %v3197 = vunpack.c.l.b16 %v793
      %v3198 = vunpack.c.l.b16 %v794
      %v3199 = vunpack.c.l.b16 %v795
      %v3200 = vunpack.c.l.b16 %v796
      %v3201 = vunpack.c.l.b16 %v797
      %v3202 = vunpack.c.l.b16 %v798
      %v3203 = vunpack.c.l.b16 %v799
      %v3204 = vunpack.c.l.b16 %v800
      %v3205 = vunpack.c.l.b16 %v801
      %v3206 = vunpack.c.l.b16 %v802
      %v3207 = vunpack.c.l.b16 %v803
      %v3208 = vunpack.c.l.b16 %v804
      %v3209 = vunpack.c.l.b16 %v805
      %v3210 = vunpack.c.l.b16 %v806
      %v3211 = vunpack.c.l.b16 %v807
      %v3212 = vunpack.c.l.b16 %v808
      %v3213 = vunpack.c.l.b16 %v809
      %v3214 = vunpack.c.l.b16 %v810
      %v3215 = vunpack.c.l.b16 %v811
      %v3216 = vunpack.c.l.b16 %v812
      %v3217 = vunpack.c.l.b16 %v813
      %v3218 = vunpack.c.l.b16 %v814
      %v3219 = vunpack.c.l.b16 %v815
      %v3220 = vunpack.c.l.b16 %v816
      %v3221 = vunpack.c.l.b16 %v817
      %v3222 = vunpack.c.l.b16 %v818
      %v3223 = vunpack.c.l.b16 %v819
      %v3224 = vunpack.c.l.b16 %v820
      %v3225 = vunpack.c.l.b16 %v821
      %v3226 = vunpack.c.l.b16 %v822
      %v3227 = vunpack.c.l.b16 %v823
      %v3228 = vunpack.c.l.b16 %v824
      %v3229 = vunpack.c.l.b16 %v825
      %v3230 = vunpack.c.l.b16 %v826
      %v3231 = vunpack.c.l.b16 %v827
      %v3232 = vunpack.c.l.b16 %v828
      %v3233 = vunpack.c.l.b16 %v829
      %v3234 = vunpack.c.l.b16 %v830
      %v3235 = vunpack.c.l.b16 %v831
      %v3236 = vunpack.c.l.b16 %v832
      %v3237 = vunpack.c.l.b16 %v833
      %v3238 = vunpack.c.l.b16 %v834
      %v3239 = vunpack.c.l.b16 %v835
      %v3240 = vunpack.c.l.b16 %v836
      %v3241 = vunpack.c.l.b16 %v837
      %v3242 = vunpack.c.l.b16 %v838
      %v3243 = vunpack.c.l.b16 %v839
      %v3244 = vunpack.c.l.b16 %v840
      %v3245 = vunpack.c.l.b16 %v841
      %v3246 = vunpack.c.l.b16 %v842
      %v3247 = vunpack.c.l.b16 %v843
      %v3248 = vunpack.c.l.b16 %v844
      %v3249 = vunpack.c.l.b16 %v845
      %v3250 = vunpack.c.l.b16 %v846
      %v3251 = vunpack.c.l.b16 %v847
      %v3252 = vunpack.c.l.b16 %v848
      %v3253 = vunpack.c.l.b16 %v849
      %v3254 = vunpack.c.l.b16 %v850
      %v3255 = vunpack.c.l.b16 %v851
      %v3256 = vunpack.c.l.b16 %v852
      %v3257 = vunpack.c.l.b16 %v853
      %v3258 = vunpack.c.l.b16 %v854
      %v3259 = vunpack.c.l.b16 %v855
      %v3260 = vunpack.c.l.b16 %v856
      %v3261 = vunpack.c.l.b16 %v857
      %v3262 = vunpack.c.l.b16 %v858
      %v3263 = vunpack.c.l.b16 %v859
      %v3264 = vunpack.c.l.b16 %v860
      %v3265 = vunpack.c.l.b16 %v861
      %v3266 = vunpack.c.l.b16 %v862
      %v3267 = vunpack.c.l.b16 %v863
      %v3268 = vunpack.c.l.b16 %v864
      %v3269 = vunpack.c.l.b16 %v865
      %v3270 = vunpack.c.l.b16 %v866
      %v3271 = vunpack.c.l.b16 %v867
      %v3272 = vunpack.c.l.b16 %v868
      %v3273 = vunpack.c.l.b16 %v869
      %v3274 = vunpack.c.l.b16 %v870
      %v3275 = vunpack.c.l.b16 %v871
      %v3276 = vunpack.c.l.b16 %v872
      %v3277 = vunpack.c.l.b16 %v873
      %v3278 = vunpack.c.l.b16 %v874
      %v3279 = vunpack.c.l.b16 %v875
      %v3280 = vunpack.c.l.b16 %v876
      %v3281 = vunpack.c.l.b16 %v877
      %v3282 = vunpack.c.l.b16 %v878
      %v3283 = vunpack.c.l.b16 %v879
      %v3284 = vunpack.c.l.b16 %v880
      %v3285 = vunpack.c.l.b16 %v881
      %v3286 = vunpack.c.l.b16 %v882
      %v3287 = vunpack.c.l.b16 %v883
      %v3288 = vunpack.c.l.b16 %v884
      %v3289 = vunpack.c.l.b16 %v885
      %v3290 = vunpack.c.l.b16 %v886
      %v3291 = vunpack.c.l.b16 %v887
      %v3292 = vunpack.c.l.b16 %v888
      %v3293 = vunpack.c.l.b16 %v889
      %v3294 = vunpack.c.l.b16 %v890
      %v3295 = vunpack.c.l.b16 %v891
      %v3296 = vunpack.c.l.b16 %v892
      %v3297 = vunpack.c.l.b16 %v893
      %v3298 = vunpack.c.l.b16 %v894
      %v3299 = vunpack.c.l.b16 %v895
      %v3300 = vunpack.c.l.b16 %v896
      %v3301 = vunpack.c.l.b16 %v897
      %v3302 = vunpack.c.l.b16 %v898
      %v3303 = vunpack.c.l.b16 %v899
      %v3304 = vunpack.c.l.b16 %v900
      %v3305 = vunpack.c.l.b16 %v901
      %v3306 = vunpack.c.l.b16 %v902
      %v3307 = vunpack.c.l.b16 %v903
      %v3308 = vunpack.c.l.b16 %v904
      %v3309 = vunpack.c.l.b16 %v905
      %v3310 = vunpack.c.l.b16 %v906
      %v3311 = vunpack.c.l.b16 %v907
      %v3312 = vunpack.c.l.b16 %v908
      %v3313 = vunpack.c.l.b16 %v909
      %v3314 = vunpack.c.l.b16 %v910
      %v3315 = vunpack.c.l.b16 %v911
      %v3316 = vunpack.c.l.b16 %v912
      %v3317 = vunpack.c.l.b16 %v913
      %v3318 = vunpack.c.l.b16 %v914
      %v3319 = vunpack.c.l.b16 %v915
      %v3320 = vunpack.c.l.b16 %v916
      %v3321 = vunpack.c.l.b16 %v917
      %v3322 = vunpack.c.l.b16 %v918
      %v3323 = vunpack.c.l.b16 %v919
      %v3324 = vunpack.c.l.b16 %v920
      %v3325 = vunpack.c.l.b16 %v921
      %v3326 = vunpack.c.l.b16 %v922
      %v3327 = vunpack.c.l.b16 %v923
      %v3328 = vunpack.c.l.b16 %v924
      %v3329 = vunpack.c.l.b16 %v925
      %v3330 = vunpack.c.l.b16 %v926
      %v3331 = vunpack.c.l.b16 %v927
      %v3332 = vunpack.c.l.b16 %v928
      %v3333 = vunpack.c.l.b16 %v929
      %v3334 = vunpack.c.l.b16 %v930
      %v3335 = vunpack.c.l.b16 %v931
      %v3336 = vunpack.c.l.b16 %v932
      %v3337 = vunpack.c.l.b16 %v933
      %v3338 = vunpack.c.l.b16 %v934
      %v3339 = vunpack.c.l.b16 %v935
      %v3340 = vunpack.c.l.b16 %v936
      %v3341 = vunpack.c.l.b16 %v937
      %v3342 = vunpack.c.l.b16 %v938
      %v3343 = vunpack.c.l.b16 %v939
      %v3344 = vunpack.c.l.b16 %v940
      %v3345 = vunpack.c.l.b16 %v941
      %v3346 = vunpack.c.l.b16 %v942
      %v3347 = vunpack.c.l.b16 %v943
      %v3348 = vunpack.c.l.b16 %v944
      %v3349 = vunpack.c.l.b16 %v945
      %v3350 = vunpack.c.l.b16 %v946
      %v3351 = vunpack.c.l.b16 %v947
      %v3352 = vunpack.c.l.b16 %v948
      %v3353 = vunpack.c.l.b16 %v949
      %v3354 = vunpack.c.l.b16 %v950
      %v3355 = vunpack.c.l.b16 %v951
      %v3356 = vunpack.c.l.b16 %v952
      %v3357 = vunpack.c.l.b16 %v953
      %v3358 = vunpack.c.l.b16 %v954
      %v3359 = vunpack.c.l.b16 %v955
      %v3360 = vunpack.c.l.b16 %v956
      %v3361 = vunpack.c.l.b16 %v957
      %v3362 = vunpack.c.l.b16 %v958
      %v3363 = vunpack.c.l.b16 %v959
      %v3364 = vunpack.c.l.b16 %v960
      %v3365 = vunpack.c.l.b16 %v961
      %v3366 = vunpack.c.l.b16 %v962
      %v3367 = vunpack.c.l.b16 %v963
      %v3368 = vunpack.c.l.b16 %v964
      %v3369 = vunpack.c.l.b16 %v965
      %v3370 = vunpack.c.l.b16 %v966
      %v3371 = vunpack.c.l.b16 %v967
      %v3372 = vunpack.c.l.b16 %v968
      %v3373 = vunpack.c.l.b16 %v969
      %v3374 = vunpack.c.l.b16 %v970
      %v3375 = vunpack.c.l.b16 %v971
      %v3376 = vunpack.c.l.b16 %v972
      %v3377 = vunpack.c.l.b16 %v973
      %v3378 = vunpack.c.l.b16 %v974
      %v3379 = vunpack.c.l.b16 %v975
      %v3380 = vunpack.c.l.b16 %v976
      %v3381 = vunpack.c.l.b16 %v977
      %v3382 = vunpack.c.l.b16 %v978
      %v3383 = vunpack.c.l.b16 %v979
      %v3384 = vunpack.c.l.b16 %v980
      %v3385 = vunpack.c.l.b16 %v981
      %v3386 = vunpack.c.l.b16 %v982
      %v3387 = vunpack.c.l.b16 %v983
      %v3388 = vunpack.c.l.b16 %v984
      %v3389 = vunpack.c.l.b16 %v985
      %v3390 = vunpack.c.l.b16 %v986
      %v3391 = vunpack.c.l.b16 %v987
      %v3392 = vunpack.c.l.b16 %v988
      %v3393 = vunpack.c.l.b16 %v989
      %v3394 = vunpack.c.l.b16 %v990
      %v3395 = vunpack.c.l.b16 %v991
      %v3396 = vunpack.c.l.b16 %v992
      %v3397 = vunpack.c.l.b16 %v993
      %v3398 = vunpack.c.l.b16 %v994
      %v3399 = vunpack.c.l.b16 %v995
      %v3400 = vunpack.c.l.b16 %v996
      %v3401 = vunpack.c.l.b16 %v997
      %v3402 = vunpack.c.l.b16 %v998
      %v3403 = vunpack.c.l.b16 %v999
      %v3404 = vunpack.c.l.b16 %v1000
      %v3405 = vunpack.c.l.b16 %v1001
      %v3406 = vunpack.c.l.b16 %v1002
      %v3407 = vunpack.c.l.b16 %v1003
      %v3408 = vunpack.c.l.b16 %v1004
      %v3409 = vunpack.c.l.b16 %v1005
      %v3410 = vunpack.c.l.b16 %v1006
      %v3411 = vunpack.c.l.b16 %v1007
      %v3412 = vunpack.c.l.b16 %v1008
      %v3413 = vunpack.c.l.b16 %v1009
      %v3414 = vunpack.c.l.b16 %v1010
      %v3415 = vunpack.c.l.b16 %v1011
      %v3416 = vunpack.c.l.b16 %v1012
      %v3417 = vunpack.c.l.b16 %v1013
      %v3418 = vunpack.c.l.b16 %v1014
      %v3419 = vunpack.c.l.b16 %v1015
      %v3420 = vunpack.c.l.b16 %v1016
      %v3421 = vunpack.c.l.b16 %v1017
      %v3422 = vunpack.c.l.b16 %v1018
      %v3423 = vunpack.c.l.b16 %v1019
      %v3424 = vunpack.c.l.b16 %v1020
      %v3425 = vunpack.c.l.b16 %v1021
      %v3426 = vunpack.c.l.b16 %v1022
      %v3427 = vunpack.c.l.b16 %v1023
      %v3428 = vunpack.c.l.b16 %v1024
      %v3429 = vunpack.c.l.b16 %v1025
      %v3430 = vunpack.c.l.b16 %v1026
      %v3431 = vunpack.c.l.b16 %v1027
      %v3432 = vunpack.c.l.b16 %v1028
      %v3433 = vunpack.c.l.b16 %v1029
      %v3434 = vunpack.c.l.b16 %v1030
      %v3435 = vunpack.c.l.b16 %v1031
      %v3436 = vunpack.c.l.b16 %v1032
      %v3437 = vunpack.c.l.b16 %v1033
      %v3438 = vunpack.c.l.b16 %v1034
      %v3439 = vunpack.c.l.b16 %v1035
      %v3440 = vunpack.c.l.b16 %v1036
      %v3441 = vunpack.c.l.b16 %v1037
      %v3442 = vunpack.c.l.b16 %v1038
      %v3443 = vunpack.c.l.b16 %v1039
      %v3444 = vunpack.c.l.b16 %v1040
      %v3445 = vunpack.c.l.b16 %v1041
      %v3446 = vunpack.c.l.b16 %v1042
      %v3447 = vunpack.c.l.b16 %v1043
      %v3448 = vunpack.c.l.b16 %v1044
      %v3449 = vunpack.c.l.b16 %v1045
      %v3450 = vunpack.c.l.b16 %v1046
      %v3451 = vunpack.c.l.b16 %v1047
      %v3452 = vunpack.c.l.b16 %v1048
      %v3453 = vunpack.c.l.b16 %v1049
      %v3454 = vunpack.c.l.b16 %v1050
      %v3455 = vunpack.c.l.b16 %v1051
      %v3456 = vunpack.c.l.b16 %v1052
      %v3457 = vunpack.c.l.b16 %v1053
      %v3458 = vunpack.c.l.b16 %v1054
      %v3459 = vunpack.c.l.b16 %v1055
      %v3460 = vunpack.c.l.b16 %v1056
      %v3461 = vunpack.c.l.b16 %v1057
      %v3462 = vunpack.c.l.b16 %v1058
      %v3463 = vunpack.c.l.b16 %v1059
      %v3464 = vunpack.c.l.b16 %v1060
      %v3465 = vunpack.c.l.b16 %v1061
      %v3466 = vunpack.c.l.b16 %v1062
      %v3467 = vunpack.c.l.b16 %v1063
      %v3468 = vunpack.c.l.b16 %v1064
      %v3469 = vunpack.c.l.b16 %v1065
      %v3470 = vunpack.c.l.b16 %v1066
      %v3471 = vunpack.c.l.b16 %v1067
      %v3472 = vunpack.c.l.b16 %v1068
      %v3473 = vunpack.c.l.b16 %v1069
      %v3474 = vunpack.c.l.b16 %v1070
      %v3475 = vunpack.c.l.b16 %v1071
      %v3476 = vunpack.c.l.b16 %v1072
      %v3477 = vunpack.c.l.b16 %v1073
      %v3478 = vunpack.c.l.b16 %v1074
      %v3479 = vunpack.c.l.b16 %v1075
      %v3480 = vunpack.c.l.b16 %v1076
      %v3481 = vunpack.c.l.b16 %v1077
      %v3482 = vunpack.c.l.b16 %v1078
      %v3483 = vunpack.c.l.b16 %v1079
      %v3484 = vunpack.c.l.b16 %v1080
      %v3485 = vunpack.c.l.b16 %v1081
      %v3486 = vunpack.c.l.b16 %v1082
      %v3487 = vunpack.c.l.b16 %v1083
      %v3488 = vunpack.c.l.b16 %v1084
      %v3489 = vunpack.c.l.b16 %v1085
      %v3490 = vunpack.c.l.b16 %v1086
      %v3491 = vunpack.c.l.b16 %v1087
      %v3492 = vunpack.c.l.b16 %v1088
      %v3493 = vunpack.c.l.b16 %v1089
      %v3494 = vunpack.c.l.b16 %v1090
      %v3495 = vunpack.c.l.b16 %v1091
      %v3496 = vunpack.c.l.b16 %v1092
      %v3497 = vunpack.c.l.b16 %v1093
      %v3498 = vunpack.c.l.b16 %v1094
      %v3499 = vunpack.c.l.b16 %v1095
      %v3500 = vunpack.c.l.b16 %v1096
      %v3501 = vunpack.c.l.b16 %v1097
      %v3502 = vunpack.c.l.b16 %v1098
      %v3503 = vunpack.c.l.b16 %v1099
      %v3504 = vunpack.c.l.b16 %v1100
      %v3505 = vunpack.c.l.b16 %v1101
      %v3506 = vunpack.c.l.b16 %v1102
      %v3507 = vunpack.c.l.b16 %v1103
      %v3508 = vunpack.c.l.b16 %v1104
      %v3509 = vunpack.c.l.b16 %v1105
      %v3510 = vunpack.c.l.b16 %v1106
      %v3511 = vunpack.c.l.b16 %v1107
      %v3512 = vunpack.c.l.b16 %v1108
      %v3513 = vunpack.c.l.b16 %v1109
      %v3514 = vunpack.c.l.b16 %v1110
      %v3515 = vunpack.c.l.b16 %v1111
      %v3516 = vunpack.c.l.b16 %v1112
      %v3517 = vunpack.c.l.b16 %v1113
      %v3518 = vunpack.c.l.b16 %v1114
      %v3519 = vunpack.c.l.b16 %v1115
      %v3520 = vunpack.c.l.b16 %v1116
      %v3521 = vunpack.c.l.b16 %v1117
      %v3522 = vunpack.c.l.b16 %v1118
      %v3523 = vunpack.c.l.b16 %v1119
      %v3524 = vunpack.c.l.b16 %v1120
      %v3525 = vunpack.c.l.b16 %v1121
      %v3526 = vunpack.c.l.b16 %v1122
      %v3527 = vunpack.c.l.b16 %v1123
      %v3528 = vunpack.c.l.b16 %v1124
      %v3529 = vunpack.c.l.b16 %v1125
      %v3530 = vunpack.c.l.b16 %v1126
      %v3531 = vunpack.c.l.b16 %v1127
      %v3532 = vunpack.c.l.b16 %v1128
      %v3533 = vunpack.c.l.b16 %v1129
      %v3534 = vunpack.c.l.b16 %v1130
      %v3535 = vpack.c.b16 %v3040, %v3039
      %v3536 = vpack.c.b16 %v3042, %v3041
      %v3537 = vpack.c.b16 %v3044, %v3043
      %v3538 = vpack.c.b16 %v3046, %v3045
      %v3539 = vpack.c.b16 %v3048, %v3047
      %v3540 = vpack.c.b16 %v3050, %v3049
      %v3541 = vpack.c.b16 %v3052, %v3051
      %v3542 = vpack.c.b16 %v3054, %v3053
      %v3543 = vpack.c.b16 %v3056, %v3055
      %v3544 = vpack.c.b16 %v3058, %v3057
      %v3545 = vpack.c.b16 %v3060, %v3059
      %v3546 = vpack.c.b16 %v3062, %v3061
      %v3547 = vpack.c.b16 %v3064, %v3063
      %v3548 = vpack.c.b16 %v3066, %v3065
      %v3549 = vpack.c.b16 %v3068, %v3067
      %v3550 = vpack.c.b16 %v3070, %v3069
      %v3551 = vpack.c.b16 %v3072, %v3071
      %v3552 = vpack.c.b16 %v3074, %v3073
      %v3553 = vpack.c.b16 %v3076, %v3075
      %v3554 = vpack.c.b16 %v3078, %v3077
      %v3555 = vpack.c.b16 %v3080, %v3079
      %v3556 = vpack.c.b16 %v3082, %v3081
      %v3557 = vpack.c.b16 %v3084, %v3083
      %v3558 = vpack.c.b16 %v3086, %v3085
      %v3559 = vpack.c.b16 %v3088, %v3087
      %v3560 = vpack.c.b16 %v3090, %v3089
      %v3561 = vpack.c.b16 %v3092, %v3091
      %v3562 = vpack.c.b16 %v3094, %v3093
      %v3563 = vpack.c.b16 %v3096, %v3095
      %v3564 = vpack.c.b16 %v3098, %v3097
      %v3565 = vpack.c.b16 %v3100, %v3099
      %v3566 = vpack.c.b16 %v3102, %v3101
      %v3567 = vpack.c.b16 %v3104, %v3103
      %v3568 = vpack.c.b16 %v3106, %v3105
      %v3569 = vpack.c.b16 %v3108, %v3107
      %v3570 = vpack.c.b16 %v3110, %v3109
      %v3571 = vpack.c.b16 %v3112, %v3111
      %v3572 = vpack.c.b16 %v3114, %v3113
      %v3573 = vpack.c.b16 %v3116, %v3115
      %v3574 = vpack.c.b16 %v3118, %v3117
      %v3575 = vpack.c.b16 %v3120, %v3119
      %v3576 = vpack.c.b16 %v3122, %v3121
      %v3577 = vpack.c.b16 %v3124, %v3123
      %v3578 = vpack.c.b16 %v3126, %v3125
      %v3579 = vpack.c.b16 %v3128, %v3127
      %v3580 = vpack.c.b16 %v3130, %v3129
      %v3581 = vpack.c.b16 %v3132, %v3131
      %v3582 = vpack.c.b16 %v3134, %v3133
      %v3583 = vpack.c.b16 %v3136, %v3135
      %v3584 = vpack.c.b16 %v3138, %v3137
      %v3585 = vpack.c.b16 %v3140, %v3139
      %v3586 = vpack.c.b16 %v3142, %v3141
      %v3587 = vpack.c.b16 %v3144, %v3143
      %v3588 = vpack.c.b16 %v3146, %v3145
      %v3589 = vpack.c.b16 %v3148, %v3147
      %v3590 = vpack.c.b16 %v3150, %v3149
      %v3591 = vpack.c.b16 %v3152, %v3151
      %v3592 = vpack.c.b16 %v3154, %v3153
      %v3593 = vpack.c.b16 %v3156, %v3155
      %v3594 = vpack.c.b16 %v3158, %v3157
      %v3595 = vpack.c.b16 %v3160, %v3159
      %v3596 = vpack.c.b16 %v3162, %v3161
      %v3597 = vpack.c.b16 %v3164, %v3163
      %v3598 = vpack.c.b16 %v3166, %v3165
      %v3599 = vpack.c.b16 %v3168, %v3167
      %v3600 = vpack.c.b16 %v3170, %v3169
      %v3601 = vpack.c.b16 %v3172, %v3171
      %v3602 = vpack.c.b16 %v3174, %v3173
      %v3603 = vpack.c.b16 %v3176, %v3175
      %v3604 = vpack.c.b16 %v3178, %v3177
      %v3605 = vpack.c.b16 %v3180, %v3179
      %v3606 = vpack.c.b16 %v3182, %v3181
      %v3607 = vpack.c.b16 %v3184, %v3183
      %v3608 = vpack.c.b16 %v3186, %v3185
      %v3609 = vpack.c.b16 %v3188, %v3187
      %v3610 = vpack.c.b16 %v3190, %v3189
      %v3611 = vpack.c.b16 %v3192, %v3191
      %v3612 = vpack.c.b16 %v3194, %v3193
      %v3613 = vpack.c.b16 %v3196, %v3195
      %v3614 = vpack.c.b16 %v3198, %v3197
      %v3615 = vpack.c.b16 %v3200, %v3199
      %v3616 = vpack.c.b16 %v3202, %v3201
      %v3617 = vpack.c.b16 %v3204, %v3203
      %v3618 = vpack.c.b16 %v3206, %v3205
      %v3619 = vpack.c.b16 %v3208, %v3207
      %v3620 = vpack.c.b16 %v3210, %v3209
      %v3621 = vpack.c.b16 %v3212, %v3211
      %v3622 = vpack.c.b16 %v3214, %v3213
      %v3623 = vpack.c.b16 %v3216, %v3215
      %v3624 = vpack.c.b16 %v3218, %v3217
      %v3625 = vpack.c.b16 %v3220, %v3219
      %v3626 = vpack.c.b16 %v3222, %v3221
      %v3627 = vpack.c.b16 %v3224, %v3223
      %v3628 = vpack.c.b16 %v3226, %v3225
      %v3629 = vpack.c.b16 %v3228, %v3227
      %v3630 = vpack.c.b16 %v3230, %v3229
      %v3631 = vpack.c.b16 %v3232, %v3231
      %v3632 = vpack.c.b16 %v3234, %v3233
      %v3633 = vpack.c.b16 %v3236, %v3235
      %v3634 = vpack.c.b16 %v3238, %v3237
      %v3635 = vpack.c.b16 %v3240, %v3239
      %v3636 = vpack.c.b16 %v3242, %v3241
      %v3637 = vpack.c.b16 %v3244, %v3243
      %v3638 = vpack.c.b16 %v3246, %v3245
      %v3639 = vpack.c.b16 %v3248, %v3247
      %v3640 = vpack.c.b16 %v3250, %v3249
      %v3641 = vpack.c.b16 %v3252, %v3251
      %v3642 = vpack.c.b16 %v3254, %v3253
      %v3643 = vpack.c.b16 %v3256, %v3255
      %v3644 = vpack.c.b16 %v3258, %v3257
      %v3645 = vpack.c.b16 %v3260, %v3259
      %v3646 = vpack.c.b16 %v3262, %v3261
      %v3647 = vpack.c.b16 %v3264, %v3263
      %v3648 = vpack.c.b16 %v3266, %v3265
      %v3649 = vpack.c.b16 %v3268, %v3267
      %v3650 = vpack.c.b16 %v3270, %v3269
      %v3651 = vpack.c.b16 %v3272, %v3271
      %v3652 = vpack.c.b16 %v3274, %v3273
      %v3653 = vpack.c.b16 %v3276, %v3275
      %v3654 = vpack.c.b16 %v3278, %v3277
      %v3655 = vpack.c.b16 %v3280, %v3279
      %v3656 = vpack.c.b16 %v3282, %v3281
      %v3657 = vpack.c.b16 %v3284, %v3283
      %v3658 = vpack.c.b16 %v3286, %v3285
      %v3659 = vpack.c.b16 %v3288, %v3287
      %v3660 = vpack.c.b16 %v3290, %v3289
      %v3661 = vpack.c.b16 %v3292, %v3291
      %v3662 = vpack.c.b16 %v3294, %v3293
      %v3663 = vpack.c.b16 %v3296, %v3295
      %v3664 = vpack.c.b16 %v3298, %v3297
      %v3665 = vpack.c.b16 %v3300, %v3299
      %v3666 = vpack.c.b16 %v3302, %v3301
      %v3667 = vpack.c.b16 %v3304, %v3303
      %v3668 = vpack.c.b16 %v3306, %v3305
      %v3669 = vpack.c.b16 %v3308, %v3307
      %v3670 = vpack.c.b16 %v3310, %v3309
      %v3671 = vpack.c.b16 %v3312, %v3311
      %v3672 = vpack.c.b16 %v3314, %v3313
      %v3673 = vpack.c.b16 %v3316, %v3315
      %v3674 = vpack.c.b16 %v3318, %v3317
      %v3675 = vpack.c.b16 %v3320, %v3319
      %v3676 = vpack.c.b16 %v3322, %v3321
      %v3677 = vpack.c.b16 %v3324, %v3323
      %v3678 = vpack.c.b16 %v3326, %v3325
      %v3679 = vpack.c.b16 %v3328, %v3327
      %v3680 = vpack.c.b16 %v3330, %v3329
      %v3681 = vpack.c.b16 %v3332, %v3331
      %v3682 = vpack.c.b16 %v3334, %v3333
      %v3683 = vpack.c.b16 %v3336, %v3335
      %v3684 = vpack.c.b16 %v3338, %v3337
      %v3685 = vpack.c.b16 %v3340, %v3339
      %v3686 = vpack.c.b16 %v3342, %v3341
      %v3687 = vpack.c.b16 %v3344, %v3343
      %v3688 = vpack.c.b16 %v3346, %v3345
      %v3689 = vpack.c.b16 %v3348, %v3347
      %v3690 = vpack.c.b16 %v3350, %v3349
      %v3691 = vpack.c.b16 %v3352, %v3351
      %v3692 = vpack.c.b16 %v3354, %v3353
      %v3693 = vpack.c.b16 %v3356, %v3355
      %v3694 = vpack.c.b16 %v3358, %v3357
      %v3695 = vpack.c.b16 %v3360, %v3359
      %v3696 = vpack.c.b16 %v3362, %v3361
      %v3697 = vpack.c.b16 %v3364, %v3363
      %v3698 = vpack.c.b16 %v3366, %v3365
      %v3699 = vpack.c.b16 %v3368, %v3367
      %v3700 = vpack.c.b16 %v3370, %v3369
      %v3701 = vpack.c.b16 %v3372, %v3371
      %v3702 = vpack.c.b16 %v3374, %v3373
      %v3703 = vpack.c.b16 %v3376, %v3375
      %v3704 = vpack.c.b16 %v3378, %v3377
      %v3705 = vpack.c.b16 %v3380, %v3379
      %v3706 = vpack.c.b16 %v3382, %v3381
      %v3707 = vpack.c.b16 %v3384, %v3383
      %v3708 = vpack.c.b16 %v3386, %v3385
      %v3709 = vpack.c.b16 %v3388, %v3387
      %v3710 = vpack.c.b16 %v3390, %v3389
      %v3711 = vpack.c.b16 %v3392, %v3391
      %v3712 = vpack.c.b16 %v3394, %v3393
      %v3713 = vpack.c.b16 %v3396, %v3395
      %v3714 = vpack.c.b16 %v3398, %v3397
      %v3715 = vpack.c.b16 %v3400, %v3399
      %v3716 = vpack.c.b16 %v3402, %v3401
      %v3717 = vpack.c.b16 %v3404, %v3403
      %v3718 = vpack.c.b16 %v3406, %v3405
      %v3719 = vpack.c.b16 %v3408, %v3407
      %v3720 = vpack.c.b16 %v3410, %v3409
      %v3721 = vpack.c.b16 %v3412, %v3411
      %v3722 = vpack.c.b16 %v3414, %v3413
      %v3723 = vpack.c.b16 %v3416, %v3415
      %v3724 = vpack.c.b16 %v3418, %v3417
      %v3725 = vpack.c.b16 %v3420, %v3419
      %v3726 = vpack.c.b16 %v3422, %v3421
      %v3727 = vpack.c.b16 %v3424, %v3423
      %v3728 = vpack.c.b16 %v3426, %v3425
      %v3729 = vpack.c.b16 %v3428, %v3427
      %v3730 = vpack.c.b16 %v3430, %v3429
      %v3731 = vpack.c.b16 %v3432, %v3431
      %v3732 = vpack.c.b16 %v3434, %v3433
      %v3733 = vpack.c.b16 %v3436, %v3435
      %v3734 = vpack.c.b16 %v3438, %v3437
      %v3735 = vpack.c.b16 %v3440, %v3439
      %v3736 = vpack.c.b16 %v3442, %v3441
      %v3737 = vpack.c.b16 %v3444, %v3443
      %v3738 = vpack.c.b16 %v3446, %v3445
      %v3739 = vpack.c.b16 %v3448, %v3447
      %v3740 = vpack.c.b16 %v3450, %v3449
      %v3741 = vpack.c.b16 %v3452, %v3451
      %v3742 = vpack.c.b16 %v3454, %v3453
      %v3743 = vpack.c.b16 %v3456, %v3455
      %v3744 = vpack.c.b16 %v3458, %v3457
      %v3745 = vpack.c.b16 %v3460, %v3459
      %v3746 = vpack.c.b16 %v3462, %v3461
      %v3747 = vpack.c.b16 %v3464, %v3463
      %v3748 = vpack.c.b16 %v3466, %v3465
      %v3749 = vpack.c.b16 %v3468, %v3467
      %v3750 = vpack.c.b16 %v3470, %v3469
      %v3751 = vpack.c.b16 %v3472, %v3471
      %v3752 = vpack.c.b16 %v3474, %v3473
      %v3753 = vpack.c.b16 %v3476, %v3475
      %v3754 = vpack.c.b16 %v3478, %v3477
      %v3755 = vpack.c.b16 %v3480, %v3479
      %v3756 = vpack.c.b16 %v3482, %v3481
      %v3757 = vpack.c.b16 %v3484, %v3483
      %v3758 = vpack.c.b16 %v3486, %v3485
      %v3759 = vpack.c.b16 %v3488, %v3487
      %v3760 = vpack.c.b16 %v3490, %v3489
      %v3761 = vpack.c.b16 %v3492, %v3491
      %v3762 = vpack.c.b16 %v3494, %v3493
      %v3763 = vpack.c.b16 %v3496, %v3495
      %v3764 = vpack.c.b16 %v3498, %v3497
      %v3765 = vpack.c.b16 %v3500, %v3499
      %v3766 = vpack.c.b16 %v3502, %v3501
      %v3767 = vpack.c.b16 %v3504, %v3503
      %v3768 = vpack.c.b16 %v3506, %v3505
      %v3769 = vpack.c.b16 %v3508, %v3507
      %v3770 = vpack.c.b16 %v3510, %v3509
      %v3771 = vpack.c.b16 %v3512, %v3511
      %v3772 = vpack.c.b16 %v3514, %v3513
      %v3773 = vpack.c.b16 %v3516, %v3515
      %v3774 = vpack.c.b16 %v3518, %v3517
      %v3775 = vpack.c.b16 %v3520, %v3519
      %v3776 = vpack.c.b16 %v3522, %v3521
      %v3777 = vpack.c.b16 %v3524, %v3523
      %v3778 = vpack.c.b16 %v3526, %v3525
      %v3779 = vpack.c.b16 %v3528, %v3527
      %v3780 = vpack.c.b16 %v3530, %v3529
      %v3781 = vpack.c.b16 %v3532, %v3531
      %v3782 = vpack.c.b16 %v3534, %v3533
      %4031 = vmatprep.subr.bf16.mxu0 0
      %4032 = vmatpush1.bf16.msra.mxu0 %v3535
      %4033 = vmatprep.subr.bf16.mxu0 0
      %4034 = vmatpush1.bf16.msra.mxu0 %v3536
      %4035 = vmatprep.subr.bf16.mxu0 0
      %4036 = vmatpush1.bf16.msra.mxu0 %v3537
      %4037 = vmatprep.subr.bf16.mxu0 0
      %4038 = vmatpush1.bf16.msra.mxu0 %v3538
      %4039 = vmatprep.subr.bf16.mxu0 0
      %4040 = vmatpush1.bf16.msra.mxu0 %v3539
      %4041 = vmatprep.subr.bf16.mxu0 0
      %4042 = vmatpush1.bf16.msra.mxu0 %v3540
      %4043 = vmatprep.subr.bf16.mxu0 0
      %4044 = vmatpush1.bf16.msra.mxu0 %v3541
      %4045 = vmatprep.subr.bf16.mxu0 0
      %4046 = vmatpush1.bf16.msra.mxu0 %v3542
      %4047 = vmatprep.subr.bf16.mxu0 0
      %4048 = vmatpush1.bf16.msra.mxu0 %v3543
      %4049 = vmatprep.subr.bf16.mxu0 0
      %4050 = vmatpush1.bf16.msra.mxu0 %v3544
      %4051 = vmatprep.subr.bf16.mxu0 0
      %4052 = vmatpush1.bf16.msra.mxu0 %v3545
      %4053 = vmatprep.subr.bf16.mxu0 0
      %4054 = vmatpush1.bf16.msra.mxu0 %v3546
      %4055 = vmatprep.subr.bf16.mxu0 0
      %4056 = vmatpush1.bf16.msra.mxu0 %v3547
      %4057 = vmatprep.subr.bf16.mxu0 0
      %4058 = vmatpush1.bf16.msra.mxu0 %v3548
      %4059 = vmatprep.subr.bf16.mxu0 0
      %4060 = vmatpush1.bf16.msra.mxu0 %v3549
      %4061 = vmatprep.subr.bf16.mxu0 0
      %4062 = vmatpush1.bf16.msra.mxu0 %v3550
      %4063 = vmatprep.mubr.bf16.mxu0 %v2414
      %4064 = vmatmul.mubr.bf16.gmra.mrb[0].mxu0 %v2413
      %v4065 = vpop.f32.mrb[0].mxu0
      %v4066 = vadd.f32 %v2541, %v4065
      %v4067 = vpop.f32.mrb[0].mxu0
      %v4068 = vpop.f32.mrb[0].mxu0
      %v4069 = vadd.f32 %v2541, %v4068
      %v4070 = vpop.f32.mrb[0].mxu0
      %4071 = vmatprep.mubr.bf16.mxu0 %v2445
      %4072 = vmatmul.mubr.bf16.gmra.mrb[0].mxu0 %v2444
      %v4073 = vpop.f32.mrb[0].mxu0
      %v4074 = vadd.f32 %v2541, %v4073
      %v4075 = vpop.f32.mrb[0].mxu0
      %v4076 = vpop.f32.mrb[0].mxu0
      %v4077 = vadd.f32 %v2541, %v4076
      %v4078 = vpop.f32.mrb[0].mxu0
      %4079 = vmatprep.mubr.bf16.mxu0 %v2476
      %4080 = vmatmul.mubr.bf16.gmra.mrb[0].mxu0 %v2475
      %v4081 = vpop.f32.mrb[0].mxu0
      %v4082 = vadd.f32 %v2541, %v4081
      %v4083 = vpop.f32.mrb[0].mxu0
      %v4084 = vpop.f32.mrb[0].mxu0
      %v4085 = vadd.f32 %v2541, %v4084
      %v4086 = vpop.f32.mrb[0].mxu0
      %4087 = vmatprep.mubr.bf16.mxu0 %v2507
      %4088 = vmatmul.mubr.bf16.gmra.mrb[0].mxu0 %v2506
      %v4089 = vpop.f32.mrb[0].mxu0
      %v4090 = vadd.f32 %v2541, %v4089
      %v4091 = vpop.f32.mrb[0].mxu0
      %v4092 = vpop.f32.mrb[0].mxu0
      %v4093 = vadd.f32 %v2541, %v4092
      %v4094 = vpop.f32.mrb[0].mxu0
      %4095 = vdwg.mxu0
      %4096 = vmatprep.subr.bf16.mxu0 0
      %4097 = vmatpush1.bf16.msra.mxu0 %v3551
      %4098 = vmatprep.subr.bf16.mxu0 0
      %4099 = vmatpush1.bf16.msra.mxu0 %v3552
      %4100 = vmatprep.subr.bf16.mxu0 0
      %4101 = vmatpush1.bf16.msra.mxu0 %v3553
      %4102 = vmatprep.subr.bf16.mxu0 0
      %4103 = vmatpush1.bf16.msra.mxu0 %v3554
      %4104 = vmatprep.subr.bf16.mxu0 0
      %4105 = vmatpush1.bf16.msra.mxu0 %v3555
      %4106 = vmatprep.subr.bf16.mxu0 0
      %4107 = vmatpush1.bf16.msra.mxu0 %v3556
      %4108 = vmatprep.subr.bf16.mxu0 0
      %4109 = vmatpush1.bf16.msra.mxu0 %v3557
      %4110 = vmatprep.subr.bf16.mxu0 0
      %4111 = vmatpush1.bf16.msra.mxu0 %v3558
      %4112 = vmatprep.subr.bf16.mxu0 0
      %4113 = vmatpush1.bf16.msra.mxu0 %v3559
      %4114 = vmatprep.subr.bf16.mxu0 0
      %4115 = vmatpush1.bf16.msra.mxu0 %v3560
      %4116 = vmatprep.subr.bf16.mxu0 0
      %4117 = vmatpush1.bf16.msra.mxu0 %v3561
      %4118 = vmatprep.subr.bf16.mxu0 0
      %4119 = vmatpush1.bf16.msra.mxu0 %v3562
      %4120 = vmatprep.subr.bf16.mxu0 0
      %4121 = vmatpush1.bf16.msra.mxu0 %v3563
      %4122 = vmatprep.subr.bf16.mxu0 0
      %4123 = vmatpush1.bf16.msra.mxu0 %v3564
      %4124 = vmatprep.subr.bf16.mxu0 0
      %4125 = vmatpush1.bf16.msra.mxu0 %v3565
      %4126 = vmatprep.subr.bf16.mxu0 0
      %4127 = vmatpush1.bf16.msra.mxu0 %v3566
      %4128 = vmatprep.mubr.bf16.mxu0 %v2416
      %4129 = vmatmul.mubr.bf16.gmra.mrb[0].mxu0 %v2415
      %v4130 = vpop.f32.mrb[0].mxu0
      %v4131 = vadd.f32 %v4066, %v4130
      %v4132 = vpop.f32.mrb[0].mxu0
      %v4133 = vpop.f32.mrb[0].mxu0
      %v4134 = vadd.f32 %v4069, %v4133
      %v4135 = vpop.f32.mrb[0].mxu0
      %4136 = vmatprep.mubr.bf16.mxu0 %v2447
      %4137 = vmatmul.mubr.bf16.gmra.mrb[0].mxu0 %v2446
      %v4138 = vpop.f32.mrb[0].mxu0
      %v4139 = vadd.f32 %v4074, %v4138
      %v4140 = vpop.f32.mrb[0].mxu0
      %v4141 = vpop.f32.mrb[0].mxu0
      %v4142 = vadd.f32 %v4077, %v4141
      %v4143 = vpop.f32.mrb[0].mxu0
      %4144 = vmatprep.mubr.bf16.mxu0 %v2478
      %4145 = vmatmul.mubr.bf16.gmra.mrb[0].mxu0 %v2477
      %v4146 = vpop.f32.mrb[0].mxu0
      %v4147 = vadd.f32 %v4082, %v4146
      %v4148 = vpop.f32.mrb[0].mxu0
      %v4149 = vpop.f32.mrb[0].mxu0
      %v4150 = vadd.f32 %v4085, %v4149
      %v4151 = vpop.f32.mrb[0].mxu0
      %4152 = vmatprep.mubr.bf16.mxu0 %v2509
      %4153 = vmatmul.mubr.bf16.gmra.mrb[0].mxu0 %v2508
      %v4154 = vpop.f32.mrb[0].mxu0
      %v4155 = vadd.f32 %v4090, %v4154
      %v4156 = vpop.f32.mrb[0].mxu0
      %v4157 = vpop.f32.mrb[0].mxu0
      %v4158 = vadd.f32 %v4093, %v4157
      %v4159 = vpop.f32.mrb[0].mxu0
      %4160 = vdwg.mxu0
      %4161 = vmatprep.subr.bf16.mxu0 0
      %4162 = vmatpush1.bf16.msra.mxu0 %v3567
      %4163 = vmatprep.subr.bf16.mxu0 0
      %4164 = vmatpush1.bf16.msra.mxu0 %v3568
      %4165 = vmatprep.subr.bf16.mxu0 0
      %4166 = vmatpush1.bf16.msra.mxu0 %v3569
      %4167 = vmatprep.subr.bf16.mxu0 0
      %4168 = vmatpush1.bf16.msra.mxu0 %v3570
      %4169 = vmatprep.subr.bf16.mxu0 0
      %4170 = vmatpush1.bf16.msra.mxu0 %v3571
      %4171 = vmatprep.subr.bf16.mxu0 0
      %4172 = vmatpush1.bf16.msra.mxu0 %v3572
      %4173 = vmatprep.subr.bf16.mxu0 0
      %4174 = vmatpush1.bf16.msra.mxu0 %v3573
      %4175 = vmatprep.subr.bf16.mxu0 0
      %4176 = vmatpush1.bf16.msra.mxu0 %v3574
      %4177 = vmatprep.subr.bf16.mxu0 0
      %4178 = vmatpush1.bf16.msra.mxu0 %v3575
      %4179 = vmatprep.subr.bf16.mxu0 0
      %4180 = vmatpush1.bf16.msra.mxu0 %v3576
      %4181 = vmatprep.subr.bf16.mxu0 0
      %4182 = vmatpush1.bf16.msra.mxu0 %v3577
      %4183 = vmatprep.subr.bf16.mxu0 0
      %4184 = vmatpush1.bf16.msra.mxu0 %v3578
      %4185 = vmatprep.subr.bf16.mxu0 0
      %4186 = vmatpush1.bf16.msra.mxu0 %v3579
      %4187 = vmatprep.subr.bf16.mxu0 0
      %4188 = vmatpush1.bf16.msra.mxu0 %v3580
      %4189 = vmatprep.subr.bf16.mxu0 0
      %4190 = vmatpush1.bf16.msra.mxu0 %v3581
      %4191 = vmatprep.subr.bf16.mxu0 0
      %4192 = vmatpush1.bf16.msra.mxu0 %v3582
      %4193 = vmatprep.mubr.bf16.mxu0 %v2418
      %4194 = vmatmul.mubr.bf16.gmra.mrb[0].mxu0 %v2417
      %v4195 = vpop.f32.mrb[0].mxu0
      %v4196 = vadd.f32 %v4131, %v4195
      %v4197 = vpop.f32.mrb[0].mxu0
      %v4198 = vpop.f32.mrb[0].mxu0
      %v4199 = vadd.f32 %v4134, %v4198
      %v4200 = vpop.f32.mrb[0].mxu0
      %4201 = vmatprep.mubr.bf16.mxu0 %v2449
      %4202 = vmatmul.mubr.bf16.gmra.mrb[0].mxu0 %v2448
      %v4203 = vpop.f32.mrb[0].mxu0
      %v4204 = vadd.f32 %v4139, %v4203
      %v4205 = vpop.f32.mrb[0].mxu0
      %v4206 = vpop.f32.mrb[0].mxu0
      %v4207 = vadd.f32 %v4142, %v4206
      %v4208 = vpop.f32.mrb[0].mxu0
      %4209 = vmatprep.mubr.bf16.mxu0 %v2480
      %4210 = vmatmul.mubr.bf16.gmra.mrb[0].mxu0 %v2479
      %v4211 = vpop.f32.mrb[0].mxu0
      %v4212 = vadd.f32 %v4147, %v4211
      %v4213 = vpop.f32.mrb[0].mxu0
      %v4214 = vpop.f32.mrb[0].mxu0
      %v4215 = vadd.f32 %v4150, %v4214
      %v4216 = vpop.f32.mrb[0].mxu0
      %4217 = vmatprep.mubr.bf16.mxu0 %v2511
      %4218 = vmatmul.mubr.bf16.gmra.mrb[0].mxu0 %v2510
      %v4219 = vpop.f32.mrb[0].mxu0
      %v4220 = vadd.f32 %v4155, %v4219
      %v4221 = vpop.f32.mrb[0].mxu0
      %v4222 = vpop.f32.mrb[0].mxu0
      %v4223 = vadd.f32 %v4158, %v4222
      %v4224 = vpop.f32.mrb[0].mxu0
      %4225 = vdwg.mxu0
      %4226 = vmatprep.subr.bf16.mxu0 0
      %4227 = vmatpush1.bf16.msra.mxu0 %v3583
      %4228 = vmatprep.subr.bf16.mxu0 0
      %4229 = vmatpush1.bf16.msra.mxu0 %v3584
      %4230 = vmatprep.subr.bf16.mxu0 0
      %4231 = vmatpush1.bf16.msra.mxu0 %v3585
      %4232 = vmatprep.subr.bf16.mxu0 0
      %4233 = vmatpush1.bf16.msra.mxu0 %v3586
      %4234 = vmatprep.subr.bf16.mxu0 0
      %4235 = vmatpush1.bf16.msra.mxu0 %v3587
      %4236 = vmatprep.subr.bf16.mxu0 0
      %4237 = vmatpush1.bf16.msra.mxu0 %v3588
      %4238 = vmatprep.subr.bf16.mxu0 0
      %4239 = vmatpush1.bf16.msra.mxu0 %v3589
      %4240 = vmatprep.subr.bf16.mxu0 0
      %4241 = vmatpush1.bf16.msra.mxu0 %v3590
      %4242 = vmatprep.subr.bf16.mxu0 0
      %4243 = vmatpush1.bf16.msra.mxu0 %v3591
      %4244 = vmatprep.subr.bf16.mxu0 0
      %4245 = vmatpush1.bf16.msra.mxu0 %v3592
      %4246 = vmatprep.subr.bf16.mxu0 0
      %4247 = vmatpush1.bf16.msra.mxu0 %v3593
      %4248 = vmatprep.subr.bf16.mxu0 0
      %4249 = vmatpush1.bf16.msra.mxu0 %v3594
      %4250 = vmatprep.subr.bf16.mxu0 0
      %4251 = vmatpush1.bf16.msra.mxu0 %v3595
      %4252 = vmatprep.subr.bf16.mxu0 0
      %4253 = vmatpush1.bf16.msra.mxu0 %v3596
      %4254 = vmatprep.subr.bf16.mxu0 0
      %4255 = vmatpush1.bf16.msra.mxu0 %v3597
      %4256 = vmatprep.subr.bf16.mxu0 0
      %4257 = vmatpush1.bf16.msra.mxu0 %v3598
      %4258 = vmatprep.mubr.bf16.mxu0 %v2420
      %4259 = vmatmul.mubr.bf16.gmra.mrb[0].mxu0 %v2419
      %v4260 = vpop.f32.mrb[0].mxu0
      %v4261 = vadd.f32 %v4196, %v4260
      %v4262 = vpop.f32.mrb[0].mxu0
      %v4263 = vpop.f32.mrb[0].mxu0
      %v4264 = vadd.f32 %v4199, %v4263
      %v4265 = vpop.f32.mrb[0].mxu0
      %4266 = vmatprep.mubr.bf16.mxu0 %v2451
      %4267 = vmatmul.mubr.bf16.gmra.mrb[0].mxu0 %v2450
      %v4268 = vpop.f32.mrb[0].mxu0
      %v4269 = vadd.f32 %v4204, %v4268
      %v4270 = vpop.f32.mrb[0].mxu0
      %v4271 = vpop.f32.mrb[0].mxu0
      %v4272 = vadd.f32 %v4207, %v4271
      %v4273 = vpop.f32.mrb[0].mxu0
      %4274 = vmatprep.mubr.bf16.mxu0 %v2482
      %4275 = vmatmul.mubr.bf16.gmra.mrb[0].mxu0 %v2481
      %v4276 = vpop.f32.mrb[0].mxu0
      %v4277 = vadd.f32 %v4212, %v4276
      %v4278 = vpop.f32.mrb[0].mxu0
      %v4279 = vpop.f32.mrb[0].mxu0
      %v4280 = vadd.f32 %v4215, %v4279
      %v4281 = vpop.f32.mrb[0].mxu0
      %4282 = vmatprep.mubr.bf16.mxu0 %v2513
      %4283 = vmatmul.mubr.bf16.gmra.mrb[0].mxu0 %v2512
      %v4284 = vpop.f32.mrb[0].mxu0
      %v4285 = vadd.f32 %v4220, %v4284
      %v4286 = vpop.f32.mrb[0].mxu0
      %v4287 = vpop.f32.mrb[0].mxu0
      %v4288 = vadd.f32 %v4223, %v4287
      %v4289 = vpop.f32.mrb[0].mxu0
      %4290 = vdwg.mxu0
      %4291 = vmatprep.subr.bf16.mxu0 0
      %4292 = vmatpush1.bf16.msra.mxu0 %v3599
      %4293 = vmatprep.subr.bf16.mxu0 0
      %4294 = vmatpush1.bf16.msra.mxu0 %v3600
      %4295 = vmatprep.subr.bf16.mxu0 0
      %4296 = vmatpush1.bf16.msra.mxu0 %v3601
      %4297 = vmatprep.subr.bf16.mxu0 0
      %4298 = vmatpush1.bf16.msra.mxu0 %v3602
      %4299 = vmatprep.subr.bf16.mxu0 0
      %4300 = vmatpush1.bf16.msra.mxu0 %v3603
      %4301 = vmatprep.subr.bf16.mxu0 0
      %4302 = vmatpush1.bf16.msra.mxu0 %v3604
      %4303 = vmatprep.subr.bf16.mxu0 0
      %4304 = vmatpush1.bf16.msra.mxu0 %v3605
      %4305 = vmatprep.subr.bf16.mxu0 0
      %4306 = vmatpush1.bf16.msra.mxu0 %v3606
      %4307 = vmatprep.subr.bf16.mxu0 0
      %4308 = vmatpush1.bf16.msra.mxu0 %v3607
      %4309 = vmatprep.subr.bf16.mxu0 0
      %4310 = vmatpush1.bf16.msra.mxu0 %v3608
      %4311 = vmatprep.subr.bf16.mxu0 0
      %4312 = vmatpush1.bf16.msra.mxu0 %v3609
      %4313 = vmatprep.subr.bf16.mxu0 0
      %4314 = vmatpush1.bf16.msra.mxu0 %v3610
      %4315 = vmatprep.subr.bf16.mxu0 0
      %4316 = vmatpush1.bf16.msra.mxu0 %v3611
      %4317 = vmatprep.subr.bf16.mxu0 0
      %4318 = vmatpush1.bf16.msra.mxu0 %v3612
      %4319 = vmatprep.subr.bf16.mxu0 0
      %4320 = vmatpush1.bf16.msra.mxu0 %v3613
      %4321 = vmatprep.subr.bf16.mxu0 0
      %4322 = vmatpush1.bf16.msra.mxu0 %v3614
      %4323 = vmatprep.mubr.bf16.mxu0 %v2422
      %4324 = vmatmul.mubr.bf16.gmra.mrb[0].mxu0 %v2421
      %v4325 = vpop.f32.mrb[0].mxu0
      %v4326 = vadd.f32 %v4261, %v4325
      %v4327 = vpop.f32.mrb[0].mxu0
      %v4328 = vpop.f32.mrb[0].mxu0
      %v4329 = vadd.f32 %v4264, %v4328
      %v4330 = vpop.f32.mrb[0].mxu0
      %4331 = vmatprep.mubr.bf16.mxu0 %v2453
      %4332 = vmatmul.mubr.bf16.gmra.mrb[0].mxu0 %v2452
      %v4333 = vpop.f32.mrb[0].mxu0
      %v4334 = vadd.f32 %v4269, %v4333
      %v4335 = vpop.f32.mrb[0].mxu0
      %v4336 = vpop.f32.mrb[0].mxu0
      %v4337 = vadd.f32 %v4272, %v4336
      %v4338 = vpop.f32.mrb[0].mxu0
      %4339 = vmatprep.mubr.bf16.mxu0 %v2484
      %4340 = vmatmul.mubr.bf16.gmra.mrb[0].mxu0 %v2483
      %v4341 = vpop.f32.mrb[0].mxu0
      %v4342 = vadd.f32 %v4277, %v4341
      %v4343 = vpop.f32.mrb[0].mxu0
      %v4344 = vpop.f32.mrb[0].mxu0
      %v4345 = vadd.f32 %v4280, %v4344
      %v4346 = vpop.f32.mrb[0].mxu0
      %4347 = vmatprep.mubr.bf16.mxu0 %v2515
      %4348 = vmatmul.mubr.bf16.gmra.mrb[0].mxu0 %v2514
      %v4349 = vpop.f32.mrb[0].mxu0
      %v4350 = vadd.f32 %v4285, %v4349
      %v4351 = vpop.f32.mrb[0].mxu0
      %v4352 = vpop.f32.mrb[0].mxu0
      %v4353 = vadd.f32 %v4288, %v4352
      %v4354 = vpop.f32.mrb[0].mxu0
      %4355 = vdwg.mxu0
      %4356 = vmatprep.subr.bf16.mxu0 0
      %4357 = vmatpush1.bf16.msra.mxu0 %v3615
      %4358 = vmatprep.subr.bf16.mxu0 0
      %4359 = vmatpush1.bf16.msra.mxu0 %v3616
      %4360 = vmatprep.subr.bf16.mxu0 0
      %4361 = vmatpush1.bf16.msra.mxu0 %v3617
      %4362 = vmatprep.subr.bf16.mxu0 0
      %4363 = vmatpush1.bf16.msra.mxu0 %v3618
      %4364 = vmatprep.subr.bf16.mxu0 0
      %4365 = vmatpush1.bf16.msra.mxu0 %v3619
      %4366 = vmatprep.subr.bf16.mxu0 0
      %4367 = vmatpush1.bf16.msra.mxu0 %v3620
      %4368 = vmatprep.subr.bf16.mxu0 0
      %4369 = vmatpush1.bf16.msra.mxu0 %v3621
      %4370 = vmatprep.subr.bf16.mxu0 0
      %4371 = vmatpush1.bf16.msra.mxu0 %v3622
      %4372 = vmatprep.subr.bf16.mxu0 0
      %4373 = vmatpush1.bf16.msra.mxu0 %v3623
      %4374 = vmatprep.subr.bf16.mxu0 0
      %4375 = vmatpush1.bf16.msra.mxu0 %v3624
      %4376 = vmatprep.subr.bf16.mxu0 0
      %4377 = vmatpush1.bf16.msra.mxu0 %v3625
      %4378 = vmatprep.subr.bf16.mxu0 0
      %4379 = vmatpush1.bf16.msra.mxu0 %v3626
      %4380 = vmatprep.subr.bf16.mxu0 0
      %4381 = vmatpush1.bf16.msra.mxu0 %v3627
      %4382 = vmatprep.subr.bf16.mxu0 0
      %4383 = vmatpush1.bf16.msra.mxu0 %v3628
      %4384 = vmatprep.subr.bf16.mxu0 0
      %4385 = vmatpush1.bf16.msra.mxu0 %v3629
      %4386 = vmatprep.subr.bf16.mxu0 0
      %4387 = vmatpush1.bf16.msra.mxu0 %v3630
      %4388 = vmatprep.mubr.bf16.mxu0 %v2424
      %4389 = vmatmul.mubr.bf16.gmra.mrb[0].mxu0 %v2423
      %v4390 = vpop.f32.mrb[0].mxu0
      %v4391 = vadd.f32 %v4326, %v4390
      %v4392 = vpop.f32.mrb[0].mxu0
      %v4393 = vpop.f32.mrb[0].mxu0
      %v4394 = vadd.f32 %v4329, %v4393
      %v4395 = vpop.f32.mrb[0].mxu0
      %4396 = vmatprep.mubr.bf16.mxu0 %v2455
      %4397 = vmatmul.mubr.bf16.gmra.mrb[0].mxu0 %v2454
      %v4398 = vpop.f32.mrb[0].mxu0
      %v4399 = vadd.f32 %v4334, %v4398
      %v4400 = vpop.f32.mrb[0].mxu0
      %v4401 = vpop.f32.mrb[0].mxu0
      %v4402 = vadd.f32 %v4337, %v4401
      %v4403 = vpop.f32.mrb[0].mxu0
      %4404 = vmatprep.mubr.bf16.mxu0 %v2486
      %4405 = vmatmul.mubr.bf16.gmra.mrb[0].mxu0 %v2485
      %v4406 = vpop.f32.mrb[0].mxu0
      %v4407 = vadd.f32 %v4342, %v4406
      %v4408 = vpop.f32.mrb[0].mxu0
      %v4409 = vpop.f32.mrb[0].mxu0
      %v4410 = vadd.f32 %v4345, %v4409
      %v4411 = vpop.f32.mrb[0].mxu0
      %4412 = vmatprep.mubr.bf16.mxu0 %v2517
      %4413 = vmatmul.mubr.bf16.gmra.mrb[0].mxu0 %v2516
      %v4414 = vpop.f32.mrb[0].mxu0
      %v4415 = vadd.f32 %v4350, %v4414
      %v4416 = vpop.f32.mrb[0].mxu0
      %v4417 = vpop.f32.mrb[0].mxu0
      %v4418 = vadd.f32 %v4353, %v4417
      %v4419 = vpop.f32.mrb[0].mxu0
      %4420 = vdwg.mxu0
      %4421 = vmatprep.subr.bf16.mxu0 0
      %4422 = vmatpush1.bf16.msra.mxu0 %v3631
      %4423 = vmatprep.subr.bf16.mxu0 0
      %4424 = vmatpush1.bf16.msra.mxu0 %v3632
      %4425 = vmatprep.subr.bf16.mxu0 0
      %4426 = vmatpush1.bf16.msra.mxu0 %v3633
      %4427 = vmatprep.subr.bf16.mxu0 0
      %4428 = vmatpush1.bf16.msra.mxu0 %v3634
      %4429 = vmatprep.subr.bf16.mxu0 0
      %4430 = vmatpush1.bf16.msra.mxu0 %v3635
      %4431 = vmatprep.subr.bf16.mxu0 0
      %4432 = vmatpush1.bf16.msra.mxu0 %v3636
      %4433 = vmatprep.subr.bf16.mxu0 0
      %4434 = vmatpush1.bf16.msra.mxu0 %v3637
      %4435 = vmatprep.subr.bf16.mxu0 0
      %4436 = vmatpush1.bf16.msra.mxu0 %v3638
      %4437 = vmatprep.subr.bf16.mxu0 0
      %4438 = vmatpush1.bf16.msra.mxu0 %v3639
      %4439 = vmatprep.subr.bf16.mxu0 0
      %4440 = vmatpush1.bf16.msra.mxu0 %v3640
      %4441 = vmatprep.subr.bf16.mxu0 0
      %4442 = vmatpush1.bf16.msra.mxu0 %v3641
      %4443 = vmatprep.subr.bf16.mxu0 0
      %4444 = vmatpush1.bf16.msra.mxu0 %v3642
      %4445 = vmatprep.subr.bf16.mxu0 0
      %4446 = vmatpush1.bf16.msra.mxu0 %v3643
      %4447 = vmatprep.subr.bf16.mxu0 0
      %4448 = vmatpush1.bf16.msra.mxu0 %v3644
      %4449 = vmatprep.subr.bf16.mxu0 0
      %4450 = vmatpush1.bf16.msra.mxu0 %v3645
      %4451 = vmatprep.subr.bf16.mxu0 0
      %4452 = vmatpush1.bf16.msra.mxu0 %v3646
      %4453 = vmatprep.mubr.bf16.mxu0 %v2426
      %4454 = vmatmul.mubr.bf16.gmra.mrb[0].mxu0 %v2425
      %v4455 = vpop.f32.mrb[0].mxu0
      %v4456 = vadd.f32 %v4391, %v4455
      %v4457 = vpop.f32.mrb[0].mxu0
      %v4458 = vpop.f32.mrb[0].mxu0
      %v4459 = vadd.f32 %v4394, %v4458
      %v4460 = vpop.f32.mrb[0].mxu0
      %4461 = vmatprep.mubr.bf16.mxu0 %v2457
      %4462 = vmatmul.mubr.bf16.gmra.mrb[0].mxu0 %v2456
      %v4463 = vpop.f32.mrb[0].mxu0
      %v4464 = vadd.f32 %v4399, %v4463
      %v4465 = vpop.f32.mrb[0].mxu0
      %v4466 = vpop.f32.mrb[0].mxu0
      %v4467 = vadd.f32 %v4402, %v4466
      %v4468 = vpop.f32.mrb[0].mxu0
      %4469 = vmatprep.mubr.bf16.mxu0 %v2488
      %4470 = vmatmul.mubr.bf16.gmra.mrb[0].mxu0 %v2487
      %v4471 = vpop.f32.mrb[0].mxu0
      %v4472 = vadd.f32 %v4407, %v4471
      %v4473 = vpop.f32.mrb[0].mxu0
      %v4474 = vpop.f32.mrb[0].mxu0
      %v4475 = vadd.f32 %v4410, %v4474
      %v4476 = vpop.f32.mrb[0].mxu0
      %4477 = vmatprep.mubr.bf16.mxu0 %v2519
      %4478 = vmatmul.mubr.bf16.gmra.mrb[0].mxu0 %v2518
      %v4479 = vpop.f32.mrb[0].mxu0
      %v4480 = vadd.f32 %v4415, %v4479
      %v4481 = vpop.f32.mrb[0].mxu0
      %v4482 = vpop.f32.mrb[0].mxu0
      %v4483 = vadd.f32 %v4418, %v4482
      %v4484 = vpop.f32.mrb[0].mxu0
      %4485 = vdwg.mxu0
      %4486 = vmatprep.subr.bf16.mxu0 0
      %4487 = vmatpush1.bf16.msra.mxu0 %v3647
      %4488 = vmatprep.subr.bf16.mxu0 0
      %4489 = vmatpush1.bf16.msra.mxu0 %v3648
      %4490 = vmatprep.subr.bf16.mxu0 0
      %4491 = vmatpush1.bf16.msra.mxu0 %v3649
      %4492 = vmatprep.subr.bf16.mxu0 0
      %4493 = vmatpush1.bf16.msra.mxu0 %v3650
      %4494 = vmatprep.subr.bf16.mxu0 0
      %4495 = vmatpush1.bf16.msra.mxu0 %v3651
      %4496 = vmatprep.subr.bf16.mxu0 0
      %4497 = vmatpush1.bf16.msra.mxu0 %v3652
      %4498 = vmatprep.subr.bf16.mxu0 0
      %4499 = vmatpush1.bf16.msra.mxu0 %v3653
      %4500 = vmatprep.subr.bf16.mxu0 0
      %4501 = vmatpush1.bf16.msra.mxu0 %v3654
      %4502 = vmatprep.subr.bf16.mxu0 0
      %4503 = vmatpush1.bf16.msra.mxu0 %v3655
      %4504 = vmatprep.subr.bf16.mxu0 0
      %4505 = vmatpush1.bf16.msra.mxu0 %v3656
      %4506 = vmatprep.subr.bf16.mxu0 0
      %4507 = vmatpush1.bf16.msra.mxu0 %v3657
      %4508 = vmatprep.subr.bf16.mxu0 0
      %4509 = vmatpush1.bf16.msra.mxu0 %v3658
      %4510 = vmatprep.subr.bf16.mxu0 0
      %4511 = vmatpush1.bf16.msra.mxu0 %v3659
      %4512 = vmatprep.subr.bf16.mxu0 0
      %4513 = vmatpush1.bf16.msra.mxu0 %v3660
      %4514 = vmatprep.subr.bf16.mxu0 0
      %4515 = vmatpush1.bf16.msra.mxu0 %v3661
      %4516 = vmatprep.subr.bf16.mxu0 0
      %4517 = vmatpush1.bf16.msra.mxu0 %v3662
      %4518 = vmatprep.mubr.bf16.mxu0 %v2428
      %4519 = vmatmul.mubr.bf16.gmra.mrb[0].mxu0 %v2427
      %v4520 = vpop.f32.mrb[0].mxu0
      %v4521 = vadd.f32 %v4456, %v4520
      %v4522 = vpop.f32.mrb[0].mxu0
      %v4523 = vpop.f32.mrb[0].mxu0
      %v4524 = vadd.f32 %v4459, %v4523
      %v4525 = vpop.f32.mrb[0].mxu0
      %4526 = vmatprep.mubr.bf16.mxu0 %v2459
      %4527 = vmatmul.mubr.bf16.gmra.mrb[0].mxu0 %v2458
      %v4528 = vpop.f32.mrb[0].mxu0
      %v4529 = vadd.f32 %v4464, %v4528
      %v4530 = vpop.f32.mrb[0].mxu0
      %v4531 = vpop.f32.mrb[0].mxu0
      %v4532 = vadd.f32 %v4467, %v4531
      %v4533 = vpop.f32.mrb[0].mxu0
      %4534 = vmatprep.mubr.bf16.mxu0 %v2490
      %4535 = vmatmul.mubr.bf16.gmra.mrb[0].mxu0 %v2489
      %v4536 = vpop.f32.mrb[0].mxu0
      %v4537 = vadd.f32 %v4472, %v4536
      %v4538 = vpop.f32.mrb[0].mxu0
      %v4539 = vpop.f32.mrb[0].mxu0
      %v4540 = vadd.f32 %v4475, %v4539
      %v4541 = vpop.f32.mrb[0].mxu0
      %4542 = vmatprep.mubr.bf16.mxu0 %v2521
      %4543 = vmatmul.mubr.bf16.gmra.mrb[0].mxu0 %v2520
      %v4544 = vpop.f32.mrb[0].mxu0
      %v4545 = vadd.f32 %v4480, %v4544
      %v4546 = vpop.f32.mrb[0].mxu0
      %v4547 = vpop.f32.mrb[0].mxu0
      %v4548 = vadd.f32 %v4483, %v4547
      %v4549 = vpop.f32.mrb[0].mxu0
      %4550 = vdwg.mxu0
      %4551 = vmatprep.subr.bf16.mxu0 0
      %4552 = vmatpush1.bf16.msra.mxu0 %v3663
      %4553 = vmatprep.subr.bf16.mxu0 0
      %4554 = vmatpush1.bf16.msra.mxu0 %v3664
      %4555 = vmatprep.subr.bf16.mxu0 0
      %4556 = vmatpush1.bf16.msra.mxu0 %v3665
      %4557 = vmatprep.subr.bf16.mxu0 0
      %4558 = vmatpush1.bf16.msra.mxu0 %v3666
      %4559 = vmatprep.subr.bf16.mxu0 0
      %4560 = vmatpush1.bf16.msra.mxu0 %v3667
      %4561 = vmatprep.subr.bf16.mxu0 0
      %4562 = vmatpush1.bf16.msra.mxu0 %v3668
      %4563 = vmatprep.subr.bf16.mxu0 0
      %4564 = vmatpush1.bf16.msra.mxu0 %v3669
      %4565 = vmatprep.subr.bf16.mxu0 0
      %4566 = vmatpush1.bf16.msra.mxu0 %v3670
      %4567 = vmatprep.subr.bf16.mxu0 0
      %4568 = vmatpush1.bf16.msra.mxu0 %v3671
      %4569 = vmatprep.subr.bf16.mxu0 0
      %4570 = vmatpush1.bf16.msra.mxu0 %v3672
      %4571 = vmatprep.subr.bf16.mxu0 0
      %4572 = vmatpush1.bf16.msra.mxu0 %v3673
      %4573 = vmatprep.subr.bf16.mxu0 0
      %4574 = vmatpush1.bf16.msra.mxu0 %v3674
      %4575 = vmatprep.subr.bf16.mxu0 0
      %4576 = vmatpush1.bf16.msra.mxu0 %v3675
      %4577 = vmatprep.subr.bf16.mxu0 0
      %4578 = vmatpush1.bf16.msra.mxu0 %v3676
      %4579 = vmatprep.subr.bf16.mxu0 0
      %4580 = vmatpush1.bf16.msra.mxu0 %v3677
      %4581 = vmatprep.subr.bf16.mxu0 0
      %4582 = vmatpush1.bf16.msra.mxu0 %v3678
      %4583 = vmatprep.mubr.bf16.mxu0 %v2430
      %4584 = vmatmul.mubr.bf16.gmra.mrb[0].mxu0 %v2429
      %v4585 = vpop.f32.mrb[0].mxu0
      %v4586 = vadd.f32 %v4521, %v4585
      %v4587 = vpop.f32.mrb[0].mxu0
      %v4588 = vpop.f32.mrb[0].mxu0
      %v4589 = vadd.f32 %v4524, %v4588
      %v4590 = vpop.f32.mrb[0].mxu0
      %4591 = vmatprep.mubr.bf16.mxu0 %v2461
      %4592 = vmatmul.mubr.bf16.gmra.mrb[0].mxu0 %v2460
      %v4593 = vpop.f32.mrb[0].mxu0
      %v4594 = vadd.f32 %v4529, %v4593
      %v4595 = vpop.f32.mrb[0].mxu0
      %v4596 = vpop.f32.mrb[0].mxu0
      %v4597 = vadd.f32 %v4532, %v4596
      %v4598 = vpop.f32.mrb[0].mxu0
      %4599 = vmatprep.mubr.bf16.mxu0 %v2492
      %4600 = vmatmul.mubr.bf16.gmra.mrb[0].mxu0 %v2491
      %v4601 = vpop.f32.mrb[0].mxu0
      %v4602 = vadd.f32 %v4537, %v4601
      %v4603 = vpop.f32.mrb[0].mxu0
      %v4604 = vpop.f32.mrb[0].mxu0
      %v4605 = vadd.f32 %v4540, %v4604
      %v4606 = vpop.f32.mrb[0].mxu0
      %4607 = vmatprep.mubr.bf16.mxu0 %v2523
      %4608 = vmatmul.mubr.bf16.gmra.mrb[0].mxu0 %v2522
      %v4609 = vpop.f32.mrb[0].mxu0
      %v4610 = vadd.f32 %v4545, %v4609
      %v4611 = vpop.f32.mrb[0].mxu0
      %v4612 = vpop.f32.mrb[0].mxu0
      %v4613 = vadd.f32 %v4548, %v4612
      %v4614 = vpop.f32.mrb[0].mxu0
      %4615 = vdwg.mxu0
      %4616 = vmatprep.subr.bf16.mxu0 0
      %4617 = vmatpush1.bf16.msra.mxu0 %v3679
      %4618 = vmatprep.subr.bf16.mxu0 0
      %4619 = vmatpush1.bf16.msra.mxu0 %v3680
      %4620 = vmatprep.subr.bf16.mxu0 0
      %4621 = vmatpush1.bf16.msra.mxu0 %v3681
      %4622 = vmatprep.subr.bf16.mxu0 0
      %4623 = vmatpush1.bf16.msra.mxu0 %v3682
      %4624 = vmatprep.subr.bf16.mxu0 0
      %4625 = vmatpush1.bf16.msra.mxu0 %v3683
      %4626 = vmatprep.subr.bf16.mxu0 0
      %4627 = vmatpush1.bf16.msra.mxu0 %v3684
      %4628 = vmatprep.subr.bf16.mxu0 0
      %4629 = vmatpush1.bf16.msra.mxu0 %v3685
      %4630 = vmatprep.subr.bf16.mxu0 0
      %4631 = vmatpush1.bf16.msra.mxu0 %v3686
      %4632 = vmatprep.subr.bf16.mxu0 0
      %4633 = vmatpush1.bf16.msra.mxu0 %v3687
      %4634 = vmatprep.subr.bf16.mxu0 0
      %4635 = vmatpush1.bf16.msra.mxu0 %v3688
      %4636 = vmatprep.subr.bf16.mxu0 0
      %4637 = vmatpush1.bf16.msra.mxu0 %v3689
      %4638 = vmatprep.subr.bf16.mxu0 0
      %4639 = vmatpush1.bf16.msra.mxu0 %v3690
      %4640 = vmatprep.subr.bf16.mxu0 0
      %4641 = vmatpush1.bf16.msra.mxu0 %v3691
      %4642 = vmatprep.subr.bf16.mxu0 0
      %4643 = vmatpush1.bf16.msra.mxu0 %v3692
      %4644 = vmatprep.subr.bf16.mxu0 0
      %4645 = vmatpush1.bf16.msra.mxu0 %v3693
      %4646 = vmatprep.subr.bf16.mxu0 0
      %4647 = vmatpush1.bf16.msra.mxu0 %v3694
      %4648 = vmatprep.mubr.bf16.mxu0 %v2432
      %4649 = vmatmul.mubr.bf16.gmra.mrb[0].mxu0 %v2431
      %v4650 = vpop.f32.mrb[0].mxu0
      %v4651 = vadd.f32 %v4586, %v4650
      %v4652 = vpop.f32.mrb[0].mxu0
      %v4653 = vpop.f32.mrb[0].mxu0
      %v4654 = vadd.f32 %v4589, %v4653
      %v4655 = vpop.f32.mrb[0].mxu0
      %4656 = vmatprep.mubr.bf16.mxu0 %v2463
      %4657 = vmatmul.mubr.bf16.gmra.mrb[0].mxu0 %v2462
      %v4658 = vpop.f32.mrb[0].mxu0
      %v4659 = vadd.f32 %v4594, %v4658
      %v4660 = vpop.f32.mrb[0].mxu0
      %v4661 = vpop.f32.mrb[0].mxu0
      %v4662 = vadd.f32 %v4597, %v4661
      %v4663 = vpop.f32.mrb[0].mxu0
      %4664 = vmatprep.mubr.bf16.mxu0 %v2494
      %4665 = vmatmul.mubr.bf16.gmra.mrb[0].mxu0 %v2493
      %v4666 = vpop.f32.mrb[0].mxu0
      %v4667 = vadd.f32 %v4602, %v4666
      %v4668 = vpop.f32.mrb[0].mxu0
      %v4669 = vpop.f32.mrb[0].mxu0
      %v4670 = vadd.f32 %v4605, %v4669
      %v4671 = vpop.f32.mrb[0].mxu0
      %4672 = vmatprep.mubr.bf16.mxu0 %v2525
      %4673 = vmatmul.mubr.bf16.gmra.mrb[0].mxu0 %v2524
      %v4674 = vpop.f32.mrb[0].mxu0
      %v4675 = vadd.f32 %v4610, %v4674
      %v4676 = vpop.f32.mrb[0].mxu0
      %v4677 = vpop.f32.mrb[0].mxu0
      %v4678 = vadd.f32 %v4613, %v4677
      %v4679 = vpop.f32.mrb[0].mxu0
      %4680 = vdwg.mxu0
      %4681 = vmatprep.subr.bf16.mxu0 0
      %4682 = vmatpush1.bf16.msra.mxu0 %v3695
      %4683 = vmatprep.subr.bf16.mxu0 0
      %4684 = vmatpush1.bf16.msra.mxu0 %v3696
      %4685 = vmatprep.subr.bf16.mxu0 0
      %4686 = vmatpush1.bf16.msra.mxu0 %v3697
      %4687 = vmatprep.subr.bf16.mxu0 0
      %4688 = vmatpush1.bf16.msra.mxu0 %v3698
      %4689 = vmatprep.subr.bf16.mxu0 0
      %4690 = vmatpush1.bf16.msra.mxu0 %v3699
      %4691 = vmatprep.subr.bf16.mxu0 0
      %4692 = vmatpush1.bf16.msra.mxu0 %v3700
      %4693 = vmatprep.subr.bf16.mxu0 0
      %4694 = vmatpush1.bf16.msra.mxu0 %v3701
      %4695 = vmatprep.subr.bf16.mxu0 0
      %4696 = vmatpush1.bf16.msra.mxu0 %v3702
      %4697 = vmatprep.subr.bf16.mxu0 0
      %4698 = vmatpush1.bf16.msra.mxu0 %v3703
      %4699 = vmatprep.subr.bf16.mxu0 0
      %4700 = vmatpush1.bf16.msra.mxu0 %v3704
      %4701 = vmatprep.subr.bf16.mxu0 0
      %4702 = vmatpush1.bf16.msra.mxu0 %v3705
      %4703 = vmatprep.subr.bf16.mxu0 0
      %4704 = vmatpush1.bf16.msra.mxu0 %v3706
      %4705 = vmatprep.subr.bf16.mxu0 0
      %4706 = vmatpush1.bf16.msra.mxu0 %v3707
      %4707 = vmatprep.subr.bf16.mxu0 0
      %4708 = vmatpush1.bf16.msra.mxu0 %v3708
      %4709 = vmatprep.subr.bf16.mxu0 0
      %4710 = vmatpush1.bf16.msra.mxu0 %v3709
      %4711 = vmatprep.subr.bf16.mxu0 0
      %4712 = vmatpush1.bf16.msra.mxu0 %v3710
      %4713 = vmatprep.mubr.bf16.mxu0 %v2434
      %4714 = vmatmul.mubr.bf16.gmra.mrb[0].mxu0 %v2433
      %v4715 = vpop.f32.mrb[0].mxu0
      %v4716 = vadd.f32 %v4651, %v4715
      %v4717 = vpop.f32.mrb[0].mxu0
      %v4718 = vpop.f32.mrb[0].mxu0
      %v4719 = vadd.f32 %v4654, %v4718
      %v4720 = vpop.f32.mrb[0].mxu0
      %4721 = vmatprep.mubr.bf16.mxu0 %v2465
      %4722 = vmatmul.mubr.bf16.gmra.mrb[0].mxu0 %v2464
      %v4723 = vpop.f32.mrb[0].mxu0
      %v4724 = vadd.f32 %v4659, %v4723
      %v4725 = vpop.f32.mrb[0].mxu0
      %v4726 = vpop.f32.mrb[0].mxu0
      %v4727 = vadd.f32 %v4662, %v4726
      %v4728 = vpop.f32.mrb[0].mxu0
      %4729 = vmatprep.mubr.bf16.mxu0 %v2496
      %4730 = vmatmul.mubr.bf16.gmra.mrb[0].mxu0 %v2495
      %v4731 = vpop.f32.mrb[0].mxu0
      %v4732 = vadd.f32 %v4667, %v4731
      %v4733 = vpop.f32.mrb[0].mxu0
      %v4734 = vpop.f32.mrb[0].mxu0
      %v4735 = vadd.f32 %v4670, %v4734
      %v4736 = vpop.f32.mrb[0].mxu0
      %4737 = vmatprep.mubr.bf16.mxu0 %v2527
      %4738 = vmatmul.mubr.bf16.gmra.mrb[0].mxu0 %v2526
      %v4739 = vpop.f32.mrb[0].mxu0
      %v4740 = vadd.f32 %v4675, %v4739
      %v4741 = vpop.f32.mrb[0].mxu0
      %v4742 = vpop.f32.mrb[0].mxu0
      %v4743 = vadd.f32 %v4678, %v4742
      %v4744 = vpop.f32.mrb[0].mxu0
      %4745 = vdwg.mxu0
      %4746 = vmatprep.subr.bf16.mxu0 0
      %4747 = vmatpush1.bf16.msra.mxu0 %v3711
      %4748 = vmatprep.subr.bf16.mxu0 0
      %4749 = vmatpush1.bf16.msra.mxu0 %v3712
      %4750 = vmatprep.subr.bf16.mxu0 0
      %4751 = vmatpush1.bf16.msra.mxu0 %v3713
      %4752 = vmatprep.subr.bf16.mxu0 0
      %4753 = vmatpush1.bf16.msra.mxu0 %v3714
      %4754 = vmatprep.subr.bf16.mxu0 0
      %4755 = vmatpush1.bf16.msra.mxu0 %v3715
      %4756 = vmatprep.subr.bf16.mxu0 0
      %4757 = vmatpush1.bf16.msra.mxu0 %v3716
      %4758 = vmatprep.subr.bf16.mxu0 0
      %4759 = vmatpush1.bf16.msra.mxu0 %v3717
      %4760 = vmatprep.subr.bf16.mxu0 0
      %4761 = vmatpush1.bf16.msra.mxu0 %v3718
      %4762 = vmatprep.subr.bf16.mxu0 0
      %4763 = vmatpush1.bf16.msra.mxu0 %v3719
      %4764 = vmatprep.subr.bf16.mxu0 0
      %4765 = vmatpush1.bf16.msra.mxu0 %v3720
      %4766 = vmatprep.subr.bf16.mxu0 0
      %4767 = vmatpush1.bf16.msra.mxu0 %v3721
      %4768 = vmatprep.subr.bf16.mxu0 0
      %4769 = vmatpush1.bf16.msra.mxu0 %v3722
      %4770 = vmatprep.subr.bf16.mxu0 0
      %4771 = vmatpush1.bf16.msra.mxu0 %v3723
      %4772 = vmatprep.subr.bf16.mxu0 0
      %4773 = vmatpush1.bf16.msra.mxu0 %v3724
      %4774 = vmatprep.subr.bf16.mxu0 0
      %4775 = vmatpush1.bf16.msra.mxu0 %v3725
      %4776 = vmatprep.subr.bf16.mxu0 0
      %4777 = vmatpush1.bf16.msra.mxu0 %v3726
      %4778 = vmatprep.mubr.bf16.mxu0 %v2436
      %4779 = vmatmul.mubr.bf16.gmra.mrb[0].mxu0 %v2435
      %v4780 = vpop.f32.mrb[0].mxu0
      %v4781 = vadd.f32 %v4716, %v4780
      %v4782 = vpop.f32.mrb[0].mxu0
      %v4783 = vpop.f32.mrb[0].mxu0
      %v4784 = vadd.f32 %v4719, %v4783
      %v4785 = vpop.f32.mrb[0].mxu0
      %4786 = vmatprep.mubr.bf16.mxu0 %v2467
      %4787 = vmatmul.mubr.bf16.gmra.mrb[0].mxu0 %v2466
      %v4788 = vpop.f32.mrb[0].mxu0
      %v4789 = vadd.f32 %v4724, %v4788
      %v4790 = vpop.f32.mrb[0].mxu0
      %v4791 = vpop.f32.mrb[0].mxu0
      %v4792 = vadd.f32 %v4727, %v4791
      %v4793 = vpop.f32.mrb[0].mxu0
      %4794 = vmatprep.mubr.bf16.mxu0 %v2498
      %4795 = vmatmul.mubr.bf16.gmra.mrb[0].mxu0 %v2497
      %v4796 = vpop.f32.mrb[0].mxu0
      %v4797 = vadd.f32 %v4732, %v4796
      %v4798 = vpop.f32.mrb[0].mxu0
      %v4799 = vpop.f32.mrb[0].mxu0
      %v4800 = vadd.f32 %v4735, %v4799
      %v4801 = vpop.f32.mrb[0].mxu0
      %4802 = vmatprep.mubr.bf16.mxu0 %v2529
      %4803 = vmatmul.mubr.bf16.gmra.mrb[0].mxu0 %v2528
      %v4804 = vpop.f32.mrb[0].mxu0
      %v4805 = vadd.f32 %v4740, %v4804
      %v4806 = vpop.f32.mrb[0].mxu0
      %v4807 = vpop.f32.mrb[0].mxu0
      %v4808 = vadd.f32 %v4743, %v4807
      %v4809 = vpop.f32.mrb[0].mxu0
      %4810 = vdwg.mxu0
      %4811 = vmatprep.subr.bf16.mxu0 0
      %4812 = vmatpush1.bf16.msra.mxu0 %v3727
      %4813 = vmatprep.subr.bf16.mxu0 0
      %4814 = vmatpush1.bf16.msra.mxu0 %v3728
      %4815 = vmatprep.subr.bf16.mxu0 0
      %4816 = vmatpush1.bf16.msra.mxu0 %v3729
      %4817 = vmatprep.subr.bf16.mxu0 0
      %4818 = vmatpush1.bf16.msra.mxu0 %v3730
      %4819 = vmatprep.subr.bf16.mxu0 0
      %4820 = vmatpush1.bf16.msra.mxu0 %v3731
      %4821 = vmatprep.subr.bf16.mxu0 0
      %4822 = vmatpush1.bf16.msra.mxu0 %v3732
      %4823 = vmatprep.subr.bf16.mxu0 0
      %4824 = vmatpush1.bf16.msra.mxu0 %v3733
      %4825 = vmatprep.subr.bf16.mxu0 0
      %4826 = vmatpush1.bf16.msra.mxu0 %v3734
      %4827 = vmatprep.subr.bf16.mxu0 0
      %4828 = vmatpush1.bf16.msra.mxu0 %v3735
      %4829 = vmatprep.subr.bf16.mxu0 0
      %4830 = vmatpush1.bf16.msra.mxu0 %v3736
      %4831 = vmatprep.subr.bf16.mxu0 0
      %4832 = vmatpush1.bf16.msra.mxu0 %v3737
      %4833 = vmatprep.subr.bf16.mxu0 0
      %4834 = vmatpush1.bf16.msra.mxu0 %v3738
      %4835 = vmatprep.subr.bf16.mxu0 0
      %4836 = vmatpush1.bf16.msra.mxu0 %v3739
      %4837 = vmatprep.subr.bf16.mxu0 0
      %4838 = vmatpush1.bf16.msra.mxu0 %v3740
      %4839 = vmatprep.subr.bf16.mxu0 0
      %4840 = vmatpush1.bf16.msra.mxu0 %v3741
      %4841 = vmatprep.subr.bf16.mxu0 0
      %4842 = vmatpush1.bf16.msra.mxu0 %v3742
      %4843 = vmatprep.mubr.bf16.mxu0 %v2438
      %4844 = vmatmul.mubr.bf16.gmra.mrb[0].mxu0 %v2437
      %v4845 = vpop.f32.mrb[0].mxu0
      %v4846 = vadd.f32 %v4781, %v4845
      %v4847 = vpop.f32.mrb[0].mxu0
      %v4848 = vpop.f32.mrb[0].mxu0
      %v4849 = vadd.f32 %v4784, %v4848
      %v4850 = vpop.f32.mrb[0].mxu0
      %4851 = vmatprep.mubr.bf16.mxu0 %v2469
      %4852 = vmatmul.mubr.bf16.gmra.mrb[0].mxu0 %v2468
      %v4853 = vpop.f32.mrb[0].mxu0
      %v4854 = vadd.f32 %v4789, %v4853
      %v4855 = vpop.f32.mrb[0].mxu0
      %v4856 = vpop.f32.mrb[0].mxu0
      %v4857 = vadd.f32 %v4792, %v4856
      %v4858 = vpop.f32.mrb[0].mxu0
      %4859 = vmatprep.mubr.bf16.mxu0 %v2500
      %4860 = vmatmul.mubr.bf16.gmra.mrb[0].mxu0 %v2499
      %v4861 = vpop.f32.mrb[0].mxu0
      %v4862 = vadd.f32 %v4797, %v4861
      %v4863 = vpop.f32.mrb[0].mxu0
      %v4864 = vpop.f32.mrb[0].mxu0
      %v4865 = vadd.f32 %v4800, %v4864
      %v4866 = vpop.f32.mrb[0].mxu0
      %4867 = vmatprep.mubr.bf16.mxu0 %v2531
      %4868 = vmatmul.mubr.bf16.gmra.mrb[0].mxu0 %v2530
      %v4869 = vpop.f32.mrb[0].mxu0
      %v4870 = vadd.f32 %v4805, %v4869
      %v4871 = vpop.f32.mrb[0].mxu0
      %v4872 = vpop.f32.mrb[0].mxu0
      %v4873 = vadd.f32 %v4808, %v4872
      %v4874 = vpop.f32.mrb[0].mxu0
      %4875 = vdwg.mxu0
      %4876 = vmatprep.subr.bf16.mxu0 0
      %4877 = vmatpush1.bf16.msra.mxu0 %v3743
      %4878 = vmatprep.subr.bf16.mxu0 0
      %4879 = vmatpush1.bf16.msra.mxu0 %v3744
      %4880 = vmatprep.subr.bf16.mxu0 0
      %4881 = vmatpush1.bf16.msra.mxu0 %v3745
      %4882 = vmatprep.subr.bf16.mxu0 0
      %4883 = vmatpush1.bf16.msra.mxu0 %v3746
      %4884 = vmatprep.subr.bf16.mxu0 0
      %4885 = vmatpush1.bf16.msra.mxu0 %v3747
      %4886 = vmatprep.subr.bf16.mxu0 0
      %4887 = vmatpush1.bf16.msra.mxu0 %v3748
      %4888 = vmatprep.subr.bf16.mxu0 0
      %4889 = vmatpush1.bf16.msra.mxu0 %v3749
      %4890 = vmatprep.subr.bf16.mxu0 0
      %4891 = vmatpush1.bf16.msra.mxu0 %v3750
      %4892 = vmatprep.subr.bf16.mxu0 0
      %4893 = vmatpush1.bf16.msra.mxu0 %v3751
      %4894 = vmatprep.subr.bf16.mxu0 0
      %4895 = vmatpush1.bf16.msra.mxu0 %v3752
      %4896 = vmatprep.subr.bf16.mxu0 0
      %4897 = vmatpush1.bf16.msra.mxu0 %v3753
      %4898 = vmatprep.subr.bf16.mxu0 0
      %4899 = vmatpush1.bf16.msra.mxu0 %v3754
      %4900 = vmatprep.subr.bf16.mxu0 0
      %4901 = vmatpush1.bf16.msra.mxu0 %v3755
      %4902 = vmatprep.subr.bf16.mxu0 0
      %4903 = vmatpush1.bf16.msra.mxu0 %v3756
      %4904 = vmatprep.subr.bf16.mxu0 0
      %4905 = vmatpush1.bf16.msra.mxu0 %v3757
      %4906 = vmatprep.subr.bf16.mxu0 0
      %4907 = vmatpush1.bf16.msra.mxu0 %v3758
      %4908 = vmatprep.mubr.bf16.mxu0 %v2440
      %4909 = vmatmul.mubr.bf16.gmra.mrb[0].mxu0 %v2439
      %v4910 = vpop.f32.mrb[0].mxu0
      %v4911 = vadd.f32 %v4846, %v4910
      %v4912 = vpop.f32.mrb[0].mxu0
      %v4913 = vpop.f32.mrb[0].mxu0
      %v4914 = vadd.f32 %v4849, %v4913
      %v4915 = vpop.f32.mrb[0].mxu0
      %4916 = vmatprep.mubr.bf16.mxu0 %v2471
      %4917 = vmatmul.mubr.bf16.gmra.mrb[0].mxu0 %v2470
      %v4918 = vpop.f32.mrb[0].mxu0
      %v4919 = vadd.f32 %v4854, %v4918
      %v4920 = vpop.f32.mrb[0].mxu0
      %v4921 = vpop.f32.mrb[0].mxu0
      %v4922 = vadd.f32 %v4857, %v4921
      %v4923 = vpop.f32.mrb[0].mxu0
      %4924 = vmatprep.mubr.bf16.mxu0 %v2502
      %4925 = vmatmul.mubr.bf16.gmra.mrb[0].mxu0 %v2501
      %v4926 = vpop.f32.mrb[0].mxu0
      %v4927 = vadd.f32 %v4862, %v4926
      %v4928 = vpop.f32.mrb[0].mxu0
      %v4929 = vpop.f32.mrb[0].mxu0
      %v4930 = vadd.f32 %v4865, %v4929
      %v4931 = vpop.f32.mrb[0].mxu0
      %4932 = vmatprep.mubr.bf16.mxu0 %v2533
      %4933 = vmatmul.mubr.bf16.gmra.mrb[0].mxu0 %v2532
      %v4934 = vpop.f32.mrb[0].mxu0
      %v4935 = vadd.f32 %v4870, %v4934
      %v4936 = vpop.f32.mrb[0].mxu0
      %v4937 = vpop.f32.mrb[0].mxu0
      %v4938 = vadd.f32 %v4873, %v4937
      %v4939 = vpop.f32.mrb[0].mxu0
      %4940 = vdwg.mxu0
      %4941 = vmatprep.subr.bf16.mxu0 0
      %4942 = vmatpush1.bf16.msra.mxu0 %v3759
      %4943 = vmatprep.subr.bf16.mxu0 0
      %4944 = vmatpush1.bf16.msra.mxu0 %v3760
      %4945 = vmatprep.subr.bf16.mxu0 0
      %4946 = vmatpush1.bf16.msra.mxu0 %v3761
      %4947 = vmatprep.subr.bf16.mxu0 0
      %4948 = vmatpush1.bf16.msra.mxu0 %v3762
      %4949 = vmatprep.subr.bf16.mxu0 0
      %4950 = vmatpush1.bf16.msra.mxu0 %v3763
      %4951 = vmatprep.subr.bf16.mxu0 0
      %4952 = vmatpush1.bf16.msra.mxu0 %v3764
      %4953 = vmatprep.subr.bf16.mxu0 0
      %4954 = vmatpush1.bf16.msra.mxu0 %v3765
      %4955 = vmatprep.subr.bf16.mxu0 0
      %4956 = vmatpush1.bf16.msra.mxu0 %v3766
      %4957 = vmatprep.subr.bf16.mxu0 0
      %4958 = vmatpush1.bf16.msra.mxu0 %v3767
      %4959 = vmatprep.subr.bf16.mxu0 0
      %4960 = vmatpush1.bf16.msra.mxu0 %v3768
      %4961 = vmatprep.subr.bf16.mxu0 0
      %4962 = vmatpush1.bf16.msra.mxu0 %v3769
      %4963 = vmatprep.subr.bf16.mxu0 0
      %4964 = vmatpush1.bf16.msra.mxu0 %v3770
      %4965 = vmatprep.subr.bf16.mxu0 0
      %4966 = vmatpush1.bf16.msra.mxu0 %v3771
      %4967 = vmatprep.subr.bf16.mxu0 0
      %4968 = vmatpush1.bf16.msra.mxu0 %v3772
      %4969 = vmatprep.subr.bf16.mxu0 0
      %4970 = vmatpush1.bf16.msra.mxu0 %v3773
      %4971 = vmatprep.subr.bf16.mxu0 0
      %4972 = vmatpush1.bf16.msra.mxu0 %v3774
      %4973 = vmatprep.mubr.bf16.mxu0 %v2442
      %4974 = vmatmul.mubr.bf16.gmra.mrb[0].mxu0 %v2441
      %v4975 = vpop.f32.mrb[0].mxu0
      %v4976 = vadd.f32 %v4911, %v4975
      %v4977 = vpop.f32.mrb[0].mxu0
      %v4978 = vpop.f32.mrb[0].mxu0
      %v4979 = vadd.f32 %v4914, %v4978
      %v4980 = vpop.f32.mrb[0].mxu0
      %4981 = vmatprep.mubr.bf16.mxu0 %v2473
      %4982 = vmatmul.mubr.bf16.gmra.mrb[0].mxu0 %v2472
      %v4983 = vpop.f32.mrb[0].mxu0
      %v4984 = vadd.f32 %v4919, %v4983
      %v4985 = vpop.f32.mrb[0].mxu0
      %v4986 = vpop.f32.mrb[0].mxu0
      %v4987 = vadd.f32 %v4922, %v4986
      %v4988 = vpop.f32.mrb[0].mxu0
      %4989 = vmatprep.mubr.bf16.mxu0 %v2504
      %4990 = vmatmul.mubr.bf16.gmra.mrb[0].mxu0 %v2503
      %v4991 = vpop.f32.mrb[0].mxu0
      %v4992 = vadd.f32 %v4927, %v4991
      %v4993 = vpop.f32.mrb[0].mxu0
      %v4994 = vpop.f32.mrb[0].mxu0
      %v4995 = vadd.f32 %v4930, %v4994
      %v4996 = vpop.f32.mrb[0].mxu0
      %4997 = vmatprep.mubr.bf16.mxu0 %v2535
      %4998 = vmatmul.mubr.bf16.gmra.mrb[0].mxu0 %v2534
      %v4999 = vpop.f32.mrb[0].mxu0
      %v5000 = vadd.f32 %v4935, %v4999
      %v5001 = vpop.f32.mrb[0].mxu0
      %v5002 = vpop.f32.mrb[0].mxu0
      %v5003 = vadd.f32 %v4938, %v5002
      %v5004 = vpop.f32.mrb[0].mxu0
      %5005 = vdwg.mxu0
      %5006 = vmatprep.subr.bf16.mxu0 0
      %5007 = vmatpush1.bf16.msra.mxu0 %v3775
      %5008 = vmatprep.subr.bf16.mxu0 0
      %5009 = vmatpush1.bf16.msra.mxu0 %v3776
      %5010 = vmatprep.subr.bf16.mxu0 0
      %5011 = vmatpush1.bf16.msra.mxu0 %v3777
      %5012 = vmatprep.subr.bf16.mxu0 0
      %5013 = vmatpush1.bf16.msra.mxu0 %v3778
      %5014 = vmatprep.subr.bf16.mxu0 0
      %5015 = vmatpush1.bf16.msra.mxu0 %v3779
      %5016 = vmatprep.subr.bf16.mxu0 0
      %5017 = vmatpush1.bf16.msra.mxu0 %v3780
      %5018 = vmatprep.subr.bf16.mxu0 0
      %5019 = vmatpush1.bf16.msra.mxu0 %v3781
      %5020 = vmatprep.subr.bf16.mxu0 0
      %5021 = vmatpush1.bf16.msra.mxu0 %v3782
      %5022 = vmatprep.subr.bf16.mxu0 0
      %5023 = vmatpush1.bf16.msra.mxu0 0
      %5024 = vmatprep.subr.bf16.mxu0 0
      %5025 = vmatpush1.bf16.msra.mxu0 0
      %5026 = vmatprep.subr.bf16.mxu0 0
      %5027 = vmatpush1.bf16.msra.mxu0 0
      %5028 = vmatprep.subr.bf16.mxu0 0
      %5029 = vmatpush1.bf16.msra.mxu0 0
      %5030 = vmatprep.subr.bf16.mxu0 0
      %5031 = vmatpush1.bf16.msra.mxu0 0
      %5032 = vmatprep.subr.bf16.mxu0 0
      %5033 = vmatpush1.bf16.msra.mxu0 0
      %5034 = vmatprep.subr.bf16.mxu0 0
      %5035 = vmatpush1.bf16.msra.mxu0 0
      %5036 = vmatprep.subr.bf16.mxu0 0
      %5037 = vmatpush1.bf16.msra.mxu0 0
      %5038 = vmatprep.mubr.bf16.mxu0 0
      %5039 = vmatmul.mubr.bf16.gmra.mrb[0].mxu0 %v2443
      %v5040 = vpop.f32.mrb[0].mxu0
      %v5041 = vadd.f32 %v4976, %v5040
      %v5042 = vpop.f32.mrb[0].mxu0
      %v5043 = vpop.f32.mrb[0].mxu0
      %v5044 = vadd.f32 %v4979, %v5043
      %v5045 = vpop.f32.mrb[0].mxu0
      %5046 = vmatprep.mubr.bf16.mxu0 0
      %5047 = vmatmul.mubr.bf16.gmra.mrb[0].mxu0 %v2474
      %v5048 = vpop.f32.mrb[0].mxu0
      %v5049 = vadd.f32 %v4984, %v5048
      %v5050 = vpop.f32.mrb[0].mxu0
      %v5051 = vpop.f32.mrb[0].mxu0
      %v5052 = vadd.f32 %v4987, %v5051
      %v5053 = vpop.f32.mrb[0].mxu0
      %5054 = vmatprep.mubr.bf16.mxu0 0
      %5055 = vmatmul.mubr.bf16.gmra.mrb[0].mxu0 %v2505
      %v5056 = vpop.f32.mrb[0].mxu0
      %v5057 = vadd.f32 %v4992, %v5056
      %v5058 = vpop.f32.mrb[0].mxu0
      %v5059 = vpop.f32.mrb[0].mxu0
      %v5060 = vadd.f32 %v4995, %v5059
      %v5061 = vpop.f32.mrb[0].mxu0
      %5062 = vmatprep.mubr.bf16.mxu0 0
      %5063 = vmatmul.mubr.bf16.gmra.mrb[0].mxu0 %v2536
      %v5064 = vpop.f32.mrb[0].mxu0
      %v5065 = vadd.f32 %v5000, %v5064
      %v5066 = vpop.f32.mrb[0].mxu0
      %v5067 = vpop.f32.mrb[0].mxu0
      %v5068 = vadd.f32 %v5003, %v5067
      %v5069 = vpop.f32.mrb[0].mxu0
      %5070 = vdwg.mxu0
      %v5071 = vmin.f32 %v5041, 25.0
      %v5072 = vmin.f32 %v5044, 25.0
      %v5073 = vmin.f32 %v5049, 25.0
      %v5074 = vmin.f32 %v5052, 25.0
      %v5075 = vmin.f32 %v5057, 25.0
      %v5076 = vmin.f32 %v5060, 25.0
      %v5077 = vmin.f32 %v5065, 25.0
      %v5078 = vmin.f32 %v5068, 25.0
      %v5079 = vmul.f32 %v5071, 1.442695
      %v5080 = vpow.pop %v5079
      %v5081 = vmul.f32 %v5072, 1.442695
      %v5082 = vpow.pop %v5081
      %v5083 = vmul.f32 %v5073, 1.442695
      %v5084 = vpow.pop %v5083
      %v5085 = vmul.f32 %v5074, 1.442695
      %v5086 = vpow.pop %v5085
      %v5087 = vmul.f32 %v5075, 1.442695
      %v5088 = vpow.pop %v5087
      %v5089 = vmul.f32 %v5076, 1.442695
      %v5090 = vpow.pop %v5089
      %v5091 = vmul.f32 %v5077, 1.442695
      %v5092 = vpow.pop %v5091
      %v5093 = vmul.f32 %v5078, 1.442695
      %v5094 = vpow.pop %v5093
      %v5095 = vadd.f32 %v5080, 1.0
      %v5096 = vadd.f32 %v5082, 1.0
      %v5097 = vadd.f32 %v5084, 1.0
      %v5098 = vadd.f32 %v5086, 1.0
      %v5099 = vadd.f32 %v5088, 1.0
      %v5100 = vadd.f32 %v5090, 1.0
      %v5101 = vadd.f32 %v5092, 1.0
      %v5102 = vadd.f32 %v5094, 1.0
      %v5103 = vmul.f32 %v5095, %v5095
      %v5104 = vmul.f32 %v5096, %v5096
      %v5105 = vmul.f32 %v5097, %v5097
      %v5106 = vmul.f32 %v5098, %v5098
      %v5107 = vmul.f32 %v5099, %v5099
      %v5108 = vmul.f32 %v5100, %v5100
      %v5109 = vmul.f32 %v5101, %v5101
      %v5110 = vmul.f32 %v5102, %v5102
      %v5111 = vsub.f32 %v5103, 1.0
      %v5112 = vsub.f32 %v5104, 1.0
      %v5113 = vsub.f32 %v5105, 1.0
      %v5114 = vsub.f32 %v5106, 1.0
      %v5115 = vsub.f32 %v5107, 1.0
      %v5116 = vsub.f32 %v5108, 1.0
      %v5117 = vsub.f32 %v5109, 1.0
      %v5118 = vsub.f32 %v5110, 1.0
      %v5119 = vmul.f32 %v5041, %v5111
      %v5120 = vmul.f32 %v5044, %v5112
      %v5121 = vmul.f32 %v5049, %v5113
      %v5122 = vmul.f32 %v5052, %v5114
      %v5123 = vmul.f32 %v5057, %v5115
      %v5124 = vmul.f32 %v5060, %v5116
      %v5125 = vmul.f32 %v5065, %v5117
      %v5126 = vmul.f32 %v5068, %v5118
      %v5127 = vadd.f32 %v5103, 1.0
      %v5128 = vadd.f32 %v5104, 1.0
      %v5129 = vadd.f32 %v5105, 1.0
      %v5130 = vadd.f32 %v5106, 1.0
      %v5131 = vadd.f32 %v5107, 1.0
      %v5132 = vadd.f32 %v5108, 1.0
      %v5133 = vadd.f32 %v5109, 1.0
      %v5134 = vadd.f32 %v5110, 1.0
      %v5135 = vrcp.pop %v5127
      %v5136 = vrcp.pop %v5128
      %v5137 = vrcp.pop %v5129
      %v5138 = vrcp.pop %v5130
      %v5139 = vrcp.pop %v5131
      %v5140 = vrcp.pop %v5132
      %v5141 = vrcp.pop %v5133
      %v5142 = vrcp.pop %v5134
      %v5143 = vmul.f32 %v5119, %v5135
      %v5144 = vmul.f32 %v5120, %v5136
      %v5145 = vmul.f32 %v5121, %v5137
      %v5146 = vmul.f32 %v5122, %v5138
      %v5147 = vmul.f32 %v5123, %v5139
      %v5148 = vmul.f32 %v5124, %v5140
      %v5149 = vmul.f32 %v5125, %v5141
      %v5150 = vmul.f32 %v5126, %v5142
      %v5151 = vpack.c.bf16 %v5144, %v5143
      %v5152 = vpack.c.bf16 %v5146, %v5145
      %v5153 = vpack.c.bf16 %v5148, %v5147
      %v5154 = vpack.c.bf16 %v5150, %v5149
      %5155 = vst.msk [vmem:[#allocation3 + $0x8] sm:$0xff] %vm390, %v5151
      %5156 = vst.msk [vmem:[#allocation3 + $0x10] sm:$0xff] %vm390, %v5152
      %5157 = vst.msk [vmem:[#allocation3 + $0x18] sm:$0xff] %vm390, %v5153
      %5158 = vst.msk [vmem:[#allocation3 + $0x20] sm:$0xff] %vm390, %v5154
      %v5159 = vld [vmem:[%s359] sm:$0xf]
      %v5160 = vld [vmem:[%s359 + $0x4] sm:$0xf]
      %v5161 = vld [vmem:[%s359 + $0x8] sm:$0xf]
      %v5162 = vld [vmem:[%s359 + $0xc] sm:$0xf]
      %v5163 = vld [vmem:[%s359 + $0x10] sm:$0xf]
      %v5164 = vld [vmem:[%s359 + $0x14] sm:$0xf]
      %v5165 = vld [vmem:[%s359 + $0x18] sm:$0xf]
      %v5166 = vld [vmem:[%s359 + $0x1c] sm:$0xf]
      %v5167 = vld [vmem:[%s359 + $0x20] sm:$0xf]
      %v5168 = vld [vmem:[%s359 + $0x24] sm:$0xf]
      %v5169 = vld [vmem:[%s359 + $0x28] sm:$0xf]
      %v5170 = vld [vmem:[%s359 + $0x2c] sm:$0xf]
      %v5171 = vld [vmem:[%s359 + $0x30] sm:$0xf]
      %v5172 = vld [vmem:[%s359 + $0x34] sm:$0xf]
      %v5173 = vld [vmem:[%s359 + $0x38] sm:$0xf]
      %v5174 = vld [vmem:[%s359 + $0x3c] sm:$0xf]
      %v5175 = vld [vmem:[%s359 + $0x40] sm:$0xf]
      %v5176 = vld [vmem:[%s359 + $0x44] sm:$0xf]
      %v5177 = vld [vmem:[%s359 + $0x48] sm:$0xf]
      %v5178 = vld [vmem:[%s359 + $0x4c] sm:$0xf]
      %v5179 = vld [vmem:[%s359 + $0x50] sm:$0xf]
      %v5180 = vld [vmem:[%s359 + $0x54] sm:$0xf]
      %v5181 = vld [vmem:[%s359 + $0x58] sm:$0xf]
      %v5182 = vld [vmem:[%s359 + $0x5c] sm:$0xf]
      %v5183 = vld [vmem:[%s359 + $0x60] sm:$0xf]
      %v5184 = vld [vmem:[%s359 + $0x64] sm:$0xf]
      %v5185 = vld [vmem:[%s359 + $0x68] sm:$0xf]
      %v5186 = vld [vmem:[%s359 + $0x6c] sm:$0xf]
      %v5187 = vld [vmem:[%s359 + $0x70] sm:$0xf]
      %v5188 = vld [vmem:[%s359 + $0x74] sm:$0xf]
      %v5189 = vld [vmem:[%s359 + $0x78] sm:$0xf]
      %v5190 = vld [vmem:[%s359 + $0x7c] sm:$0xf]
      %v5191 = vld [vmem:[%s359 + $0x80] sm:$0xf]
      %v5192 = vld [vmem:[%s359 + $0x84] sm:$0xf]
      %v5193 = vld [vmem:[%s359 + $0x88] sm:$0xf]
      %v5194 = vld [vmem:[%s359 + $0x8c] sm:$0xf]
      %v5195 = vld [vmem:[%s359 + $0x90] sm:$0xf]
      %v5196 = vld [vmem:[%s359 + $0x94] sm:$0xf]
      %v5197 = vld [vmem:[%s359 + $0x98] sm:$0xf]
      %v5198 = vld [vmem:[%s359 + $0x9c] sm:$0xf]
      %v5199 = vld [vmem:[%s359 + $0xa0] sm:$0xf]
      %v5200 = vld [vmem:[%s359 + $0xa4] sm:$0xf]
      %v5201 = vld [vmem:[%s359 + $0xa8] sm:$0xf]
      %v5202 = vld [vmem:[%s359 + $0xac] sm:$0xf]
      %v5203 = vld [vmem:[%s359 + $0xb0] sm:$0xf]
      %v5204 = vld [vmem:[%s359 + $0xb4] sm:$0xf]
      %v5205 = vld [vmem:[%s359 + $0xb8] sm:$0xf]
      %v5206 = vld [vmem:[%s359 + $0xbc] sm:$0xf]
      %v5207 = vld [vmem:[%s359 + $0xc0] sm:$0xf]
      %v5208 = vld [vmem:[%s359 + $0xc4] sm:$0xf]
      %v5209 = vld [vmem:[%s359 + $0xc8] sm:$0xf]
      %v5210 = vld [vmem:[%s359 + $0xcc] sm:$0xf]
      %v5211 = vld [vmem:[%s359 + $0xd0] sm:$0xf]
      %v5212 = vld [vmem:[%s359 + $0xd4] sm:$0xf]
      %v5213 = vld [vmem:[%s359 + $0xd8] sm:$0xf]
      %v5214 = vld [vmem:[%s359 + $0xdc] sm:$0xf]
      %v5215 = vld [vmem:[%s359 + $0xe0] sm:$0xf]
      %v5216 = vld [vmem:[%s359 + $0xe4] sm:$0xf]
      %v5217 = vld [vmem:[%s359 + $0xe8] sm:$0xf]
      %v5218 = vld [vmem:[%s359 + $0xec] sm:$0xf]
      %v5219 = vld [vmem:[%s359 + $0xf0] sm:$0xf]
      %v5220 = vld [vmem:[%s359 + $0xf4] sm:$0xf]
      %v5221 = vld [vmem:[%s359 + $0xf8] sm:$0xf]
      %v5222 = vld [vmem:[%s359 + $0xfc] sm:$0xf]
      %v5223 = vld [vmem:[%s359 + $0x100] sm:$0xf]
      %v5224 = vld [vmem:[%s359 + $0x104] sm:$0xf]
      %v5225 = vld [vmem:[%s359 + $0x108] sm:$0xf]
      %v5226 = vld [vmem:[%s359 + $0x10c] sm:$0xf]
      %v5227 = vld [vmem:[%s359 + $0x110] sm:$0xf]
      %v5228 = vld [vmem:[%s359 + $0x114] sm:$0xf]
      %v5229 = vld [vmem:[%s359 + $0x118] sm:$0xf]
      %v5230 = vld [vmem:[%s359 + $0x11c] sm:$0xf]
      %v5231 = vld [vmem:[%s359 + $0x120] sm:$0xf]
      %v5232 = vld [vmem:[%s359 + $0x124] sm:$0xf]
      %v5233 = vld [vmem:[%s359 + $0x128] sm:$0xf]
      %v5234 = vld [vmem:[%s359 + $0x12c] sm:$0xf]
      %v5235 = vld [vmem:[%s359 + $0x130] sm:$0xf]
      %v5236 = vld [vmem:[%s359 + $0x134] sm:$0xf]
      %v5237 = vld [vmem:[%s359 + $0x138] sm:$0xf]
      %v5238 = vld [vmem:[%s359 + $0x13c] sm:$0xf]
      %v5239 = vld [vmem:[%s359 + $0x140] sm:$0xf]
      %v5240 = vld [vmem:[%s359 + $0x144] sm:$0xf]
      %v5241 = vld [vmem:[%s359 + $0x148] sm:$0xf]
      %v5242 = vld [vmem:[%s359 + $0x14c] sm:$0xf]
      %v5243 = vld [vmem:[%s359 + $0x150] sm:$0xf]
      %v5244 = vld [vmem:[%s359 + $0x154] sm:$0xf]
      %v5245 = vld [vmem:[%s359 + $0x158] sm:$0xf]
      %v5246 = vld [vmem:[%s359 + $0x15c] sm:$0xf]
      %v5247 = vld [vmem:[%s359 + $0x160] sm:$0xf]
      %v5248 = vld [vmem:[%s359 + $0x164] sm:$0xf]
      %v5249 = vld [vmem:[%s359 + $0x168] sm:$0xf]
      %v5250 = vld [vmem:[%s359 + $0x16c] sm:$0xf]
      %v5251 = vld [vmem:[%s359 + $0x170] sm:$0xf]
      %v5252 = vld [vmem:[%s359 + $0x174] sm:$0xf]
      %v5253 = vld [vmem:[%s359 + $0x178] sm:$0xf]
      %v5254 = vld [vmem:[%s359 + $0x17c] sm:$0xf]
      %v5255 = vld [vmem:[%s359 + $0x180] sm:$0xf]
      %v5256 = vld [vmem:[%s359 + $0x184] sm:$0xf]
      %v5257 = vld [vmem:[%s359 + $0x188] sm:$0xf]
      %v5258 = vld [vmem:[%s359 + $0x18c] sm:$0xf]
      %v5259 = vld [vmem:[%s359 + $0x190] sm:$0xf]
      %v5260 = vld [vmem:[%s359 + $0x194] sm:$0xf]
      %v5261 = vld [vmem:[%s359 + $0x198] sm:$0xf]
      %v5262 = vld [vmem:[%s359 + $0x19c] sm:$0xf]
      %v5263 = vld [vmem:[%s359 + $0x1a0] sm:$0xf]
      %v5264 = vld [vmem:[%s359 + $0x1a4] sm:$0xf]
      %v5265 = vld [vmem:[%s359 + $0x1a8] sm:$0xf]
      %v5266 = vld [vmem:[%s359 + $0x1ac] sm:$0xf]
      %v5267 = vld [vmem:[%s359 + $0x1b0] sm:$0xf]
      %v5268 = vld [vmem:[%s359 + $0x1b4] sm:$0xf]
      %v5269 = vld [vmem:[%s359 + $0x1b8] sm:$0xf]
      %v5270 = vld [vmem:[%s359 + $0x1bc] sm:$0xf]
      %v5271 = vld [vmem:[%s359 + $0x1c0] sm:$0xf]
      %v5272 = vld [vmem:[%s359 + $0x1c4] sm:$0xf]
      %v5273 = vld [vmem:[%s359 + $0x1c8] sm:$0xf]
      %v5274 = vld [vmem:[%s359 + $0x1cc] sm:$0xf]
      %v5275 = vld [vmem:[%s359 + $0x1d0] sm:$0xf]
      %v5276 = vld [vmem:[%s359 + $0x1d4] sm:$0xf]
      %v5277 = vld [vmem:[%s359 + $0x1d8] sm:$0xf]
      %v5278 = vld [vmem:[%s359 + $0x1dc] sm:$0xf]
      %v5279 = vld [vmem:[%s359 + $0x1e0] sm:$0xf]
      %v5280 = vld [vmem:[%s359 + $0x1e4] sm:$0xf]
      %v5281 = vld [vmem:[%s359 + $0x1e8] sm:$0xf]
      %v5282 = vld [vmem:[%s359 + $0x1ec] sm:$0xf]
      %v5283 = vld [vmem:[%s359 + $0x1f0] sm:$0xf]
      %v5284 = vld [vmem:[%s359 + $0x1f4] sm:$0xf]
      %v5285 = vld [vmem:[%s359 + $0x1f8] sm:$0xf]
      %v5286 = vld [vmem:[%s359 + $0x1fc] sm:$0xf]
      %v5287 = vld [vmem:[%s359 + $0x200] sm:$0xf]
      %v5288 = vld [vmem:[%s359 + $0x204] sm:$0xf]
      %v5289 = vld [vmem:[%s359 + $0x208] sm:$0xf]
      %v5290 = vld [vmem:[%s359 + $0x20c] sm:$0xf]
      %v5291 = vld [vmem:[%s359 + $0x210] sm:$0xf]
      %v5292 = vld [vmem:[%s359 + $0x214] sm:$0xf]
      %v5293 = vld [vmem:[%s359 + $0x218] sm:$0xf]
      %v5294 = vld [vmem:[%s359 + $0x21c] sm:$0xf]
      %v5295 = vld [vmem:[%s359 + $0x220] sm:$0xf]
      %v5296 = vld [vmem:[%s359 + $0x224] sm:$0xf]
      %v5297 = vld [vmem:[%s359 + $0x228] sm:$0xf]
      %v5298 = vld [vmem:[%s359 + $0x22c] sm:$0xf]
      %v5299 = vld [vmem:[%s359 + $0x230] sm:$0xf]
      %v5300 = vld [vmem:[%s359 + $0x234] sm:$0xf]
      %v5301 = vld [vmem:[%s359 + $0x238] sm:$0xf]
      %v5302 = vld [vmem:[%s359 + $0x23c] sm:$0xf]
      %v5303 = vld [vmem:[%s359 + $0x240] sm:$0xf]
      %v5304 = vld [vmem:[%s359 + $0x244] sm:$0xf]
      %v5305 = vld [vmem:[%s359 + $0x248] sm:$0xf]
      %v5306 = vld [vmem:[%s359 + $0x24c] sm:$0xf]
      %v5307 = vld [vmem:[%s359 + $0x250] sm:$0xf]
      %v5308 = vld [vmem:[%s359 + $0x254] sm:$0xf]
      %v5309 = vld [vmem:[%s359 + $0x258] sm:$0xf]
      %v5310 = vld [vmem:[%s359 + $0x25c] sm:$0xf]
      %v5311 = vld [vmem:[%s359 + $0x260] sm:$0xf]
      %v5312 = vld [vmem:[%s359 + $0x264] sm:$0xf]
      %v5313 = vld [vmem:[%s359 + $0x268] sm:$0xf]
      %v5314 = vld [vmem:[%s359 + $0x26c] sm:$0xf]
      %v5315 = vld [vmem:[%s359 + $0x270] sm:$0xf]
      %v5316 = vld [vmem:[%s359 + $0x274] sm:$0xf]
      %v5317 = vld [vmem:[%s359 + $0x278] sm:$0xf]
      %v5318 = vld [vmem:[%s359 + $0x27c] sm:$0xf]
      %v5319 = vld [vmem:[%s359 + $0x280] sm:$0xf]
      %v5320 = vld [vmem:[%s359 + $0x284] sm:$0xf]
      %v5321 = vld [vmem:[%s359 + $0x288] sm:$0xf]
      %v5322 = vld [vmem:[%s359 + $0x28c] sm:$0xf]
      %v5323 = vld [vmem:[%s359 + $0x290] sm:$0xf]
      %v5324 = vld [vmem:[%s359 + $0x294] sm:$0xf]
      %v5325 = vld [vmem:[%s359 + $0x298] sm:$0xf]
      %v5326 = vld [vmem:[%s359 + $0x29c] sm:$0xf]
      %v5327 = vld [vmem:[%s359 + $0x2a0] sm:$0xf]
      %v5328 = vld [vmem:[%s359 + $0x2a4] sm:$0xf]
      %v5329 = vld [vmem:[%s359 + $0x2a8] sm:$0xf]
      %v5330 = vld [vmem:[%s359 + $0x2ac] sm:$0xf]
      %v5331 = vld [vmem:[%s359 + $0x2b0] sm:$0xf]
      %v5332 = vld [vmem:[%s359 + $0x2b4] sm:$0xf]
      %v5333 = vld [vmem:[%s359 + $0x2b8] sm:$0xf]
      %v5334 = vld [vmem:[%s359 + $0x2bc] sm:$0xf]
      %v5335 = vld [vmem:[%s359 + $0x2c0] sm:$0xf]
      %v5336 = vld [vmem:[%s359 + $0x2c4] sm:$0xf]
      %v5337 = vld [vmem:[%s359 + $0x2c8] sm:$0xf]
      %v5338 = vld [vmem:[%s359 + $0x2cc] sm:$0xf]
      %v5339 = vld [vmem:[%s359 + $0x2d0] sm:$0xf]
      %v5340 = vld [vmem:[%s359 + $0x2d4] sm:$0xf]
      %v5341 = vld [vmem:[%s359 + $0x2d8] sm:$0xf]
      %v5342 = vld [vmem:[%s359 + $0x2dc] sm:$0xf]
      %v5343 = vld [vmem:[%s359 + $0x2e0] sm:$0xf]
      %v5344 = vld [vmem:[%s359 + $0x2e4] sm:$0xf]
      %v5345 = vld [vmem:[%s359 + $0x2e8] sm:$0xf]
      %v5346 = vld [vmem:[%s359 + $0x2ec] sm:$0xf]
      %v5347 = vld [vmem:[%s359 + $0x2f0] sm:$0xf]
      %v5348 = vld [vmem:[%s359 + $0x2f4] sm:$0xf]
      %v5349 = vld [vmem:[%s359 + $0x2f8] sm:$0xf]
      %v5350 = vld [vmem:[%s359 + $0x2fc] sm:$0xf]
      %v5351 = vld [vmem:[%s359 + $0x300] sm:$0xf]
      %v5352 = vld [vmem:[%s359 + $0x304] sm:$0xf]
      %v5353 = vld [vmem:[%s359 + $0x308] sm:$0xf]
      %v5354 = vld [vmem:[%s359 + $0x30c] sm:$0xf]
      %v5355 = vld [vmem:[%s359 + $0x310] sm:$0xf]
      %v5356 = vld [vmem:[%s359 + $0x314] sm:$0xf]
      %v5357 = vld [vmem:[%s359 + $0x318] sm:$0xf]
      %v5358 = vld [vmem:[%s359 + $0x31c] sm:$0xf]
      %v5359 = vld [vmem:[%s359 + $0x320] sm:$0xf]
      %v5360 = vld [vmem:[%s359 + $0x324] sm:$0xf]
      %v5361 = vld [vmem:[%s359 + $0x328] sm:$0xf]
      %v5362 = vld [vmem:[%s359 + $0x32c] sm:$0xf]
      %v5363 = vld [vmem:[%s359 + $0x330] sm:$0xf]
      %v5364 = vld [vmem:[%s359 + $0x334] sm:$0xf]
      %v5365 = vld [vmem:[%s359 + $0x338] sm:$0xf]
      %v5366 = vld [vmem:[%s359 + $0x33c] sm:$0xf]
      %v5367 = vld [vmem:[%s359 + $0x340] sm:$0xf]
      %v5368 = vld [vmem:[%s359 + $0x344] sm:$0xf]
      %v5369 = vld [vmem:[%s359 + $0x348] sm:$0xf]
      %v5370 = vld [vmem:[%s359 + $0x34c] sm:$0xf]
      %v5371 = vld [vmem:[%s359 + $0x350] sm:$0xf]
      %v5372 = vld [vmem:[%s359 + $0x354] sm:$0xf]
      %v5373 = vld [vmem:[%s359 + $0x358] sm:$0xf]
      %v5374 = vld [vmem:[%s359 + $0x35c] sm:$0xf]
      %v5375 = vld [vmem:[%s359 + $0x360] sm:$0xf]
      %v5376 = vld [vmem:[%s359 + $0x364] sm:$0xf]
      %v5377 = vld [vmem:[%s359 + $0x368] sm:$0xf]
      %v5378 = vld [vmem:[%s359 + $0x36c] sm:$0xf]
      %v5379 = vld [vmem:[%s359 + $0x370] sm:$0xf]
      %v5380 = vld [vmem:[%s359 + $0x374] sm:$0xf]
      %v5381 = vld [vmem:[%s359 + $0x378] sm:$0xf]
      %v5382 = vld [vmem:[%s359 + $0x37c] sm:$0xf]
      %v5383 = vld [vmem:[%s359 + $0x380] sm:$0xf]
      %v5384 = vld [vmem:[%s359 + $0x384] sm:$0xf]
      %v5385 = vld [vmem:[%s359 + $0x388] sm:$0xf]
      %v5386 = vld [vmem:[%s359 + $0x38c] sm:$0xf]
      %v5387 = vld [vmem:[%s359 + $0x390] sm:$0xf]
      %v5388 = vld [vmem:[%s359 + $0x394] sm:$0xf]
      %v5389 = vld [vmem:[%s359 + $0x398] sm:$0xf]
      %v5390 = vld [vmem:[%s359 + $0x39c] sm:$0xf]
      %v5391 = vld [vmem:[%s359 + $0x3a0] sm:$0xf]
      %v5392 = vld [vmem:[%s359 + $0x3a4] sm:$0xf]
      %v5393 = vld [vmem:[%s359 + $0x3a8] sm:$0xf]
      %v5394 = vld [vmem:[%s359 + $0x3ac] sm:$0xf]
      %v5395 = vld [vmem:[%s359 + $0x3b0] sm:$0xf]
      %v5396 = vld [vmem:[%s359 + $0x3b4] sm:$0xf]
      %v5397 = vld [vmem:[%s359 + $0x3b8] sm:$0xf]
      %v5398 = vld [vmem:[%s359 + $0x3bc] sm:$0xf]
      %v5399 = vld [vmem:[%s359 + $0x3c0] sm:$0xf]
      %v5400 = vld [vmem:[%s359 + $0x3c4] sm:$0xf]
      %v5401 = vld [vmem:[%s359 + $0x3c8] sm:$0xf]
      %v5402 = vld [vmem:[%s359 + $0x3cc] sm:$0xf]
      %v5403 = vld [vmem:[%s359 + $0x3d0] sm:$0xf]
      %v5404 = vld [vmem:[%s359 + $0x3d4] sm:$0xf]
      %v5405 = vld [vmem:[%s359 + $0x3d8] sm:$0xf]
      %v5406 = vld [vmem:[%s359 + $0x3dc] sm:$0xf]
      %v5407 = vld [vmem:[%s359 + $0x3e0] sm:$0xf]
      %v5408 = vld [vmem:[%s359 + $0x3e4] sm:$0xf]
      %v5409 = vld [vmem:[%s359 + $0x3e8] sm:$0xf]
      %v5410 = vld [vmem:[%s359 + $0x3ec] sm:$0xf]
      %v5411 = vld [vmem:[%s359 + $0x3f0] sm:$0xf]
      %v5412 = vld [vmem:[%s359 + $0x3f4] sm:$0xf]
      %v5413 = vld [vmem:[%s359 + $0x3f8] sm:$0xf]
      %v5414 = vld [vmem:[%s359 + $0x3fc] sm:$0xf]
      %v5415 = vld [vmem:[%s359 + $0x400] sm:$0xf]
      %v5416 = vld [vmem:[%s359 + $0x404] sm:$0xf]
      %v5417 = vld [vmem:[%s359 + $0x408] sm:$0xf]
      %v5418 = vld [vmem:[%s359 + $0x40c] sm:$0xf]
      %v5419 = vld [vmem:[%s359 + $0x410] sm:$0xf]
      %v5420 = vld [vmem:[%s359 + $0x414] sm:$0xf]
      %v5421 = vld [vmem:[%s359 + $0x418] sm:$0xf]
      %v5422 = vld [vmem:[%s359 + $0x41c] sm:$0xf]
      %v5423 = vld [vmem:[%s359 + $0x420] sm:$0xf]
      %v5424 = vld [vmem:[%s359 + $0x424] sm:$0xf]
      %v5425 = vld [vmem:[%s359 + $0x428] sm:$0xf]
      %v5426 = vld [vmem:[%s359 + $0x42c] sm:$0xf]
      %v5427 = vld [vmem:[%s359 + $0x430] sm:$0xf]
      %v5428 = vld [vmem:[%s359 + $0x434] sm:$0xf]
      %v5429 = vld [vmem:[%s359 + $0x438] sm:$0xf]
      %v5430 = vld [vmem:[%s359 + $0x43c] sm:$0xf]
      %v5431 = vld [vmem:[%s359 + $0x440] sm:$0xf]
      %v5432 = vld [vmem:[%s359 + $0x444] sm:$0xf]
      %v5433 = vld [vmem:[%s359 + $0x448] sm:$0xf]
      %v5434 = vld [vmem:[%s359 + $0x44c] sm:$0xf]
      %v5435 = vld [vmem:[%s359 + $0x450] sm:$0xf]
      %v5436 = vld [vmem:[%s359 + $0x454] sm:$0xf]
      %v5437 = vld [vmem:[%s359 + $0x458] sm:$0xf]
      %v5438 = vld [vmem:[%s359 + $0x45c] sm:$0xf]
      %v5439 = vld [vmem:[%s359 + $0x460] sm:$0xf]
      %v5440 = vld [vmem:[%s359 + $0x464] sm:$0xf]
      %v5441 = vld [vmem:[%s359 + $0x468] sm:$0xf]
      %v5442 = vld [vmem:[%s359 + $0x46c] sm:$0xf]
      %v5443 = vld [vmem:[%s359 + $0x470] sm:$0xf]
      %v5444 = vld [vmem:[%s359 + $0x474] sm:$0xf]
      %v5445 = vld [vmem:[%s359 + $0x478] sm:$0xf]
      %v5446 = vld [vmem:[%s359 + $0x47c] sm:$0xf]
      %v5447 = vld [vmem:[%s359 + $0x480] sm:$0xf]
      %v5448 = vld [vmem:[%s359 + $0x484] sm:$0xf]
      %v5449 = vld [vmem:[%s359 + $0x488] sm:$0xf]
      %v5450 = vld [vmem:[%s359 + $0x48c] sm:$0xf]
      %v5451 = vld [vmem:[%s359 + $0x490] sm:$0xf]
      %v5452 = vld [vmem:[%s359 + $0x494] sm:$0xf]
      %v5453 = vld [vmem:[%s359 + $0x498] sm:$0xf]
      %v5454 = vld [vmem:[%s359 + $0x49c] sm:$0xf]
      %v5455 = vld [vmem:[%s359 + $0x4a0] sm:$0xf]
      %v5456 = vld [vmem:[%s359 + $0x4a4] sm:$0xf]
      %v5457 = vld [vmem:[%s359 + $0x4a8] sm:$0xf]
      %v5458 = vld [vmem:[%s359 + $0x4ac] sm:$0xf]
      %v5459 = vld [vmem:[%s359 + $0x4b0] sm:$0xf]
      %v5460 = vld [vmem:[%s359 + $0x4b4] sm:$0xf]
      %v5461 = vld [vmem:[%s359 + $0x4b8] sm:$0xf]
      %v5462 = vld [vmem:[%s359 + $0x4bc] sm:$0xf]
      %v5463 = vld [vmem:[%s359 + $0x4c0] sm:$0xf]
      %v5464 = vld [vmem:[%s359 + $0x4c4] sm:$0xf]
      %v5465 = vld [vmem:[%s359 + $0x4c8] sm:$0xf]
      %v5466 = vld [vmem:[%s359 + $0x4cc] sm:$0xf]
      %v5467 = vld [vmem:[%s359 + $0x4d0] sm:$0xf]
      %v5468 = vld [vmem:[%s359 + $0x4d4] sm:$0xf]
      %v5469 = vld [vmem:[%s359 + $0x4d8] sm:$0xf]
      %v5470 = vld [vmem:[%s359 + $0x4dc] sm:$0xf]
      %v5471 = vld [vmem:[%s359 + $0x4e0] sm:$0xf]
      %v5472 = vld [vmem:[%s359 + $0x4e4] sm:$0xf]
      %v5473 = vld [vmem:[%s359 + $0x4e8] sm:$0xf]
      %v5474 = vld [vmem:[%s359 + $0x4ec] sm:$0xf]
      %v5475 = vld [vmem:[%s359 + $0x4f0] sm:$0xf]
      %v5476 = vld [vmem:[%s359 + $0x4f4] sm:$0xf]
      %v5477 = vld [vmem:[%s359 + $0x4f8] sm:$0xf]
      %v5478 = vld [vmem:[%s359 + $0x4fc] sm:$0xf]
      %v5479 = vld [vmem:[%s359 + $0x500] sm:$0xf]
      %v5480 = vld [vmem:[%s359 + $0x504] sm:$0xf]
      %v5481 = vld [vmem:[%s359 + $0x508] sm:$0xf]
      %v5482 = vld [vmem:[%s359 + $0x50c] sm:$0xf]
      %v5483 = vld [vmem:[%s359 + $0x510] sm:$0xf]
      %v5484 = vld [vmem:[%s359 + $0x514] sm:$0xf]
      %v5485 = vld [vmem:[%s359 + $0x518] sm:$0xf]
      %v5486 = vld [vmem:[%s359 + $0x51c] sm:$0xf]
      %v5487 = vld [vmem:[%s359 + $0x520] sm:$0xf]
      %v5488 = vld [vmem:[%s359 + $0x524] sm:$0xf]
      %v5489 = vld [vmem:[%s359 + $0x528] sm:$0xf]
      %v5490 = vld [vmem:[%s359 + $0x52c] sm:$0xf]
      %v5491 = vld [vmem:[%s359 + $0x530] sm:$0xf]
      %v5492 = vld [vmem:[%s359 + $0x534] sm:$0xf]
      %v5493 = vld [vmem:[%s359 + $0x538] sm:$0xf]
      %v5494 = vld [vmem:[%s359 + $0x53c] sm:$0xf]
      %v5495 = vld [vmem:[%s359 + $0x540] sm:$0xf]
      %v5496 = vld [vmem:[%s359 + $0x544] sm:$0xf]
      %v5497 = vld [vmem:[%s359 + $0x548] sm:$0xf]
      %v5498 = vld [vmem:[%s359 + $0x54c] sm:$0xf]
      %v5499 = vld [vmem:[%s359 + $0x550] sm:$0xf]
      %v5500 = vld [vmem:[%s359 + $0x554] sm:$0xf]
      %v5501 = vld [vmem:[%s359 + $0x558] sm:$0xf]
      %v5502 = vld [vmem:[%s359 + $0x55c] sm:$0xf]
      %v5503 = vld [vmem:[%s359 + $0x560] sm:$0xf]
      %v5504 = vld [vmem:[%s359 + $0x564] sm:$0xf]
      %v5505 = vld [vmem:[%s359 + $0x568] sm:$0xf]
      %v5506 = vld [vmem:[%s359 + $0x56c] sm:$0xf]
      %v5507 = vld [vmem:[%s359 + $0x570] sm:$0xf]
      %v5508 = vld [vmem:[%s359 + $0x574] sm:$0xf]
      %v5509 = vld [vmem:[%s359 + $0x578] sm:$0xf]
      %v5510 = vld [vmem:[%s359 + $0x57c] sm:$0xf]
      %v5511 = vld [vmem:[%s359 + $0x580] sm:$0xf]
      %v5512 = vld [vmem:[%s359 + $0x584] sm:$0xf]
      %v5513 = vld [vmem:[%s359 + $0x588] sm:$0xf]
      %v5514 = vld [vmem:[%s359 + $0x58c] sm:$0xf]
      %v5515 = vld [vmem:[%s359 + $0x590] sm:$0xf]
      %v5516 = vld [vmem:[%s359 + $0x594] sm:$0xf]
      %v5517 = vld [vmem:[%s359 + $0x598] sm:$0xf]
      %v5518 = vld [vmem:[%s359 + $0x59c] sm:$0xf]
      %v5519 = vld [vmem:[%s359 + $0x5a0] sm:$0xf]
      %v5520 = vld [vmem:[%s359 + $0x5a4] sm:$0xf]
      %v5521 = vld [vmem:[%s359 + $0x5a8] sm:$0xf]
      %v5522 = vld [vmem:[%s359 + $0x5ac] sm:$0xf]
      %v5523 = vld [vmem:[%s359 + $0x5b0] sm:$0xf]
      %v5524 = vld [vmem:[%s359 + $0x5b4] sm:$0xf]
      %v5525 = vld [vmem:[%s359 + $0x5b8] sm:$0xf]
      %v5526 = vld [vmem:[%s359 + $0x5bc] sm:$0xf]
      %v5527 = vld [vmem:[%s359 + $0x5c0] sm:$0xf]
      %v5528 = vld [vmem:[%s359 + $0x5c4] sm:$0xf]
      %v5529 = vld [vmem:[%s359 + $0x5c8] sm:$0xf]
      %v5530 = vld [vmem:[%s359 + $0x5cc] sm:$0xf]
      %v5531 = vld [vmem:[%s359 + $0x5d0] sm:$0xf]
      %v5532 = vld [vmem:[%s359 + $0x5d4] sm:$0xf]
      %v5533 = vld [vmem:[%s359 + $0x5d8] sm:$0xf]
      %v5534 = vld [vmem:[%s359 + $0x5dc] sm:$0xf]
      %v5535 = vld [vmem:[%s359 + $0x5e0] sm:$0xf]
      %v5536 = vld [vmem:[%s359 + $0x5e4] sm:$0xf]
      %v5537 = vld [vmem:[%s359 + $0x5e8] sm:$0xf]
      %v5538 = vld [vmem:[%s359 + $0x5ec] sm:$0xf]
      %v5539 = vld [vmem:[%s359 + $0x5f0] sm:$0xf]
      %v5540 = vld [vmem:[%s359 + $0x5f4] sm:$0xf]
      %v5541 = vld [vmem:[%s359 + $0x5f8] sm:$0xf]
      %v5542 = vld [vmem:[%s359 + $0x5fc] sm:$0xf]
      %v5543 = vld [vmem:[%s359 + $0x600] sm:$0xf]
      %v5544 = vld [vmem:[%s359 + $0x604] sm:$0xf]
      %v5545 = vld [vmem:[%s359 + $0x608] sm:$0xf]
      %v5546 = vld [vmem:[%s359 + $0x60c] sm:$0xf]
      %v5547 = vld [vmem:[%s359 + $0x610] sm:$0xf]
      %v5548 = vld [vmem:[%s359 + $0x614] sm:$0xf]
      %v5549 = vld [vmem:[%s359 + $0x618] sm:$0xf]
      %v5550 = vld [vmem:[%s359 + $0x61c] sm:$0xf]
      %v5551 = vld [vmem:[%s359 + $0x620] sm:$0xf]
      %v5552 = vld [vmem:[%s359 + $0x624] sm:$0xf]
      %v5553 = vld [vmem:[%s359 + $0x628] sm:$0xf]
      %v5554 = vld [vmem:[%s359 + $0x62c] sm:$0xf]
      %v5555 = vld [vmem:[%s359 + $0x630] sm:$0xf]
      %v5556 = vld [vmem:[%s359 + $0x634] sm:$0xf]
      %v5557 = vld [vmem:[%s359 + $0x638] sm:$0xf]
      %v5558 = vld [vmem:[%s359 + $0x63c] sm:$0xf]
      %v5559 = vld [vmem:[%s359 + $0x640] sm:$0xf]
      %v5560 = vld [vmem:[%s359 + $0x644] sm:$0xf]
      %v5561 = vld [vmem:[%s359 + $0x648] sm:$0xf]
      %v5562 = vld [vmem:[%s359 + $0x64c] sm:$0xf]
      %v5563 = vld [vmem:[%s359 + $0x650] sm:$0xf]
      %v5564 = vld [vmem:[%s359 + $0x654] sm:$0xf]
      %v5565 = vld [vmem:[%s359 + $0x658] sm:$0xf]
      %v5566 = vld [vmem:[%s359 + $0x65c] sm:$0xf]
      %v5567 = vld [vmem:[%s359 + $0x660] sm:$0xf]
      %v5568 = vld [vmem:[%s359 + $0x664] sm:$0xf]
      %v5569 = vld [vmem:[%s359 + $0x668] sm:$0xf]
      %v5570 = vld [vmem:[%s359 + $0x66c] sm:$0xf]
      %v5571 = vld [vmem:[%s359 + $0x670] sm:$0xf]
      %v5572 = vld [vmem:[%s359 + $0x674] sm:$0xf]
      %v5573 = vld [vmem:[%s359 + $0x678] sm:$0xf]
      %v5574 = vld [vmem:[%s359 + $0x67c] sm:$0xf]
      %v5575 = vld [vmem:[%s359 + $0x680] sm:$0xf]
      %v5576 = vld [vmem:[%s359 + $0x684] sm:$0xf]
      %v5577 = vld [vmem:[%s359 + $0x688] sm:$0xf]
      %v5578 = vld [vmem:[%s359 + $0x68c] sm:$0xf]
      %v5579 = vld [vmem:[%s359 + $0x690] sm:$0xf]
      %v5580 = vld [vmem:[%s359 + $0x694] sm:$0xf]
      %v5581 = vld [vmem:[%s359 + $0x698] sm:$0xf]
      %v5582 = vld [vmem:[%s359 + $0x69c] sm:$0xf]
      %v5583 = vld [vmem:[%s359 + $0x6a0] sm:$0xf]
      %v5584 = vld [vmem:[%s359 + $0x6a4] sm:$0xf]
      %v5585 = vld [vmem:[%s359 + $0x6a8] sm:$0xf]
      %v5586 = vld [vmem:[%s359 + $0x6ac] sm:$0xf]
      %v5587 = vld [vmem:[%s359 + $0x6b0] sm:$0xf]
      %v5588 = vld [vmem:[%s359 + $0x6b4] sm:$0xf]
      %v5589 = vld [vmem:[%s359 + $0x6b8] sm:$0xf]
      %v5590 = vld [vmem:[%s359 + $0x6bc] sm:$0xf]
      %v5591 = vld [vmem:[%s359 + $0x6c0] sm:$0xf]
      %v5592 = vld [vmem:[%s359 + $0x6c4] sm:$0xf]
      %v5593 = vld [vmem:[%s359 + $0x6c8] sm:$0xf]
      %v5594 = vld [vmem:[%s359 + $0x6cc] sm:$0xf]
      %v5595 = vld [vmem:[%s359 + $0x6d0] sm:$0xf]
      %v5596 = vld [vmem:[%s359 + $0x6d4] sm:$0xf]
      %v5597 = vld [vmem:[%s359 + $0x6d8] sm:$0xf]
      %v5598 = vld [vmem:[%s359 + $0x6dc] sm:$0xf]
      %v5599 = vld [vmem:[%s359 + $0x6e0] sm:$0xf]
      %v5600 = vld [vmem:[%s359 + $0x6e4] sm:$0xf]
      %v5601 = vld [vmem:[%s359 + $0x6e8] sm:$0xf]
      %v5602 = vld [vmem:[%s359 + $0x6ec] sm:$0xf]
      %v5603 = vld [vmem:[%s359 + $0x6f0] sm:$0xf]
      %v5604 = vld [vmem:[%s359 + $0x6f4] sm:$0xf]
      %v5605 = vld [vmem:[%s359 + $0x6f8] sm:$0xf]
      %v5606 = vld [vmem:[%s359 + $0x6fc] sm:$0xf]
      %v5607 = vld [vmem:[%s359 + $0x700] sm:$0xf]
      %v5608 = vld [vmem:[%s359 + $0x704] sm:$0xf]
      %v5609 = vld [vmem:[%s359 + $0x708] sm:$0xf]
      %v5610 = vld [vmem:[%s359 + $0x70c] sm:$0xf]
      %v5611 = vld [vmem:[%s359 + $0x710] sm:$0xf]
      %v5612 = vld [vmem:[%s359 + $0x714] sm:$0xf]
      %v5613 = vld [vmem:[%s359 + $0x718] sm:$0xf]
      %v5614 = vld [vmem:[%s359 + $0x71c] sm:$0xf]
      %v5615 = vld [vmem:[%s359 + $0x720] sm:$0xf]
      %v5616 = vld [vmem:[%s359 + $0x724] sm:$0xf]
      %v5617 = vld [vmem:[%s359 + $0x728] sm:$0xf]
      %v5618 = vld [vmem:[%s359 + $0x72c] sm:$0xf]
      %v5619 = vld [vmem:[%s359 + $0x730] sm:$0xf]
      %v5620 = vld [vmem:[%s359 + $0x734] sm:$0xf]
      %v5621 = vld [vmem:[%s359 + $0x738] sm:$0xf]
      %v5622 = vld [vmem:[%s359 + $0x73c] sm:$0xf]
      %v5623 = vld [vmem:[%s359 + $0x740] sm:$0xf]
      %v5624 = vld [vmem:[%s359 + $0x744] sm:$0xf]
      %v5625 = vld [vmem:[%s359 + $0x748] sm:$0xf]
      %v5626 = vld [vmem:[%s359 + $0x74c] sm:$0xf]
      %v5627 = vld [vmem:[%s359 + $0x750] sm:$0xf]
      %v5628 = vld [vmem:[%s359 + $0x754] sm:$0xf]
      %v5629 = vld [vmem:[%s359 + $0x758] sm:$0xf]
      %v5630 = vld [vmem:[%s359 + $0x75c] sm:$0xf]
      %v5631 = vld [vmem:[%s359 + $0x760] sm:$0xf]
      %v5632 = vld [vmem:[%s359 + $0x764] sm:$0xf]
      %v5633 = vld [vmem:[%s359 + $0x768] sm:$0xf]
      %v5634 = vld [vmem:[%s359 + $0x76c] sm:$0xf]
      %v5635 = vld [vmem:[%s359 + $0x770] sm:$0xf]
      %v5636 = vld [vmem:[%s359 + $0x774] sm:$0xf]
      %v5637 = vld [vmem:[%s359 + $0x778] sm:$0xf]
      %v5638 = vld [vmem:[%s359 + $0x77c] sm:$0xf]
      %v5639 = vld [vmem:[%s359 + $0x780] sm:$0xf]
      %v5640 = vld [vmem:[%s359 + $0x784] sm:$0xf]
      %v5641 = vld [vmem:[%s359 + $0x788] sm:$0xf]
      %v5642 = vld [vmem:[%s359 + $0x78c] sm:$0xf]
      %v5643 = vld [vmem:[%s359 + $0x790] sm:$0xf]
      %v5644 = vld [vmem:[%s359 + $0x794] sm:$0xf]
      %v5645 = vld [vmem:[%s359 + $0x798] sm:$0xf]
      %v5646 = vld [vmem:[%s359 + $0x79c] sm:$0xf]
      %v5647 = vld [vmem:[%s359 + $0x7a0] sm:$0xf]
      %v5648 = vld [vmem:[%s359 + $0x7a4] sm:$0xf]
      %v5649 = vld [vmem:[%s359 + $0x7a8] sm:$0xf]
      %v5650 = vld [vmem:[%s359 + $0x7ac] sm:$0xf]
      %v5651 = vld [vmem:[%s359 + $0x7b0] sm:$0xf]
      %v5652 = vld [vmem:[%s359 + $0x7b4] sm:$0xf]
      %v5653 = vld [vmem:[%s359 + $0x7b8] sm:$0xf]
      %v5654 = vld [vmem:[%s359 + $0x7bc] sm:$0xf]
      %v5655 = vld [vmem:[%s362] sm:$0x1]
      %v5656 = vld [vmem:[#allocation3] sm:$0xff]
      %v5657 = vld [vmem:[#allocation3 + $0x8] sm:$0xff]
      %v5658 = vld [vmem:[#allocation3 + $0x10] sm:$0xff]
      %v5659 = vld [vmem:[#allocation3 + $0x18] sm:$0xff]
      %v5660 = vld [vmem:[#allocation3 + $0x20] sm:$0x1]
      %v5662 = vshrl.u32 %v5656, 16
      %v5664 = vshll.u32 %v5656, 16
      %v5666 = vrot.slane %v5664, 1
      %v5667 = vor.u32 %v5662, %v5666
      %v5669 = vshll.u32 %v5657, 16
      %v5671 = vrot.slane %v5669, 1
      %v5672 = vsel %vm1137, %v5667, %v5671
      %v5673 = vshrl.u32 %v5657, 16
      %v5675 = vor.u32 %v5673, %v5671
      %v5677 = vshll.u32 %v5658, 16
      %v5679 = vrot.slane %v5677, 1
      %v5680 = vsel %vm1137, %v5675, %v5679
      %v5681 = vshrl.u32 %v5658, 16
      %v5683 = vor.u32 %v5681, %v5679
      %v5685 = vshll.u32 %v5659, 16
      %v5687 = vrot.slane %v5685, 1
      %v5688 = vsel %vm1137, %v5683, %v5687
      %v5689 = vshrl.u32 %v5659, 16
      %v5691 = vor.u32 %v5689, %v5687
      %v5693 = vshll.u32 %v5660, 16
      %v5695 = vrot.slane %v5693, 1
      %v5696 = vsel %vm1137, %v5691, %v5695
      %5701 = vst.msk [vmem:[#allocation4] sm:$0xff] %vm390, %v5672
      %5702 = vst.msk [vmem:[#allocation4 + $0xf8] sm:$0xff] %vm390, %v5680
      %5703 = vst.msk [vmem:[#allocation4 + $0x1f0] sm:$0xff] %vm390, %v5688
      %5704 = vst.msk [vmem:[#allocation4 + $0x2e8] sm:$0xff] %vm390, %v5696
      %v5705 = vld [vmem:[#allocation3] sm:$0xfe]
      %v5706 = vld [vmem:[#allocation3 + $0x8] sm:$0xff]
      %v5707 = vld [vmem:[#allocation3 + $0x10] sm:$0xff]
      %v5708 = vld [vmem:[#allocation3 + $0x18] sm:$0xff]
      %v5709 = vld [vmem:[#allocation3 + $0x20] sm:$0x1]
      %v5715 = vrot.slane %v5705, 1
      %v5716 = vrot.slane %v5706, 1
      %v5717 = vsel %vm1192, %v5715, %v5716
      %v5718 = vrot.slane %v5707, 1
      %v5719 = vsel %vm1192, %v5716, %v5718
      %v5720 = vrot.slane %v5708, 1
      %v5721 = vsel %vm1192, %v5718, %v5720
      %v5722 = vrot.slane %v5709, 1
      %v5723 = vsel %vm1192, %v5720, %v5722
      %5728 = vst.msk [vmem:[#allocation4 + $0x8] sm:$0xff] %vm390, %v5717
      %5729 = vst.msk [vmem:[#allocation4 + $0x100] sm:$0xff] %vm390, %v5719
      %5730 = vst.msk [vmem:[#allocation4 + $0x1f8] sm:$0xff] %vm390, %v5721
      %5731 = vst.msk [vmem:[#allocation4 + $0x2f0] sm:$0xff] %vm390, %v5723
      %v5732 = vld [vmem:[#allocation3] sm:$0xfe]
      %v5733 = vld [vmem:[#allocation3 + $0x8] sm:$0xff]
      %v5734 = vld [vmem:[#allocation3 + $0x10] sm:$0xff]
      %v5735 = vld [vmem:[#allocation3 + $0x18] sm:$0xff]
      %v5736 = vld [vmem:[#allocation3 + $0x20] sm:$0x3]
      %v5738 = vshrl.u32 %v5732, 16
      %v5740 = vrot.slane %v5738, 1
      %v5741 = vshll.u32 %v5732, 16
      %v5743 = vrot.slane %v5741, 2
      %v5744 = vor.u32 %v5740, %v5743
      %v5746 = vshrl.u32 %v5733, 16
      %v5748 = vrot.slane %v5746, 1
      %v5749 = vshll.u32 %v5733, 16
      %v5751 = vrot.slane %v5749, 2
      %v5752 = vor.u32 %v5748, %v5751
      %v5753 = vsel %vm1215, %v5744, %v5752
      %v5755 = vshrl.u32 %v5734, 16
      %v5757 = vrot.slane %v5755, 1
      %v5758 = vshll.u32 %v5734, 16
      %v5760 = vrot.slane %v5758, 2
      %v5761 = vor.u32 %v5757, %v5760
      %v5762 = vsel %vm1215, %v5752, %v5761
      %v5764 = vshrl.u32 %v5735, 16
      %v5766 = vrot.slane %v5764, 1
      %v5767 = vshll.u32 %v5735, 16
      %v5769 = vrot.slane %v5767, 2
      %v5770 = vor.u32 %v5766, %v5769
      %v5771 = vsel %vm1215, %v5761, %v5770
      %v5773 = vshrl.u32 %v5736, 16
      %v5775 = vrot.slane %v5773, 1
      %v5776 = vshll.u32 %v5736, 16
      %v5778 = vrot.slane %v5776, 2
      %v5779 = vor.u32 %v5775, %v5778
      %v5780 = vsel %vm1215, %v5770, %v5779
      %5785 = vst.msk [vmem:[#allocation4 + $0x10] sm:$0xff] %vm390, %v5753
      %5786 = vst.msk [vmem:[#allocation4 + $0x108] sm:$0xff] %vm390, %v5762
      %5787 = vst.msk [vmem:[#allocation4 + $0x200] sm:$0xff] %vm390, %v5771
      %5788 = vst.msk [vmem:[#allocation4 + $0x2f8] sm:$0xff] %vm390, %v5780
      %v5789 = vld [vmem:[#allocation3] sm:$0xfc]
      %v5790 = vld [vmem:[#allocation3 + $0x8] sm:$0xff]
      %v5791 = vld [vmem:[#allocation3 + $0x10] sm:$0xff]
      %v5792 = vld [vmem:[#allocation3 + $0x18] sm:$0xff]
      %v5793 = vld [vmem:[#allocation3 + $0x20] sm:$0x3]
      %v5799 = vrot.slane %v5789, 2
      %v5800 = vrot.slane %v5790, 2
      %v5801 = vsel %vm1278, %v5799, %v5800
      %v5802 = vrot.slane %v5791, 2
      %v5803 = vsel %vm1278, %v5800, %v5802
      %v5804 = vrot.slane %v5792, 2
      %v5805 = vsel %vm1278, %v5802, %v5804
      %v5806 = vrot.slane %v5793, 2
      %v5807 = vsel %vm1278, %v5804, %v5806
      %5812 = vst.msk [vmem:[#allocation4 + $0x18] sm:$0xff] %vm390, %v5801
      %5813 = vst.msk [vmem:[#allocation4 + $0x110] sm:$0xff] %vm390, %v5803
      %5814 = vst.msk [vmem:[#allocation4 + $0x208] sm:$0xff] %vm390, %v5805
      %5815 = vst.msk [vmem:[#allocation4 + $0x300] sm:$0xff] %vm390, %v5807
      %v5816 = vld [vmem:[#allocation3] sm:$0xfc]
      %v5817 = vld [vmem:[#allocation3 + $0x8] sm:$0xff]
      %v5818 = vld [vmem:[#allocation3 + $0x10] sm:$0xff]
      %v5819 = vld [vmem:[#allocation3 + $0x18] sm:$0xff]
      %v5820 = vld [vmem:[#allocation3 + $0x20] sm:$0x7]
      %v5822 = vshrl.u32 %v5816, 16
      %v5824 = vrot.slane %v5822, 2
      %v5825 = vshll.u32 %v5816, 16
      %v5827 = vrot.slane %v5825, 3
      %v5828 = vor.u32 %v5824, %v5827
      %v5830 = vshrl.u32 %v5817, 16
      %v5832 = vrot.slane %v5830, 2
      %v5833 = vshll.u32 %v5817, 16
      %v5835 = vrot.slane %v5833, 3
      %v5836 = vor.u32 %v5832, %v5835
      %v5837 = vsel %vm1301, %v5828, %v5836
      %v5839 = vshrl.u32 %v5818, 16
      %v5841 = vrot.slane %v5839, 2
      %v5842 = vshll.u32 %v5818, 16
      %v5844 = vrot.slane %v5842, 3
      %v5845 = vor.u32 %v5841, %v5844
      %v5846 = vsel %vm1301, %v5836, %v5845
      %v5848 = vshrl.u32 %v5819, 16
      %v5850 = vrot.slane %v5848, 2
      %v5851 = vshll.u32 %v5819, 16
      %v5853 = vrot.slane %v5851, 3
      %v5854 = vor.u32 %v5850, %v5853
      %v5855 = vsel %vm1301, %v5845, %v5854
      %v5857 = vshrl.u32 %v5820, 16
      %v5859 = vrot.slane %v5857, 2
      %v5860 = vshll.u32 %v5820, 16
      %v5862 = vrot.slane %v5860, 3
      %v5863 = vor.u32 %v5859, %v5862
      %v5864 = vsel %vm1301, %v5854, %v5863
      %5869 = vst.msk [vmem:[#allocation4 + $0x20] sm:$0xff] %vm390, %v5837
      %5870 = vst.msk [vmem:[#allocation4 + $0x118] sm:$0xff] %vm390, %v5846
      %5871 = vst.msk [vmem:[#allocation4 + $0x210] sm:$0xff] %vm390, %v5855
      %5872 = vst.msk [vmem:[#allocation4 + $0x308] sm:$0xff] %vm390, %v5864
      %v5873 = vld [vmem:[#allocation3] sm:$0xf8]
      %v5874 = vld [vmem:[#allocation3 + $0x8] sm:$0xff]
      %v5875 = vld [vmem:[#allocation3 + $0x10] sm:$0xff]
      %v5876 = vld [vmem:[#allocation3 + $0x18] sm:$0xff]
      %v5877 = vld [vmem:[#allocation3 + $0x20] sm:$0x7]
      %v5883 = vrot.slane %v5873, 3
      %v5884 = vrot.slane %v5874, 3
      %v5885 = vsel %vm1364, %v5883, %v5884
      %v5886 = vrot.slane %v5875, 3
      %v5887 = vsel %vm1364, %v5884, %v5886
      %v5888 = vrot.slane %v5876, 3
      %v5889 = vsel %vm1364, %v5886, %v5888
      %v5890 = vrot.slane %v5877, 3
      %v5891 = vsel %vm1364, %v5888, %v5890
      %5896 = vst.msk [vmem:[#allocation4 + $0x28] sm:$0xff] %vm390, %v5885
      %5897 = vst.msk [vmem:[#allocation4 + $0x120] sm:$0xff] %vm390, %v5887
      %5898 = vst.msk [vmem:[#allocation4 + $0x218] sm:$0xff] %vm390, %v5889
      %5899 = vst.msk [vmem:[#allocation4 + $0x310] sm:$0xff] %vm390, %v5891
      %v5900 = vld [vmem:[#allocation3] sm:$0xf8]
      %v5901 = vld [vmem:[#allocation3 + $0x8] sm:$0xff]
      %v5902 = vld [vmem:[#allocation3 + $0x10] sm:$0xff]
      %v5903 = vld [vmem:[#allocation3 + $0x18] sm:$0xff]
      %v5904 = vld [vmem:[#allocation3 + $0x20] sm:$0xf]
      %v5906 = vshrl.u32 %v5900, 16
      %v5908 = vrot.slane %v5906, 3
      %v5909 = vshll.u32 %v5900, 16
      %v5911 = vrot.slane %v5909, 4
      %v5912 = vor.u32 %v5908, %v5911
      %v5914 = vshrl.u32 %v5901, 16
      %v5916 = vrot.slane %v5914, 3
      %v5917 = vshll.u32 %v5901, 16
      %v5919 = vrot.slane %v5917, 4
      %v5920 = vor.u32 %v5916, %v5919
      %v5921 = vsel %vm1387, %v5912, %v5920
      %v5923 = vshrl.u32 %v5902, 16
      %v5925 = vrot.slane %v5923, 3
      %v5926 = vshll.u32 %v5902, 16
      %v5928 = vrot.slane %v5926, 4
      %v5929 = vor.u32 %v5925, %v5928
      %v5930 = vsel %vm1387, %v5920, %v5929
      %v5932 = vshrl.u32 %v5903, 16
      %v5934 = vrot.slane %v5932, 3
      %v5935 = vshll.u32 %v5903, 16
      %v5937 = vrot.slane %v5935, 4
      %v5938 = vor.u32 %v5934, %v5937
      %v5939 = vsel %vm1387, %v5929, %v5938
      %v5941 = vshrl.u32 %v5904, 16
      %v5943 = vrot.slane %v5941, 3
      %v5944 = vshll.u32 %v5904, 16
      %v5946 = vrot.slane %v5944, 4
      %v5947 = vor.u32 %v5943, %v5946
      %v5948 = vsel %vm1387, %v5938, %v5947
      %5953 = vst.msk [vmem:[#allocation4 + $0x30] sm:$0xff] %vm390, %v5921
      %5954 = vst.msk [vmem:[#allocation4 + $0x128] sm:$0xff] %vm390, %v5930
      %5955 = vst.msk [vmem:[#allocation4 + $0x220] sm:$0xff] %vm390, %v5939
      %5956 = vst.msk [vmem:[#allocation4 + $0x318] sm:$0xff] %vm390, %v5948
      %v5957 = vld [vmem:[#allocation3] sm:$0xf0]
      %v5958 = vld [vmem:[#allocation3 + $0x8] sm:$0xff]
      %v5959 = vld [vmem:[#allocation3 + $0x10] sm:$0xff]
      %v5960 = vld [vmem:[#allocation3 + $0x18] sm:$0xff]
      %v5961 = vld [vmem:[#allocation3 + $0x20] sm:$0xf]
      %v5967 = vrot.slane %v5957, 4
      %v5968 = vrot.slane %v5958, 4
      %v5969 = vsel %vm1450, %v5967, %v5968
      %v5970 = vrot.slane %v5959, 4
      %v5971 = vsel %vm1450, %v5968, %v5970
      %v5972 = vrot.slane %v5960, 4
      %v5973 = vsel %vm1450, %v5970, %v5972
      %v5974 = vrot.slane %v5961, 4
      %v5975 = vsel %vm1450, %v5972, %v5974
      %5980 = vst.msk [vmem:[#allocation4 + $0x38] sm:$0xff] %vm390, %v5969
      %5981 = vst.msk [vmem:[#allocation4 + $0x130] sm:$0xff] %vm390, %v5971
      %5982 = vst.msk [vmem:[#allocation4 + $0x228] sm:$0xff] %vm390, %v5973
      %5983 = vst.msk [vmem:[#allocation4 + $0x320] sm:$0xff] %vm390, %v5975
      %v5984 = vld [vmem:[#allocation3] sm:$0xf0]
      %v5985 = vld [vmem:[#allocation3 + $0x8] sm:$0xff]
      %v5986 = vld [vmem:[#allocation3 + $0x10] sm:$0xff]
      %v5987 = vld [vmem:[#allocation3 + $0x18] sm:$0xff]
      %v5988 = vld [vmem:[#allocation3 + $0x20] sm:$0x1f]
      %v5990 = vshrl.u32 %v5984, 16
      %v5992 = vrot.slane %v5990, 4
      %v5993 = vshll.u32 %v5984, 16
      %v5995 = vrot.slane %v5993, 5
      %v5996 = vor.u32 %v5992, %v5995
      %v5998 = vshrl.u32 %v5985, 16
      %v6000 = vrot.slane %v5998, 4
      %v6001 = vshll.u32 %v5985, 16
      %v6003 = vrot.slane %v6001, 5
      %v6004 = vor.u32 %v6000, %v6003
      %v6005 = vsel %vm1473, %v5996, %v6004
      %v6007 = vshrl.u32 %v5986, 16
      %v6009 = vrot.slane %v6007, 4
      %v6010 = vshll.u32 %v5986, 16
      %v6012 = vrot.slane %v6010, 5
      %v6013 = vor.u32 %v6009, %v6012
      %v6014 = vsel %vm1473, %v6004, %v6013
      %v6016 = vshrl.u32 %v5987, 16
      %v6018 = vrot.slane %v6016, 4
      %v6019 = vshll.u32 %v5987, 16
      %v6021 = vrot.slane %v6019, 5
      %v6022 = vor.u32 %v6018, %v6021
      %v6023 = vsel %vm1473, %v6013, %v6022
      %v6025 = vshrl.u32 %v5988, 16
      %v6027 = vrot.slane %v6025, 4
      %v6028 = vshll.u32 %v5988, 16
      %v6030 = vrot.slane %v6028, 5
      %v6031 = vor.u32 %v6027, %v6030
      %v6032 = vsel %vm1473, %v6022, %v6031
      %6037 = vst.msk [vmem:[#allocation4 + $0x40] sm:$0xff] %vm390, %v6005
      %6038 = vst.msk [vmem:[#allocation4 + $0x138] sm:$0xff] %vm390, %v6014
      %6039 = vst.msk [vmem:[#allocation4 + $0x230] sm:$0xff] %vm390, %v6023
      %6040 = vst.msk [vmem:[#allocation4 + $0x328] sm:$0xff] %vm390, %v6032
      %v6041 = vld [vmem:[#allocation3] sm:$0xe0]
      %v6042 = vld [vmem:[#allocation3 + $0x8] sm:$0xff]
      %v6043 = vld [vmem:[#allocation3 + $0x10] sm:$0xff]
      %v6044 = vld [vmem:[#allocation3 + $0x18] sm:$0xff]
      %v6045 = vld [vmem:[#allocation3 + $0x20] sm:$0x1f]
      %v6051 = vrot.slane %v6041, 5
      %v6052 = vrot.slane %v6042, 5
      %v6053 = vsel %vm1536, %v6051, %v6052
      %v6054 = vrot.slane %v6043, 5
      %v6055 = vsel %vm1536, %v6052, %v6054
      %v6056 = vrot.slane %v6044, 5
      %v6057 = vsel %vm1536, %v6054, %v6056
      %v6058 = vrot.slane %v6045, 5
      %v6059 = vsel %vm1536, %v6056, %v6058
      %6064 = vst.msk [vmem:[#allocation4 + $0x48] sm:$0xff] %vm390, %v6053
      %6065 = vst.msk [vmem:[#allocation4 + $0x140] sm:$0xff] %vm390, %v6055
      %6066 = vst.msk [vmem:[#allocation4 + $0x238] sm:$0xff] %vm390, %v6057
      %6067 = vst.msk [vmem:[#allocation4 + $0x330] sm:$0xff] %vm390, %v6059
      %v6068 = vld [vmem:[#allocation3] sm:$0xe0]
      %v6069 = vld [vmem:[#allocation3 + $0x8] sm:$0xff]
      %v6070 = vld [vmem:[#allocation3 + $0x10] sm:$0xff]
      %v6071 = vld [vmem:[#allocation3 + $0x18] sm:$0xff]
      %v6072 = vld [vmem:[#allocation3 + $0x20] sm:$0x3f]
      %v6074 = vshrl.u32 %v6068, 16
      %v6076 = vrot.slane %v6074, 5
      %v6077 = vshll.u32 %v6068, 16
      %v6079 = vrot.slane %v6077, 6
      %v6080 = vor.u32 %v6076, %v6079
      %v6082 = vshrl.u32 %v6069, 16
      %v6084 = vrot.slane %v6082, 5
      %v6085 = vshll.u32 %v6069, 16
      %v6087 = vrot.slane %v6085, 6
      %v6088 = vor.u32 %v6084, %v6087
      %v6089 = vsel %vm1559, %v6080, %v6088
      %v6091 = vshrl.u32 %v6070, 16
      %v6093 = vrot.slane %v6091, 5
      %v6094 = vshll.u32 %v6070, 16
      %v6096 = vrot.slane %v6094, 6
      %v6097 = vor.u32 %v6093, %v6096
      %v6098 = vsel %vm1559, %v6088, %v6097
      %v6100 = vshrl.u32 %v6071, 16
      %v6102 = vrot.slane %v6100, 5
      %v6103 = vshll.u32 %v6071, 16
      %v6105 = vrot.slane %v6103, 6
      %v6106 = vor.u32 %v6102, %v6105
      %v6107 = vsel %vm1559, %v6097, %v6106
      %v6109 = vshrl.u32 %v6072, 16
      %v6111 = vrot.slane %v6109, 5
      %v6112 = vshll.u32 %v6072, 16
      %v6114 = vrot.slane %v6112, 6
      %v6115 = vor.u32 %v6111, %v6114
      %v6116 = vsel %vm1559, %v6106, %v6115
      %6121 = vst.msk [vmem:[#allocation4 + $0x50] sm:$0xff] %vm390, %v6089
      %6122 = vst.msk [vmem:[#allocation4 + $0x148] sm:$0xff] %vm390, %v6098
      %6123 = vst.msk [vmem:[#allocation4 + $0x240] sm:$0xff] %vm390, %v6107
      %6124 = vst.msk [vmem:[#allocation4 + $0x338] sm:$0xff] %vm390, %v6116
      %v6125 = vld [vmem:[#allocation3] sm:$0xc0]
      %v6126 = vld [vmem:[#allocation3 + $0x8] sm:$0xff]
      %v6127 = vld [vmem:[#allocation3 + $0x10] sm:$0xff]
      %v6128 = vld [vmem:[#allocation3 + $0x18] sm:$0xff]
      %v6129 = vld [vmem:[#allocation3 + $0x20] sm:$0x3f]
      %v6135 = vrot.slane %v6125, 6
      %v6136 = vrot.slane %v6126, 6
      %v6137 = vsel %vm1622, %v6135, %v6136
      %v6138 = vrot.slane %v6127, 6
      %v6139 = vsel %vm1622, %v6136, %v6138
      %v6140 = vrot.slane %v6128, 6
      %v6141 = vsel %vm1622, %v6138, %v6140
      %v6142 = vrot.slane %v6129, 6
      %v6143 = vsel %vm1622, %v6140, %v6142
      %6148 = vst.msk [vmem:[#allocation4 + $0x58] sm:$0xff] %vm390, %v6137
      %6149 = vst.msk [vmem:[#allocation4 + $0x150] sm:$0xff] %vm390, %v6139
      %6150 = vst.msk [vmem:[#allocation4 + $0x248] sm:$0xff] %vm390, %v6141
      %6151 = vst.msk [vmem:[#allocation4 + $0x340] sm:$0xff] %vm390, %v6143
      %v6152 = vld [vmem:[#allocation3] sm:$0xc0]
      %v6153 = vld [vmem:[#allocation3 + $0x8] sm:$0xff]
      %v6154 = vld [vmem:[#allocation3 + $0x10] sm:$0xff]
      %v6155 = vld [vmem:[#allocation3 + $0x18] sm:$0xff]
      %v6156 = vld [vmem:[#allocation3 + $0x20] sm:$0x7f]
      %v6158 = vshrl.u32 %v6152, 16
      %v6160 = vrot.slane %v6158, 6
      %v6161 = vshll.u32 %v6152, 16
      %v6163 = vrot.slane %v6161, 7
      %v6164 = vor.u32 %v6160, %v6163
      %v6166 = vshrl.u32 %v6153, 16
      %v6168 = vrot.slane %v6166, 6
      %v6169 = vshll.u32 %v6153, 16
      %v6171 = vrot.slane %v6169, 7
      %v6172 = vor.u32 %v6168, %v6171
      %v6173 = vsel %vm1645, %v6164, %v6172
      %v6175 = vshrl.u32 %v6154, 16
      %v6177 = vrot.slane %v6175, 6
      %v6178 = vshll.u32 %v6154, 16
      %v6180 = vrot.slane %v6178, 7
      %v6181 = vor.u32 %v6177, %v6180
      %v6182 = vsel %vm1645, %v6172, %v6181
      %v6184 = vshrl.u32 %v6155, 16
      %v6186 = vrot.slane %v6184, 6
      %v6187 = vshll.u32 %v6155, 16
      %v6189 = vrot.slane %v6187, 7
      %v6190 = vor.u32 %v6186, %v6189
      %v6191 = vsel %vm1645, %v6181, %v6190
      %v6193 = vshrl.u32 %v6156, 16
      %v6195 = vrot.slane %v6193, 6
      %v6196 = vshll.u32 %v6156, 16
      %v6198 = vrot.slane %v6196, 7
      %v6199 = vor.u32 %v6195, %v6198
      %v6200 = vsel %vm1645, %v6190, %v6199
      %6205 = vst.msk [vmem:[#allocation4 + $0x60] sm:$0xff] %vm390, %v6173
      %6206 = vst.msk [vmem:[#allocation4 + $0x158] sm:$0xff] %vm390, %v6182
      %6207 = vst.msk [vmem:[#allocation4 + $0x250] sm:$0xff] %vm390, %v6191
      %6208 = vst.msk [vmem:[#allocation4 + $0x348] sm:$0xff] %vm390, %v6200
      %v6209 = vld [vmem:[#allocation3] sm:$0x80]
      %v6210 = vld [vmem:[#allocation3 + $0x8] sm:$0xff]
      %v6211 = vld [vmem:[#allocation3 + $0x10] sm:$0xff]
      %v6212 = vld [vmem:[#allocation3 + $0x18] sm:$0xff]
      %v6213 = vld [vmem:[#allocation3 + $0x20] sm:$0x7f]
      %v6219 = vrot.slane %v6209, 7
      %v6220 = vrot.slane %v6210, 7
      %v6221 = vsel %vm1708, %v6219, %v6220
      %v6222 = vrot.slane %v6211, 7
      %v6223 = vsel %vm1708, %v6220, %v6222
      %v6224 = vrot.slane %v6212, 7
      %v6225 = vsel %vm1708, %v6222, %v6224
      %v6226 = vrot.slane %v6213, 7
      %v6227 = vsel %vm1708, %v6224, %v6226
      %6232 = vst.msk [vmem:[#allocation4 + $0x68] sm:$0xff] %vm390, %v6221
      %6233 = vst.msk [vmem:[#allocation4 + $0x160] sm:$0xff] %vm390, %v6223
      %6234 = vst.msk [vmem:[#allocation4 + $0x258] sm:$0xff] %vm390, %v6225
      %6235 = vst.msk [vmem:[#allocation4 + $0x350] sm:$0xff] %vm390, %v6227
      %v6236 = vld [vmem:[#allocation3] sm:$0x80]
      %v6237 = vld [vmem:[#allocation3 + $0x8] sm:$0xff]
      %v6238 = vld [vmem:[#allocation3 + $0x10] sm:$0xff]
      %v6239 = vld [vmem:[#allocation3 + $0x18] sm:$0xff]
      %v6240 = vld [vmem:[#allocation3 + $0x20] sm:$0xff]
      %v6242 = vshrl.u32 %v6236, 16
      %v6244 = vrot.slane %v6242, 7
      %v6246 = vshrl.u32 %v6237, 16
      %v6248 = vrot.slane %v6246, 7
      %v6249 = vshll.u32 %v6237, 16
      %v6251 = vor.u32 %v6248, %v6249
      %v6252 = vsel %vm1731, %v6244, %v6251
      %v6254 = vshrl.u32 %v6238, 16
      %v6256 = vrot.slane %v6254, 7
      %v6257 = vshll.u32 %v6238, 16
      %v6259 = vor.u32 %v6256, %v6257
      %v6260 = vsel %vm1731, %v6248, %v6259
      %v6262 = vshrl.u32 %v6239, 16
      %v6264 = vrot.slane %v6262, 7
      %v6265 = vshll.u32 %v6239, 16
      %v6267 = vor.u32 %v6264, %v6265
      %v6268 = vsel %vm1731, %v6256, %v6267
      %v6270 = vshrl.u32 %v6240, 16
      %v6272 = vrot.slane %v6270, 7
      %v6273 = vshll.u32 %v6240, 16
      %v6275 = vor.u32 %v6272, %v6273
      %v6276 = vsel %vm1731, %v6264, %v6275
      %6281 = vst.msk [vmem:[#allocation4 + $0x70] sm:$0xff] %vm390, %v6252
      %6282 = vst.msk [vmem:[#allocation4 + $0x168] sm:$0xff] %vm390, %v6260
      %6283 = vst.msk [vmem:[#allocation4 + $0x260] sm:$0xff] %vm390, %v6268
      %6284 = vst.msk [vmem:[#allocation4 + $0x358] sm:$0xff] %vm390, %v6276
      %v6285 = vld [vmem:[#allocation3 + $0x8] sm:$0xff]
      %v6286 = vld [vmem:[#allocation3 + $0x10] sm:$0xff]
      %v6287 = vld [vmem:[#allocation3 + $0x18] sm:$0xff]
      %v6288 = vld [vmem:[#allocation3 + $0x20] sm:$0xff]
      %6289 = vst.msk [vmem:[#allocation4 + $0x78] sm:$0xff] %vm390, %v6285
      %6290 = vst.msk [vmem:[#allocation4 + $0x170] sm:$0xff] %vm390, %v6286
      %6291 = vst.msk [vmem:[#allocation4 + $0x268] sm:$0xff] %vm390, %v6287
      %6292 = vst.msk [vmem:[#allocation4 + $0x360] sm:$0xff] %vm390, %v6288
      %v6293 = vld [vmem:[#allocation3 + $0x8] sm:$0xff]
      %v6294 = vld [vmem:[#allocation3 + $0x10] sm:$0xff]
      %v6295 = vld [vmem:[#allocation3 + $0x18] sm:$0xff]
      %v6296 = vld [vmem:[#allocation3 + $0x20] sm:$0xff]
      %v6297 = vld [vmem:[#allocation3 + $0x28] sm:$0x1]
      %v6299 = vshrl.u32 %v6293, 16
      %v6301 = vshll.u32 %v6293, 16
      %v6303 = vrot.slane %v6301, 1
      %v6304 = vor.u32 %v6299, %v6303
      %v6306 = vshll.u32 %v6294, 16
      %v6308 = vrot.slane %v6306, 1
      %v6309 = vsel %vm1137, %v6304, %v6308
      %v6310 = vshrl.u32 %v6294, 16
      %v6312 = vor.u32 %v6310, %v6308
      %v6314 = vshll.u32 %v6295, 16
      %v6316 = vrot.slane %v6314, 1
      %v6317 = vsel %vm1137, %v6312, %v6316
      %v6318 = vshrl.u32 %v6295, 16
      %v6320 = vor.u32 %v6318, %v6316
      %v6322 = vshll.u32 %v6296, 16
      %v6324 = vrot.slane %v6322, 1
      %v6325 = vsel %vm1137, %v6320, %v6324
      %v6326 = vshrl.u32 %v6296, 16
      %v6328 = vor.u32 %v6326, %v6324
      %v6330 = vshll.u32 %v6297, 16
      %v6332 = vrot.slane %v6330, 1
      %v6333 = vsel %vm1137, %v6328, %v6332
      %6338 = vst.msk [vmem:[#allocation4 + $0x80] sm:$0xff] %vm390, %v6309
      %6339 = vst.msk [vmem:[#allocation4 + $0x178] sm:$0xff] %vm390, %v6317
      %6340 = vst.msk [vmem:[#allocation4 + $0x270] sm:$0xff] %vm390, %v6325
      %6341 = vst.msk [vmem:[#allocation4 + $0x368] sm:$0xff] %vm390, %v6333
      %v6342 = vld [vmem:[#allocation3 + $0x8] sm:$0xfe]
      %v6343 = vld [vmem:[#allocation3 + $0x10] sm:$0xff]
      %v6344 = vld [vmem:[#allocation3 + $0x18] sm:$0xff]
      %v6345 = vld [vmem:[#allocation3 + $0x20] sm:$0xff]
      %v6346 = vld [vmem:[#allocation3 + $0x28] sm:$0x1]
      %v6352 = vrot.slane %v6342, 1
      %v6353 = vrot.slane %v6343, 1
      %v6354 = vsel %vm1192, %v6352, %v6353
      %v6355 = vrot.slane %v6344, 1
      %v6356 = vsel %vm1192, %v6353, %v6355
      %v6357 = vrot.slane %v6345, 1
      %v6358 = vsel %vm1192, %v6355, %v6357
      %v6359 = vrot.slane %v6346, 1
      %v6360 = vsel %vm1192, %v6357, %v6359
      %6365 = vst.msk [vmem:[#allocation4 + $0x88] sm:$0xff] %vm390, %v6354
      %6366 = vst.msk [vmem:[#allocation4 + $0x180] sm:$0xff] %vm390, %v6356
      %6367 = vst.msk [vmem:[#allocation4 + $0x278] sm:$0xff] %vm390, %v6358
      %6368 = vst.msk [vmem:[#allocation4 + $0x370] sm:$0xff] %vm390, %v6360
      %v6369 = vld [vmem:[#allocation3 + $0x8] sm:$0xfe]
      %v6370 = vld [vmem:[#allocation3 + $0x10] sm:$0xff]
      %v6371 = vld [vmem:[#allocation3 + $0x18] sm:$0xff]
      %v6372 = vld [vmem:[#allocation3 + $0x20] sm:$0xff]
      %v6373 = vld [vmem:[#allocation3 + $0x28] sm:$0x3]
      %v6375 = vshrl.u32 %v6369, 16
      %v6377 = vrot.slane %v6375, 1
      %v6378 = vshll.u32 %v6369, 16
      %v6380 = vrot.slane %v6378, 2
      %v6381 = vor.u32 %v6377, %v6380
      %v6383 = vshrl.u32 %v6370, 16
      %v6385 = vrot.slane %v6383, 1
      %v6386 = vshll.u32 %v6370, 16
      %v6388 = vrot.slane %v6386, 2
      %v6389 = vor.u32 %v6385, %v6388
      %v6390 = vsel %vm1215, %v6381, %v6389
      %v6392 = vshrl.u32 %v6371, 16
      %v6394 = vrot.slane %v6392, 1
      %v6395 = vshll.u32 %v6371, 16
      %v6397 = vrot.slane %v6395, 2
      %v6398 = vor.u32 %v6394, %v6397
      %v6399 = vsel %vm1215, %v6389, %v6398
      %v6401 = vshrl.u32 %v6372, 16
      %v6403 = vrot.slane %v6401, 1
      %v6404 = vshll.u32 %v6372, 16
      %v6406 = vrot.slane %v6404, 2
      %v6407 = vor.u32 %v6403, %v6406
      %v6408 = vsel %vm1215, %v6398, %v6407
      %v6410 = vshrl.u32 %v6373, 16
      %v6412 = vrot.slane %v6410, 1
      %v6413 = vshll.u32 %v6373, 16
      %v6415 = vrot.slane %v6413, 2
      %v6416 = vor.u32 %v6412, %v6415
      %v6417 = vsel %vm1215, %v6407, %v6416
      %6422 = vst.msk [vmem:[#allocation4 + $0x90] sm:$0xff] %vm390, %v6390
      %6423 = vst.msk [vmem:[#allocation4 + $0x188] sm:$0xff] %vm390, %v6399
      %6424 = vst.msk [vmem:[#allocation4 + $0x280] sm:$0xff] %vm390, %v6408
      %6425 = vst.msk [vmem:[#allocation4 + $0x378] sm:$0xff] %vm390, %v6417
      %v6426 = vld [vmem:[#allocation3 + $0x8] sm:$0xfc]
      %v6427 = vld [vmem:[#allocation3 + $0x10] sm:$0xff]
      %v6428 = vld [vmem:[#allocation3 + $0x18] sm:$0xff]
      %v6429 = vld [vmem:[#allocation3 + $0x20] sm:$0xff]
      %v6430 = vld [vmem:[#allocation3 + $0x28] sm:$0x3]
      %v6436 = vrot.slane %v6426, 2
      %v6437 = vrot.slane %v6427, 2
      %v6438 = vsel %vm1278, %v6436, %v6437
      %v6439 = vrot.slane %v6428, 2
      %v6440 = vsel %vm1278, %v6437, %v6439
      %v6441 = vrot.slane %v6429, 2
      %v6442 = vsel %vm1278, %v6439, %v6441
      %v6443 = vrot.slane %v6430, 2
      %v6444 = vsel %vm1278, %v6441, %v6443
      %6449 = vst.msk [vmem:[#allocation4 + $0x98] sm:$0xff] %vm390, %v6438
      %6450 = vst.msk [vmem:[#allocation4 + $0x190] sm:$0xff] %vm390, %v6440
      %6451 = vst.msk [vmem:[#allocation4 + $0x288] sm:$0xff] %vm390, %v6442
      %6452 = vst.msk [vmem:[#allocation4 + $0x380] sm:$0xff] %vm390, %v6444
      %v6453 = vld [vmem:[#allocation3 + $0x8] sm:$0xfc]
      %v6454 = vld [vmem:[#allocation3 + $0x10] sm:$0xff]
      %v6455 = vld [vmem:[#allocation3 + $0x18] sm:$0xff]
      %v6456 = vld [vmem:[#allocation3 + $0x20] sm:$0xff]
      %v6457 = vld [vmem:[#allocation3 + $0x28] sm:$0x7]
      %v6459 = vshrl.u32 %v6453, 16
      %v6461 = vrot.slane %v6459, 2
      %v6462 = vshll.u32 %v6453, 16
      %v6464 = vrot.slane %v6462, 3
      %v6465 = vor.u32 %v6461, %v6464
      %v6467 = vshrl.u32 %v6454, 16
      %v6469 = vrot.slane %v6467, 2
      %v6470 = vshll.u32 %v6454, 16
      %v6472 = vrot.slane %v6470, 3
      %v6473 = vor.u32 %v6469, %v6472
      %v6474 = vsel %vm1301, %v6465, %v6473
      %v6476 = vshrl.u32 %v6455, 16
      %v6478 = vrot.slane %v6476, 2
      %v6479 = vshll.u32 %v6455, 16
      %v6481 = vrot.slane %v6479, 3
      %v6482 = vor.u32 %v6478, %v6481
      %v6483 = vsel %vm1301, %v6473, %v6482
      %v6485 = vshrl.u32 %v6456, 16
      %v6487 = vrot.slane %v6485, 2
      %v6488 = vshll.u32 %v6456, 16
      %v6490 = vrot.slane %v6488, 3
      %v6491 = vor.u32 %v6487, %v6490
      %v6492 = vsel %vm1301, %v6482, %v6491
      %v6494 = vshrl.u32 %v6457, 16
      %v6496 = vrot.slane %v6494, 2
      %v6497 = vshll.u32 %v6457, 16
      %v6499 = vrot.slane %v6497, 3
      %v6500 = vor.u32 %v6496, %v6499
      %v6501 = vsel %vm1301, %v6491, %v6500
      %6506 = vst.msk [vmem:[#allocation4 + $0xa0] sm:$0xff] %vm390, %v6474
      %6507 = vst.msk [vmem:[#allocation4 + $0x198] sm:$0xff] %vm390, %v6483
      %6508 = vst.msk [vmem:[#allocation4 + $0x290] sm:$0xff] %vm390, %v6492
      %6509 = vst.msk [vmem:[#allocation4 + $0x388] sm:$0xff] %vm390, %v6501
      %v6510 = vld [vmem:[#allocation3 + $0x8] sm:$0xf8]
      %v6511 = vld [vmem:[#allocation3 + $0x10] sm:$0xff]
      %v6512 = vld [vmem:[#allocation3 + $0x18] sm:$0xff]
      %v6513 = vld [vmem:[#allocation3 + $0x20] sm:$0xff]
      %v6514 = vld [vmem:[#allocation3 + $0x28] sm:$0x7]
      %v6520 = vrot.slane %v6510, 3
      %v6521 = vrot.slane %v6511, 3
      %v6522 = vsel %vm1364, %v6520, %v6521
      %v6523 = vrot.slane %v6512, 3
      %v6524 = vsel %vm1364, %v6521, %v6523
      %v6525 = vrot.slane %v6513, 3
      %v6526 = vsel %vm1364, %v6523, %v6525
      %v6527 = vrot.slane %v6514, 3
      %v6528 = vsel %vm1364, %v6525, %v6527
      %6533 = vst.msk [vmem:[#allocation4 + $0xa8] sm:$0xff] %vm390, %v6522
      %6534 = vst.msk [vmem:[#allocation4 + $0x1a0] sm:$0xff] %vm390, %v6524
      %6535 = vst.msk [vmem:[#allocation4 + $0x298] sm:$0xff] %vm390, %v6526
      %6536 = vst.msk [vmem:[#allocation4 + $0x390] sm:$0xff] %vm390, %v6528
      %v6537 = vld [vmem:[#allocation3 + $0x8] sm:$0xf8]
      %v6538 = vld [vmem:[#allocation3 + $0x10] sm:$0xff]
      %v6539 = vld [vmem:[#allocation3 + $0x18] sm:$0xff]
      %v6540 = vld [vmem:[#allocation3 + $0x20] sm:$0xff]
      %v6541 = vld [vmem:[#allocation3 + $0x28] sm:$0xf]
      %v6543 = vshrl.u32 %v6537, 16
      %v6545 = vrot.slane %v6543, 3
      %v6546 = vshll.u32 %v6537, 16
      %v6548 = vrot.slane %v6546, 4
      %v6549 = vor.u32 %v6545, %v6548
      %v6551 = vshrl.u32 %v6538, 16
      %v6553 = vrot.slane %v6551, 3
      %v6554 = vshll.u32 %v6538, 16
      %v6556 = vrot.slane %v6554, 4
      %v6557 = vor.u32 %v6553, %v6556
      %v6558 = vsel %vm1387, %v6549, %v6557
      %v6560 = vshrl.u32 %v6539, 16
      %v6562 = vrot.slane %v6560, 3
      %v6563 = vshll.u32 %v6539, 16
      %v6565 = vrot.slane %v6563, 4
      %v6566 = vor.u32 %v6562, %v6565
      %v6567 = vsel %vm1387, %v6557, %v6566
      %v6569 = vshrl.u32 %v6540, 16
      %v6571 = vrot.slane %v6569, 3
      %v6572 = vshll.u32 %v6540, 16
      %v6574 = vrot.slane %v6572, 4
      %v6575 = vor.u32 %v6571, %v6574
      %v6576 = vsel %vm1387, %v6566, %v6575
      %v6578 = vshrl.u32 %v6541, 16
      %v6580 = vrot.slane %v6578, 3
      %v6581 = vshll.u32 %v6541, 16
      %v6583 = vrot.slane %v6581, 4
      %v6584 = vor.u32 %v6580, %v6583
      %v6585 = vsel %vm1387, %v6575, %v6584
      %6590 = vst.msk [vmem:[#allocation4 + $0xb0] sm:$0xff] %vm390, %v6558
      %6591 = vst.msk [vmem:[#allocation4 + $0x1a8] sm:$0xff] %vm390, %v6567
      %6592 = vst.msk [vmem:[#allocation4 + $0x2a0] sm:$0xff] %vm390, %v6576
      %6593 = vst.msk [vmem:[#allocation4 + $0x398] sm:$0xff] %vm390, %v6585
      %v6594 = vld [vmem:[#allocation3 + $0x8] sm:$0xf0]
      %v6595 = vld [vmem:[#allocation3 + $0x10] sm:$0xff]
      %v6596 = vld [vmem:[#allocation3 + $0x18] sm:$0xff]
      %v6597 = vld [vmem:[#allocation3 + $0x20] sm:$0xff]
      %v6598 = vld [vmem:[#allocation3 + $0x28] sm:$0xf]
      %v6604 = vrot.slane %v6594, 4
      %v6605 = vrot.slane %v6595, 4
      %v6606 = vsel %vm1450, %v6604, %v6605
      %v6607 = vrot.slane %v6596, 4
      %v6608 = vsel %vm1450, %v6605, %v6607
      %v6609 = vrot.slane %v6597, 4
      %v6610 = vsel %vm1450, %v6607, %v6609
      %v6611 = vrot.slane %v6598, 4
      %v6612 = vsel %vm1450, %v6609, %v6611
      %6617 = vst.msk [vmem:[#allocation4 + $0xb8] sm:$0xff] %vm390, %v6606
      %6618 = vst.msk [vmem:[#allocation4 + $0x1b0] sm:$0xff] %vm390, %v6608
      %6619 = vst.msk [vmem:[#allocation4 + $0x2a8] sm:$0xff] %vm390, %v6610
      %6620 = vst.msk [vmem:[#allocation4 + $0x3a0] sm:$0xff] %vm390, %v6612
      %v6621 = vld [vmem:[#allocation3 + $0x8] sm:$0xf0]
      %v6622 = vld [vmem:[#allocation3 + $0x10] sm:$0xff]
      %v6623 = vld [vmem:[#allocation3 + $0x18] sm:$0xff]
      %v6624 = vld [vmem:[#allocation3 + $0x20] sm:$0xff]
      %v6625 = vld [vmem:[#allocation3 + $0x28] sm:$0x1f]
      %v6627 = vshrl.u32 %v6621, 16
      %v6629 = vrot.slane %v6627, 4
      %v6630 = vshll.u32 %v6621, 16
      %v6632 = vrot.slane %v6630, 5
      %v6633 = vor.u32 %v6629, %v6632
      %v6635 = vshrl.u32 %v6622, 16
      %v6637 = vrot.slane %v6635, 4
      %v6638 = vshll.u32 %v6622, 16
      %v6640 = vrot.slane %v6638, 5
      %v6641 = vor.u32 %v6637, %v6640
      %v6642 = vsel %vm1473, %v6633, %v6641
      %v6644 = vshrl.u32 %v6623, 16
      %v6646 = vrot.slane %v6644, 4
      %v6647 = vshll.u32 %v6623, 16
      %v6649 = vrot.slane %v6647, 5
      %v6650 = vor.u32 %v6646, %v6649
      %v6651 = vsel %vm1473, %v6641, %v6650
      %v6653 = vshrl.u32 %v6624, 16
      %v6655 = vrot.slane %v6653, 4
      %v6656 = vshll.u32 %v6624, 16
      %v6658 = vrot.slane %v6656, 5
      %v6659 = vor.u32 %v6655, %v6658
      %v6660 = vsel %vm1473, %v6650, %v6659
      %v6662 = vshrl.u32 %v6625, 16
      %v6664 = vrot.slane %v6662, 4
      %v6665 = vshll.u32 %v6625, 16
      %v6667 = vrot.slane %v6665, 5
      %v6668 = vor.u32 %v6664, %v6667
      %v6669 = vsel %vm1473, %v6659, %v6668
      %6674 = vst.msk [vmem:[#allocation4 + $0xc0] sm:$0xff] %vm390, %v6642
      %6675 = vst.msk [vmem:[#allocation4 + $0x1b8] sm:$0xff] %vm390, %v6651
      %6676 = vst.msk [vmem:[#allocation4 + $0x2b0] sm:$0xff] %vm390, %v6660
      %6677 = vst.msk [vmem:[#allocation4 + $0x3a8] sm:$0xff] %vm390, %v6669
      %v6678 = vld [vmem:[#allocation3 + $0x8] sm:$0xe0]
      %v6679 = vld [vmem:[#allocation3 + $0x10] sm:$0xff]
      %v6680 = vld [vmem:[#allocation3 + $0x18] sm:$0xff]
      %v6681 = vld [vmem:[#allocation3 + $0x20] sm:$0xff]
      %v6682 = vld [vmem:[#allocation3 + $0x28] sm:$0x1f]
      %v6688 = vrot.slane %v6678, 5
      %v6689 = vrot.slane %v6679, 5
      %v6690 = vsel %vm1536, %v6688, %v6689
      %v6691 = vrot.slane %v6680, 5
      %v6692 = vsel %vm1536, %v6689, %v6691
      %v6693 = vrot.slane %v6681, 5
      %v6694 = vsel %vm1536, %v6691, %v6693
      %v6695 = vrot.slane %v6682, 5
      %v6696 = vsel %vm1536, %v6693, %v6695
      %6701 = vst.msk [vmem:[#allocation4 + $0xc8] sm:$0xff] %vm390, %v6690
      %6702 = vst.msk [vmem:[#allocation4 + $0x1c0] sm:$0xff] %vm390, %v6692
      %6703 = vst.msk [vmem:[#allocation4 + $0x2b8] sm:$0xff] %vm390, %v6694
      %6704 = vst.msk [vmem:[#allocation4 + $0x3b0] sm:$0xff] %vm390, %v6696
      %v6705 = vld [vmem:[#allocation3 + $0x8] sm:$0xe0]
      %v6706 = vld [vmem:[#allocation3 + $0x10] sm:$0xff]
      %v6707 = vld [vmem:[#allocation3 + $0x18] sm:$0xff]
      %v6708 = vld [vmem:[#allocation3 + $0x20] sm:$0xff]
      %v6709 = vld [vmem:[#allocation3 + $0x28] sm:$0x3f]
      %v6711 = vshrl.u32 %v6705, 16
      %v6713 = vrot.slane %v6711, 5
      %v6714 = vshll.u32 %v6705, 16
      %v6716 = vrot.slane %v6714, 6
      %v6717 = vor.u32 %v6713, %v6716
      %v6719 = vshrl.u32 %v6706, 16
      %v6721 = vrot.slane %v6719, 5
      %v6722 = vshll.u32 %v6706, 16
      %v6724 = vrot.slane %v6722, 6
      %v6725 = vor.u32 %v6721, %v6724
      %v6726 = vsel %vm1559, %v6717, %v6725
      %v6728 = vshrl.u32 %v6707, 16
      %v6730 = vrot.slane %v6728, 5
      %v6731 = vshll.u32 %v6707, 16
      %v6733 = vrot.slane %v6731, 6
      %v6734 = vor.u32 %v6730, %v6733
      %v6735 = vsel %vm1559, %v6725, %v6734
      %v6737 = vshrl.u32 %v6708, 16
      %v6739 = vrot.slane %v6737, 5
      %v6740 = vshll.u32 %v6708, 16
      %v6742 = vrot.slane %v6740, 6
      %v6743 = vor.u32 %v6739, %v6742
      %v6744 = vsel %vm1559, %v6734, %v6743
      %v6746 = vshrl.u32 %v6709, 16
      %v6748 = vrot.slane %v6746, 5
      %v6749 = vshll.u32 %v6709, 16
      %v6751 = vrot.slane %v6749, 6
      %v6752 = vor.u32 %v6748, %v6751
      %v6753 = vsel %vm1559, %v6743, %v6752
      %6758 = vst.msk [vmem:[#allocation4 + $0xd0] sm:$0xff] %vm390, %v6726
      %6759 = vst.msk [vmem:[#allocation4 + $0x1c8] sm:$0xff] %vm390, %v6735
      %6760 = vst.msk [vmem:[#allocation4 + $0x2c0] sm:$0xff] %vm390, %v6744
      %6761 = vst.msk [vmem:[#allocation4 + $0x3b8] sm:$0xff] %vm390, %v6753
      %v6762 = vld [vmem:[#allocation3 + $0x8] sm:$0xc0]
      %v6763 = vld [vmem:[#allocation3 + $0x10] sm:$0xff]
      %v6764 = vld [vmem:[#allocation3 + $0x18] sm:$0xff]
      %v6765 = vld [vmem:[#allocation3 + $0x20] sm:$0xff]
      %v6766 = vld [vmem:[#allocation3 + $0x28] sm:$0x3f]
      %v6772 = vrot.slane %v6762, 6
      %v6773 = vrot.slane %v6763, 6
      %v6774 = vsel %vm1622, %v6772, %v6773
      %v6775 = vrot.slane %v6764, 6
      %v6776 = vsel %vm1622, %v6773, %v6775
      %v6777 = vrot.slane %v6765, 6
      %v6778 = vsel %vm1622, %v6775, %v6777
      %v6779 = vrot.slane %v6766, 6
      %v6780 = vsel %vm1622, %v6777, %v6779
      %6785 = vst.msk [vmem:[#allocation4 + $0xd8] sm:$0xff] %vm390, %v6774
      %6786 = vst.msk [vmem:[#allocation4 + $0x1d0] sm:$0xff] %vm390, %v6776
      %6787 = vst.msk [vmem:[#allocation4 + $0x2c8] sm:$0xff] %vm390, %v6778
      %6788 = vst.msk [vmem:[#allocation4 + $0x3c0] sm:$0xff] %vm390, %v6780
      %v6789 = vld [vmem:[#allocation3 + $0x8] sm:$0xc0]
      %v6790 = vld [vmem:[#allocation3 + $0x10] sm:$0xff]
      %v6791 = vld [vmem:[#allocation3 + $0x18] sm:$0xff]
      %v6792 = vld [vmem:[#allocation3 + $0x20] sm:$0xff]
      %v6793 = vld [vmem:[#allocation3 + $0x28] sm:$0x7f]
      %v6795 = vshrl.u32 %v6789, 16
      %v6797 = vrot.slane %v6795, 6
      %v6798 = vshll.u32 %v6789, 16
      %v6800 = vrot.slane %v6798, 7
      %v6801 = vor.u32 %v6797, %v6800
      %v6803 = vshrl.u32 %v6790, 16
      %v6805 = vrot.slane %v6803, 6
      %v6806 = vshll.u32 %v6790, 16
      %v6808 = vrot.slane %v6806, 7
      %v6809 = vor.u32 %v6805, %v6808
      %v6810 = vsel %vm1645, %v6801, %v6809
      %v6812 = vshrl.u32 %v6791, 16
      %v6814 = vrot.slane %v6812, 6
      %v6815 = vshll.u32 %v6791, 16
      %v6817 = vrot.slane %v6815, 7
      %v6818 = vor.u32 %v6814, %v6817
      %v6819 = vsel %vm1645, %v6809, %v6818
      %v6821 = vshrl.u32 %v6792, 16
      %v6823 = vrot.slane %v6821, 6
      %v6824 = vshll.u32 %v6792, 16
      %v6826 = vrot.slane %v6824, 7
      %v6827 = vor.u32 %v6823, %v6826
      %v6828 = vsel %vm1645, %v6818, %v6827
      %v6830 = vshrl.u32 %v6793, 16
      %v6832 = vrot.slane %v6830, 6
      %v6833 = vshll.u32 %v6793, 16
      %v6835 = vrot.slane %v6833, 7
      %v6836 = vor.u32 %v6832, %v6835
      %v6837 = vsel %vm1645, %v6827, %v6836
      %6842 = vst.msk [vmem:[#allocation4 + $0xe0] sm:$0xff] %vm390, %v6810
      %6843 = vst.msk [vmem:[#allocation4 + $0x1d8] sm:$0xff] %vm390, %v6819
      %6844 = vst.msk [vmem:[#allocation4 + $0x2d0] sm:$0xff] %vm390, %v6828
      %6845 = vst.msk [vmem:[#allocation4 + $0x3c8] sm:$0xff] %vm390, %v6837
      %v6846 = vld [vmem:[#allocation3 + $0x8] sm:$0x80]
      %v6847 = vld [vmem:[#allocation3 + $0x10] sm:$0xff]
      %v6848 = vld [vmem:[#allocation3 + $0x18] sm:$0xff]
      %v6849 = vld [vmem:[#allocation3 + $0x20] sm:$0xff]
      %v6850 = vld [vmem:[#allocation3 + $0x28] sm:$0x7f]
      %v6856 = vrot.slane %v6846, 7
      %v6857 = vrot.slane %v6847, 7
      %v6858 = vsel %vm1708, %v6856, %v6857
      %v6859 = vrot.slane %v6848, 7
      %v6860 = vsel %vm1708, %v6857, %v6859
      %v6861 = vrot.slane %v6849, 7
      %v6862 = vsel %vm1708, %v6859, %v6861
      %v6863 = vrot.slane %v6850, 7
      %v6864 = vsel %vm1708, %v6861, %v6863
      %6869 = vst.msk [vmem:[#allocation4 + $0xe8] sm:$0xff] %vm390, %v6858
      %6870 = vst.msk [vmem:[#allocation4 + $0x1e0] sm:$0xff] %vm390, %v6860
      %6871 = vst.msk [vmem:[#allocation4 + $0x2d8] sm:$0xff] %vm390, %v6862
      %6872 = vst.msk [vmem:[#allocation4 + $0x3d0] sm:$0xff] %vm390, %v6864
      %v6873 = vld [vmem:[#allocation3 + $0x8] sm:$0x80]
      %v6874 = vld [vmem:[#allocation3 + $0x10] sm:$0xff]
      %v6875 = vld [vmem:[#allocation3 + $0x18] sm:$0xff]
      %v6876 = vld [vmem:[#allocation3 + $0x20] sm:$0xff]
      %v6877 = vld [vmem:[#allocation3 + $0x28] sm:$0xff]
      %v6879 = vshrl.u32 %v6873, 16
      %v6881 = vrot.slane %v6879, 7
      %v6883 = vshrl.u32 %v6874, 16
      %v6885 = vrot.slane %v6883, 7
      %v6886 = vshll.u32 %v6874, 16
      %v6888 = vor.u32 %v6885, %v6886
      %v6889 = vsel %vm1731, %v6881, %v6888
      %v6891 = vshrl.u32 %v6875, 16
      %v6893 = vrot.slane %v6891, 7
      %v6894 = vshll.u32 %v6875, 16
      %v6896 = vor.u32 %v6893, %v6894
      %v6897 = vsel %vm1731, %v6885, %v6896
      %v6899 = vshrl.u32 %v6876, 16
      %v6901 = vrot.slane %v6899, 7
      %v6902 = vshll.u32 %v6876, 16
      %v6904 = vor.u32 %v6901, %v6902
      %v6905 = vsel %vm1731, %v6893, %v6904
      %v6907 = vshrl.u32 %v6877, 16
      %v6909 = vrot.slane %v6907, 7
      %v6910 = vshll.u32 %v6877, 16
      %v6912 = vor.u32 %v6909, %v6910
      %v6913 = vsel %vm1731, %v6901, %v6912
      %6918 = vst.msk [vmem:[#allocation4 + $0xf0] sm:$0xff] %vm390, %v6889
      %6919 = vst.msk [vmem:[#allocation4 + $0x1e8] sm:$0xff] %vm390, %v6897
      %6920 = vst.msk [vmem:[#allocation4 + $0x2e0] sm:$0xff] %vm390, %v6905
      %6921 = vst.msk [vmem:[#allocation4 + $0x3d8] sm:$0xff] %vm390, %v6913
      %v6922 = vld [vmem:[#allocation4] sm:$0xff]
      %v6923 = vld [vmem:[#allocation4 + $0x8] sm:$0xff]
      %v6924 = vld [vmem:[#allocation4 + $0x10] sm:$0xff]
      %v6925 = vld [vmem:[#allocation4 + $0x18] sm:$0xff]
      %v6926 = vld [vmem:[#allocation4 + $0x20] sm:$0xff]
      %v6927 = vld [vmem:[#allocation4 + $0x28] sm:$0xff]
      %v6928 = vld [vmem:[#allocation4 + $0x30] sm:$0xff]
      %v6929 = vld [vmem:[#allocation4 + $0x38] sm:$0xff]
      %v6930 = vld [vmem:[#allocation4 + $0x40] sm:$0xff]
      %v6931 = vld [vmem:[#allocation4 + $0x48] sm:$0xff]
      %v6932 = vld [vmem:[#allocation4 + $0x50] sm:$0xff]
      %v6933 = vld [vmem:[#allocation4 + $0x58] sm:$0xff]
      %v6934 = vld [vmem:[#allocation4 + $0x60] sm:$0xff]
      %v6935 = vld [vmem:[#allocation4 + $0x68] sm:$0xff]
      %v6936 = vld [vmem:[#allocation4 + $0x70] sm:$0xff]
      %v6937 = vld [vmem:[#allocation4 + $0x78] sm:$0xff]
      %v6938 = vld [vmem:[#allocation4 + $0x80] sm:$0xff]
      %v6939 = vld [vmem:[#allocation4 + $0x88] sm:$0xff]
      %v6940 = vld [vmem:[#allocation4 + $0x90] sm:$0xff]
      %v6941 = vld [vmem:[#allocation4 + $0x98] sm:$0xff]
      %v6942 = vld [vmem:[#allocation4 + $0xa0] sm:$0xff]
      %v6943 = vld [vmem:[#allocation4 + $0xa8] sm:$0xff]
      %v6944 = vld [vmem:[#allocation4 + $0xb0] sm:$0xff]
      %v6945 = vld [vmem:[#allocation4 + $0xb8] sm:$0xff]
      %v6946 = vld [vmem:[#allocation4 + $0xc0] sm:$0xff]
      %v6947 = vld [vmem:[#allocation4 + $0xc8] sm:$0xff]
      %v6948 = vld [vmem:[#allocation4 + $0xd0] sm:$0xff]
      %v6949 = vld [vmem:[#allocation4 + $0xd8] sm:$0xff]
      %v6950 = vld [vmem:[#allocation4 + $0xe0] sm:$0xff]
      %v6951 = vld [vmem:[#allocation4 + $0xe8] sm:$0xff]
      %v6952 = vld [vmem:[#allocation4 + $0xf0] sm:$0xff]
      %v6953 = vld [vmem:[#allocation4 + $0xf8] sm:$0xff]
      %v6954 = vld [vmem:[#allocation4 + $0x100] sm:$0xff]
      %v6955 = vld [vmem:[#allocation4 + $0x108] sm:$0xff]
      %v6956 = vld [vmem:[#allocation4 + $0x110] sm:$0xff]
      %v6957 = vld [vmem:[#allocation4 + $0x118] sm:$0xff]
      %v6958 = vld [vmem:[#allocation4 + $0x120] sm:$0xff]
      %v6959 = vld [vmem:[#allocation4 + $0x128] sm:$0xff]
      %v6960 = vld [vmem:[#allocation4 + $0x130] sm:$0xff]
      %v6961 = vld [vmem:[#allocation4 + $0x138] sm:$0xff]
      %v6962 = vld [vmem:[#allocation4 + $0x140] sm:$0xff]
      %v6963 = vld [vmem:[#allocation4 + $0x148] sm:$0xff]
      %v6964 = vld [vmem:[#allocation4 + $0x150] sm:$0xff]
      %v6965 = vld [vmem:[#allocation4 + $0x158] sm:$0xff]
      %v6966 = vld [vmem:[#allocation4 + $0x160] sm:$0xff]
      %v6967 = vld [vmem:[#allocation4 + $0x168] sm:$0xff]
      %v6968 = vld [vmem:[#allocation4 + $0x170] sm:$0xff]
      %v6969 = vld [vmem:[#allocation4 + $0x178] sm:$0xff]
      %v6970 = vld [vmem:[#allocation4 + $0x180] sm:$0xff]
      %v6971 = vld [vmem:[#allocation4 + $0x188] sm:$0xff]
      %v6972 = vld [vmem:[#allocation4 + $0x190] sm:$0xff]
      %v6973 = vld [vmem:[#allocation4 + $0x198] sm:$0xff]
      %v6974 = vld [vmem:[#allocation4 + $0x1a0] sm:$0xff]
      %v6975 = vld [vmem:[#allocation4 + $0x1a8] sm:$0xff]
      %v6976 = vld [vmem:[#allocation4 + $0x1b0] sm:$0xff]
      %v6977 = vld [vmem:[#allocation4 + $0x1b8] sm:$0xff]
      %v6978 = vld [vmem:[#allocation4 + $0x1c0] sm:$0xff]
      %v6979 = vld [vmem:[#allocation4 + $0x1c8] sm:$0xff]
      %v6980 = vld [vmem:[#allocation4 + $0x1d0] sm:$0xff]
      %v6981 = vld [vmem:[#allocation4 + $0x1d8] sm:$0xff]
      %v6982 = vld [vmem:[#allocation4 + $0x1e0] sm:$0xff]
      %v6983 = vld [vmem:[#allocation4 + $0x1e8] sm:$0xff]
      %v6984 = vld [vmem:[#allocation4 + $0x1f0] sm:$0xff]
      %v6985 = vld [vmem:[#allocation4 + $0x1f8] sm:$0xff]
      %v6986 = vld [vmem:[#allocation4 + $0x200] sm:$0xff]
      %v6987 = vld [vmem:[#allocation4 + $0x208] sm:$0xff]
      %v6988 = vld [vmem:[#allocation4 + $0x210] sm:$0xff]
      %v6989 = vld [vmem:[#allocation4 + $0x218] sm:$0xff]
      %v6990 = vld [vmem:[#allocation4 + $0x220] sm:$0xff]
      %v6991 = vld [vmem:[#allocation4 + $0x228] sm:$0xff]
      %v6992 = vld [vmem:[#allocation4 + $0x230] sm:$0xff]
      %v6993 = vld [vmem:[#allocation4 + $0x238] sm:$0xff]
      %v6994 = vld [vmem:[#allocation4 + $0x240] sm:$0xff]
      %v6995 = vld [vmem:[#allocation4 + $0x248] sm:$0xff]
      %v6996 = vld [vmem:[#allocation4 + $0x250] sm:$0xff]
      %v6997 = vld [vmem:[#allocation4 + $0x258] sm:$0xff]
      %v6998 = vld [vmem:[#allocation4 + $0x260] sm:$0xff]
      %v6999 = vld [vmem:[#allocation4 + $0x268] sm:$0xff]
      %v7000 = vld [vmem:[#allocation4 + $0x270] sm:$0xff]
      %v7001 = vld [vmem:[#allocation4 + $0x278] sm:$0xff]
      %v7002 = vld [vmem:[#allocation4 + $0x280] sm:$0xff]
      %v7003 = vld [vmem:[#allocation4 + $0x288] sm:$0xff]
      %v7004 = vld [vmem:[#allocation4 + $0x290] sm:$0xff]
      %v7005 = vld [vmem:[#allocation4 + $0x298] sm:$0xff]
      %v7006 = vld [vmem:[#allocation4 + $0x2a0] sm:$0xff]
      %v7007 = vld [vmem:[#allocation4 + $0x2a8] sm:$0xff]
      %v7008 = vld [vmem:[#allocation4 + $0x2b0] sm:$0xff]
      %v7009 = vld [vmem:[#allocation4 + $0x2b8] sm:$0xff]
      %v7010 = vld [vmem:[#allocation4 + $0x2c0] sm:$0xff]
      %v7011 = vld [vmem:[#allocation4 + $0x2c8] sm:$0xff]
      %v7012 = vld [vmem:[#allocation4 + $0x2d0] sm:$0xff]
      %v7013 = vld [vmem:[#allocation4 + $0x2d8] sm:$0xff]
      %v7014 = vld [vmem:[#allocation4 + $0x2e0] sm:$0xff]
      %v7015 = vld [vmem:[#allocation4 + $0x2e8] sm:$0xff]
      %v7016 = vld [vmem:[#allocation4 + $0x2f0] sm:$0xff]
      %v7017 = vld [vmem:[#allocation4 + $0x2f8] sm:$0xff]
      %v7018 = vld [vmem:[#allocation4 + $0x300] sm:$0xff]
      %v7019 = vld [vmem:[#allocation4 + $0x308] sm:$0xff]
      %v7020 = vld [vmem:[#allocation4 + $0x310] sm:$0xff]
      %v7021 = vld [vmem:[#allocation4 + $0x318] sm:$0xff]
      %v7022 = vld [vmem:[#allocation4 + $0x320] sm:$0xff]
      %v7023 = vld [vmem:[#allocation4 + $0x328] sm:$0xff]
      %v7024 = vld [vmem:[#allocation4 + $0x330] sm:$0xff]
      %v7025 = vld [vmem:[#allocation4 + $0x338] sm:$0xff]
      %v7026 = vld [vmem:[#allocation4 + $0x340] sm:$0xff]
      %v7027 = vld [vmem:[#allocation4 + $0x348] sm:$0xff]
      %v7028 = vld [vmem:[#allocation4 + $0x350] sm:$0xff]
      %v7029 = vld [vmem:[#allocation4 + $0x358] sm:$0xff]
      %v7030 = vld [vmem:[#allocation4 + $0x360] sm:$0xff]
      %v7031 = vld [vmem:[#allocation4 + $0x368] sm:$0xff]
      %v7032 = vld [vmem:[#allocation4 + $0x370] sm:$0xff]
      %v7033 = vld [vmem:[#allocation4 + $0x378] sm:$0xff]
      %v7034 = vld [vmem:[#allocation4 + $0x380] sm:$0xff]
      %v7035 = vld [vmem:[#allocation4 + $0x388] sm:$0xff]
      %v7036 = vld [vmem:[#allocation4 + $0x390] sm:$0xff]
      %v7037 = vld [vmem:[#allocation4 + $0x398] sm:$0xff]
      %v7038 = vld [vmem:[#allocation4 + $0x3a0] sm:$0xff]
      %v7039 = vld [vmem:[#allocation4 + $0x3a8] sm:$0xff]
      %v7040 = vld [vmem:[#allocation4 + $0x3b0] sm:$0xff]
      %v7041 = vld [vmem:[#allocation4 + $0x3b8] sm:$0xff]
      %v7042 = vld [vmem:[#allocation4 + $0x3c0] sm:$0xff]
      %v7043 = vld [vmem:[#allocation4 + $0x3c8] sm:$0xff]
      %v7044 = vld [vmem:[#allocation4 + $0x3d0] sm:$0xff]
      %v7045 = vld [vmem:[#allocation4 + $0x3d8] sm:$0xff]
      %v7047 = vlaneseq
      %v7048 = vshrl.u32 %v7047, 7
      %v7049 = vsub.s32 0, %v7048
      %v7050 = vrot.slane %v5655, %v7049
      %v7548 = vunpack.c.l.b16 %v5159
      %v7549 = vunpack.c.l.b16 %v5160
      %v7550 = vunpack.c.l.b16 %v5161
      %v7551 = vunpack.c.l.b16 %v5162
      %v7552 = vunpack.c.l.b16 %v5163
      %v7553 = vunpack.c.l.b16 %v5164
      %v7554 = vunpack.c.l.b16 %v5165
      %v7555 = vunpack.c.l.b16 %v5166
      %v7556 = vunpack.c.l.b16 %v5167
      %v7557 = vunpack.c.l.b16 %v5168
      %v7558 = vunpack.c.l.b16 %v5169
      %v7559 = vunpack.c.l.b16 %v5170
      %v7560 = vunpack.c.l.b16 %v5171
      %v7561 = vunpack.c.l.b16 %v5172
      %v7562 = vunpack.c.l.b16 %v5173
      %v7563 = vunpack.c.l.b16 %v5174
      %v7564 = vunpack.c.l.b16 %v5175
      %v7565 = vunpack.c.l.b16 %v5176
      %v7566 = vunpack.c.l.b16 %v5177
      %v7567 = vunpack.c.l.b16 %v5178
      %v7568 = vunpack.c.l.b16 %v5179
      %v7569 = vunpack.c.l.b16 %v5180
      %v7570 = vunpack.c.l.b16 %v5181
      %v7571 = vunpack.c.l.b16 %v5182
      %v7572 = vunpack.c.l.b16 %v5183
      %v7573 = vunpack.c.l.b16 %v5184
      %v7574 = vunpack.c.l.b16 %v5185
      %v7575 = vunpack.c.l.b16 %v5186
      %v7576 = vunpack.c.l.b16 %v5187
      %v7577 = vunpack.c.l.b16 %v5188
      %v7578 = vunpack.c.l.b16 %v5189
      %v7579 = vunpack.c.l.b16 %v5190
      %v7580 = vunpack.c.l.b16 %v5191
      %v7581 = vunpack.c.l.b16 %v5192
      %v7582 = vunpack.c.l.b16 %v5193
      %v7583 = vunpack.c.l.b16 %v5194
      %v7584 = vunpack.c.l.b16 %v5195
      %v7585 = vunpack.c.l.b16 %v5196
      %v7586 = vunpack.c.l.b16 %v5197
      %v7587 = vunpack.c.l.b16 %v5198
      %v7588 = vunpack.c.l.b16 %v5199
      %v7589 = vunpack.c.l.b16 %v5200
      %v7590 = vunpack.c.l.b16 %v5201
      %v7591 = vunpack.c.l.b16 %v5202
      %v7592 = vunpack.c.l.b16 %v5203
      %v7593 = vunpack.c.l.b16 %v5204
      %v7594 = vunpack.c.l.b16 %v5205
      %v7595 = vunpack.c.l.b16 %v5206
      %v7596 = vunpack.c.l.b16 %v5207
      %v7597 = vunpack.c.l.b16 %v5208
      %v7598 = vunpack.c.l.b16 %v5209
      %v7599 = vunpack.c.l.b16 %v5210
      %v7600 = vunpack.c.l.b16 %v5211
      %v7601 = vunpack.c.l.b16 %v5212
      %v7602 = vunpack.c.l.b16 %v5213
      %v7603 = vunpack.c.l.b16 %v5214
      %v7604 = vunpack.c.l.b16 %v5215
      %v7605 = vunpack.c.l.b16 %v5216
      %v7606 = vunpack.c.l.b16 %v5217
      %v7607 = vunpack.c.l.b16 %v5218
      %v7608 = vunpack.c.l.b16 %v5219
      %v7609 = vunpack.c.l.b16 %v5220
      %v7610 = vunpack.c.l.b16 %v5221
      %v7611 = vunpack.c.l.b16 %v5222
      %v7612 = vunpack.c.l.b16 %v5223
      %v7613 = vunpack.c.l.b16 %v5224
      %v7614 = vunpack.c.l.b16 %v5225
      %v7615 = vunpack.c.l.b16 %v5226
      %v7616 = vunpack.c.l.b16 %v5227
      %v7617 = vunpack.c.l.b16 %v5228
      %v7618 = vunpack.c.l.b16 %v5229
      %v7619 = vunpack.c.l.b16 %v5230
      %v7620 = vunpack.c.l.b16 %v5231
      %v7621 = vunpack.c.l.b16 %v5232
      %v7622 = vunpack.c.l.b16 %v5233
      %v7623 = vunpack.c.l.b16 %v5234
      %v7624 = vunpack.c.l.b16 %v5235
      %v7625 = vunpack.c.l.b16 %v5236
      %v7626 = vunpack.c.l.b16 %v5237
      %v7627 = vunpack.c.l.b16 %v5238
      %v7628 = vunpack.c.l.b16 %v5239
      %v7629 = vunpack.c.l.b16 %v5240
      %v7630 = vunpack.c.l.b16 %v5241
      %v7631 = vunpack.c.l.b16 %v5242
      %v7632 = vunpack.c.l.b16 %v5243
      %v7633 = vunpack.c.l.b16 %v5244
      %v7634 = vunpack.c.l.b16 %v5245
      %v7635 = vunpack.c.l.b16 %v5246
      %v7636 = vunpack.c.l.b16 %v5247
      %v7637 = vunpack.c.l.b16 %v5248
      %v7638 = vunpack.c.l.b16 %v5249
      %v7639 = vunpack.c.l.b16 %v5250
      %v7640 = vunpack.c.l.b16 %v5251
      %v7641 = vunpack.c.l.b16 %v5252
      %v7642 = vunpack.c.l.b16 %v5253
      %v7643 = vunpack.c.l.b16 %v5254
      %v7644 = vunpack.c.l.b16 %v5255
      %v7645 = vunpack.c.l.b16 %v5256
      %v7646 = vunpack.c.l.b16 %v5257
      %v7647 = vunpack.c.l.b16 %v5258
      %v7648 = vunpack.c.l.b16 %v5259
      %v7649 = vunpack.c.l.b16 %v5260
      %v7650 = vunpack.c.l.b16 %v5261
      %v7651 = vunpack.c.l.b16 %v5262
      %v7652 = vunpack.c.l.b16 %v5263
      %v7653 = vunpack.c.l.b16 %v5264
      %v7654 = vunpack.c.l.b16 %v5265
      %v7655 = vunpack.c.l.b16 %v5266
      %v7656 = vunpack.c.l.b16 %v5267
      %v7657 = vunpack.c.l.b16 %v5268
      %v7658 = vunpack.c.l.b16 %v5269
      %v7659 = vunpack.c.l.b16 %v5270
      %v7660 = vunpack.c.l.b16 %v5271
      %v7661 = vunpack.c.l.b16 %v5272
      %v7662 = vunpack.c.l.b16 %v5273
      %v7663 = vunpack.c.l.b16 %v5274
      %v7664 = vunpack.c.l.b16 %v5275
      %v7665 = vunpack.c.l.b16 %v5276
      %v7666 = vunpack.c.l.b16 %v5277
      %v7667 = vunpack.c.l.b16 %v5278
      %v7668 = vunpack.c.l.b16 %v5279
      %v7669 = vunpack.c.l.b16 %v5280
      %v7670 = vunpack.c.l.b16 %v5281
      %v7671 = vunpack.c.l.b16 %v5282
      %v7672 = vunpack.c.l.b16 %v5283
      %v7673 = vunpack.c.l.b16 %v5284
      %v7674 = vunpack.c.l.b16 %v5285
      %v7675 = vunpack.c.l.b16 %v5286
      %v7676 = vunpack.c.l.b16 %v5287
      %v7677 = vunpack.c.l.b16 %v5288
      %v7678 = vunpack.c.l.b16 %v5289
      %v7679 = vunpack.c.l.b16 %v5290
      %v7680 = vunpack.c.l.b16 %v5291
      %v7681 = vunpack.c.l.b16 %v5292
      %v7682 = vunpack.c.l.b16 %v5293
      %v7683 = vunpack.c.l.b16 %v5294
      %v7684 = vunpack.c.l.b16 %v5295
      %v7685 = vunpack.c.l.b16 %v5296
      %v7686 = vunpack.c.l.b16 %v5297
      %v7687 = vunpack.c.l.b16 %v5298
      %v7688 = vunpack.c.l.b16 %v5299
      %v7689 = vunpack.c.l.b16 %v5300
      %v7690 = vunpack.c.l.b16 %v5301
      %v7691 = vunpack.c.l.b16 %v5302
      %v7692 = vunpack.c.l.b16 %v5303
      %v7693 = vunpack.c.l.b16 %v5304
      %v7694 = vunpack.c.l.b16 %v5305
      %v7695 = vunpack.c.l.b16 %v5306
      %v7696 = vunpack.c.l.b16 %v5307
      %v7697 = vunpack.c.l.b16 %v5308
      %v7698 = vunpack.c.l.b16 %v5309
      %v7699 = vunpack.c.l.b16 %v5310
      %v7700 = vunpack.c.l.b16 %v5311
      %v7701 = vunpack.c.l.b16 %v5312
      %v7702 = vunpack.c.l.b16 %v5313
      %v7703 = vunpack.c.l.b16 %v5314
      %v7704 = vunpack.c.l.b16 %v5315
      %v7705 = vunpack.c.l.b16 %v5316
      %v7706 = vunpack.c.l.b16 %v5317
      %v7707 = vunpack.c.l.b16 %v5318
      %v7708 = vunpack.c.l.b16 %v5319
      %v7709 = vunpack.c.l.b16 %v5320
      %v7710 = vunpack.c.l.b16 %v5321
      %v7711 = vunpack.c.l.b16 %v5322
      %v7712 = vunpack.c.l.b16 %v5323
      %v7713 = vunpack.c.l.b16 %v5324
      %v7714 = vunpack.c.l.b16 %v5325
      %v7715 = vunpack.c.l.b16 %v5326
      %v7716 = vunpack.c.l.b16 %v5327
      %v7717 = vunpack.c.l.b16 %v5328
      %v7718 = vunpack.c.l.b16 %v5329
      %v7719 = vunpack.c.l.b16 %v5330
      %v7720 = vunpack.c.l.b16 %v5331
      %v7721 = vunpack.c.l.b16 %v5332
      %v7722 = vunpack.c.l.b16 %v5333
      %v7723 = vunpack.c.l.b16 %v5334
      %v7724 = vunpack.c.l.b16 %v5335
      %v7725 = vunpack.c.l.b16 %v5336
      %v7726 = vunpack.c.l.b16 %v5337
      %v7727 = vunpack.c.l.b16 %v5338
      %v7728 = vunpack.c.l.b16 %v5339
      %v7729 = vunpack.c.l.b16 %v5340
      %v7730 = vunpack.c.l.b16 %v5341
      %v7731 = vunpack.c.l.b16 %v5342
      %v7732 = vunpack.c.l.b16 %v5343
      %v7733 = vunpack.c.l.b16 %v5344
      %v7734 = vunpack.c.l.b16 %v5345
      %v7735 = vunpack.c.l.b16 %v5346
      %v7736 = vunpack.c.l.b16 %v5347
      %v7737 = vunpack.c.l.b16 %v5348
      %v7738 = vunpack.c.l.b16 %v5349
      %v7739 = vunpack.c.l.b16 %v5350
      %v7740 = vunpack.c.l.b16 %v5351
      %v7741 = vunpack.c.l.b16 %v5352
      %v7742 = vunpack.c.l.b16 %v5353
      %v7743 = vunpack.c.l.b16 %v5354
      %v7744 = vunpack.c.l.b16 %v5355
      %v7745 = vunpack.c.l.b16 %v5356
      %v7746 = vunpack.c.l.b16 %v5357
      %v7747 = vunpack.c.l.b16 %v5358
      %v7748 = vunpack.c.l.b16 %v5359
      %v7749 = vunpack.c.l.b16 %v5360
      %v7750 = vunpack.c.l.b16 %v5361
      %v7751 = vunpack.c.l.b16 %v5362
      %v7752 = vunpack.c.l.b16 %v5363
      %v7753 = vunpack.c.l.b16 %v5364
      %v7754 = vunpack.c.l.b16 %v5365
      %v7755 = vunpack.c.l.b16 %v5366
      %v7756 = vunpack.c.l.b16 %v5367
      %v7757 = vunpack.c.l.b16 %v5368
      %v7758 = vunpack.c.l.b16 %v5369
      %v7759 = vunpack.c.l.b16 %v5370
      %v7760 = vunpack.c.l.b16 %v5371
      %v7761 = vunpack.c.l.b16 %v5372
      %v7762 = vunpack.c.l.b16 %v5373
      %v7763 = vunpack.c.l.b16 %v5374
      %v7764 = vunpack.c.l.b16 %v5375
      %v7765 = vunpack.c.l.b16 %v5376
      %v7766 = vunpack.c.l.b16 %v5377
      %v7767 = vunpack.c.l.b16 %v5378
      %v7768 = vunpack.c.l.b16 %v5379
      %v7769 = vunpack.c.l.b16 %v5380
      %v7770 = vunpack.c.l.b16 %v5381
      %v7771 = vunpack.c.l.b16 %v5382
      %v7772 = vunpack.c.l.b16 %v5383
      %v7773 = vunpack.c.l.b16 %v5384
      %v7774 = vunpack.c.l.b16 %v5385
      %v7775 = vunpack.c.l.b16 %v5386
      %v7776 = vunpack.c.l.b16 %v5387
      %v7777 = vunpack.c.l.b16 %v5388
      %v7778 = vunpack.c.l.b16 %v5389
      %v7779 = vunpack.c.l.b16 %v5390
      %v7780 = vunpack.c.l.b16 %v5391
      %v7781 = vunpack.c.l.b16 %v5392
      %v7782 = vunpack.c.l.b16 %v5393
      %v7783 = vunpack.c.l.b16 %v5394
      %v7784 = vunpack.c.l.b16 %v5395
      %v7785 = vunpack.c.l.b16 %v5396
      %v7786 = vunpack.c.l.b16 %v5397
      %v7787 = vunpack.c.l.b16 %v5398
      %v7788 = vunpack.c.l.b16 %v5399
      %v7789 = vunpack.c.l.b16 %v5400
      %v7790 = vunpack.c.l.b16 %v5401
      %v7791 = vunpack.c.l.b16 %v5402
      %v7792 = vunpack.c.l.b16 %v5403
      %v7793 = vunpack.c.l.b16 %v5404
      %v7794 = vunpack.c.l.b16 %v5405
      %v7795 = vunpack.c.l.b16 %v5406
      %v7796 = vunpack.c.l.b16 %v5407
      %v7797 = vunpack.c.l.b16 %v5408
      %v7798 = vunpack.c.l.b16 %v5409
      %v7799 = vunpack.c.l.b16 %v5410
      %v7800 = vunpack.c.l.b16 %v5411
      %v7801 = vunpack.c.l.b16 %v5412
      %v7802 = vunpack.c.l.b16 %v5413
      %v7803 = vunpack.c.l.b16 %v5414
      %v7804 = vunpack.c.l.b16 %v5415
      %v7805 = vunpack.c.l.b16 %v5416
      %v7806 = vunpack.c.l.b16 %v5417
      %v7807 = vunpack.c.l.b16 %v5418
      %v7808 = vunpack.c.l.b16 %v5419
      %v7809 = vunpack.c.l.b16 %v5420
      %v7810 = vunpack.c.l.b16 %v5421
      %v7811 = vunpack.c.l.b16 %v5422
      %v7812 = vunpack.c.l.b16 %v5423
      %v7813 = vunpack.c.l.b16 %v5424
      %v7814 = vunpack.c.l.b16 %v5425
      %v7815 = vunpack.c.l.b16 %v5426
      %v7816 = vunpack.c.l.b16 %v5427
      %v7817 = vunpack.c.l.b16 %v5428
      %v7818 = vunpack.c.l.b16 %v5429
      %v7819 = vunpack.c.l.b16 %v5430
      %v7820 = vunpack.c.l.b16 %v5431
      %v7821 = vunpack.c.l.b16 %v5432
      %v7822 = vunpack.c.l.b16 %v5433
      %v7823 = vunpack.c.l.b16 %v5434
      %v7824 = vunpack.c.l.b16 %v5435
      %v7825 = vunpack.c.l.b16 %v5436
      %v7826 = vunpack.c.l.b16 %v5437
      %v7827 = vunpack.c.l.b16 %v5438
      %v7828 = vunpack.c.l.b16 %v5439
      %v7829 = vunpack.c.l.b16 %v5440
      %v7830 = vunpack.c.l.b16 %v5441
      %v7831 = vunpack.c.l.b16 %v5442
      %v7832 = vunpack.c.l.b16 %v5443
      %v7833 = vunpack.c.l.b16 %v5444
      %v7834 = vunpack.c.l.b16 %v5445
      %v7835 = vunpack.c.l.b16 %v5446
      %v7836 = vunpack.c.l.b16 %v5447
      %v7837 = vunpack.c.l.b16 %v5448
      %v7838 = vunpack.c.l.b16 %v5449
      %v7839 = vunpack.c.l.b16 %v5450
      %v7840 = vunpack.c.l.b16 %v5451
      %v7841 = vunpack.c.l.b16 %v5452
      %v7842 = vunpack.c.l.b16 %v5453
      %v7843 = vunpack.c.l.b16 %v5454
      %v7844 = vunpack.c.l.b16 %v5455
      %v7845 = vunpack.c.l.b16 %v5456
      %v7846 = vunpack.c.l.b16 %v5457
      %v7847 = vunpack.c.l.b16 %v5458
      %v7848 = vunpack.c.l.b16 %v5459
      %v7849 = vunpack.c.l.b16 %v5460
      %v7850 = vunpack.c.l.b16 %v5461
      %v7851 = vunpack.c.l.b16 %v5462
      %v7852 = vunpack.c.l.b16 %v5463
      %v7853 = vunpack.c.l.b16 %v5464
      %v7854 = vunpack.c.l.b16 %v5465
      %v7855 = vunpack.c.l.b16 %v5466
      %v7856 = vunpack.c.l.b16 %v5467
      %v7857 = vunpack.c.l.b16 %v5468
      %v7858 = vunpack.c.l.b16 %v5469
      %v7859 = vunpack.c.l.b16 %v5470
      %v7860 = vunpack.c.l.b16 %v5471
      %v7861 = vunpack.c.l.b16 %v5472
      %v7862 = vunpack.c.l.b16 %v5473
      %v7863 = vunpack.c.l.b16 %v5474
      %v7864 = vunpack.c.l.b16 %v5475
      %v7865 = vunpack.c.l.b16 %v5476
      %v7866 = vunpack.c.l.b16 %v5477
      %v7867 = vunpack.c.l.b16 %v5478
      %v7868 = vunpack.c.l.b16 %v5479
      %v7869 = vunpack.c.l.b16 %v5480
      %v7870 = vunpack.c.l.b16 %v5481
      %v7871 = vunpack.c.l.b16 %v5482
      %v7872 = vunpack.c.l.b16 %v5483
      %v7873 = vunpack.c.l.b16 %v5484
      %v7874 = vunpack.c.l.b16 %v5485
      %v7875 = vunpack.c.l.b16 %v5486
      %v7876 = vunpack.c.l.b16 %v5487
      %v7877 = vunpack.c.l.b16 %v5488
      %v7878 = vunpack.c.l.b16 %v5489
      %v7879 = vunpack.c.l.b16 %v5490
      %v7880 = vunpack.c.l.b16 %v5491
      %v7881 = vunpack.c.l.b16 %v5492
      %v7882 = vunpack.c.l.b16 %v5493
      %v7883 = vunpack.c.l.b16 %v5494
      %v7884 = vunpack.c.l.b16 %v5495
      %v7885 = vunpack.c.l.b16 %v5496
      %v7886 = vunpack.c.l.b16 %v5497
      %v7887 = vunpack.c.l.b16 %v5498
      %v7888 = vunpack.c.l.b16 %v5499
      %v7889 = vunpack.c.l.b16 %v5500
      %v7890 = vunpack.c.l.b16 %v5501
      %v7891 = vunpack.c.l.b16 %v5502
      %v7892 = vunpack.c.l.b16 %v5503
      %v7893 = vunpack.c.l.b16 %v5504
      %v7894 = vunpack.c.l.b16 %v5505
      %v7895 = vunpack.c.l.b16 %v5506
      %v7896 = vunpack.c.l.b16 %v5507
      %v7897 = vunpack.c.l.b16 %v5508
      %v7898 = vunpack.c.l.b16 %v5509
      %v7899 = vunpack.c.l.b16 %v5510
      %v7900 = vunpack.c.l.b16 %v5511
      %v7901 = vunpack.c.l.b16 %v5512
      %v7902 = vunpack.c.l.b16 %v5513
      %v7903 = vunpack.c.l.b16 %v5514
      %v7904 = vunpack.c.l.b16 %v5515
      %v7905 = vunpack.c.l.b16 %v5516
      %v7906 = vunpack.c.l.b16 %v5517
      %v7907 = vunpack.c.l.b16 %v5518
      %v7908 = vunpack.c.l.b16 %v5519
      %v7909 = vunpack.c.l.b16 %v5520
      %v7910 = vunpack.c.l.b16 %v5521
      %v7911 = vunpack.c.l.b16 %v5522
      %v7912 = vunpack.c.l.b16 %v5523
      %v7913 = vunpack.c.l.b16 %v5524
      %v7914 = vunpack.c.l.b16 %v5525
      %v7915 = vunpack.c.l.b16 %v5526
      %v7916 = vunpack.c.l.b16 %v5527
      %v7917 = vunpack.c.l.b16 %v5528
      %v7918 = vunpack.c.l.b16 %v5529
      %v7919 = vunpack.c.l.b16 %v5530
      %v7920 = vunpack.c.l.b16 %v5531
      %v7921 = vunpack.c.l.b16 %v5532
      %v7922 = vunpack.c.l.b16 %v5533
      %v7923 = vunpack.c.l.b16 %v5534
      %v7924 = vunpack.c.l.b16 %v5535
      %v7925 = vunpack.c.l.b16 %v5536
      %v7926 = vunpack.c.l.b16 %v5537
      %v7927 = vunpack.c.l.b16 %v5538
      %v7928 = vunpack.c.l.b16 %v5539
      %v7929 = vunpack.c.l.b16 %v5540
      %v7930 = vunpack.c.l.b16 %v5541
      %v7931 = vunpack.c.l.b16 %v5542
      %v7932 = vunpack.c.l.b16 %v5543
      %v7933 = vunpack.c.l.b16 %v5544
      %v7934 = vunpack.c.l.b16 %v5545
      %v7935 = vunpack.c.l.b16 %v5546
      %v7936 = vunpack.c.l.b16 %v5547
      %v7937 = vunpack.c.l.b16 %v5548
      %v7938 = vunpack.c.l.b16 %v5549
      %v7939 = vunpack.c.l.b16 %v5550
      %v7940 = vunpack.c.l.b16 %v5551
      %v7941 = vunpack.c.l.b16 %v5552
      %v7942 = vunpack.c.l.b16 %v5553
      %v7943 = vunpack.c.l.b16 %v5554
      %v7944 = vunpack.c.l.b16 %v5555
      %v7945 = vunpack.c.l.b16 %v5556
      %v7946 = vunpack.c.l.b16 %v5557
      %v7947 = vunpack.c.l.b16 %v5558
      %v7948 = vunpack.c.l.b16 %v5559
      %v7949 = vunpack.c.l.b16 %v5560
      %v7950 = vunpack.c.l.b16 %v5561
      %v7951 = vunpack.c.l.b16 %v5562
      %v7952 = vunpack.c.l.b16 %v5563
      %v7953 = vunpack.c.l.b16 %v5564
      %v7954 = vunpack.c.l.b16 %v5565
      %v7955 = vunpack.c.l.b16 %v5566
      %v7956 = vunpack.c.l.b16 %v5567
      %v7957 = vunpack.c.l.b16 %v5568
      %v7958 = vunpack.c.l.b16 %v5569
      %v7959 = vunpack.c.l.b16 %v5570
      %v7960 = vunpack.c.l.b16 %v5571
      %v7961 = vunpack.c.l.b16 %v5572
      %v7962 = vunpack.c.l.b16 %v5573
      %v7963 = vunpack.c.l.b16 %v5574
      %v7964 = vunpack.c.l.b16 %v5575
      %v7965 = vunpack.c.l.b16 %v5576
      %v7966 = vunpack.c.l.b16 %v5577
      %v7967 = vunpack.c.l.b16 %v5578
      %v7968 = vunpack.c.l.b16 %v5579
      %v7969 = vunpack.c.l.b16 %v5580
      %v7970 = vunpack.c.l.b16 %v5581
      %v7971 = vunpack.c.l.b16 %v5582
      %v7972 = vunpack.c.l.b16 %v5583
      %v7973 = vunpack.c.l.b16 %v5584
      %v7974 = vunpack.c.l.b16 %v5585
      %v7975 = vunpack.c.l.b16 %v5586
      %v7976 = vunpack.c.l.b16 %v5587
      %v7977 = vunpack.c.l.b16 %v5588
      %v7978 = vunpack.c.l.b16 %v5589
      %v7979 = vunpack.c.l.b16 %v5590
      %v7980 = vunpack.c.l.b16 %v5591
      %v7981 = vunpack.c.l.b16 %v5592
      %v7982 = vunpack.c.l.b16 %v5593
      %v7983 = vunpack.c.l.b16 %v5594
      %v7984 = vunpack.c.l.b16 %v5595
      %v7985 = vunpack.c.l.b16 %v5596
      %v7986 = vunpack.c.l.b16 %v5597
      %v7987 = vunpack.c.l.b16 %v5598
      %v7988 = vunpack.c.l.b16 %v5599
      %v7989 = vunpack.c.l.b16 %v5600
      %v7990 = vunpack.c.l.b16 %v5601
      %v7991 = vunpack.c.l.b16 %v5602
      %v7992 = vunpack.c.l.b16 %v5603
      %v7993 = vunpack.c.l.b16 %v5604
      %v7994 = vunpack.c.l.b16 %v5605
      %v7995 = vunpack.c.l.b16 %v5606
      %v7996 = vunpack.c.l.b16 %v5607
      %v7997 = vunpack.c.l.b16 %v5608
      %v7998 = vunpack.c.l.b16 %v5609
      %v7999 = vunpack.c.l.b16 %v5610
      %v8000 = vunpack.c.l.b16 %v5611
      %v8001 = vunpack.c.l.b16 %v5612
      %v8002 = vunpack.c.l.b16 %v5613
      %v8003 = vunpack.c.l.b16 %v5614
      %v8004 = vunpack.c.l.b16 %v5615
      %v8005 = vunpack.c.l.b16 %v5616
      %v8006 = vunpack.c.l.b16 %v5617
      %v8007 = vunpack.c.l.b16 %v5618
      %v8008 = vunpack.c.l.b16 %v5619
      %v8009 = vunpack.c.l.b16 %v5620
      %v8010 = vunpack.c.l.b16 %v5621
      %v8011 = vunpack.c.l.b16 %v5622
      %v8012 = vunpack.c.l.b16 %v5623
      %v8013 = vunpack.c.l.b16 %v5624
      %v8014 = vunpack.c.l.b16 %v5625
      %v8015 = vunpack.c.l.b16 %v5626
      %v8016 = vunpack.c.l.b16 %v5627
      %v8017 = vunpack.c.l.b16 %v5628
      %v8018 = vunpack.c.l.b16 %v5629
      %v8019 = vunpack.c.l.b16 %v5630
      %v8020 = vunpack.c.l.b16 %v5631
      %v8021 = vunpack.c.l.b16 %v5632
      %v8022 = vunpack.c.l.b16 %v5633
      %v8023 = vunpack.c.l.b16 %v5634
      %v8024 = vunpack.c.l.b16 %v5635
      %v8025 = vunpack.c.l.b16 %v5636
      %v8026 = vunpack.c.l.b16 %v5637
      %v8027 = vunpack.c.l.b16 %v5638
      %v8028 = vunpack.c.l.b16 %v5639
      %v8029 = vunpack.c.l.b16 %v5640
      %v8030 = vunpack.c.l.b16 %v5641
      %v8031 = vunpack.c.l.b16 %v5642
      %v8032 = vunpack.c.l.b16 %v5643
      %v8033 = vunpack.c.l.b16 %v5644
      %v8034 = vunpack.c.l.b16 %v5645
      %v8035 = vunpack.c.l.b16 %v5646
      %v8036 = vunpack.c.l.b16 %v5647
      %v8037 = vunpack.c.l.b16 %v5648
      %v8038 = vunpack.c.l.b16 %v5649
      %v8039 = vunpack.c.l.b16 %v5650
      %v8040 = vunpack.c.l.b16 %v5651
      %v8041 = vunpack.c.l.b16 %v5652
      %v8042 = vunpack.c.l.b16 %v5653
      %v8043 = vunpack.c.l.b16 %v5654
      %v8044 = vpack.c.b16 %v7549, %v7548
      %v8045 = vpack.c.b16 %v7551, %v7550
      %v8046 = vpack.c.b16 %v7553, %v7552
      %v8047 = vpack.c.b16 %v7555, %v7554
      %v8048 = vpack.c.b16 %v7557, %v7556
      %v8049 = vpack.c.b16 %v7559, %v7558
      %v8050 = vpack.c.b16 %v7561, %v7560
      %v8051 = vpack.c.b16 %v7563, %v7562
      %v8052 = vpack.c.b16 %v7565, %v7564
      %v8053 = vpack.c.b16 %v7567, %v7566
      %v8054 = vpack.c.b16 %v7569, %v7568
      %v8055 = vpack.c.b16 %v7571, %v7570
      %v8056 = vpack.c.b16 %v7573, %v7572
      %v8057 = vpack.c.b16 %v7575, %v7574
      %v8058 = vpack.c.b16 %v7577, %v7576
      %v8059 = vpack.c.b16 %v7579, %v7578
      %v8060 = vpack.c.b16 %v7581, %v7580
      %v8061 = vpack.c.b16 %v7583, %v7582
      %v8062 = vpack.c.b16 %v7585, %v7584
      %v8063 = vpack.c.b16 %v7587, %v7586
      %v8064 = vpack.c.b16 %v7589, %v7588
      %v8065 = vpack.c.b16 %v7591, %v7590
      %v8066 = vpack.c.b16 %v7593, %v7592
      %v8067 = vpack.c.b16 %v7595, %v7594
      %v8068 = vpack.c.b16 %v7597, %v7596
      %v8069 = vpack.c.b16 %v7599, %v7598
      %v8070 = vpack.c.b16 %v7601, %v7600
      %v8071 = vpack.c.b16 %v7603, %v7602
      %v8072 = vpack.c.b16 %v7605, %v7604
      %v8073 = vpack.c.b16 %v7607, %v7606
      %v8074 = vpack.c.b16 %v7609, %v7608
      %v8075 = vpack.c.b16 %v7611, %v7610
      %v8076 = vpack.c.b16 %v7613, %v7612
      %v8077 = vpack.c.b16 %v7615, %v7614
      %v8078 = vpack.c.b16 %v7617, %v7616
      %v8079 = vpack.c.b16 %v7619, %v7618
      %v8080 = vpack.c.b16 %v7621, %v7620
      %v8081 = vpack.c.b16 %v7623, %v7622
      %v8082 = vpack.c.b16 %v7625, %v7624
      %v8083 = vpack.c.b16 %v7627, %v7626
      %v8084 = vpack.c.b16 %v7629, %v7628
      %v8085 = vpack.c.b16 %v7631, %v7630
      %v8086 = vpack.c.b16 %v7633, %v7632
      %v8087 = vpack.c.b16 %v7635, %v7634
      %v8088 = vpack.c.b16 %v7637, %v7636
      %v8089 = vpack.c.b16 %v7639, %v7638
      %v8090 = vpack.c.b16 %v7641, %v7640
      %v8091 = vpack.c.b16 %v7643, %v7642
      %v8092 = vpack.c.b16 %v7645, %v7644
      %v8093 = vpack.c.b16 %v7647, %v7646
      %v8094 = vpack.c.b16 %v7649, %v7648
      %v8095 = vpack.c.b16 %v7651, %v7650
      %v8096 = vpack.c.b16 %v7653, %v7652
      %v8097 = vpack.c.b16 %v7655, %v7654
      %v8098 = vpack.c.b16 %v7657, %v7656
      %v8099 = vpack.c.b16 %v7659, %v7658
      %v8100 = vpack.c.b16 %v7661, %v7660
      %v8101 = vpack.c.b16 %v7663, %v7662
      %v8102 = vpack.c.b16 %v7665, %v7664
      %v8103 = vpack.c.b16 %v7667, %v7666
      %v8104 = vpack.c.b16 %v7669, %v7668
      %v8105 = vpack.c.b16 %v7671, %v7670
      %v8106 = vpack.c.b16 %v7673, %v7672
      %v8107 = vpack.c.b16 %v7675, %v7674
      %v8108 = vpack.c.b16 %v7677, %v7676
      %v8109 = vpack.c.b16 %v7679, %v7678
      %v8110 = vpack.c.b16 %v7681, %v7680
      %v8111 = vpack.c.b16 %v7683, %v7682
      %v8112 = vpack.c.b16 %v7685, %v7684
      %v8113 = vpack.c.b16 %v7687, %v7686
      %v8114 = vpack.c.b16 %v7689, %v7688
      %v8115 = vpack.c.b16 %v7691, %v7690
      %v8116 = vpack.c.b16 %v7693, %v7692
      %v8117 = vpack.c.b16 %v7695, %v7694
      %v8118 = vpack.c.b16 %v7697, %v7696
      %v8119 = vpack.c.b16 %v7699, %v7698
      %v8120 = vpack.c.b16 %v7701, %v7700
      %v8121 = vpack.c.b16 %v7703, %v7702
      %v8122 = vpack.c.b16 %v7705, %v7704
      %v8123 = vpack.c.b16 %v7707, %v7706
      %v8124 = vpack.c.b16 %v7709, %v7708
      %v8125 = vpack.c.b16 %v7711, %v7710
      %v8126 = vpack.c.b16 %v7713, %v7712
      %v8127 = vpack.c.b16 %v7715, %v7714
      %v8128 = vpack.c.b16 %v7717, %v7716
      %v8129 = vpack.c.b16 %v7719, %v7718
      %v8130 = vpack.c.b16 %v7721, %v7720
      %v8131 = vpack.c.b16 %v7723, %v7722
      %v8132 = vpack.c.b16 %v7725, %v7724
      %v8133 = vpack.c.b16 %v7727, %v7726
      %v8134 = vpack.c.b16 %v7729, %v7728
      %v8135 = vpack.c.b16 %v7731, %v7730
      %v8136 = vpack.c.b16 %v7733, %v7732
      %v8137 = vpack.c.b16 %v7735, %v7734
      %v8138 = vpack.c.b16 %v7737, %v7736
      %v8139 = vpack.c.b16 %v7739, %v7738
      %v8140 = vpack.c.b16 %v7741, %v7740
      %v8141 = vpack.c.b16 %v7743, %v7742
      %v8142 = vpack.c.b16 %v7745, %v7744
      %v8143 = vpack.c.b16 %v7747, %v7746
      %v8144 = vpack.c.b16 %v7749, %v7748
      %v8145 = vpack.c.b16 %v7751, %v7750
      %v8146 = vpack.c.b16 %v7753, %v7752
      %v8147 = vpack.c.b16 %v7755, %v7754
      %v8148 = vpack.c.b16 %v7757, %v7756
      %v8149 = vpack.c.b16 %v7759, %v7758
      %v8150 = vpack.c.b16 %v7761, %v7760
      %v8151 = vpack.c.b16 %v7763, %v7762
      %v8152 = vpack.c.b16 %v7765, %v7764
      %v8153 = vpack.c.b16 %v7767, %v7766
      %v8154 = vpack.c.b16 %v7769, %v7768
      %v8155 = vpack.c.b16 %v7771, %v7770
      %v8156 = vpack.c.b16 %v7773, %v7772
      %v8157 = vpack.c.b16 %v7775, %v7774
      %v8158 = vpack.c.b16 %v7777, %v7776
      %v8159 = vpack.c.b16 %v7779, %v7778
      %v8160 = vpack.c.b16 %v7781, %v7780
      %v8161 = vpack.c.b16 %v7783, %v7782
      %v8162 = vpack.c.b16 %v7785, %v7784
      %v8163 = vpack.c.b16 %v7787, %v7786
      %v8164 = vpack.c.b16 %v7789, %v7788
      %v8165 = vpack.c.b16 %v7791, %v7790
      %v8166 = vpack.c.b16 %v7793, %v7792
      %v8167 = vpack.c.b16 %v7795, %v7794
      %v8168 = vpack.c.b16 %v7797, %v7796
      %v8169 = vpack.c.b16 %v7799, %v7798
      %v8170 = vpack.c.b16 %v7801, %v7800
      %v8171 = vpack.c.b16 %v7803, %v7802
      %v8172 = vpack.c.b16 %v7805, %v7804
      %v8173 = vpack.c.b16 %v7807, %v7806
      %v8174 = vpack.c.b16 %v7809, %v7808
      %v8175 = vpack.c.b16 %v7811, %v7810
      %v8176 = vpack.c.b16 %v7813, %v7812
      %v8177 = vpack.c.b16 %v7815, %v7814
      %v8178 = vpack.c.b16 %v7817, %v7816
      %v8179 = vpack.c.b16 %v7819, %v7818
      %v8180 = vpack.c.b16 %v7821, %v7820
      %v8181 = vpack.c.b16 %v7823, %v7822
      %v8182 = vpack.c.b16 %v7825, %v7824
      %v8183 = vpack.c.b16 %v7827, %v7826
      %v8184 = vpack.c.b16 %v7829, %v7828
      %v8185 = vpack.c.b16 %v7831, %v7830
      %v8186 = vpack.c.b16 %v7833, %v7832
      %v8187 = vpack.c.b16 %v7835, %v7834
      %v8188 = vpack.c.b16 %v7837, %v7836
      %v8189 = vpack.c.b16 %v7839, %v7838
      %v8190 = vpack.c.b16 %v7841, %v7840
      %v8191 = vpack.c.b16 %v7843, %v7842
      %v8192 = vpack.c.b16 %v7845, %v7844
      %v8193 = vpack.c.b16 %v7847, %v7846
      %v8194 = vpack.c.b16 %v7849, %v7848
      %v8195 = vpack.c.b16 %v7851, %v7850
      %v8196 = vpack.c.b16 %v7853, %v7852
      %v8197 = vpack.c.b16 %v7855, %v7854
      %v8198 = vpack.c.b16 %v7857, %v7856
      %v8199 = vpack.c.b16 %v7859, %v7858
      %v8200 = vpack.c.b16 %v7861, %v7860
      %v8201 = vpack.c.b16 %v7863, %v7862
      %v8202 = vpack.c.b16 %v7865, %v7864
      %v8203 = vpack.c.b16 %v7867, %v7866
      %v8204 = vpack.c.b16 %v7869, %v7868
      %v8205 = vpack.c.b16 %v7871, %v7870
      %v8206 = vpack.c.b16 %v7873, %v7872
      %v8207 = vpack.c.b16 %v7875, %v7874
      %v8208 = vpack.c.b16 %v7877, %v7876
      %v8209 = vpack.c.b16 %v7879, %v7878
      %v8210 = vpack.c.b16 %v7881, %v7880
      %v8211 = vpack.c.b16 %v7883, %v7882
      %v8212 = vpack.c.b16 %v7885, %v7884
      %v8213 = vpack.c.b16 %v7887, %v7886
      %v8214 = vpack.c.b16 %v7889, %v7888
      %v8215 = vpack.c.b16 %v7891, %v7890
      %v8216 = vpack.c.b16 %v7893, %v7892
      %v8217 = vpack.c.b16 %v7895, %v7894
      %v8218 = vpack.c.b16 %v7897, %v7896
      %v8219 = vpack.c.b16 %v7899, %v7898
      %v8220 = vpack.c.b16 %v7901, %v7900
      %v8221 = vpack.c.b16 %v7903, %v7902
      %v8222 = vpack.c.b16 %v7905, %v7904
      %v8223 = vpack.c.b16 %v7907, %v7906
      %v8224 = vpack.c.b16 %v7909, %v7908
      %v8225 = vpack.c.b16 %v7911, %v7910
      %v8226 = vpack.c.b16 %v7913, %v7912
      %v8227 = vpack.c.b16 %v7915, %v7914
      %v8228 = vpack.c.b16 %v7917, %v7916
      %v8229 = vpack.c.b16 %v7919, %v7918
      %v8230 = vpack.c.b16 %v7921, %v7920
      %v8231 = vpack.c.b16 %v7923, %v7922
      %v8232 = vpack.c.b16 %v7925, %v7924
      %v8233 = vpack.c.b16 %v7927, %v7926
      %v8234 = vpack.c.b16 %v7929, %v7928
      %v8235 = vpack.c.b16 %v7931, %v7930
      %v8236 = vpack.c.b16 %v7933, %v7932
      %v8237 = vpack.c.b16 %v7935, %v7934
      %v8238 = vpack.c.b16 %v7937, %v7936
      %v8239 = vpack.c.b16 %v7939, %v7938
      %v8240 = vpack.c.b16 %v7941, %v7940
      %v8241 = vpack.c.b16 %v7943, %v7942
      %v8242 = vpack.c.b16 %v7945, %v7944
      %v8243 = vpack.c.b16 %v7947, %v7946
      %v8244 = vpack.c.b16 %v7949, %v7948
      %v8245 = vpack.c.b16 %v7951, %v7950
      %v8246 = vpack.c.b16 %v7953, %v7952
      %v8247 = vpack.c.b16 %v7955, %v7954
      %v8248 = vpack.c.b16 %v7957, %v7956
      %v8249 = vpack.c.b16 %v7959, %v7958
      %v8250 = vpack.c.b16 %v7961, %v7960
      %v8251 = vpack.c.b16 %v7963, %v7962
      %v8252 = vpack.c.b16 %v7965, %v7964
      %v8253 = vpack.c.b16 %v7967, %v7966
      %v8254 = vpack.c.b16 %v7969, %v7968
      %v8255 = vpack.c.b16 %v7971, %v7970
      %v8256 = vpack.c.b16 %v7973, %v7972
      %v8257 = vpack.c.b16 %v7975, %v7974
      %v8258 = vpack.c.b16 %v7977, %v7976
      %v8259 = vpack.c.b16 %v7979, %v7978
      %v8260 = vpack.c.b16 %v7981, %v7980
      %v8261 = vpack.c.b16 %v7983, %v7982
      %v8262 = vpack.c.b16 %v7985, %v7984
      %v8263 = vpack.c.b16 %v7987, %v7986
      %v8264 = vpack.c.b16 %v7989, %v7988
      %v8265 = vpack.c.b16 %v7991, %v7990
      %v8266 = vpack.c.b16 %v7993, %v7992
      %v8267 = vpack.c.b16 %v7995, %v7994
      %v8268 = vpack.c.b16 %v7997, %v7996
      %v8269 = vpack.c.b16 %v7999, %v7998
      %v8270 = vpack.c.b16 %v8001, %v8000
      %v8271 = vpack.c.b16 %v8003, %v8002
      %v8272 = vpack.c.b16 %v8005, %v8004
      %v8273 = vpack.c.b16 %v8007, %v8006
      %v8274 = vpack.c.b16 %v8009, %v8008
      %v8275 = vpack.c.b16 %v8011, %v8010
      %v8276 = vpack.c.b16 %v8013, %v8012
      %v8277 = vpack.c.b16 %v8015, %v8014
      %v8278 = vpack.c.b16 %v8017, %v8016
      %v8279 = vpack.c.b16 %v8019, %v8018
      %v8280 = vpack.c.b16 %v8021, %v8020
      %v8281 = vpack.c.b16 %v8023, %v8022
      %v8282 = vpack.c.b16 %v8025, %v8024
      %v8283 = vpack.c.b16 %v8027, %v8026
      %v8284 = vpack.c.b16 %v8029, %v8028
      %v8285 = vpack.c.b16 %v8031, %v8030
      %v8286 = vpack.c.b16 %v8033, %v8032
      %v8287 = vpack.c.b16 %v8035, %v8034
      %v8288 = vpack.c.b16 %v8037, %v8036
      %v8289 = vpack.c.b16 %v8039, %v8038
      %v8290 = vpack.c.b16 %v8041, %v8040
      %v8291 = vpack.c.b16 %v8043, %v8042
      %8540 = vmatprep.subr.bf16.mxu0 0
      %8541 = vmatpush1.bf16.msra.mxu0 %v8044
      %8542 = vmatprep.subr.bf16.mxu0 0
      %8543 = vmatpush1.bf16.msra.mxu0 %v8045
      %8544 = vmatprep.subr.bf16.mxu0 0
      %8545 = vmatpush1.bf16.msra.mxu0 %v8046
      %8546 = vmatprep.subr.bf16.mxu0 0
      %8547 = vmatpush1.bf16.msra.mxu0 %v8047
      %8548 = vmatprep.subr.bf16.mxu0 0
      %8549 = vmatpush1.bf16.msra.mxu0 %v8048
      %8550 = vmatprep.subr.bf16.mxu0 0
      %8551 = vmatpush1.bf16.msra.mxu0 %v8049
      %8552 = vmatprep.subr.bf16.mxu0 0
      %8553 = vmatpush1.bf16.msra.mxu0 %v8050
      %8554 = vmatprep.subr.bf16.mxu0 0
      %8555 = vmatpush1.bf16.msra.mxu0 %v8051
      %8556 = vmatprep.subr.bf16.mxu0 0
      %8557 = vmatpush1.bf16.msra.mxu0 %v8052
      %8558 = vmatprep.subr.bf16.mxu0 0
      %8559 = vmatpush1.bf16.msra.mxu0 %v8053
      %8560 = vmatprep.subr.bf16.mxu0 0
      %8561 = vmatpush1.bf16.msra.mxu0 %v8054
      %8562 = vmatprep.subr.bf16.mxu0 0
      %8563 = vmatpush1.bf16.msra.mxu0 %v8055
      %8564 = vmatprep.subr.bf16.mxu0 0
      %8565 = vmatpush1.bf16.msra.mxu0 %v8056
      %8566 = vmatprep.subr.bf16.mxu0 0
      %8567 = vmatpush1.bf16.msra.mxu0 %v8057
      %8568 = vmatprep.subr.bf16.mxu0 0
      %8569 = vmatpush1.bf16.msra.mxu0 %v8058
      %8570 = vmatprep.subr.bf16.mxu0 0
      %8571 = vmatpush1.bf16.msra.mxu0 %v8059
      %8572 = vmatprep.mubr.bf16.mxu0 %v6923
      %8573 = vmatmul.mubr.bf16.gmra.mrb[0].mxu0 %v6922
      %v8574 = vpop.f32.mrb[0].mxu0
      %v8575 = vadd.f32 %v7050, %v8574
      %v8576 = vpop.f32.mrb[0].mxu0
      %v8577 = vpop.f32.mrb[0].mxu0
      %v8578 = vadd.f32 %v7050, %v8577
      %v8579 = vpop.f32.mrb[0].mxu0
      %8580 = vmatprep.mubr.bf16.mxu0 %v6954
      %8581 = vmatmul.mubr.bf16.gmra.mrb[0].mxu0 %v6953
      %v8582 = vpop.f32.mrb[0].mxu0
      %v8583 = vadd.f32 %v7050, %v8582
      %v8584 = vpop.f32.mrb[0].mxu0
      %v8585 = vpop.f32.mrb[0].mxu0
      %v8586 = vadd.f32 %v7050, %v8585
      %v8587 = vpop.f32.mrb[0].mxu0
      %8588 = vmatprep.mubr.bf16.mxu0 %v6985
      %8589 = vmatmul.mubr.bf16.gmra.mrb[0].mxu0 %v6984
      %v8590 = vpop.f32.mrb[0].mxu0
      %v8591 = vadd.f32 %v7050, %v8590
      %v8592 = vpop.f32.mrb[0].mxu0
      %v8593 = vpop.f32.mrb[0].mxu0
      %v8594 = vadd.f32 %v7050, %v8593
      %v8595 = vpop.f32.mrb[0].mxu0
      %8596 = vmatprep.mubr.bf16.mxu0 %v7016
      %8597 = vmatmul.mubr.bf16.gmra.mrb[0].mxu0 %v7015
      %v8598 = vpop.f32.mrb[0].mxu0
      %v8599 = vadd.f32 %v7050, %v8598
      %v8600 = vpop.f32.mrb[0].mxu0
      %v8601 = vpop.f32.mrb[0].mxu0
      %v8602 = vadd.f32 %v7050, %v8601
      %v8603 = vpop.f32.mrb[0].mxu0
      %8604 = vdwg.mxu0
      %8605 = vmatprep.subr.bf16.mxu0 0
      %8606 = vmatpush1.bf16.msra.mxu0 %v8060
      %8607 = vmatprep.subr.bf16.mxu0 0
      %8608 = vmatpush1.bf16.msra.mxu0 %v8061
      %8609 = vmatprep.subr.bf16.mxu0 0
      %8610 = vmatpush1.bf16.msra.mxu0 %v8062
      %8611 = vmatprep.subr.bf16.mxu0 0
      %8612 = vmatpush1.bf16.msra.mxu0 %v8063
      %8613 = vmatprep.subr.bf16.mxu0 0
      %8614 = vmatpush1.bf16.msra.mxu0 %v8064
      %8615 = vmatprep.subr.bf16.mxu0 0
      %8616 = vmatpush1.bf16.msra.mxu0 %v8065
      %8617 = vmatprep.subr.bf16.mxu0 0
      %8618 = vmatpush1.bf16.msra.mxu0 %v8066
      %8619 = vmatprep.subr.bf16.mxu0 0
      %8620 = vmatpush1.bf16.msra.mxu0 %v8067
      %8621 = vmatprep.subr.bf16.mxu0 0
      %8622 = vmatpush1.bf16.msra.mxu0 %v8068
      %8623 = vmatprep.subr.bf16.mxu0 0
      %8624 = vmatpush1.bf16.msra.mxu0 %v8069
      %8625 = vmatprep.subr.bf16.mxu0 0
      %8626 = vmatpush1.bf16.msra.mxu0 %v8070
      %8627 = vmatprep.subr.bf16.mxu0 0
      %8628 = vmatpush1.bf16.msra.mxu0 %v8071
      %8629 = vmatprep.subr.bf16.mxu0 0
      %8630 = vmatpush1.bf16.msra.mxu0 %v8072
      %8631 = vmatprep.subr.bf16.mxu0 0
      %8632 = vmatpush1.bf16.msra.mxu0 %v8073
      %8633 = vmatprep.subr.bf16.mxu0 0
      %8634 = vmatpush1.bf16.msra.mxu0 %v8074
      %8635 = vmatprep.subr.bf16.mxu0 0
      %8636 = vmatpush1.bf16.msra.mxu0 %v8075
      %8637 = vmatprep.mubr.bf16.mxu0 %v6925
      %8638 = vmatmul.mubr.bf16.gmra.mrb[0].mxu0 %v6924
      %v8639 = vpop.f32.mrb[0].mxu0
      %v8640 = vadd.f32 %v8575, %v8639
      %v8641 = vpop.f32.mrb[0].mxu0
      %v8642 = vpop.f32.mrb[0].mxu0
      %v8643 = vadd.f32 %v8578, %v8642
      %v8644 = vpop.f32.mrb[0].mxu0
      %8645 = vmatprep.mubr.bf16.mxu0 %v6956
      %8646 = vmatmul.mubr.bf16.gmra.mrb[0].mxu0 %v6955
      %v8647 = vpop.f32.mrb[0].mxu0
      %v8648 = vadd.f32 %v8583, %v8647
      %v8649 = vpop.f32.mrb[0].mxu0
      %v8650 = vpop.f32.mrb[0].mxu0
      %v8651 = vadd.f32 %v8586, %v8650
      %v8652 = vpop.f32.mrb[0].mxu0
      %8653 = vmatprep.mubr.bf16.mxu0 %v6987
      %8654 = vmatmul.mubr.bf16.gmra.mrb[0].mxu0 %v6986
      %v8655 = vpop.f32.mrb[0].mxu0
      %v8656 = vadd.f32 %v8591, %v8655
      %v8657 = vpop.f32.mrb[0].mxu0
      %v8658 = vpop.f32.mrb[0].mxu0
      %v8659 = vadd.f32 %v8594, %v8658
      %v8660 = vpop.f32.mrb[0].mxu0
      %8661 = vmatprep.mubr.bf16.mxu0 %v7018
      %8662 = vmatmul.mubr.bf16.gmra.mrb[0].mxu0 %v7017
      %v8663 = vpop.f32.mrb[0].mxu0
      %v8664 = vadd.f32 %v8599, %v8663
      %v8665 = vpop.f32.mrb[0].mxu0
      %v8666 = vpop.f32.mrb[0].mxu0
      %v8667 = vadd.f32 %v8602, %v8666
      %v8668 = vpop.f32.mrb[0].mxu0
      %8669 = vdwg.mxu0
      %8670 = vmatprep.subr.bf16.mxu0 0
      %8671 = vmatpush1.bf16.msra.mxu0 %v8076
      %8672 = vmatprep.subr.bf16.mxu0 0
      %8673 = vmatpush1.bf16.msra.mxu0 %v8077
      %8674 = vmatprep.subr.bf16.mxu0 0
      %8675 = vmatpush1.bf16.msra.mxu0 %v8078
      %8676 = vmatprep.subr.bf16.mxu0 0
      %8677 = vmatpush1.bf16.msra.mxu0 %v8079
      %8678 = vmatprep.subr.bf16.mxu0 0
      %8679 = vmatpush1.bf16.msra.mxu0 %v8080
      %8680 = vmatprep.subr.bf16.mxu0 0
      %8681 = vmatpush1.bf16.msra.mxu0 %v8081
      %8682 = vmatprep.subr.bf16.mxu0 0
      %8683 = vmatpush1.bf16.msra.mxu0 %v8082
      %8684 = vmatprep.subr.bf16.mxu0 0
      %8685 = vmatpush1.bf16.msra.mxu0 %v8083
      %8686 = vmatprep.subr.bf16.mxu0 0
      %8687 = vmatpush1.bf16.msra.mxu0 %v8084
      %8688 = vmatprep.subr.bf16.mxu0 0
      %8689 = vmatpush1.bf16.msra.mxu0 %v8085
      %8690 = vmatprep.subr.bf16.mxu0 0
      %8691 = vmatpush1.bf16.msra.mxu0 %v8086
      %8692 = vmatprep.subr.bf16.mxu0 0
      %8693 = vmatpush1.bf16.msra.mxu0 %v8087
      %8694 = vmatprep.subr.bf16.mxu0 0
      %8695 = vmatpush1.bf16.msra.mxu0 %v8088
      %8696 = vmatprep.subr.bf16.mxu0 0
      %8697 = vmatpush1.bf16.msra.mxu0 %v8089
      %8698 = vmatprep.subr.bf16.mxu0 0
      %8699 = vmatpush1.bf16.msra.mxu0 %v8090
      %8700 = vmatprep.subr.bf16.mxu0 0
      %8701 = vmatpush1.bf16.msra.mxu0 %v8091
      %8702 = vmatprep.mubr.bf16.mxu0 %v6927
      %8703 = vmatmul.mubr.bf16.gmra.mrb[0].mxu0 %v6926
      %v8704 = vpop.f32.mrb[0].mxu0
      %v8705 = vadd.f32 %v8640, %v8704
      %v8706 = vpop.f32.mrb[0].mxu0
      %v8707 = vpop.f32.mrb[0].mxu0
      %v8708 = vadd.f32 %v8643, %v8707
      %v8709 = vpop.f32.mrb[0].mxu0
      %8710 = vmatprep.mubr.bf16.mxu0 %v6958
      %8711 = vmatmul.mubr.bf16.gmra.mrb[0].mxu0 %v6957
      %v8712 = vpop.f32.mrb[0].mxu0
      %v8713 = vadd.f32 %v8648, %v8712
      %v8714 = vpop.f32.mrb[0].mxu0
      %v8715 = vpop.f32.mrb[0].mxu0
      %v8716 = vadd.f32 %v8651, %v8715
      %v8717 = vpop.f32.mrb[0].mxu0
      %8718 = vmatprep.mubr.bf16.mxu0 %v6989
      %8719 = vmatmul.mubr.bf16.gmra.mrb[0].mxu0 %v6988
      %v8720 = vpop.f32.mrb[0].mxu0
      %v8721 = vadd.f32 %v8656, %v8720
      %v8722 = vpop.f32.mrb[0].mxu0
      %v8723 = vpop.f32.mrb[0].mxu0
      %v8724 = vadd.f32 %v8659, %v8723
      %v8725 = vpop.f32.mrb[0].mxu0
      %8726 = vmatprep.mubr.bf16.mxu0 %v7020
      %8727 = vmatmul.mubr.bf16.gmra.mrb[0].mxu0 %v7019
      %v8728 = vpop.f32.mrb[0].mxu0
      %v8729 = vadd.f32 %v8664, %v8728
      %v8730 = vpop.f32.mrb[0].mxu0
      %v8731 = vpop.f32.mrb[0].mxu0
      %v8732 = vadd.f32 %v8667, %v8731
      %v8733 = vpop.f32.mrb[0].mxu0
      %8734 = vdwg.mxu0
      %8735 = vmatprep.subr.bf16.mxu0 0
      %8736 = vmatpush1.bf16.msra.mxu0 %v8092
      %8737 = vmatprep.subr.bf16.mxu0 0
      %8738 = vmatpush1.bf16.msra.mxu0 %v8093
      %8739 = vmatprep.subr.bf16.mxu0 0
      %8740 = vmatpush1.bf16.msra.mxu0 %v8094
      %8741 = vmatprep.subr.bf16.mxu0 0
      %8742 = vmatpush1.bf16.msra.mxu0 %v8095
      %8743 = vmatprep.subr.bf16.mxu0 0
      %8744 = vmatpush1.bf16.msra.mxu0 %v8096
      %8745 = vmatprep.subr.bf16.mxu0 0
      %8746 = vmatpush1.bf16.msra.mxu0 %v8097
      %8747 = vmatprep.subr.bf16.mxu0 0
      %8748 = vmatpush1.bf16.msra.mxu0 %v8098
      %8749 = vmatprep.subr.bf16.mxu0 0
      %8750 = vmatpush1.bf16.msra.mxu0 %v8099
      %8751 = vmatprep.subr.bf16.mxu0 0
      %8752 = vmatpush1.bf16.msra.mxu0 %v8100
      %8753 = vmatprep.subr.bf16.mxu0 0
      %8754 = vmatpush1.bf16.msra.mxu0 %v8101
      %8755 = vmatprep.subr.bf16.mxu0 0
      %8756 = vmatpush1.bf16.msra.mxu0 %v8102
      %8757 = vmatprep.subr.bf16.mxu0 0
      %8758 = vmatpush1.bf16.msra.mxu0 %v8103
      %8759 = vmatprep.subr.bf16.mxu0 0
      %8760 = vmatpush1.bf16.msra.mxu0 %v8104
      %8761 = vmatprep.subr.bf16.mxu0 0
      %8762 = vmatpush1.bf16.msra.mxu0 %v8105
      %8763 = vmatprep.subr.bf16.mxu0 0
      %8764 = vmatpush1.bf16.msra.mxu0 %v8106
      %8765 = vmatprep.subr.bf16.mxu0 0
      %8766 = vmatpush1.bf16.msra.mxu0 %v8107
      %8767 = vmatprep.mubr.bf16.mxu0 %v6929
      %8768 = vmatmul.mubr.bf16.gmra.mrb[0].mxu0 %v6928
      %v8769 = vpop.f32.mrb[0].mxu0
      %v8770 = vadd.f32 %v8705, %v8769
      %v8771 = vpop.f32.mrb[0].mxu0
      %v8772 = vpop.f32.mrb[0].mxu0
      %v8773 = vadd.f32 %v8708, %v8772
      %v8774 = vpop.f32.mrb[0].mxu0
      %8775 = vmatprep.mubr.bf16.mxu0 %v6960
      %8776 = vmatmul.mubr.bf16.gmra.mrb[0].mxu0 %v6959
      %v8777 = vpop.f32.mrb[0].mxu0
      %v8778 = vadd.f32 %v8713, %v8777
      %v8779 = vpop.f32.mrb[0].mxu0
      %v8780 = vpop.f32.mrb[0].mxu0
      %v8781 = vadd.f32 %v8716, %v8780
      %v8782 = vpop.f32.mrb[0].mxu0
      %8783 = vmatprep.mubr.bf16.mxu0 %v6991
      %8784 = vmatmul.mubr.bf16.gmra.mrb[0].mxu0 %v6990
      %v8785 = vpop.f32.mrb[0].mxu0
      %v8786 = vadd.f32 %v8721, %v8785
      %v8787 = vpop.f32.mrb[0].mxu0
      %v8788 = vpop.f32.mrb[0].mxu0
      %v8789 = vadd.f32 %v8724, %v8788
      %v8790 = vpop.f32.mrb[0].mxu0
      %8791 = vmatprep.mubr.bf16.mxu0 %v7022
      %8792 = vmatmul.mubr.bf16.gmra.mrb[0].mxu0 %v7021
      %v8793 = vpop.f32.mrb[0].mxu0
      %v8794 = vadd.f32 %v8729, %v8793
      %v8795 = vpop.f32.mrb[0].mxu0
      %v8796 = vpop.f32.mrb[0].mxu0
      %v8797 = vadd.f32 %v8732, %v8796
      %v8798 = vpop.f32.mrb[0].mxu0
      %8799 = vdwg.mxu0
      %8800 = vmatprep.subr.bf16.mxu0 0
      %8801 = vmatpush1.bf16.msra.mxu0 %v8108
      %8802 = vmatprep.subr.bf16.mxu0 0
      %8803 = vmatpush1.bf16.msra.mxu0 %v8109
      %8804 = vmatprep.subr.bf16.mxu0 0
      %8805 = vmatpush1.bf16.msra.mxu0 %v8110
      %8806 = vmatprep.subr.bf16.mxu0 0
      %8807 = vmatpush1.bf16.msra.mxu0 %v8111
      %8808 = vmatprep.subr.bf16.mxu0 0
      %8809 = vmatpush1.bf16.msra.mxu0 %v8112
      %8810 = vmatprep.subr.bf16.mxu0 0
      %8811 = vmatpush1.bf16.msra.mxu0 %v8113
      %8812 = vmatprep.subr.bf16.mxu0 0
      %8813 = vmatpush1.bf16.msra.mxu0 %v8114
      %8814 = vmatprep.subr.bf16.mxu0 0
      %8815 = vmatpush1.bf16.msra.mxu0 %v8115
      %8816 = vmatprep.subr.bf16.mxu0 0
      %8817 = vmatpush1.bf16.msra.mxu0 %v8116
      %8818 = vmatprep.subr.bf16.mxu0 0
      %8819 = vmatpush1.bf16.msra.mxu0 %v8117
      %8820 = vmatprep.subr.bf16.mxu0 0
      %8821 = vmatpush1.bf16.msra.mxu0 %v8118
      %8822 = vmatprep.subr.bf16.mxu0 0
      %8823 = vmatpush1.bf16.msra.mxu0 %v8119
      %8824 = vmatprep.subr.bf16.mxu0 0
      %8825 = vmatpush1.bf16.msra.mxu0 %v8120
      %8826 = vmatprep.subr.bf16.mxu0 0
      %8827 = vmatpush1.bf16.msra.mxu0 %v8121
      %8828 = vmatprep.subr.bf16.mxu0 0
      %8829 = vmatpush1.bf16.msra.mxu0 %v8122
      %8830 = vmatprep.subr.bf16.mxu0 0
      %8831 = vmatpush1.bf16.msra.mxu0 %v8123
      %8832 = vmatprep.mubr.bf16.mxu0 %v6931
      %8833 = vmatmul.mubr.bf16.gmra.mrb[0].mxu0 %v6930
      %v8834 = vpop.f32.mrb[0].mxu0
      %v8835 = vadd.f32 %v8770, %v8834
      %v8836 = vpop.f32.mrb[0].mxu0
      %v8837 = vpop.f32.mrb[0].mxu0
      %v8838 = vadd.f32 %v8773, %v8837
      %v8839 = vpop.f32.mrb[0].mxu0
      %8840 = vmatprep.mubr.bf16.mxu0 %v6962
      %8841 = vmatmul.mubr.bf16.gmra.mrb[0].mxu0 %v6961
      %v8842 = vpop.f32.mrb[0].mxu0
      %v8843 = vadd.f32 %v8778, %v8842
      %v8844 = vpop.f32.mrb[0].mxu0
      %v8845 = vpop.f32.mrb[0].mxu0
      %v8846 = vadd.f32 %v8781, %v8845
      %v8847 = vpop.f32.mrb[0].mxu0
      %8848 = vmatprep.mubr.bf16.mxu0 %v6993
      %8849 = vmatmul.mubr.bf16.gmra.mrb[0].mxu0 %v6992
      %v8850 = vpop.f32.mrb[0].mxu0
      %v8851 = vadd.f32 %v8786, %v8850
      %v8852 = vpop.f32.mrb[0].mxu0
      %v8853 = vpop.f32.mrb[0].mxu0
      %v8854 = vadd.f32 %v8789, %v8853
      %v8855 = vpop.f32.mrb[0].mxu0
      %8856 = vmatprep.mubr.bf16.mxu0 %v7024
      %8857 = vmatmul.mubr.bf16.gmra.mrb[0].mxu0 %v7023
      %v8858 = vpop.f32.mrb[0].mxu0
      %v8859 = vadd.f32 %v8794, %v8858
      %v8860 = vpop.f32.mrb[0].mxu0
      %v8861 = vpop.f32.mrb[0].mxu0
      %v8862 = vadd.f32 %v8797, %v8861
      %v8863 = vpop.f32.mrb[0].mxu0
      %8864 = vdwg.mxu0
      %8865 = vmatprep.subr.bf16.mxu0 0
      %8866 = vmatpush1.bf16.msra.mxu0 %v8124
      %8867 = vmatprep.subr.bf16.mxu0 0
      %8868 = vmatpush1.bf16.msra.mxu0 %v8125
      %8869 = vmatprep.subr.bf16.mxu0 0
      %8870 = vmatpush1.bf16.msra.mxu0 %v8126
      %8871 = vmatprep.subr.bf16.mxu0 0
      %8872 = vmatpush1.bf16.msra.mxu0 %v8127
      %8873 = vmatprep.subr.bf16.mxu0 0
      %8874 = vmatpush1.bf16.msra.mxu0 %v8128
      %8875 = vmatprep.subr.bf16.mxu0 0
      %8876 = vmatpush1.bf16.msra.mxu0 %v8129
      %8877 = vmatprep.subr.bf16.mxu0 0
      %8878 = vmatpush1.bf16.msra.mxu0 %v8130
      %8879 = vmatprep.subr.bf16.mxu0 0
      %8880 = vmatpush1.bf16.msra.mxu0 %v8131
      %8881 = vmatprep.subr.bf16.mxu0 0
      %8882 = vmatpush1.bf16.msra.mxu0 %v8132
      %8883 = vmatprep.subr.bf16.mxu0 0
      %8884 = vmatpush1.bf16.msra.mxu0 %v8133
      %8885 = vmatprep.subr.bf16.mxu0 0
      %8886 = vmatpush1.bf16.msra.mxu0 %v8134
      %8887 = vmatprep.subr.bf16.mxu0 0
      %8888 = vmatpush1.bf16.msra.mxu0 %v8135
      %8889 = vmatprep.subr.bf16.mxu0 0
      %8890 = vmatpush1.bf16.msra.mxu0 %v8136
      %8891 = vmatprep.subr.bf16.mxu0 0
      %8892 = vmatpush1.bf16.msra.mxu0 %v8137
      %8893 = vmatprep.subr.bf16.mxu0 0
      %8894 = vmatpush1.bf16.msra.mxu0 %v8138
      %8895 = vmatprep.subr.bf16.mxu0 0
      %8896 = vmatpush1.bf16.msra.mxu0 %v8139
      %8897 = vmatprep.mubr.bf16.mxu0 %v6933
      %8898 = vmatmul.mubr.bf16.gmra.mrb[0].mxu0 %v6932
      %v8899 = vpop.f32.mrb[0].mxu0
      %v8900 = vadd.f32 %v8835, %v8899
      %v8901 = vpop.f32.mrb[0].mxu0
      %v8902 = vpop.f32.mrb[0].mxu0
      %v8903 = vadd.f32 %v8838, %v8902
      %v8904 = vpop.f32.mrb[0].mxu0
      %8905 = vmatprep.mubr.bf16.mxu0 %v6964
      %8906 = vmatmul.mubr.bf16.gmra.mrb[0].mxu0 %v6963
      %v8907 = vpop.f32.mrb[0].mxu0
      %v8908 = vadd.f32 %v8843, %v8907
      %v8909 = vpop.f32.mrb[0].mxu0
      %v8910 = vpop.f32.mrb[0].mxu0
      %v8911 = vadd.f32 %v8846, %v8910
      %v8912 = vpop.f32.mrb[0].mxu0
      %8913 = vmatprep.mubr.bf16.mxu0 %v6995
      %8914 = vmatmul.mubr.bf16.gmra.mrb[0].mxu0 %v6994
      %v8915 = vpop.f32.mrb[0].mxu0
      %v8916 = vadd.f32 %v8851, %v8915
      %v8917 = vpop.f32.mrb[0].mxu0
      %v8918 = vpop.f32.mrb[0].mxu0
      %v8919 = vadd.f32 %v8854, %v8918
      %v8920 = vpop.f32.mrb[0].mxu0
      %8921 = vmatprep.mubr.bf16.mxu0 %v7026
      %8922 = vmatmul.mubr.bf16.gmra.mrb[0].mxu0 %v7025
      %v8923 = vpop.f32.mrb[0].mxu0
      %v8924 = vadd.f32 %v8859, %v8923
      %v8925 = vpop.f32.mrb[0].mxu0
      %v8926 = vpop.f32.mrb[0].mxu0
      %v8927 = vadd.f32 %v8862, %v8926
      %v8928 = vpop.f32.mrb[0].mxu0
      %8929 = vdwg.mxu0
      %8930 = vmatprep.subr.bf16.mxu0 0
      %8931 = vmatpush1.bf16.msra.mxu0 %v8140
      %8932 = vmatprep.subr.bf16.mxu0 0
      %8933 = vmatpush1.bf16.msra.mxu0 %v8141
      %8934 = vmatprep.subr.bf16.mxu0 0
      %8935 = vmatpush1.bf16.msra.mxu0 %v8142
      %8936 = vmatprep.subr.bf16.mxu0 0
      %8937 = vmatpush1.bf16.msra.mxu0 %v8143
      %8938 = vmatprep.subr.bf16.mxu0 0
      %8939 = vmatpush1.bf16.msra.mxu0 %v8144
      %8940 = vmatprep.subr.bf16.mxu0 0
      %8941 = vmatpush1.bf16.msra.mxu0 %v8145
      %8942 = vmatprep.subr.bf16.mxu0 0
      %8943 = vmatpush1.bf16.msra.mxu0 %v8146
      %8944 = vmatprep.subr.bf16.mxu0 0
      %8945 = vmatpush1.bf16.msra.mxu0 %v8147
      %8946 = vmatprep.subr.bf16.mxu0 0
      %8947 = vmatpush1.bf16.msra.mxu0 %v8148
      %8948 = vmatprep.subr.bf16.mxu0 0
      %8949 = vmatpush1.bf16.msra.mxu0 %v8149
      %8950 = vmatprep.subr.bf16.mxu0 0
      %8951 = vmatpush1.bf16.msra.mxu0 %v8150
      %8952 = vmatprep.subr.bf16.mxu0 0
      %8953 = vmatpush1.bf16.msra.mxu0 %v8151
      %8954 = vmatprep.subr.bf16.mxu0 0
      %8955 = vmatpush1.bf16.msra.mxu0 %v8152
      %8956 = vmatprep.subr.bf16.mxu0 0
      %8957 = vmatpush1.bf16.msra.mxu0 %v8153
      %8958 = vmatprep.subr.bf16.mxu0 0
      %8959 = vmatpush1.bf16.msra.mxu0 %v8154
      %8960 = vmatprep.subr.bf16.mxu0 0
      %8961 = vmatpush1.bf16.msra.mxu0 %v8155
      %8962 = vmatprep.mubr.bf16.mxu0 %v6935
      %8963 = vmatmul.mubr.bf16.gmra.mrb[0].mxu0 %v6934
      %v8964 = vpop.f32.mrb[0].mxu0
      %v8965 = vadd.f32 %v8900, %v8964
      %v8966 = vpop.f32.mrb[0].mxu0
      %v8967 = vpop.f32.mrb[0].mxu0
      %v8968 = vadd.f32 %v8903, %v8967
      %v8969 = vpop.f32.mrb[0].mxu0
      %8970 = vmatprep.mubr.bf16.mxu0 %v6966
      %8971 = vmatmul.mubr.bf16.gmra.mrb[0].mxu0 %v6965
      %v8972 = vpop.f32.mrb[0].mxu0
      %v8973 = vadd.f32 %v8908, %v8972
      %v8974 = vpop.f32.mrb[0].mxu0
      %v8975 = vpop.f32.mrb[0].mxu0
      %v8976 = vadd.f32 %v8911, %v8975
      %v8977 = vpop.f32.mrb[0].mxu0
      %8978 = vmatprep.mubr.bf16.mxu0 %v6997
      %8979 = vmatmul.mubr.bf16.gmra.mrb[0].mxu0 %v6996
      %v8980 = vpop.f32.mrb[0].mxu0
      %v8981 = vadd.f32 %v8916, %v8980
      %v8982 = vpop.f32.mrb[0].mxu0
      %v8983 = vpop.f32.mrb[0].mxu0
      %v8984 = vadd.f32 %v8919, %v8983
      %v8985 = vpop.f32.mrb[0].mxu0
      %8986 = vmatprep.mubr.bf16.mxu0 %v7028
      %8987 = vmatmul.mubr.bf16.gmra.mrb[0].mxu0 %v7027
      %v8988 = vpop.f32.mrb[0].mxu0
      %v8989 = vadd.f32 %v8924, %v8988
      %v8990 = vpop.f32.mrb[0].mxu0
      %v8991 = vpop.f32.mrb[0].mxu0
      %v8992 = vadd.f32 %v8927, %v8991
      %v8993 = vpop.f32.mrb[0].mxu0
      %8994 = vdwg.mxu0
      %8995 = vmatprep.subr.bf16.mxu0 0
      %8996 = vmatpush1.bf16.msra.mxu0 %v8156
      %8997 = vmatprep.subr.bf16.mxu0 0
      %8998 = vmatpush1.bf16.msra.mxu0 %v8157
      %8999 = vmatprep.subr.bf16.mxu0 0
      %9000 = vmatpush1.bf16.msra.mxu0 %v8158
      %9001 = vmatprep.subr.bf16.mxu0 0
      %9002 = vmatpush1.bf16.msra.mxu0 %v8159
      %9003 = vmatprep.subr.bf16.mxu0 0
      %9004 = vmatpush1.bf16.msra.mxu0 %v8160
      %9005 = vmatprep.subr.bf16.mxu0 0
      %9006 = vmatpush1.bf16.msra.mxu0 %v8161
      %9007 = vmatprep.subr.bf16.mxu0 0
      %9008 = vmatpush1.bf16.msra.mxu0 %v8162
      %9009 = vmatprep.subr.bf16.mxu0 0
      %9010 = vmatpush1.bf16.msra.mxu0 %v8163
      %9011 = vmatprep.subr.bf16.mxu0 0
      %9012 = vmatpush1.bf16.msra.mxu0 %v8164
      %9013 = vmatprep.subr.bf16.mxu0 0
      %9014 = vmatpush1.bf16.msra.mxu0 %v8165
      %9015 = vmatprep.subr.bf16.mxu0 0
      %9016 = vmatpush1.bf16.msra.mxu0 %v8166
      %9017 = vmatprep.subr.bf16.mxu0 0
      %9018 = vmatpush1.bf16.msra.mxu0 %v8167
      %9019 = vmatprep.subr.bf16.mxu0 0
      %9020 = vmatpush1.bf16.msra.mxu0 %v8168
      %9021 = vmatprep.subr.bf16.mxu0 0
      %9022 = vmatpush1.bf16.msra.mxu0 %v8169
      %9023 = vmatprep.subr.bf16.mxu0 0
      %9024 = vmatpush1.bf16.msra.mxu0 %v8170
      %9025 = vmatprep.subr.bf16.mxu0 0
      %9026 = vmatpush1.bf16.msra.mxu0 %v8171
      %9027 = vmatprep.mubr.bf16.mxu0 %v6937
      %9028 = vmatmul.mubr.bf16.gmra.mrb[0].mxu0 %v6936
      %v9029 = vpop.f32.mrb[0].mxu0
      %v9030 = vadd.f32 %v8965, %v9029
      %v9031 = vpop.f32.mrb[0].mxu0
      %v9032 = vpop.f32.mrb[0].mxu0
      %v9033 = vadd.f32 %v8968, %v9032
      %v9034 = vpop.f32.mrb[0].mxu0
      %9035 = vmatprep.mubr.bf16.mxu0 %v6968
      %9036 = vmatmul.mubr.bf16.gmra.mrb[0].mxu0 %v6967
      %v9037 = vpop.f32.mrb[0].mxu0
      %v9038 = vadd.f32 %v8973, %v9037
      %v9039 = vpop.f32.mrb[0].mxu0
      %v9040 = vpop.f32.mrb[0].mxu0
      %v9041 = vadd.f32 %v8976, %v9040
      %v9042 = vpop.f32.mrb[0].mxu0
      %9043 = vmatprep.mubr.bf16.mxu0 %v6999
      %9044 = vmatmul.mubr.bf16.gmra.mrb[0].mxu0 %v6998
      %v9045 = vpop.f32.mrb[0].mxu0
      %v9046 = vadd.f32 %v8981, %v9045
      %v9047 = vpop.f32.mrb[0].mxu0
      %v9048 = vpop.f32.mrb[0].mxu0
      %v9049 = vadd.f32 %v8984, %v9048
      %v9050 = vpop.f32.mrb[0].mxu0
      %9051 = vmatprep.mubr.bf16.mxu0 %v7030
      %9052 = vmatmul.mubr.bf16.gmra.mrb[0].mxu0 %v7029
      %v9053 = vpop.f32.mrb[0].mxu0
      %v9054 = vadd.f32 %v8989, %v9053
      %v9055 = vpop.f32.mrb[0].mxu0
      %v9056 = vpop.f32.mrb[0].mxu0
      %v9057 = vadd.f32 %v8992, %v9056
      %v9058 = vpop.f32.mrb[0].mxu0
      %9059 = vdwg.mxu0
      %9060 = vmatprep.subr.bf16.mxu0 0
      %9061 = vmatpush1.bf16.msra.mxu0 %v8172
      %9062 = vmatprep.subr.bf16.mxu0 0
      %9063 = vmatpush1.bf16.msra.mxu0 %v8173
      %9064 = vmatprep.subr.bf16.mxu0 0
      %9065 = vmatpush1.bf16.msra.mxu0 %v8174
      %9066 = vmatprep.subr.bf16.mxu0 0
      %9067 = vmatpush1.bf16.msra.mxu0 %v8175
      %9068 = vmatprep.subr.bf16.mxu0 0
      %9069 = vmatpush1.bf16.msra.mxu0 %v8176
      %9070 = vmatprep.subr.bf16.mxu0 0
      %9071 = vmatpush1.bf16.msra.mxu0 %v8177
      %9072 = vmatprep.subr.bf16.mxu0 0
      %9073 = vmatpush1.bf16.msra.mxu0 %v8178
      %9074 = vmatprep.subr.bf16.mxu0 0
      %9075 = vmatpush1.bf16.msra.mxu0 %v8179
      %9076 = vmatprep.subr.bf16.mxu0 0
      %9077 = vmatpush1.bf16.msra.mxu0 %v8180
      %9078 = vmatprep.subr.bf16.mxu0 0
      %9079 = vmatpush1.bf16.msra.mxu0 %v8181
      %9080 = vmatprep.subr.bf16.mxu0 0
      %9081 = vmatpush1.bf16.msra.mxu0 %v8182
      %9082 = vmatprep.subr.bf16.mxu0 0
      %9083 = vmatpush1.bf16.msra.mxu0 %v8183
      %9084 = vmatprep.subr.bf16.mxu0 0
      %9085 = vmatpush1.bf16.msra.mxu0 %v8184
      %9086 = vmatprep.subr.bf16.mxu0 0
      %9087 = vmatpush1.bf16.msra.mxu0 %v8185
      %9088 = vmatprep.subr.bf16.mxu0 0
      %9089 = vmatpush1.bf16.msra.mxu0 %v8186
      %9090 = vmatprep.subr.bf16.mxu0 0
      %9091 = vmatpush1.bf16.msra.mxu0 %v8187
      %9092 = vmatprep.mubr.bf16.mxu0 %v6939
      %9093 = vmatmul.mubr.bf16.gmra.mrb[0].mxu0 %v6938
      %v9094 = vpop.f32.mrb[0].mxu0
      %v9095 = vadd.f32 %v9030, %v9094
      %v9096 = vpop.f32.mrb[0].mxu0
      %v9097 = vpop.f32.mrb[0].mxu0
      %v9098 = vadd.f32 %v9033, %v9097
      %v9099 = vpop.f32.mrb[0].mxu0
      %9100 = vmatprep.mubr.bf16.mxu0 %v6970
      %9101 = vmatmul.mubr.bf16.gmra.mrb[0].mxu0 %v6969
      %v9102 = vpop.f32.mrb[0].mxu0
      %v9103 = vadd.f32 %v9038, %v9102
      %v9104 = vpop.f32.mrb[0].mxu0
      %v9105 = vpop.f32.mrb[0].mxu0
      %v9106 = vadd.f32 %v9041, %v9105
      %v9107 = vpop.f32.mrb[0].mxu0
      %9108 = vmatprep.mubr.bf16.mxu0 %v7001
      %9109 = vmatmul.mubr.bf16.gmra.mrb[0].mxu0 %v7000
      %v9110 = vpop.f32.mrb[0].mxu0
      %v9111 = vadd.f32 %v9046, %v9110
      %v9112 = vpop.f32.mrb[0].mxu0
      %v9113 = vpop.f32.mrb[0].mxu0
      %v9114 = vadd.f32 %v9049, %v9113
      %v9115 = vpop.f32.mrb[0].mxu0
      %9116 = vmatprep.mubr.bf16.mxu0 %v7032
      %9117 = vmatmul.mubr.bf16.gmra.mrb[0].mxu0 %v7031
      %v9118 = vpop.f32.mrb[0].mxu0
      %v9119 = vadd.f32 %v9054, %v9118
      %v9120 = vpop.f32.mrb[0].mxu0
      %v9121 = vpop.f32.mrb[0].mxu0
      %v9122 = vadd.f32 %v9057, %v9121
      %v9123 = vpop.f32.mrb[0].mxu0
      %9124 = vdwg.mxu0
      %9125 = vmatprep.subr.bf16.mxu0 0
      %9126 = vmatpush1.bf16.msra.mxu0 %v8188
      %9127 = vmatprep.subr.bf16.mxu0 0
      %9128 = vmatpush1.bf16.msra.mxu0 %v8189
      %9129 = vmatprep.subr.bf16.mxu0 0
      %9130 = vmatpush1.bf16.msra.mxu0 %v8190
      %9131 = vmatprep.subr.bf16.mxu0 0
      %9132 = vmatpush1.bf16.msra.mxu0 %v8191
      %9133 = vmatprep.subr.bf16.mxu0 0
      %9134 = vmatpush1.bf16.msra.mxu0 %v8192
      %9135 = vmatprep.subr.bf16.mxu0 0
      %9136 = vmatpush1.bf16.msra.mxu0 %v8193
      %9137 = vmatprep.subr.bf16.mxu0 0
      %9138 = vmatpush1.bf16.msra.mxu0 %v8194
      %9139 = vmatprep.subr.bf16.mxu0 0
      %9140 = vmatpush1.bf16.msra.mxu0 %v8195
      %9141 = vmatprep.subr.bf16.mxu0 0
      %9142 = vmatpush1.bf16.msra.mxu0 %v8196
      %9143 = vmatprep.subr.bf16.mxu0 0
      %9144 = vmatpush1.bf16.msra.mxu0 %v8197
      %9145 = vmatprep.subr.bf16.mxu0 0
      %9146 = vmatpush1.bf16.msra.mxu0 %v8198
      %9147 = vmatprep.subr.bf16.mxu0 0
      %9148 = vmatpush1.bf16.msra.mxu0 %v8199
      %9149 = vmatprep.subr.bf16.mxu0 0
      %9150 = vmatpush1.bf16.msra.mxu0 %v8200
      %9151 = vmatprep.subr.bf16.mxu0 0
      %9152 = vmatpush1.bf16.msra.mxu0 %v8201
      %9153 = vmatprep.subr.bf16.mxu0 0
      %9154 = vmatpush1.bf16.msra.mxu0 %v8202
      %9155 = vmatprep.subr.bf16.mxu0 0
      %9156 = vmatpush1.bf16.msra.mxu0 %v8203
      %9157 = vmatprep.mubr.bf16.mxu0 %v6941
      %9158 = vmatmul.mubr.bf16.gmra.mrb[0].mxu0 %v6940
      %v9159 = vpop.f32.mrb[0].mxu0
      %v9160 = vadd.f32 %v9095, %v9159
      %v9161 = vpop.f32.mrb[0].mxu0
      %v9162 = vpop.f32.mrb[0].mxu0
      %v9163 = vadd.f32 %v9098, %v9162
      %v9164 = vpop.f32.mrb[0].mxu0
      %9165 = vmatprep.mubr.bf16.mxu0 %v6972
      %9166 = vmatmul.mubr.bf16.gmra.mrb[0].mxu0 %v6971
      %v9167 = vpop.f32.mrb[0].mxu0
      %v9168 = vadd.f32 %v9103, %v9167
      %v9169 = vpop.f32.mrb[0].mxu0
      %v9170 = vpop.f32.mrb[0].mxu0
      %v9171 = vadd.f32 %v9106, %v9170
      %v9172 = vpop.f32.mrb[0].mxu0
      %9173 = vmatprep.mubr.bf16.mxu0 %v7003
      %9174 = vmatmul.mubr.bf16.gmra.mrb[0].mxu0 %v7002
      %v9175 = vpop.f32.mrb[0].mxu0
      %v9176 = vadd.f32 %v9111, %v9175
      %v9177 = vpop.f32.mrb[0].mxu0
      %v9178 = vpop.f32.mrb[0].mxu0
      %v9179 = vadd.f32 %v9114, %v9178
      %v9180 = vpop.f32.mrb[0].mxu0
      %9181 = vmatprep.mubr.bf16.mxu0 %v7034
      %9182 = vmatmul.mubr.bf16.gmra.mrb[0].mxu0 %v7033
      %v9183 = vpop.f32.mrb[0].mxu0
      %v9184 = vadd.f32 %v9119, %v9183
      %v9185 = vpop.f32.mrb[0].mxu0
      %v9186 = vpop.f32.mrb[0].mxu0
      %v9187 = vadd.f32 %v9122, %v9186
      %v9188 = vpop.f32.mrb[0].mxu0
      %9189 = vdwg.mxu0
      %9190 = vmatprep.subr.bf16.mxu0 0
      %9191 = vmatpush1.bf16.msra.mxu0 %v8204
      %9192 = vmatprep.subr.bf16.mxu0 0
      %9193 = vmatpush1.bf16.msra.mxu0 %v8205
      %9194 = vmatprep.subr.bf16.mxu0 0
      %9195 = vmatpush1.bf16.msra.mxu0 %v8206
      %9196 = vmatprep.subr.bf16.mxu0 0
      %9197 = vmatpush1.bf16.msra.mxu0 %v8207
      %9198 = vmatprep.subr.bf16.mxu0 0
      %9199 = vmatpush1.bf16.msra.mxu0 %v8208
      %9200 = vmatprep.subr.bf16.mxu0 0
      %9201 = vmatpush1.bf16.msra.mxu0 %v8209
      %9202 = vmatprep.subr.bf16.mxu0 0
      %9203 = vmatpush1.bf16.msra.mxu0 %v8210
      %9204 = vmatprep.subr.bf16.mxu0 0
      %9205 = vmatpush1.bf16.msra.mxu0 %v8211
      %9206 = vmatprep.subr.bf16.mxu0 0
      %9207 = vmatpush1.bf16.msra.mxu0 %v8212
      %9208 = vmatprep.subr.bf16.mxu0 0
      %9209 = vmatpush1.bf16.msra.mxu0 %v8213
      %9210 = vmatprep.subr.bf16.mxu0 0
      %9211 = vmatpush1.bf16.msra.mxu0 %v8214
      %9212 = vmatprep.subr.bf16.mxu0 0
      %9213 = vmatpush1.bf16.msra.mxu0 %v8215
      %9214 = vmatprep.subr.bf16.mxu0 0
      %9215 = vmatpush1.bf16.msra.mxu0 %v8216
      %9216 = vmatprep.subr.bf16.mxu0 0
      %9217 = vmatpush1.bf16.msra.mxu0 %v8217
      %9218 = vmatprep.subr.bf16.mxu0 0
      %9219 = vmatpush1.bf16.msra.mxu0 %v8218
      %9220 = vmatprep.subr.bf16.mxu0 0
      %9221 = vmatpush1.bf16.msra.mxu0 %v8219
      %9222 = vmatprep.mubr.bf16.mxu0 %v6943
      %9223 = vmatmul.mubr.bf16.gmra.mrb[0].mxu0 %v6942
      %v9224 = vpop.f32.mrb[0].mxu0
      %v9225 = vadd.f32 %v9160, %v9224
      %v9226 = vpop.f32.mrb[0].mxu0
      %v9227 = vpop.f32.mrb[0].mxu0
      %v9228 = vadd.f32 %v9163, %v9227
      %v9229 = vpop.f32.mrb[0].mxu0
      %9230 = vmatprep.mubr.bf16.mxu0 %v6974
      %9231 = vmatmul.mubr.bf16.gmra.mrb[0].mxu0 %v6973
      %v9232 = vpop.f32.mrb[0].mxu0
      %v9233 = vadd.f32 %v9168, %v9232
      %v9234 = vpop.f32.mrb[0].mxu0
      %v9235 = vpop.f32.mrb[0].mxu0
      %v9236 = vadd.f32 %v9171, %v9235
      %v9237 = vpop.f32.mrb[0].mxu0
      %9238 = vmatprep.mubr.bf16.mxu0 %v7005
      %9239 = vmatmul.mubr.bf16.gmra.mrb[0].mxu0 %v7004
      %v9240 = vpop.f32.mrb[0].mxu0
      %v9241 = vadd.f32 %v9176, %v9240
      %v9242 = vpop.f32.mrb[0].mxu0
      %v9243 = vpop.f32.mrb[0].mxu0
      %v9244 = vadd.f32 %v9179, %v9243
      %v9245 = vpop.f32.mrb[0].mxu0
      %9246 = vmatprep.mubr.bf16.mxu0 %v7036
      %9247 = vmatmul.mubr.bf16.gmra.mrb[0].mxu0 %v7035
      %v9248 = vpop.f32.mrb[0].mxu0
      %v9249 = vadd.f32 %v9184, %v9248
      %v9250 = vpop.f32.mrb[0].mxu0
      %v9251 = vpop.f32.mrb[0].mxu0
      %v9252 = vadd.f32 %v9187, %v9251
      %v9253 = vpop.f32.mrb[0].mxu0
      %9254 = vdwg.mxu0
      %9255 = vmatprep.subr.bf16.mxu0 0
      %9256 = vmatpush1.bf16.msra.mxu0 %v8220
      %9257 = vmatprep.subr.bf16.mxu0 0
      %9258 = vmatpush1.bf16.msra.mxu0 %v8221
      %9259 = vmatprep.subr.bf16.mxu0 0
      %9260 = vmatpush1.bf16.msra.mxu0 %v8222
      %9261 = vmatprep.subr.bf16.mxu0 0
      %9262 = vmatpush1.bf16.msra.mxu0 %v8223
      %9263 = vmatprep.subr.bf16.mxu0 0
      %9264 = vmatpush1.bf16.msra.mxu0 %v8224
      %9265 = vmatprep.subr.bf16.mxu0 0
      %9266 = vmatpush1.bf16.msra.mxu0 %v8225
      %9267 = vmatprep.subr.bf16.mxu0 0
      %9268 = vmatpush1.bf16.msra.mxu0 %v8226
      %9269 = vmatprep.subr.bf16.mxu0 0
      %9270 = vmatpush1.bf16.msra.mxu0 %v8227
      %9271 = vmatprep.subr.bf16.mxu0 0
      %9272 = vmatpush1.bf16.msra.mxu0 %v8228
      %9273 = vmatprep.subr.bf16.mxu0 0
      %9274 = vmatpush1.bf16.msra.mxu0 %v8229
      %9275 = vmatprep.subr.bf16.mxu0 0
      %9276 = vmatpush1.bf16.msra.mxu0 %v8230
      %9277 = vmatprep.subr.bf16.mxu0 0
      %9278 = vmatpush1.bf16.msra.mxu0 %v8231
      %9279 = vmatprep.subr.bf16.mxu0 0
      %9280 = vmatpush1.bf16.msra.mxu0 %v8232
      %9281 = vmatprep.subr.bf16.mxu0 0
      %9282 = vmatpush1.bf16.msra.mxu0 %v8233
      %9283 = vmatprep.subr.bf16.mxu0 0
      %9284 = vmatpush1.bf16.msra.mxu0 %v8234
      %9285 = vmatprep.subr.bf16.mxu0 0
      %9286 = vmatpush1.bf16.msra.mxu0 %v8235
      %9287 = vmatprep.mubr.bf16.mxu0 %v6945
      %9288 = vmatmul.mubr.bf16.gmra.mrb[0].mxu0 %v6944
      %v9289 = vpop.f32.mrb[0].mxu0
      %v9290 = vadd.f32 %v9225, %v9289
      %v9291 = vpop.f32.mrb[0].mxu0
      %v9292 = vpop.f32.mrb[0].mxu0
      %v9293 = vadd.f32 %v9228, %v9292
      %v9294 = vpop.f32.mrb[0].mxu0
      %9295 = vmatprep.mubr.bf16.mxu0 %v6976
      %9296 = vmatmul.mubr.bf16.gmra.mrb[0].mxu0 %v6975
      %v9297 = vpop.f32.mrb[0].mxu0
      %v9298 = vadd.f32 %v9233, %v9297
      %v9299 = vpop.f32.mrb[0].mxu0
      %v9300 = vpop.f32.mrb[0].mxu0
      %v9301 = vadd.f32 %v9236, %v9300
      %v9302 = vpop.f32.mrb[0].mxu0
      %9303 = vmatprep.mubr.bf16.mxu0 %v7007
      %9304 = vmatmul.mubr.bf16.gmra.mrb[0].mxu0 %v7006
      %v9305 = vpop.f32.mrb[0].mxu0
      %v9306 = vadd.f32 %v9241, %v9305
      %v9307 = vpop.f32.mrb[0].mxu0
      %v9308 = vpop.f32.mrb[0].mxu0
      %v9309 = vadd.f32 %v9244, %v9308
      %v9310 = vpop.f32.mrb[0].mxu0
      %9311 = vmatprep.mubr.bf16.mxu0 %v7038
      %9312 = vmatmul.mubr.bf16.gmra.mrb[0].mxu0 %v7037
      %v9313 = vpop.f32.mrb[0].mxu0
      %v9314 = vadd.f32 %v9249, %v9313
      %v9315 = vpop.f32.mrb[0].mxu0
      %v9316 = vpop.f32.mrb[0].mxu0
      %v9317 = vadd.f32 %v9252, %v9316
      %v9318 = vpop.f32.mrb[0].mxu0
      %9319 = vdwg.mxu0
      %9320 = vmatprep.subr.bf16.mxu0 0
      %9321 = vmatpush1.bf16.msra.mxu0 %v8236
      %9322 = vmatprep.subr.bf16.mxu0 0
      %9323 = vmatpush1.bf16.msra.mxu0 %v8237
      %9324 = vmatprep.subr.bf16.mxu0 0
      %9325 = vmatpush1.bf16.msra.mxu0 %v8238
      %9326 = vmatprep.subr.bf16.mxu0 0
      %9327 = vmatpush1.bf16.msra.mxu0 %v8239
      %9328 = vmatprep.subr.bf16.mxu0 0
      %9329 = vmatpush1.bf16.msra.mxu0 %v8240
      %9330 = vmatprep.subr.bf16.mxu0 0
      %9331 = vmatpush1.bf16.msra.mxu0 %v8241
      %9332 = vmatprep.subr.bf16.mxu0 0
      %9333 = vmatpush1.bf16.msra.mxu0 %v8242
      %9334 = vmatprep.subr.bf16.mxu0 0
      %9335 = vmatpush1.bf16.msra.mxu0 %v8243
      %9336 = vmatprep.subr.bf16.mxu0 0
      %9337 = vmatpush1.bf16.msra.mxu0 %v8244
      %9338 = vmatprep.subr.bf16.mxu0 0
      %9339 = vmatpush1.bf16.msra.mxu0 %v8245
      %9340 = vmatprep.subr.bf16.mxu0 0
      %9341 = vmatpush1.bf16.msra.mxu0 %v8246
      %9342 = vmatprep.subr.bf16.mxu0 0
      %9343 = vmatpush1.bf16.msra.mxu0 %v8247
      %9344 = vmatprep.subr.bf16.mxu0 0
      %9345 = vmatpush1.bf16.msra.mxu0 %v8248
      %9346 = vmatprep.subr.bf16.mxu0 0
      %9347 = vmatpush1.bf16.msra.mxu0 %v8249
      %9348 = vmatprep.subr.bf16.mxu0 0
      %9349 = vmatpush1.bf16.msra.mxu0 %v8250
      %9350 = vmatprep.subr.bf16.mxu0 0
      %9351 = vmatpush1.bf16.msra.mxu0 %v8251
      %9352 = vmatprep.mubr.bf16.mxu0 %v6947
      %9353 = vmatmul.mubr.bf16.gmra.mrb[0].mxu0 %v6946
      %v9354 = vpop.f32.mrb[0].mxu0
      %v9355 = vadd.f32 %v9290, %v9354
      %v9356 = vpop.f32.mrb[0].mxu0
      %v9357 = vpop.f32.mrb[0].mxu0
      %v9358 = vadd.f32 %v9293, %v9357
      %v9359 = vpop.f32.mrb[0].mxu0
      %9360 = vmatprep.mubr.bf16.mxu0 %v6978
      %9361 = vmatmul.mubr.bf16.gmra.mrb[0].mxu0 %v6977
      %v9362 = vpop.f32.mrb[0].mxu0
      %v9363 = vadd.f32 %v9298, %v9362
      %v9364 = vpop.f32.mrb[0].mxu0
      %v9365 = vpop.f32.mrb[0].mxu0
      %v9366 = vadd.f32 %v9301, %v9365
      %v9367 = vpop.f32.mrb[0].mxu0
      %9368 = vmatprep.mubr.bf16.mxu0 %v7009
      %9369 = vmatmul.mubr.bf16.gmra.mrb[0].mxu0 %v7008
      %v9370 = vpop.f32.mrb[0].mxu0
      %v9371 = vadd.f32 %v9306, %v9370
      %v9372 = vpop.f32.mrb[0].mxu0
      %v9373 = vpop.f32.mrb[0].mxu0
      %v9374 = vadd.f32 %v9309, %v9373
      %v9375 = vpop.f32.mrb[0].mxu0
      %9376 = vmatprep.mubr.bf16.mxu0 %v7040
      %9377 = vmatmul.mubr.bf16.gmra.mrb[0].mxu0 %v7039
      %v9378 = vpop.f32.mrb[0].mxu0
      %v9379 = vadd.f32 %v9314, %v9378
      %v9380 = vpop.f32.mrb[0].mxu0
      %v9381 = vpop.f32.mrb[0].mxu0
      %v9382 = vadd.f32 %v9317, %v9381
      %v9383 = vpop.f32.mrb[0].mxu0
      %9384 = vdwg.mxu0
      %9385 = vmatprep.subr.bf16.mxu0 0
      %9386 = vmatpush1.bf16.msra.mxu0 %v8252
      %9387 = vmatprep.subr.bf16.mxu0 0
      %9388 = vmatpush1.bf16.msra.mxu0 %v8253
      %9389 = vmatprep.subr.bf16.mxu0 0
      %9390 = vmatpush1.bf16.msra.mxu0 %v8254
      %9391 = vmatprep.subr.bf16.mxu0 0
      %9392 = vmatpush1.bf16.msra.mxu0 %v8255
      %9393 = vmatprep.subr.bf16.mxu0 0
      %9394 = vmatpush1.bf16.msra.mxu0 %v8256
      %9395 = vmatprep.subr.bf16.mxu0 0
      %9396 = vmatpush1.bf16.msra.mxu0 %v8257
      %9397 = vmatprep.subr.bf16.mxu0 0
      %9398 = vmatpush1.bf16.msra.mxu0 %v8258
      %9399 = vmatprep.subr.bf16.mxu0 0
      %9400 = vmatpush1.bf16.msra.mxu0 %v8259
      %9401 = vmatprep.subr.bf16.mxu0 0
      %9402 = vmatpush1.bf16.msra.mxu0 %v8260
      %9403 = vmatprep.subr.bf16.mxu0 0
      %9404 = vmatpush1.bf16.msra.mxu0 %v8261
      %9405 = vmatprep.subr.bf16.mxu0 0
      %9406 = vmatpush1.bf16.msra.mxu0 %v8262
      %9407 = vmatprep.subr.bf16.mxu0 0
      %9408 = vmatpush1.bf16.msra.mxu0 %v8263
      %9409 = vmatprep.subr.bf16.mxu0 0
      %9410 = vmatpush1.bf16.msra.mxu0 %v8264
      %9411 = vmatprep.subr.bf16.mxu0 0
      %9412 = vmatpush1.bf16.msra.mxu0 %v8265
      %9413 = vmatprep.subr.bf16.mxu0 0
      %9414 = vmatpush1.bf16.msra.mxu0 %v8266
      %9415 = vmatprep.subr.bf16.mxu0 0
      %9416 = vmatpush1.bf16.msra.mxu0 %v8267
      %9417 = vmatprep.mubr.bf16.mxu0 %v6949
      %9418 = vmatmul.mubr.bf16.gmra.mrb[0].mxu0 %v6948
      %v9419 = vpop.f32.mrb[0].mxu0
      %v9420 = vadd.f32 %v9355, %v9419
      %v9421 = vpop.f32.mrb[0].mxu0
      %v9422 = vpop.f32.mrb[0].mxu0
      %v9423 = vadd.f32 %v9358, %v9422
      %v9424 = vpop.f32.mrb[0].mxu0
      %9425 = vmatprep.mubr.bf16.mxu0 %v6980
      %9426 = vmatmul.mubr.bf16.gmra.mrb[0].mxu0 %v6979
      %v9427 = vpop.f32.mrb[0].mxu0
      %v9428 = vadd.f32 %v9363, %v9427
      %v9429 = vpop.f32.mrb[0].mxu0
      %v9430 = vpop.f32.mrb[0].mxu0
      %v9431 = vadd.f32 %v9366, %v9430
      %v9432 = vpop.f32.mrb[0].mxu0
      %9433 = vmatprep.mubr.bf16.mxu0 %v7011
      %9434 = vmatmul.mubr.bf16.gmra.mrb[0].mxu0 %v7010
      %v9435 = vpop.f32.mrb[0].mxu0
      %v9436 = vadd.f32 %v9371, %v9435
      %v9437 = vpop.f32.mrb[0].mxu0
      %v9438 = vpop.f32.mrb[0].mxu0
      %v9439 = vadd.f32 %v9374, %v9438
      %v9440 = vpop.f32.mrb[0].mxu0
      %9441 = vmatprep.mubr.bf16.mxu0 %v7042
      %9442 = vmatmul.mubr.bf16.gmra.mrb[0].mxu0 %v7041
      %v9443 = vpop.f32.mrb[0].mxu0
      %v9444 = vadd.f32 %v9379, %v9443
      %v9445 = vpop.f32.mrb[0].mxu0
      %v9446 = vpop.f32.mrb[0].mxu0
      %v9447 = vadd.f32 %v9382, %v9446
      %v9448 = vpop.f32.mrb[0].mxu0
      %9449 = vdwg.mxu0
      %9450 = vmatprep.subr.bf16.mxu0 0
      %9451 = vmatpush1.bf16.msra.mxu0 %v8268
      %9452 = vmatprep.subr.bf16.mxu0 0
      %9453 = vmatpush1.bf16.msra.mxu0 %v8269
      %9454 = vmatprep.subr.bf16.mxu0 0
      %9455 = vmatpush1.bf16.msra.mxu0 %v8270
      %9456 = vmatprep.subr.bf16.mxu0 0
      %9457 = vmatpush1.bf16.msra.mxu0 %v8271
      %9458 = vmatprep.subr.bf16.mxu0 0
      %9459 = vmatpush1.bf16.msra.mxu0 %v8272
      %9460 = vmatprep.subr.bf16.mxu0 0
      %9461 = vmatpush1.bf16.msra.mxu0 %v8273
      %9462 = vmatprep.subr.bf16.mxu0 0
      %9463 = vmatpush1.bf16.msra.mxu0 %v8274
      %9464 = vmatprep.subr.bf16.mxu0 0
      %9465 = vmatpush1.bf16.msra.mxu0 %v8275
      %9466 = vmatprep.subr.bf16.mxu0 0
      %9467 = vmatpush1.bf16.msra.mxu0 %v8276
      %9468 = vmatprep.subr.bf16.mxu0 0
      %9469 = vmatpush1.bf16.msra.mxu0 %v8277
      %9470 = vmatprep.subr.bf16.mxu0 0
      %9471 = vmatpush1.bf16.msra.mxu0 %v8278
      %9472 = vmatprep.subr.bf16.mxu0 0
      %9473 = vmatpush1.bf16.msra.mxu0 %v8279
      %9474 = vmatprep.subr.bf16.mxu0 0
      %9475 = vmatpush1.bf16.msra.mxu0 %v8280
      %9476 = vmatprep.subr.bf16.mxu0 0
      %9477 = vmatpush1.bf16.msra.mxu0 %v8281
      %9478 = vmatprep.subr.bf16.mxu0 0
      %9479 = vmatpush1.bf16.msra.mxu0 %v8282
      %9480 = vmatprep.subr.bf16.mxu0 0
      %9481 = vmatpush1.bf16.msra.mxu0 %v8283
      %9482 = vmatprep.mubr.bf16.mxu0 %v6951
      %9483 = vmatmul.mubr.bf16.gmra.mrb[0].mxu0 %v6950
      %v9484 = vpop.f32.mrb[0].mxu0
      %v9485 = vadd.f32 %v9420, %v9484
      %v9486 = vpop.f32.mrb[0].mxu0
      %v9487 = vpop.f32.mrb[0].mxu0
      %v9488 = vadd.f32 %v9423, %v9487
      %v9489 = vpop.f32.mrb[0].mxu0
      %9490 = vmatprep.mubr.bf16.mxu0 %v6982
      %9491 = vmatmul.mubr.bf16.gmra.mrb[0].mxu0 %v6981
      %v9492 = vpop.f32.mrb[0].mxu0
      %v9493 = vadd.f32 %v9428, %v9492
      %v9494 = vpop.f32.mrb[0].mxu0
      %v9495 = vpop.f32.mrb[0].mxu0
      %v9496 = vadd.f32 %v9431, %v9495
      %v9497 = vpop.f32.mrb[0].mxu0
      %9498 = vmatprep.mubr.bf16.mxu0 %v7013
      %9499 = vmatmul.mubr.bf16.gmra.mrb[0].mxu0 %v7012
      %v9500 = vpop.f32.mrb[0].mxu0
      %v9501 = vadd.f32 %v9436, %v9500
      %v9502 = vpop.f32.mrb[0].mxu0
      %v9503 = vpop.f32.mrb[0].mxu0
      %v9504 = vadd.f32 %v9439, %v9503
      %v9505 = vpop.f32.mrb[0].mxu0
      %9506 = vmatprep.mubr.bf16.mxu0 %v7044
      %9507 = vmatmul.mubr.bf16.gmra.mrb[0].mxu0 %v7043
      %v9508 = vpop.f32.mrb[0].mxu0
      %v9509 = vadd.f32 %v9444, %v9508
      %v9510 = vpop.f32.mrb[0].mxu0
      %v9511 = vpop.f32.mrb[0].mxu0
      %v9512 = vadd.f32 %v9447, %v9511
      %v9513 = vpop.f32.mrb[0].mxu0
      %9514 = vdwg.mxu0
      %9515 = vmatprep.subr.bf16.mxu0 0
      %9516 = vmatpush1.bf16.msra.mxu0 %v8284
      %9517 = vmatprep.subr.bf16.mxu0 0
      %9518 = vmatpush1.bf16.msra.mxu0 %v8285
      %9519 = vmatprep.subr.bf16.mxu0 0
      %9520 = vmatpush1.bf16.msra.mxu0 %v8286
      %9521 = vmatprep.subr.bf16.mxu0 0
      %9522 = vmatpush1.bf16.msra.mxu0 %v8287
      %9523 = vmatprep.subr.bf16.mxu0 0
      %9524 = vmatpush1.bf16.msra.mxu0 %v8288
      %9525 = vmatprep.subr.bf16.mxu0 0
      %9526 = vmatpush1.bf16.msra.mxu0 %v8289
      %9527 = vmatprep.subr.bf16.mxu0 0
      %9528 = vmatpush1.bf16.msra.mxu0 %v8290
      %9529 = vmatprep.subr.bf16.mxu0 0
      %9530 = vmatpush1.bf16.msra.mxu0 %v8291
      %9531 = vmatprep.subr.bf16.mxu0 0
      %9532 = vmatpush1.bf16.msra.mxu0 0
      %9533 = vmatprep.subr.bf16.mxu0 0
      %9534 = vmatpush1.bf16.msra.mxu0 0
      %9535 = vmatprep.subr.bf16.mxu0 0
      %9536 = vmatpush1.bf16.msra.mxu0 0
      %9537 = vmatprep.subr.bf16.mxu0 0
      %9538 = vmatpush1.bf16.msra.mxu0 0
      %9539 = vmatprep.subr.bf16.mxu0 0
      %9540 = vmatpush1.bf16.msra.mxu0 0
      %9541 = vmatprep.subr.bf16.mxu0 0
      %9542 = vmatpush1.bf16.msra.mxu0 0
      %9543 = vmatprep.subr.bf16.mxu0 0
      %9544 = vmatpush1.bf16.msra.mxu0 0
      %9545 = vmatprep.subr.bf16.mxu0 0
      %9546 = vmatpush1.bf16.msra.mxu0 0
      %9547 = vmatprep.mubr.bf16.mxu0 0
      %9548 = vmatmul.mubr.bf16.gmra.mrb[0].mxu0 %v6952
      %v9549 = vpop.f32.mrb[0].mxu0
      %v9550 = vadd.f32 %v9485, %v9549
      %v9551 = vpop.f32.mrb[0].mxu0
      %v9552 = vpop.f32.mrb[0].mxu0
      %v9553 = vadd.f32 %v9488, %v9552
      %v9554 = vpop.f32.mrb[0].mxu0
      %9555 = vmatprep.mubr.bf16.mxu0 0
      %9556 = vmatmul.mubr.bf16.gmra.mrb[0].mxu0 %v6983
      %v9557 = vpop.f32.mrb[0].mxu0
      %v9558 = vadd.f32 %v9493, %v9557
      %v9559 = vpop.f32.mrb[0].mxu0
      %v9560 = vpop.f32.mrb[0].mxu0
      %v9561 = vadd.f32 %v9496, %v9560
      %v9562 = vpop.f32.mrb[0].mxu0
      %9563 = vmatprep.mubr.bf16.mxu0 0
      %9564 = vmatmul.mubr.bf16.gmra.mrb[0].mxu0 %v7014
      %v9565 = vpop.f32.mrb[0].mxu0
      %v9566 = vadd.f32 %v9501, %v9565
      %v9567 = vpop.f32.mrb[0].mxu0
      %v9568 = vpop.f32.mrb[0].mxu0
      %v9569 = vadd.f32 %v9504, %v9568
      %v9570 = vpop.f32.mrb[0].mxu0
      %9571 = vmatprep.mubr.bf16.mxu0 0
      %9572 = vmatmul.mubr.bf16.gmra.mrb[0].mxu0 %v7045
      %v9573 = vpop.f32.mrb[0].mxu0
      %v9574 = vadd.f32 %v9509, %v9573
      %v9575 = vpop.f32.mrb[0].mxu0
      %v9576 = vpop.f32.mrb[0].mxu0
      %v9577 = vadd.f32 %v9512, %v9576
      %v9578 = vpop.f32.mrb[0].mxu0
      %9579 = vdwg.mxu0
      %v9580 = vmin.f32 %v9550, 25.0
      %v9581 = vmin.f32 %v9553, 25.0
      %v9582 = vmin.f32 %v9558, 25.0
      %v9583 = vmin.f32 %v9561, 25.0
      %v9584 = vmin.f32 %v9566, 25.0
      %v9585 = vmin.f32 %v9569, 25.0
      %v9586 = vmin.f32 %v9574, 25.0
      %v9587 = vmin.f32 %v9577, 25.0
      %v9588 = vmul.f32 %v9580, 1.442695
      %v9589 = vpow.pop %v9588
      %v9590 = vmul.f32 %v9581, 1.442695
      %v9591 = vpow.pop %v9590
      %v9592 = vmul.f32 %v9582, 1.442695
      %v9593 = vpow.pop %v9592
      %v9594 = vmul.f32 %v9583, 1.442695
      %v9595 = vpow.pop %v9594
      %v9596 = vmul.f32 %v9584, 1.442695
      %v9597 = vpow.pop %v9596
      %v9598 = vmul.f32 %v9585, 1.442695
      %v9599 = vpow.pop %v9598
      %v9600 = vmul.f32 %v9586, 1.442695
      %v9601 = vpow.pop %v9600
      %v9602 = vmul.f32 %v9587, 1.442695
      %v9603 = vpow.pop %v9602
      %v9604 = vadd.f32 %v9589, 1.0
      %v9605 = vadd.f32 %v9591, 1.0
      %v9606 = vadd.f32 %v9593, 1.0
      %v9607 = vadd.f32 %v9595, 1.0
      %v9608 = vadd.f32 %v9597, 1.0
      %v9609 = vadd.f32 %v9599, 1.0
      %v9610 = vadd.f32 %v9601, 1.0
      %v9611 = vadd.f32 %v9603, 1.0
      %v9612 = vmul.f32 %v9604, %v9604
      %v9613 = vmul.f32 %v9605, %v9605
      %v9614 = vmul.f32 %v9606, %v9606
      %v9615 = vmul.f32 %v9607, %v9607
      %v9616 = vmul.f32 %v9608, %v9608
      %v9617 = vmul.f32 %v9609, %v9609
      %v9618 = vmul.f32 %v9610, %v9610
      %v9619 = vmul.f32 %v9611, %v9611
      %v9620 = vsub.f32 %v9612, 1.0
      %v9621 = vsub.f32 %v9613, 1.0
      %v9622 = vsub.f32 %v9614, 1.0
      %v9623 = vsub.f32 %v9615, 1.0
      %v9624 = vsub.f32 %v9616, 1.0
      %v9625 = vsub.f32 %v9617, 1.0
      %v9626 = vsub.f32 %v9618, 1.0
      %v9627 = vsub.f32 %v9619, 1.0
      %v9628 = vmul.f32 %v9550, %v9620
      %v9629 = vmul.f32 %v9553, %v9621
      %v9630 = vmul.f32 %v9558, %v9622
      %v9631 = vmul.f32 %v9561, %v9623
      %v9632 = vmul.f32 %v9566, %v9624
      %v9633 = vmul.f32 %v9569, %v9625
      %v9634 = vmul.f32 %v9574, %v9626
      %v9635 = vmul.f32 %v9577, %v9627
      %v9636 = vadd.f32 %v9612, 1.0
      %v9637 = vadd.f32 %v9613, 1.0
      %v9638 = vadd.f32 %v9614, 1.0
      %v9639 = vadd.f32 %v9615, 1.0
      %v9640 = vadd.f32 %v9616, 1.0
      %v9641 = vadd.f32 %v9617, 1.0
      %v9642 = vadd.f32 %v9618, 1.0
      %v9643 = vadd.f32 %v9619, 1.0
      %v9644 = vrcp.pop %v9636
      %v9645 = vrcp.pop %v9637
      %v9646 = vrcp.pop %v9638
      %v9647 = vrcp.pop %v9639
      %v9648 = vrcp.pop %v9640
      %v9649 = vrcp.pop %v9641
      %v9650 = vrcp.pop %v9642
      %v9651 = vrcp.pop %v9643
      %v9652 = vmul.f32 %v9628, %v9644
      %v9653 = vmul.f32 %v9629, %v9645
      %v9654 = vmul.f32 %v9630, %v9646
      %v9655 = vmul.f32 %v9631, %v9647
      %v9656 = vmul.f32 %v9632, %v9648
      %v9657 = vmul.f32 %v9633, %v9649
      %v9658 = vmul.f32 %v9634, %v9650
      %v9659 = vmul.f32 %v9635, %v9651
      %v9660 = vsel %vm459, %v9652, 0.0
      %v9661 = vsel %vm460, %v9653, 0.0
      %v9662 = vsel %vm461, %v9654, 0.0
      %v9663 = vsel %vm462, %v9655, 0.0
      %v9664 = vsel %vm463, %v9656, 0.0
      %v9665 = vsel %vm464, %v9657, 0.0
      %v9666 = vsel %vm465, %v9658, 0.0
      %v9667 = vsel %vm466, %v9659, 0.0
      %9668 = vst.msk [vmem:[%s370] sm:$0xff] %vm390, %v9660
      %9669 = vst.msk [vmem:[%s370 + $0x8] sm:$0xff] %vm390, %v9661
      %9670 = vst.msk [vmem:[%s370 + $0x10] sm:$0xff] %vm390, %v9662
      %9671 = vst.msk [vmem:[%s370 + $0x18] sm:$0xff] %vm390, %v9663
      %9672 = vst.msk [vmem:[%s370 + $0x20] sm:$0xff] %vm390, %v9664
      %9673 = vst.msk [vmem:[%s370 + $0x28] sm:$0xff] %vm390, %v9665
      %9674 = vst.msk [vmem:[%s370 + $0x30] sm:$0xff] %vm390, %v9666
      %9675 = vst.msk [vmem:[%s370 + $0x38] sm:$0xff] %vm390, %v9667
      %p9676 = scmp.lt.s32.totalorder %s22, 1
      %s9677 = scalar_select %p9676, %s22, 1
      %p9678 = scmp.lt.s32.totalorder %s21, 0
      %s9679 = scalar_select %p9678, %s21, 0
      %s9680 = smul.addr %s9677, 8
      %s9681 = sadd.s32 %s9679, %s9680
      %s9682 = smul.addr %s9681, 8
      %s9683 = scalar_lea.vmem %s6, %s9682
      // Predicated region
      $region45: #{tpu_custom_call.1} parent=43 // pred_check
        %p9684 = pneg %p207
      $region46: #{tpu_custom_call.1} parent=43 // pred_check_branch
        %9686 = sbr.rel (%p9684) target = $region48
      $region47: #{tpu_custom_call.1} parent=43 // pred_region
        _
      $region48: #{tpu_custom_call.1} parent=43 // pred_fallthru
        _
    $region44: #{tpu_custom_call.1} parent=5 // pred_fallthru
      _
    %p9687 = scmp.le.s32.totalorder 2, %s12
    // Predicated region
    $region49: #{tpu_custom_call.1} parent=5 // pred_check
      %p9688 = pneg %p9687
    $region50: #{tpu_custom_call.1} parent=5 // pred_check_branch
      %9690 = sbr.rel (%p9688) target = $region52
    $region51: #{tpu_custom_call.1} parent=5 // pred_region
      %s9691 = ssub.s32 %s12, 2
      // Predicated region
      $region53: #{tpu_custom_call.1} parent=51 // pred_check
        %p9692 = pneg %p213
      $region54: #{tpu_custom_call.1} parent=51 // pred_check_branch
        %9694 = sbr.rel (%p9692) target = $region56
      $region55: #{tpu_custom_call.1} parent=51 // pred_region
        %p9695 = scmp.lt.s32.totalorder %s24, 1
        %s9696 = scalar_select %p9695, %s24, 1
        %p9697 = scmp.lt.s32.totalorder %s23, 0
        %s9698 = scalar_select %p9697, %s23, 0
        %s9699 = smul.addr %s9696, 8
        %s9700 = sadd.s32 %s9698, %s9699
        %s9701 = smul.addr %s9700, 8
        %s9702 = scalar_lea.vmem %s6, %s9701
      $region56: #{tpu_custom_call.1} parent=51 // pred_fallthru
        _
    $region52: #{tpu_custom_call.1} parent=5 // pred_fallthru
      _
  $region6: #{tpu_custom_call.1} parent=0 // loop_footer
    %s16 = sadd.s32 1, %s12
  $region7: #{tpu_custom_call.1} parent=0 // loop_footer_branch
    %11 = sbr.rel target = $region3
  $region8: #{tpu_custom_call.1} parent=0 // loop_exit
    _

</llo_original>
